<compile_context>
chip_gen: v5e
topology: v5e:2x2
jax: 0.10.0
libtpu: 0.0.40
codegen_flags: <defaults>
</compile_context>

<pallas_src>
import functools
import math

import jax
import jax.numpy as jnp
from jax import lax
from jax.experimental import pallas as pl
from jax.experimental.pallas import tpu as pltpu

EPS = 1e-6
NEG_INF = 1e9
_MIB = 1024 * 1024


# ------------------------------ shared helpers ------------------------------ #

def _layer_norm_f32(x, gamma, beta):
    """Reference LayerNorm: unbiased std (ddof=1), eps added to std.
    Two-pass centered variance; exact divide (approx recip only used for softmax)."""
    d = x.shape[-1]
    mean = jnp.mean(x, axis=-1, keepdims=True)
    xc = x - mean
    var = jnp.sum(xc * xc, axis=-1, keepdims=True) * (1.0 / (d - 1))
    std = jnp.sqrt(var)
    return gamma * xc * (1.0 / (std + EPS)) + beta


def _tile(n, cap=256):
    """Largest tile (multiple of 8, <= cap) evenly dividing n; falls back to the full dim."""
    t = cap
    while t >= 8:
        if n % t == 0:
            return t
        t //= 2
    return n


def _compiler_params(dims, est_bytes):
    """dimension_semantics + explicit scoped-VMEM budget.
    Floor 32 MiB (> v5e's 16 MiB default), ceiling 60 MiB (< v7x's 64 MiB physical)."""
    limit = int(min(max(2 * est_bytes, 32 * _MIB), 60 * _MIB))
    return pltpu.CompilerParams(dimension_semantics=dims, vmem_limit_bytes=limit)


# ------------------------------ Pallas kernels ------------------------------ #

def _ln_kernel(x_ref, g_ref, b_ref, o_ref):
    x = x_ref[...].astype(jnp.float32)                       # [TM, D]
    o_ref[...] = _layer_norm_f32(x, g_ref[...], b_ref[...]).astype(o_ref.dtype)


def _ffn_sublayer_kernel(x_ref, g_ref, b_ref, w1_ref, b1_ref, w2_ref, b2_ref, o_ref):
    """o = x + ReLU(LN(x) @ W1 + b1) @ W2 + b2   (row tile [TM, D])."""
    x = x_ref[...].astype(jnp.float32)                       # [TM, D]
    xn = _layer_norm_f32(x, g_ref[...], b_ref[...])
    h = jnp.dot(xn.astype(jnp.bfloat16), w1_ref[...],
                preferred_element_type=jnp.float32) + b1_ref[...]
    h = jnp.maximum(h, 0.0).astype(jnp.bfloat16)             # ReLU, bf16 immediately
    y = jnp.dot(h, w2_ref[...], preferred_element_type=jnp.float32) + b2_ref[...]
    o_ref[...] = (x + y).astype(o_ref.dtype)


def _attn_sublayer_kernel(*refs, n_heads, self_kv, tq):
    """Fused attention sublayer for one (batch, query-tile) grid step:
         o = x + MHA(LN(x), kv, kv) @ Wo + bo
       kv = LN(x_full) for self-attention (causal mask generated in-kernel),
       kv = memory for cross-attention (key-padding mask -> additive bias)."""
    if self_kv:
        (xq_ref, kv_ref, g_ref, b_ref,
         wq_ref, bq_ref, wk_ref, bk_ref, wv_ref, bv_ref,
         wo_ref, bo_ref, o_ref) = refs
        mask_ref = None
    else:
        (xq_ref, kv_ref, mask_ref, g_ref, b_ref,
         wq_ref, bq_ref, wk_ref, bk_ref, wv_ref, bv_ref,
         wo_ref, bo_ref, o_ref) = refs

    x = xq_ref[0, :, :].astype(jnp.float32)                  # [tq, D] residual / query rows
    d = x.shape[-1]
    dk = d // n_heads
    scale = 1.0 / math.sqrt(dk)

    gamma = g_ref[...]
    beta = b_ref[...]

    xn_q = _layer_norm_f32(x, gamma, beta)                   # query-side LN

    if self_kv:
        kv_b = _layer_norm_f32(kv_ref[0, :, :].astype(jnp.float32),
                               gamma, beta).astype(jnp.bfloat16)
    else:
        kv_b = kv_ref[0, :, :].astype(jnp.bfloat16)          # encoder memory (no LN)
    tk = kv_b.shape[0]

    # QKV projections: bias fused in epilogue, cast to bf16 immediately
    # (no f32 + bf16 duplicates kept live).
    q = (jnp.dot(xn_q.astype(jnp.bfloat16), wq_ref[...],
                 preferred_element_type=jnp.float32) + bq_ref[...]).astype(jnp.bfloat16)
    k = (jnp.dot(kv_b, wk_ref[...],
                 preferred_element_type=jnp.float32) + bk_ref[...]).astype(jnp.bfloat16)
    v = (jnp.dot(kv_b, wv_ref[...],
                 preferred_element_type=jnp.float32) + bv_ref[...]).astype(jnp.bfloat16)

    # Additive mask bias (no precomputed f32 bias DMA).
    if self_kv:
        q0 = pl.program_id(1) * tq                           # global row offset of this tile
        row = q0 + lax.broadcasted_iota(jnp.int32, (tq, tk), 0)
        col = lax.broadcasted_iota(jnp.int32, (tq, tk), 1)
        bias = jnp.where(row >= col, 0.0, -NEG_INF)          # causal, matches masked_fill(==0,-1e9)
    else:
        bias = (mask_ref[0].astype(jnp.float32) - 1.0) * NEG_INF   # [1, tk], broadcasts over tq

    # Per-head attention; context accumulated directly into Wo (no lane-axis concat).
    # TODO(synk): at long Tk convert to lax.fori_loop + flash-style online softmax to bound
    # per-head liveness; at tiny demo shapes the static loop + reduction chain is sufficient.
    nt_dims = (((1,), (1,)), ((), ()))                       # q @ k^T (contract dk)
    acc = jnp.zeros((tq, d), jnp.float32)
    for h in range(n_heads):
        sl = slice(h * dk, (h + 1) * dk)
        s = lax.dot_general(q[:, sl], k[:, sl], nt_dims,
                            preferred_element_type=jnp.float32)      # [tq, tk]
        s = s * scale + bias
        s = s - jnp.max(s, axis=-1, keepdims=True)
        p = jnp.exp(s)
        p = p * pl.reciprocal(jnp.sum(p, axis=-1, keepdims=True), approx=True)  # EUP slot
        ctx = jnp.dot(p.astype(jnp.bfloat16), v[:, sl],
                      preferred_element_type=jnp.float32)             # [tq, dk]
        acc = acc + jnp.dot(ctx.astype(jnp.bfloat16), wo_ref[sl, :],
                            preferred_element_type=jnp.float32)       # Wo rows of head h
    o_ref[0, :, :] = (x + acc + bo_ref[...]).astype(o_ref.dtype)      # fused residual add


# ------------------------------ Pallas wrappers ------------------------------ #

def layernorm(x2d, gamma, beta):
    R, D = x2d.shape
    tm = _tile(R)
    est = 4 * tm * D * 4 + 2 * D * 4
    return pl.pallas_call(
        _ln_kernel,
        out_shape=jax.ShapeDtypeStruct((R, D), x2d.dtype),
        grid=(R // tm,),
        in_specs=[pl.BlockSpec((tm, D), lambda i: (i, 0)),
                  pl.BlockSpec((1, D), lambda i: (0, 0)),
                  pl.BlockSpec((1, D), lambda i: (0, 0))],
        out_specs=pl.BlockSpec((tm, D), lambda i: (i, 0)),
        compiler_params=_compiler_params(("parallel",), est),
    )(x2d, gamma.reshape(1, D), beta.reshape(1, D))


def ffn_sublayer(p, gamma, beta, x):
    B, T, D = x.shape
    R = B * T
    Dff = p["w1"].shape[1]
    tm = _tile(R)                                            # capped at 256 rows (v7x VMEM)
    est = (4 * tm * D * 4                 # x in/out, double-buffered
           + 2 * (D * Dff + Dff * D) * 2  # bf16 W1 + W2 (buffering headroom)
           + tm * Dff * 4 + tm * Dff * 2  # f32 + bf16 hidden
           + tm * D * 4)
    # TODO(synk): tile Dff with an "arbitrary" grid axis + f32 accumulator for very large Dff.
    y = pl.pallas_call(
        _ffn_sublayer_kernel,
        out_shape=jax.ShapeDtypeStruct((R, D), x.dtype),
        grid=(R // tm,),
        in_specs=[pl.BlockSpec((tm, D), lambda i: (i, 0)),
                  pl.BlockSpec((1, D), lambda i: (0, 0)),
                  pl.BlockSpec((1, D), lambda i: (0, 0)),
                  pl.BlockSpec((D, Dff), lambda i: (0, 0)),   # weights VMEM-resident
                  pl.BlockSpec((1, Dff), lambda i: (0, 0)),
                  pl.BlockSpec((Dff, D), lambda i: (0, 0)),
                  pl.BlockSpec((1, D), lambda i: (0, 0))],
        out_specs=pl.BlockSpec((tm, D), lambda i: (i, 0)),
        compiler_params=_compiler_params(("parallel",), est),
    )(x.reshape(R, D), gamma.reshape(1, D), beta.reshape(1, D),
      p["w1"], p["b1"].reshape(1, Dff), p["w2"], p["b2"].reshape(1, D))
    return y.reshape(B, T, D)


def attention_sublayer(p, ln_g, ln_b, x, kv, key_mask, n_heads, self_kv):
    B, Tq, D = x.shape
    tq = _tile(Tq)                                           # query-tile grid axis
    if self_kv:
        kv_arr, Tk = x, Tq                                   # K/V source = full x (LN'd in-kernel)
    else:
        kv_arr, Tk = kv, kv.shape[1]

    x_spec = pl.BlockSpec((1, tq, D), lambda b, qi: (b, qi, 0))
    kv_spec = pl.BlockSpec((1, Tk, D), lambda b, qi: (b, 0, 0))
    w_spec = pl.BlockSpec((D, D), lambda b, qi: (0, 0))      # weights VMEM-resident
    v_spec = pl.BlockSpec((1, D), lambda b, qi: (0, 0))      # biases / LN params

    in_specs = [x_spec, kv_spec]
    args = [x, kv_arr]
    if not self_kv:
        in_specs.append(pl.BlockSpec((1, 1, Tk), lambda b, qi: (b, 0, 0)))
        args.append(key_mask.reshape(B, 1, Tk))
    in_specs += [v_spec, v_spec,
                 w_spec, v_spec, w_spec, v_spec, w_spec, v_spec, w_spec, v_spec]
    args += [ln_g.reshape(1, D), ln_b.reshape(1, D),
             p["wq"], p["bq"].reshape(1, D),
             p["wk"], p["bk"].reshape(1, D),
             p["wv"], p["bv"].reshape(1, D),
             p["wo"], p["bo"].reshape(1, D)]

    est = (4 * tq * D * 4                 # x tile in/out, double-buffered
           + 2 * Tk * D * 4               # full K/V source
           + 8 * D * D * 2                # 4 bf16 weight matrices (buffering headroom)
           + (tq + 2 * Tk) * D * 2        # q/k/v bf16
           + 4 * tq * Tk * 4              # scores / probs headroom
           + 2 * tq * D * 4)              # f32 accumulator + output staging

    return pl.pallas_call(
        functools.partial(_attn_sublayer_kernel, n_heads=n_heads, self_kv=self_kv, tq=tq),
        out_shape=jax.ShapeDtypeStruct((B, Tq, D), x.dtype),
        grid=(B, Tq // tq),
        in_specs=in_specs,
        out_specs=x_spec,
        compiler_params=_compiler_params(("parallel", "parallel"), est),
    )(*args)


# -------------------------------- Decoder model ------------------------------ #

def decoder_layer_forward(p, x, memory, src_key_mask, n_heads):
    # sublayer 1: masked self-attention (LN + QKV + causal attn + Wo + residual fused)
    x = attention_sublayer(p["self_attn"], p["ln1_g"], p["ln1_b"],
                           x, None, None, n_heads, self_kv=True)
    # sublayer 2: cross-attention over encoder memory (key-padding mask)
    x = attention_sublayer(p["src_attn"], p["ln2_g"], p["ln2_b"],
                           x, memory, src_key_mask, n_heads, self_kv=False)
    # sublayer 3: position-wise feed-forward (LN + FFN + residual fused)
    x = ffn_sublayer(p["ffn"], p["ln3_g"], p["ln3_b"], x)
    return x


def decoder_forward(params, x, memory, src_mask, tgt_mask, n_heads):
    # Causal tgt mask is generated in-kernel (zero HBM bias traffic); src mask is reduced to
    # a key-padding mask (query-independent), matching standard decoder semantics.
    del tgt_mask
    src_key_mask = src_mask[:, 0, 0, :].astype(jnp.float32)          # [B, S] (1 attend / 0 mask)
    # TODO(synk): cross-call weight prefetch (P10) / per-layer sublayer fusion to hide weight DMA.
    for layer_p in params["layers"]:
        x = decoder_layer_forward(layer_p, x, memory, src_key_mask, n_heads)
    B, T, D = x.shape
    # final LayerNorm — the computation defined by the given Decoder module
    return layernorm(x.reshape(B * T, D), params["norm_g"], params["norm_b"]).reshape(B, T, D)


# ------------------------------- Parameter init ------------------------------ #

def _init_attn(key, d_model):
    ks = jax.random.split(key, 4)
    s = 1.0 / math.sqrt(d_model)

    def w(k):
        # weights stored bf16 (halves weight DMA, feeds the MXU at bf16 rate)
        return (jax.random.normal(k, (d_model, d_model), jnp.float32) * s).astype(jnp.bfloat16)

    return {
        "wq": w(ks[0]), "bq": jnp.zeros((d_model,), jnp.float32),
        "wk": w(ks[1]), "bk": jnp.zeros((d_model,), jnp.float32),
        "wv": w(ks[2]), "bv": jnp.zeros((d_model,), jnp.float32),
        "wo": w(ks[3]), "bo": jnp.zeros((d_model,), jnp.float32),
    }


def init_decoder_params(key, n_layers, d_model, d_ff):
    layers = []
    for _ in range(n_layers):
        k_self, k_src, k_f1, k_f2, key = jax.random.split(key, 5)
        layers.append({
            "self_attn": _init_attn(k_self, d_model),
            "src_attn": _init_attn(k_src, d_model),
            "ffn": {
                "w1": (jax.random.normal(k_f1, (d_model, d_ff), jnp.float32)
                       / math.sqrt(d_model)).astype(jnp.bfloat16),
                "b1": jnp.zeros((d_ff,), jnp.float32),
                "w2": (jax.random.normal(k_f2, (d_ff, d_model), jnp.float32)
                       / math.sqrt(d_ff)).astype(jnp.bfloat16),
                "b2": jnp.zeros((d_model,), jnp.float32),
            },
            "ln1_g": jnp.ones((d_model,), jnp.float32), "ln1_b": jnp.zeros((d_model,), jnp.float32),
            "ln2_g": jnp.ones((d_model,), jnp.float32), "ln2_b": jnp.zeros((d_model,), jnp.float32),
            "ln3_g": jnp.ones((d_model,), jnp.float32), "ln3_b": jnp.zeros((d_model,), jnp.float32),
        })
    return {
        "layers": layers,
        "norm_g": jnp.ones((d_model,), jnp.float32),   # final LayerNorm gamma
        "norm_b": jnp.zeros((d_model,), jnp.float32),  # final LayerNorm beta
    }


# ------------------------------------ main ----------------------------------- #

if __name__ == "__main__":
    B, T, S = 2, 8, 8        # batch, target seq, source (memory) seq
    D, H, DFF, N = 32, 4, 64, 2

    key = jax.random.PRNGKey(0)
    k_x, k_mem, k_p = jax.random.split(key, 3)

    x = jax.random.normal(k_x, (B, T, D), jnp.float32)
    memory = jax.random.normal(k_mem, (B, S, D), jnp.float32)

    # masks: 1 = attend, 0 = masked (matches masked_fill(mask == 0, -1e9))
    tgt_mask = jnp.tril(jnp.ones((T, T), jnp.float32))[None, None].repeat(B, axis=0)   # [B,1,T,T]
    src_mask = jnp.ones((B, 1, T, S), jnp.float32)                                     # [B,1,T,S]

    params = init_decoder_params(k_p, N, D, DFF)

    fwd = jax.jit(functools.partial(decoder_forward, n_heads=H))
    out = fwd(params, x, memory, src_mask, tgt_mask)
    out = jax.block_until_ready(out)

    assert out.shape == (B, T, D) and out.dtype == jnp.float32
    assert bool(jnp.all(jnp.isfinite(out)))
    print("KERNEL_OK")
</pallas_src>

<mosaic_0001>
module attributes {stable_mosaic.version = 11 : i64} {
  func.func @_attn_sublayer_kernel(%arg0: i32, %arg1: i32, %arg2: memref<1x8x32xf32, #tpu.memory_space<vmem>>, %arg3: memref<1x8x32xf32, #tpu.memory_space<vmem>>, %arg4: memref<1x32xf32, #tpu.memory_space<vmem>>, %arg5: memref<1x32xf32, #tpu.memory_space<vmem>>, %arg6: memref<32x32xbf16, #tpu.memory_space<vmem>>, %arg7: memref<1x32xf32, #tpu.memory_space<vmem>>, %arg8: memref<32x32xbf16, #tpu.memory_space<vmem>>, %arg9: memref<1x32xf32, #tpu.memory_space<vmem>>, %arg10: memref<32x32xbf16, #tpu.memory_space<vmem>>, %arg11: memref<1x32xf32, #tpu.memory_space<vmem>>, %arg12: memref<32x32xbf16, #tpu.memory_space<vmem>>, %arg13: memref<1x32xf32, #tpu.memory_space<vmem>>, %arg14: memref<1x8x32xf32, #tpu.memory_space<vmem>>) attributes {dimension_semantics = [#tpu.dimension_semantics<parallel>, #tpu.dimension_semantics<parallel>], iteration_bounds = array<i64: 2, 1>, scalar_prefetch = 0 : i64, scratch_operands = 0 : i64, tpu.core_type = #tpu.core_type<tc>, window_params = [{transform_indices = @transform_0, window_bounds = array<i64: 1, 8, 32>}, {transform_indices = @transform_1, window_bounds = array<i64: 1, 8, 32>}, {pipeline_mode = #tpu.pipeline_mode<synchronous>, transform_indices = @transform_2, window_bounds = array<i64: 1, 32>}, {pipeline_mode = #tpu.pipeline_mode<synchronous>, transform_indices = @transform_3, window_bounds = array<i64: 1, 32>}, {pipeline_mode = #tpu.pipeline_mode<synchronous>, transform_indices = @transform_4, window_bounds = array<i64: 32, 32>}, {pipeline_mode = #tpu.pipeline_mode<synchronous>, transform_indices = @transform_5, window_bounds = array<i64: 1, 32>}, {pipeline_mode = #tpu.pipeline_mode<synchronous>, transform_indices = @transform_6, window_bounds = array<i64: 32, 32>}, {pipeline_mode = #tpu.pipeline_mode<synchronous>, transform_indices = @transform_7, window_bounds = array<i64: 1, 32>}, {pipeline_mode = #tpu.pipeline_mode<synchronous>, transform_indices = @transform_8, window_bounds = array<i64: 32, 32>}, {pipeline_mode = #tpu.pipeline_mode<synchronous>, transform_indices = @transform_9, window_bounds = array<i64: 1, 32>}, {pipeline_mode = #tpu.pipeline_mode<synchronous>, transform_indices = @transform_10, window_bounds = array<i64: 32, 32>}, {pipeline_mode = #tpu.pipeline_mode<synchronous>, transform_indices = @transform_11, window_bounds = array<i64: 1, 32>}, {transform_indices = @transform_12, window_bounds = array<i64: 1, 8, 32>}]} {
    %c0 = arith.constant 0 : index
    %c0_0 = arith.constant 0 : index
    %c0_1 = arith.constant 0 : index
    %0 = vector.load %arg2[%c0, %c0_0, %c0_1] : memref<1x8x32xf32, #tpu.memory_space<vmem>>, vector<1x8x32xf32>
    %1 = vector.shape_cast %0 : vector<1x8x32xf32> to vector<8x32xf32>
    %c0_2 = arith.constant 0 : index
    %c0_3 = arith.constant 0 : index
    %2 = vector.load %arg4[%c0_2, %c0_3] : memref<1x32xf32, #tpu.memory_space<vmem>>, vector<1x32xf32>
    %c0_4 = arith.constant 0 : index
    %c0_5 = arith.constant 0 : index
    %3 = vector.load %arg5[%c0_4, %c0_5] : memref<1x32xf32, #tpu.memory_space<vmem>>, vector<1x32xf32>
    %cst = arith.constant dense<0.000000e+00> : vector<8xf32>
    %4 = vector.multi_reduction <add>, %1, %cst [1] : vector<8x32xf32> to vector<8xf32>
    %5 = vector.shape_cast %4 : vector<8xf32> to vector<8x1xf32>
    %cst_6 = arith.constant 3.200000e+01 : f32
    %6 = vector.broadcast %cst_6 : f32 to vector<8x1xf32>
    %7 = arith.divf %5, %6 : vector<8x1xf32>
    %8 = vector.broadcast %7 : vector<8x1xf32> to vector<8x32xf32>
    %9 = arith.subf %1, %8 : vector<8x32xf32>
    %10 = arith.mulf %9, %9 : vector<8x32xf32>
    %cst_7 = arith.constant dense<0.000000e+00> : vector<8xf32>
    %11 = vector.multi_reduction <add>, %10, %cst_7 [1] : vector<8x32xf32> to vector<8xf32>
    %12 = vector.shape_cast %11 : vector<8xf32> to vector<8x1xf32>
    %cst_8 = arith.constant 0.0322580636 : f32
    %13 = vector.broadcast %cst_8 : f32 to vector<8x1xf32>
    %14 = arith.mulf %12, %13 : vector<8x1xf32>
    %15 = math.sqrt %14 : vector<8x1xf32>
    %16 = vector.broadcast %2 : vector<1x32xf32> to vector<8x32xf32>
    %17 = arith.mulf %16, %9 : vector<8x32xf32>
    %cst_9 = arith.constant 9.99999997E-7 : f32
    %18 = vector.broadcast %cst_9 : f32 to vector<8x1xf32>
    %19 = arith.addf %15, %18 : vector<8x1xf32>
    %cst_10 = arith.constant 1.000000e+00 : f32
    %20 = vector.broadcast %cst_10 : f32 to vector<8x1xf32>
    %21 = arith.divf %20, %19 : vector<8x1xf32>
    %22 = vector.broadcast %21 : vector<8x1xf32> to vector<8x32xf32>
    %23 = arith.mulf %17, %22 : vector<8x32xf32>
    %24 = vector.broadcast %3 : vector<1x32xf32> to vector<8x32xf32>
    %25 = arith.addf %23, %24 : vector<8x32xf32>
    %c0_11 = arith.constant 0 : index
    %c0_12 = arith.constant 0 : index
    %c0_13 = arith.constant 0 : index
    %26 = vector.load %arg3[%c0_11, %c0_12, %c0_13] : memref<1x8x32xf32, #tpu.memory_space<vmem>>, vector<1x8x32xf32>
    %27 = vector.shape_cast %26 : vector<1x8x32xf32> to vector<8x32xf32>
    %cst_14 = arith.constant dense<0.000000e+00> : vector<8xf32>
    %28 = vector.multi_reduction <add>, %27, %cst_14 [1] : vector<8x32xf32> to vector<8xf32>
    %29 = vector.shape_cast %28 : vector<8xf32> to vector<8x1xf32>
    %cst_15 = arith.constant 3.200000e+01 : f32
    %30 = vector.broadcast %cst_15 : f32 to vector<8x1xf32>
    %31 = arith.divf %29, %30 : vector<8x1xf32>
    %32 = vector.broadcast %31 : vector<8x1xf32> to vector<8x32xf32>
    %33 = arith.subf %27, %32 : vector<8x32xf32>
    %34 = arith.mulf %33, %33 : vector<8x32xf32>
    %cst_16 = arith.constant dense<0.000000e+00> : vector<8xf32>
    %35 = vector.multi_reduction <add>, %34, %cst_16 [1] : vector<8x32xf32> to vector<8xf32>
    %36 = vector.shape_cast %35 : vector<8xf32> to vector<8x1xf32>
    %cst_17 = arith.constant 0.0322580636 : f32
    %37 = vector.broadcast %cst_17 : f32 to vector<8x1xf32>
    %38 = arith.mulf %36, %37 : vector<8x1xf32>
    %39 = math.sqrt %38 : vector<8x1xf32>
    %40 = vector.broadcast %2 : vector<1x32xf32> to vector<8x32xf32>
    %41 = arith.mulf %40, %33 : vector<8x32xf32>
    %cst_18 = arith.constant 9.99999997E-7 : f32
    %42 = vector.broadcast %cst_18 : f32 to vector<8x1xf32>
    %43 = arith.addf %39, %42 : vector<8x1xf32>
    %cst_19 = arith.constant 1.000000e+00 : f32
    %44 = vector.broadcast %cst_19 : f32 to vector<8x1xf32>
    %45 = arith.divf %44, %43 : vector<8x1xf32>
    %46 = vector.broadcast %45 : vector<8x1xf32> to vector<8x32xf32>
    %47 = arith.mulf %41, %46 : vector<8x32xf32>
    %48 = vector.broadcast %3 : vector<1x32xf32> to vector<8x32xf32>
    %49 = arith.addf %47, %48 : vector<8x32xf32>
    %50 = arith.truncf %49 : vector<8x32xf32> to vector<8x32xbf16>
    %51 = arith.truncf %25 : vector<8x32xf32> to vector<8x32xbf16>
    %c0_20 = arith.constant 0 : index
    %c0_21 = arith.constant 0 : index
    %52 = vector.load %arg6[%c0_20, %c0_21] : memref<32x32xbf16, #tpu.memory_space<vmem>>, vector<32x32xbf16>
    %cst_22 = arith.constant dense<0.000000e+00> : vector<8x32xf32>
    %53 = tpu.matmul %51, %52, %cst_22 {dimension_numbers = #tpu.dot_dimension_numbers<[1], [0], [0], [1], [0, 0, 1, 1], [], []>} : vector<8x32xbf16>, vector<32x32xbf16>, vector<8x32xf32> -> vector<8x32xf32>
    %c0_23 = arith.constant 0 : index
    %c0_24 = arith.constant 0 : index
    %54 = vector.load %arg7[%c0_23, %c0_24] : memref<1x32xf32, #tpu.memory_space<vmem>>, vector<1x32xf32>
    %55 = vector.broadcast %54 : vector<1x32xf32> to vector<8x32xf32>
    %56 = arith.addf %53, %55 : vector<8x32xf32>
    %57 = arith.truncf %56 : vector<8x32xf32> to vector<8x32xbf16>
    %c0_25 = arith.constant 0 : index
    %c0_26 = arith.constant 0 : index
    %58 = vector.load %arg8[%c0_25, %c0_26] : memref<32x32xbf16, #tpu.memory_space<vmem>>, vector<32x32xbf16>
    %cst_27 = arith.constant dense<0.000000e+00> : vector<8x32xf32>
    %59 = tpu.matmul %50, %58, %cst_27 {dimension_numbers = #tpu.dot_dimension_numbers<[1], [0], [0], [1], [0, 0, 1, 1], [], []>} : vector<8x32xbf16>, vector<32x32xbf16>, vector<8x32xf32> -> vector<8x32xf32>
    %c0_28 = arith.constant 0 : index
    %c0_29 = arith.constant 0 : index
    %60 = vector.load %arg9[%c0_28, %c0_29] : memref<1x32xf32, #tpu.memory_space<vmem>>, vector<1x32xf32>
    %61 = vector.broadcast %60 : vector<1x32xf32> to vector<8x32xf32>
    %62 = arith.addf %59, %61 : vector<8x32xf32>
    %63 = arith.truncf %62 : vector<8x32xf32> to vector<8x32xbf16>
    %c0_30 = arith.constant 0 : index
    %c0_31 = arith.constant 0 : index
    %64 = vector.load %arg10[%c0_30, %c0_31] : memref<32x32xbf16, #tpu.memory_space<vmem>>, vector<32x32xbf16>
    %cst_32 = arith.constant dense<0.000000e+00> : vector<8x32xf32>
    %65 = tpu.matmul %50, %64, %cst_32 {dimension_numbers = #tpu.dot_dimension_numbers<[1], [0], [0], [1], [0, 0, 1, 1], [], []>} : vector<8x32xbf16>, vector<32x32xbf16>, vector<8x32xf32> -> vector<8x32xf32>
    %c0_33 = arith.constant 0 : index
    %c0_34 = arith.constant 0 : index
    %66 = vector.load %arg11[%c0_33, %c0_34] : memref<1x32xf32, #tpu.memory_space<vmem>>, vector<1x32xf32>
    %67 = vector.broadcast %66 : vector<1x32xf32> to vector<8x32xf32>
    %68 = arith.addf %65, %67 : vector<8x32xf32>
    %69 = arith.truncf %68 : vector<8x32xf32> to vector<8x32xbf16>
    %c8_i32 = arith.constant 8 : i32
    %70 = arith.muli %arg1, %c8_i32 : i32
    %71 = tpu.iota {dimensions = array<i32: 0>} : vector<8x8xi32>
    %72 = vector.broadcast %70 : i32 to vector<8x8xi32>
    %73 = arith.addi %72, %71 : vector<8x8xi32>
    %74 = tpu.iota {dimensions = array<i32: 1>} : vector<8x8xi32>
    %75 = arith.cmpi sge, %73, %74 : vector<8x8xi32>
    %cst_35 = arith.constant 0.000000e+00 : f32
    %cst_36 = arith.constant -1.000000e+09 : f32
    %76 = vector.broadcast %cst_35 : f32 to vector<8x8xf32>
    %77 = vector.broadcast %cst_36 : f32 to vector<8x8xf32>
    %78 = arith.select %75, %76, %77 : vector<8x8xi1>, vector<8x8xf32>
    %cst_37 = arith.constant 0.000000e+00 : f32
    %79 = vector.broadcast %cst_37 : f32 to vector<8x32xf32>
    %80 = vector.extract_strided_slice %57 {offsets = [0, 0], sizes = [8, 8], strides = [1, 1]} : vector<8x32xbf16> to vector<8x8xbf16>
    %81 = vector.extract_strided_slice %63 {offsets = [0, 0], sizes = [8, 8], strides = [1, 1]} : vector<8x32xbf16> to vector<8x8xbf16>
    %cst_38 = arith.constant dense<0.000000e+00> : vector<8x8xf32>
    %82 = tpu.matmul %80, %81, %cst_38 {dimension_numbers = #tpu.dot_dimension_numbers<[1], [1], [0], [0], [0, 0, 1, 0], [], []>} : vector<8x8xbf16>, vector<8x8xbf16>, vector<8x8xf32> -> vector<8x8xf32>
    %cst_39 = arith.constant 0.353553385 : f32
    %83 = vector.broadcast %cst_39 : f32 to vector<8x8xf32>
    %84 = arith.mulf %82, %83 : vector<8x8xf32>
    %85 = arith.addf %84, %78 : vector<8x8xf32>
    %cst_40 = arith.constant dense<0xFF800000> : vector<8xf32>
    %86 = vector.multi_reduction <maximumf>, %85, %cst_40 [1] : vector<8x8xf32> to vector<8xf32>
    %87 = vector.shape_cast %86 : vector<8xf32> to vector<8x1xf32>
    %88 = vector.broadcast %87 : vector<8x1xf32> to vector<8x8xf32>
    %89 = arith.subf %85, %88 : vector<8x8xf32>
    %90 = math.exp %89 : vector<8x8xf32>
    %cst_41 = arith.constant dense<0.000000e+00> : vector<8xf32>
    %91 = vector.multi_reduction <add>, %90, %cst_41 [1] : vector<8x8xf32> to vector<8xf32>
    %92 = vector.shape_cast %91 : vector<8xf32> to vector<8x1xf32>
    %93 = tpu.reciprocal %92 {approx = true} : vector<8x1xf32> -> vector<8x1xf32>
    %94 = vector.broadcast %93 : vector<8x1xf32> to vector<8x8xf32>
    %95 = arith.mulf %90, %94 : vector<8x8xf32>
    %96 = arith.truncf %95 : vector<8x8xf32> to vector<8x8xbf16>
    %97 = vector.extract_strided_slice %69 {offsets = [0, 0], sizes = [8, 8], strides = [1, 1]} : vector<8x32xbf16> to vector<8x8xbf16>
    %cst_42 = arith.constant dense<0.000000e+00> : vector<8x8xf32>
    %98 = tpu.matmul %96, %97, %cst_42 {dimension_numbers = #tpu.dot_dimension_numbers<[1], [0], [0], [1], [0, 0, 1, 1], [], []>} : vector<8x8xbf16>, vector<8x8xbf16>, vector<8x8xf32> -> vector<8x8xf32>
    %99 = arith.truncf %98 : vector<8x8xf32> to vector<8x8xbf16>
    %c0_43 = arith.constant 0 : index
    %c0_44 = arith.constant 0 : index
    %100 = vector.load %arg12[%c0_43, %c0_44] : memref<32x32xbf16, #tpu.memory_space<vmem>>, vector<8x32xbf16>
    %cst_45 = arith.constant dense<0.000000e+00> : vector<8x32xf32>
    %101 = tpu.matmul %99, %100, %cst_45 {dimension_numbers = #tpu.dot_dimension_numbers<[1], [0], [0], [1], [0, 0, 1, 1], [], []>} : vector<8x8xbf16>, vector<8x32xbf16>, vector<8x32xf32> -> vector<8x32xf32>
    %102 = arith.addf %79, %101 : vector<8x32xf32>
    %103 = vector.extract_strided_slice %57 {offsets = [0, 8], sizes = [8, 8], strides = [1, 1]} : vector<8x32xbf16> to vector<8x8xbf16>
    %104 = vector.extract_strided_slice %63 {offsets = [0, 8], sizes = [8, 8], strides = [1, 1]} : vector<8x32xbf16> to vector<8x8xbf16>
    %cst_46 = arith.constant dense<0.000000e+00> : vector<8x8xf32>
    %105 = tpu.matmul %103, %104, %cst_46 {dimension_numbers = #tpu.dot_dimension_numbers<[1], [1], [0], [0], [0, 0, 1, 0], [], []>} : vector<8x8xbf16>, vector<8x8xbf16>, vector<8x8xf32> -> vector<8x8xf32>
    %cst_47 = arith.constant 0.353553385 : f32
    %106 = vector.broadcast %cst_47 : f32 to vector<8x8xf32>
    %107 = arith.mulf %105, %106 : vector<8x8xf32>
    %108 = arith.addf %107, %78 : vector<8x8xf32>
    %cst_48 = arith.constant dense<0xFF800000> : vector<8xf32>
    %109 = vector.multi_reduction <maximumf>, %108, %cst_48 [1] : vector<8x8xf32> to vector<8xf32>
    %110 = vector.shape_cast %109 : vector<8xf32> to vector<8x1xf32>
    %111 = vector.broadcast %110 : vector<8x1xf32> to vector<8x8xf32>
    %112 = arith.subf %108, %111 : vector<8x8xf32>
    %113 = math.exp %112 : vector<8x8xf32>
    %cst_49 = arith.constant dense<0.000000e+00> : vector<8xf32>
    %114 = vector.multi_reduction <add>, %113, %cst_49 [1] : vector<8x8xf32> to vector<8xf32>
    %115 = vector.shape_cast %114 : vector<8xf32> to vector<8x1xf32>
    %116 = tpu.reciprocal %115 {approx = true} : vector<8x1xf32> -> vector<8x1xf32>
    %117 = vector.broadcast %116 : vector<8x1xf32> to vector<8x8xf32>
    %118 = arith.mulf %113, %117 : vector<8x8xf32>
    %119 = arith.truncf %118 : vector<8x8xf32> to vector<8x8xbf16>
    %120 = vector.extract_strided_slice %69 {offsets = [0, 8], sizes = [8, 8], strides = [1, 1]} : vector<8x32xbf16> to vector<8x8xbf16>
    %cst_50 = arith.constant dense<0.000000e+00> : vector<8x8xf32>
    %121 = tpu.matmul %119, %120, %cst_50 {dimension_numbers = #tpu.dot_dimension_numbers<[1], [0], [0], [1], [0, 0, 1, 1], [], []>} : vector<8x8xbf16>, vector<8x8xbf16>, vector<8x8xf32> -> vector<8x8xf32>
    %122 = arith.truncf %121 : vector<8x8xf32> to vector<8x8xbf16>
    %c8 = arith.constant 8 : index
    %c0_51 = arith.constant 0 : index
    %123 = vector.load %arg12[%c8, %c0_51] : memref<32x32xbf16, #tpu.memory_space<vmem>>, vector<8x32xbf16>
    %cst_52 = arith.constant dense<0.000000e+00> : vector<8x32xf32>
    %124 = tpu.matmul %122, %123, %cst_52 {dimension_numbers = #tpu.dot_dimension_numbers<[1], [0], [0], [1], [0, 0, 1, 1], [], []>} : vector<8x8xbf16>, vector<8x32xbf16>, vector<8x32xf32> -> vector<8x32xf32>
    %125 = arith.addf %102, %124 : vector<8x32xf32>
    %126 = vector.extract_strided_slice %57 {offsets = [0, 16], sizes = [8, 8], strides = [1, 1]} : vector<8x32xbf16> to vector<8x8xbf16>
    %127 = vector.extract_strided_slice %63 {offsets = [0, 16], sizes = [8, 8], strides = [1, 1]} : vector<8x32xbf16> to vector<8x8xbf16>
    %cst_53 = arith.constant dense<0.000000e+00> : vector<8x8xf32>
    %128 = tpu.matmul %126, %127, %cst_53 {dimension_numbers = #tpu.dot_dimension_numbers<[1], [1], [0], [0], [0, 0, 1, 0], [], []>} : vector<8x8xbf16>, vector<8x8xbf16>, vector<8x8xf32> -> vector<8x8xf32>
    %cst_54 = arith.constant 0.353553385 : f32
    %129 = vector.broadcast %cst_54 : f32 to vector<8x8xf32>
    %130 = arith.mulf %128, %129 : vector<8x8xf32>
    %131 = arith.addf %130, %78 : vector<8x8xf32>
    %cst_55 = arith.constant dense<0xFF800000> : vector<8xf32>
    %132 = vector.multi_reduction <maximumf>, %131, %cst_55 [1] : vector<8x8xf32> to vector<8xf32>
    %133 = vector.shape_cast %132 : vector<8xf32> to vector<8x1xf32>
    %134 = vector.broadcast %133 : vector<8x1xf32> to vector<8x8xf32>
    %135 = arith.subf %131, %134 : vector<8x8xf32>
    %136 = math.exp %135 : vector<8x8xf32>
    %cst_56 = arith.constant dense<0.000000e+00> : vector<8xf32>
    %137 = vector.multi_reduction <add>, %136, %cst_56 [1] : vector<8x8xf32> to vector<8xf32>
    %138 = vector.shape_cast %137 : vector<8xf32> to vector<8x1xf32>
    %139 = tpu.reciprocal %138 {approx = true} : vector<8x1xf32> -> vector<8x1xf32>
    %140 = vector.broadcast %139 : vector<8x1xf32> to vector<8x8xf32>
    %141 = arith.mulf %136, %140 : vector<8x8xf32>
    %142 = arith.truncf %141 : vector<8x8xf32> to vector<8x8xbf16>
    %143 = vector.extract_strided_slice %69 {offsets = [0, 16], sizes = [8, 8], strides = [1, 1]} : vector<8x32xbf16> to vector<8x8xbf16>
    %cst_57 = arith.constant dense<0.000000e+00> : vector<8x8xf32>
    %144 = tpu.matmul %142, %143, %cst_57 {dimension_numbers = #tpu.dot_dimension_numbers<[1], [0], [0], [1], [0, 0, 1, 1], [], []>} : vector<8x8xbf16>, vector<8x8xbf16>, vector<8x8xf32> -> vector<8x8xf32>
    %145 = arith.truncf %144 : vector<8x8xf32> to vector<8x8xbf16>
    %c16 = arith.constant 16 : index
    %c0_58 = arith.constant 0 : index
    %146 = vector.load %arg12[%c16, %c0_58] : memref<32x32xbf16, #tpu.memory_space<vmem>>, vector<8x32xbf16>
    %cst_59 = arith.constant dense<0.000000e+00> : vector<8x32xf32>
    %147 = tpu.matmul %145, %146, %cst_59 {dimension_numbers = #tpu.dot_dimension_numbers<[1], [0], [0], [1], [0, 0, 1, 1], [], []>} : vector<8x8xbf16>, vector<8x32xbf16>, vector<8x32xf32> -> vector<8x32xf32>
    %148 = arith.addf %125, %147 : vector<8x32xf32>
    %149 = vector.extract_strided_slice %57 {offsets = [0, 24], sizes = [8, 8], strides = [1, 1]} : vector<8x32xbf16> to vector<8x8xbf16>
    %150 = vector.extract_strided_slice %63 {offsets = [0, 24], sizes = [8, 8], strides = [1, 1]} : vector<8x32xbf16> to vector<8x8xbf16>
    %cst_60 = arith.constant dense<0.000000e+00> : vector<8x8xf32>
    %151 = tpu.matmul %149, %150, %cst_60 {dimension_numbers = #tpu.dot_dimension_numbers<[1], [1], [0], [0], [0, 0, 1, 0], [], []>} : vector<8x8xbf16>, vector<8x8xbf16>, vector<8x8xf32> -> vector<8x8xf32>
    %cst_61 = arith.constant 0.353553385 : f32
    %152 = vector.broadcast %cst_61 : f32 to vector<8x8xf32>
    %153 = arith.mulf %151, %152 : vector<8x8xf32>
    %154 = arith.addf %153, %78 : vector<8x8xf32>
    %cst_62 = arith.constant dense<0xFF800000> : vector<8xf32>
    %155 = vector.multi_reduction <maximumf>, %154, %cst_62 [1] : vector<8x8xf32> to vector<8xf32>
    %156 = vector.shape_cast %155 : vector<8xf32> to vector<8x1xf32>
    %157 = vector.broadcast %156 : vector<8x1xf32> to vector<8x8xf32>
    %158 = arith.subf %154, %157 : vector<8x8xf32>
    %159 = math.exp %158 : vector<8x8xf32>
    %cst_63 = arith.constant dense<0.000000e+00> : vector<8xf32>
    %160 = vector.multi_reduction <add>, %159, %cst_63 [1] : vector<8x8xf32> to vector<8xf32>
    %161 = vector.shape_cast %160 : vector<8xf32> to vector<8x1xf32>
    %162 = tpu.reciprocal %161 {approx = true} : vector<8x1xf32> -> vector<8x1xf32>
    %163 = vector.broadcast %162 : vector<8x1xf32> to vector<8x8xf32>
    %164 = arith.mulf %159, %163 : vector<8x8xf32>
    %165 = arith.truncf %164 : vector<8x8xf32> to vector<8x8xbf16>
    %166 = vector.extract_strided_slice %69 {offsets = [0, 24], sizes = [8, 8], strides = [1, 1]} : vector<8x32xbf16> to vector<8x8xbf16>
    %cst_64 = arith.constant dense<0.000000e+00> : vector<8x8xf32>
    %167 = tpu.matmul %165, %166, %cst_64 {dimension_numbers = #tpu.dot_dimension_numbers<[1], [0], [0], [1], [0, 0, 1, 1], [], []>} : vector<8x8xbf16>, vector<8x8xbf16>, vector<8x8xf32> -> vector<8x8xf32>
    %168 = arith.truncf %167 : vector<8x8xf32> to vector<8x8xbf16>
    %c24 = arith.constant 24 : index
    %c0_65 = arith.constant 0 : index
    %169 = vector.load %arg12[%c24, %c0_65] : memref<32x32xbf16, #tpu.memory_space<vmem>>, vector<8x32xbf16>
    %cst_66 = arith.constant dense<0.000000e+00> : vector<8x32xf32>
    %170 = tpu.matmul %168, %169, %cst_66 {dimension_numbers = #tpu.dot_dimension_numbers<[1], [0], [0], [1], [0, 0, 1, 1], [], []>} : vector<8x8xbf16>, vector<8x32xbf16>, vector<8x32xf32> -> vector<8x32xf32>
    %171 = arith.addf %148, %170 : vector<8x32xf32>
    %172 = arith.addf %1, %171 : vector<8x32xf32>
    %c0_67 = arith.constant 0 : index
    %c0_68 = arith.constant 0 : index
    %173 = vector.load %arg13[%c0_67, %c0_68] : memref<1x32xf32, #tpu.memory_space<vmem>>, vector<1x32xf32>
    %174 = vector.broadcast %173 : vector<1x32xf32> to vector<8x32xf32>
    %175 = arith.addf %172, %174 : vector<8x32xf32>
    %c0_69 = arith.constant 0 : index
    %c0_70 = arith.constant 0 : index
    %c0_71 = arith.constant 0 : index
    %176 = vector.load %arg14[%c0_69, %c0_70, %c0_71] : memref<1x8x32xf32, #tpu.memory_space<vmem>>, vector<1x8x32xf32>
    %177 = vector.shape_cast %176 : vector<1x8x32xf32> to vector<8x32xf32>
    %178 = vector.shape_cast %175 : vector<8x32xf32> to vector<1x8x32xf32>
    tpu.vector_store %arg14[%c0_69, %c0_70, %c0_71], %178 {strides = array<i32>} : memref<1x8x32xf32, #tpu.memory_space<vmem>>, vector<1x8x32xf32>,
    return
  }
  func.func @transform_0(%arg0: i32, %arg1: i32) -> (i32, i32, i32) {
    %c0_i32 = arith.constant 0 : i32
    %c0_i32_0 = arith.constant 0 : i32
    return %arg0, %arg1, %c0_i32 : i32, i32, i32
  }
  func.func @transform_1(%arg0: i32, %arg1: i32) -> (i32, i32, i32) {
    %c0_i32 = arith.constant 0 : i32
    %c0_i32_0 = arith.constant 0 : i32
    %c0_i32_1 = arith.constant 0 : i32
    return %arg0, %c0_i32, %c0_i32_0 : i32, i32, i32
  }
  func.func @transform_2(%arg0: i32, %arg1: i32) -> (i32, i32) {
    %c0_i32 = arith.constant 0 : i32
    %c0_i32_0 = arith.constant 0 : i32
    %c0_i32_1 = arith.constant 0 : i32
    return %c0_i32, %c0_i32_0 : i32, i32
  }
  func.func @transform_3(%arg0: i32, %arg1: i32) -> (i32, i32) {
    %c0_i32 = arith.constant 0 : i32
    %c0_i32_0 = arith.constant 0 : i32
    %c0_i32_1 = arith.constant 0 : i32
    return %c0_i32, %c0_i32_0 : i32, i32
  }
  func.func @transform_4(%arg0: i32, %arg1: i32) -> (i32, i32) {
    %c0_i32 = arith.constant 0 : i32
    %c0_i32_0 = arith.constant 0 : i32
    %c0_i32_1 = arith.constant 0 : i32
    return %c0_i32, %c0_i32_0 : i32, i32
  }
  func.func @transform_5(%arg0: i32, %arg1: i32) -> (i32, i32) {
    %c0_i32 = arith.constant 0 : i32
    %c0_i32_0 = arith.constant 0 : i32
    %c0_i32_1 = arith.constant 0 : i32
    return %c0_i32, %c0_i32_0 : i32, i32
  }
  func.func @transform_6(%arg0: i32, %arg1: i32) -> (i32, i32) {
    %c0_i32 = arith.constant 0 : i32
    %c0_i32_0 = arith.constant 0 : i32
    %c0_i32_1 = arith.constant 0 : i32
    return %c0_i32, %c0_i32_0 : i32, i32
  }
  func.func @transform_7(%arg0: i32, %arg1: i32) -> (i32, i32) {
    %c0_i32 = arith.constant 0 : i32
    %c0_i32_0 = arith.constant 0 : i32
    %c0_i32_1 = arith.constant 0 : i32
    return %c0_i32, %c0_i32_0 : i32, i32
  }
  func.func @transform_8(%arg0: i32, %arg1: i32) -> (i32, i32) {
    %c0_i32 = arith.constant 0 : i32
    %c0_i32_0 = arith.constant 0 : i32
    %c0_i32_1 = arith.constant 0 : i32
    return %c0_i32, %c0_i32_0 : i32, i32
  }
  func.func @transform_9(%arg0: i32, %arg1: i32) -> (i32, i32) {
    %c0_i32 = arith.constant 0 : i32
    %c0_i32_0 = arith.constant 0 : i32
    %c0_i32_1 = arith.constant 0 : i32
    return %c0_i32, %c0_i32_0 : i32, i32
  }
  func.func @transform_10(%arg0: i32, %arg1: i32) -> (i32, i32) {
    %c0_i32 = arith.constant 0 : i32
    %c0_i32_0 = arith.constant 0 : i32
    %c0_i32_1 = arith.constant 0 : i32
    return %c0_i32, %c0_i32_0 : i32, i32
  }
  func.func @transform_11(%arg0: i32, %arg1: i32) -> (i32, i32) {
    %c0_i32 = arith.constant 0 : i32
    %c0_i32_0 = arith.constant 0 : i32
    %c0_i32_1 = arith.constant 0 : i32
    return %c0_i32, %c0_i32_0 : i32, i32
  }
  func.func @transform_12(%arg0: i32, %arg1: i32) -> (i32, i32, i32) {
    %c0_i32 = arith.constant 0 : i32
    %c0_i32_0 = arith.constant 0 : i32
    return %arg0, %arg1, %c0_i32 : i32, i32, i32
  }
}

module attributes {stable_mosaic.version = 11 : i64} {
  func.func @_attn_sublayer_kernel(%arg0: i32, %arg1: i32, %arg2: memref<1x8x32xf32, #tpu.memory_space<vmem>>, %arg3: memref<1x8x32xf32, #tpu.memory_space<vmem>>, %arg4: memref<1x1x8xf32, #tpu.memory_space<vmem>>, %arg5: memref<1x32xf32, #tpu.memory_space<vmem>>, %arg6: memref<1x32xf32, #tpu.memory_space<vmem>>, %arg7: memref<32x32xbf16, #tpu.memory_space<vmem>>, %arg8: memref<1x32xf32, #tpu.memory_space<vmem>>, %arg9: memref<32x32xbf16, #tpu.memory_space<vmem>>, %arg10: memref<1x32xf32, #tpu.memory_space<vmem>>, %arg11: memref<32x32xbf16, #tpu.memory_space<vmem>>, %arg12: memref<1x32xf32, #tpu.memory_space<vmem>>, %arg13: memref<32x32xbf16, #tpu.memory_space<vmem>>, %arg14: memref<1x32xf32, #tpu.memory_space<vmem>>, %arg15: memref<1x8x32xf32, #tpu.memory_space<vmem>>) attributes {dimension_semantics = [#tpu.dimension_semantics<parallel>, #tpu.dimension_semantics<parallel>], iteration_bounds = array<i64: 2, 1>, scalar_prefetch = 0 : i64, scratch_operands = 0 : i64, tpu.core_type = #tpu.core_type<tc>, window_params = [{transform_indices = @transform_0, window_bounds = array<i64: 1, 8, 32>}, {transform_indices = @transform_1, window_bounds = array<i64: 1, 8, 32>}, {transform_indices = @transform_2, window_bounds = array<i64: 1, 1, 8>}, {pipeline_mode = #tpu.pipeline_mode<synchronous>, transform_indices = @transform_3, window_bounds = array<i64: 1, 32>}, {pipeline_mode = #tpu.pipeline_mode<synchronous>, transform_indices = @transform_4, window_bounds = array<i64: 1, 32>}, {pipeline_mode = #tpu.pipeline_mode<synchronous>, transform_indices = @transform_5, window_bounds = array<i64: 32, 32>}, {pipeline_mode = #tpu.pipeline_mode<synchronous>, transform_indices = @transform_6, window_bounds = array<i64: 1, 32>}, {pipeline_mode = #tpu.pipeline_mode<synchronous>, transform_indices = @transform_7, window_bounds = array<i64: 32, 32>}, {pipeline_mode = #tpu.pipeline_mode<synchronous>, transform_indices = @transform_8, window_bounds = array<i64: 1, 32>}, {pipeline_mode = #tpu.pipeline_mode<synchronous>, transform_indices = @transform_9, window_bounds = array<i64: 32, 32>}, {pipeline_mode = #tpu.pipeline_mode<synchronous>, transform_indices = @transform_10, window_bounds = array<i64: 1, 32>}, {pipeline_mode = #tpu.pipeline_mode<synchronous>, transform_indices = @transform_11, window_bounds = array<i64: 32, 32>}, {pipeline_mode = #tpu.pipeline_mode<synchronous>, transform_indices = @transform_12, window_bounds = array<i64: 1, 32>}, {transform_indices = @transform_13, window_bounds = array<i64: 1, 8, 32>}]} {
    %c0 = arith.constant 0 : index
    %c0_0 = arith.constant 0 : index
    %c0_1 = arith.constant 0 : index
    %0 = vector.load %arg2[%c0, %c0_0, %c0_1] : memref<1x8x32xf32, #tpu.memory_space<vmem>>, vector<1x8x32xf32>
    %1 = vector.shape_cast %0 : vector<1x8x32xf32> to vector<8x32xf32>
    %c0_2 = arith.constant 0 : index
    %c0_3 = arith.constant 0 : index
    %2 = vector.load %arg5[%c0_2, %c0_3] : memref<1x32xf32, #tpu.memory_space<vmem>>, vector<1x32xf32>
    %c0_4 = arith.constant 0 : index
    %c0_5 = arith.constant 0 : index
    %3 = vector.load %arg6[%c0_4, %c0_5] : memref<1x32xf32, #tpu.memory_space<vmem>>, vector<1x32xf32>
    %cst = arith.constant dense<0.000000e+00> : vector<8xf32>
    %4 = vector.multi_reduction <add>, %1, %cst [1] : vector<8x32xf32> to vector<8xf32>
    %5 = vector.shape_cast %4 : vector<8xf32> to vector<8x1xf32>
    %cst_6 = arith.constant 3.200000e+01 : f32
    %6 = vector.broadcast %cst_6 : f32 to vector<8x1xf32>
    %7 = arith.divf %5, %6 : vector<8x1xf32>
    %8 = vector.broadcast %7 : vector<8x1xf32> to vector<8x32xf32>
    %9 = arith.subf %1, %8 : vector<8x32xf32>
    %10 = arith.mulf %9, %9 : vector<8x32xf32>
    %cst_7 = arith.constant dense<0.000000e+00> : vector<8xf32>
    %11 = vector.multi_reduction <add>, %10, %cst_7 [1] : vector<8x32xf32> to vector<8xf32>
    %12 = vector.shape_cast %11 : vector<8xf32> to vector<8x1xf32>
    %cst_8 = arith.constant 0.0322580636 : f32
    %13 = vector.broadcast %cst_8 : f32 to vector<8x1xf32>
    %14 = arith.mulf %12, %13 : vector<8x1xf32>
    %15 = math.sqrt %14 : vector<8x1xf32>
    %16 = vector.broadcast %2 : vector<1x32xf32> to vector<8x32xf32>
    %17 = arith.mulf %16, %9 : vector<8x32xf32>
    %cst_9 = arith.constant 9.99999997E-7 : f32
    %18 = vector.broadcast %cst_9 : f32 to vector<8x1xf32>
    %19 = arith.addf %15, %18 : vector<8x1xf32>
    %cst_10 = arith.constant 1.000000e+00 : f32
    %20 = vector.broadcast %cst_10 : f32 to vector<8x1xf32>
    %21 = arith.divf %20, %19 : vector<8x1xf32>
    %22 = vector.broadcast %21 : vector<8x1xf32> to vector<8x32xf32>
    %23 = arith.mulf %17, %22 : vector<8x32xf32>
    %24 = vector.broadcast %3 : vector<1x32xf32> to vector<8x32xf32>
    %25 = arith.addf %23, %24 : vector<8x32xf32>
    %c0_11 = arith.constant 0 : index
    %c0_12 = arith.constant 0 : index
    %c0_13 = arith.constant 0 : index
    %26 = vector.load %arg3[%c0_11, %c0_12, %c0_13] : memref<1x8x32xf32, #tpu.memory_space<vmem>>, vector<1x8x32xf32>
    %27 = vector.shape_cast %26 : vector<1x8x32xf32> to vector<8x32xf32>
    %28 = arith.truncf %27 : vector<8x32xf32> to vector<8x32xbf16>
    %29 = arith.truncf %25 : vector<8x32xf32> to vector<8x32xbf16>
    %c0_14 = arith.constant 0 : index
    %c0_15 = arith.constant 0 : index
    %30 = vector.load %arg7[%c0_14, %c0_15] : memref<32x32xbf16, #tpu.memory_space<vmem>>, vector<32x32xbf16>
    %cst_16 = arith.constant dense<0.000000e+00> : vector<8x32xf32>
    %31 = tpu.matmul %29, %30, %cst_16 {dimension_numbers = #tpu.dot_dimension_numbers<[1], [0], [0], [1], [0, 0, 1, 1], [], []>} : vector<8x32xbf16>, vector<32x32xbf16>, vector<8x32xf32> -> vector<8x32xf32>
    %c0_17 = arith.constant 0 : index
    %c0_18 = arith.constant 0 : index
    %32 = vector.load %arg8[%c0_17, %c0_18] : memref<1x32xf32, #tpu.memory_space<vmem>>, vector<1x32xf32>
    %33 = vector.broadcast %32 : vector<1x32xf32> to vector<8x32xf32>
    %34 = arith.addf %31, %33 : vector<8x32xf32>
    %35 = arith.truncf %34 : vector<8x32xf32> to vector<8x32xbf16>
    %c0_19 = arith.constant 0 : index
    %c0_20 = arith.constant 0 : index
    %36 = vector.load %arg9[%c0_19, %c0_20] : memref<32x32xbf16, #tpu.memory_space<vmem>>, vector<32x32xbf16>
    %cst_21 = arith.constant dense<0.000000e+00> : vector<8x32xf32>
    %37 = tpu.matmul %28, %36, %cst_21 {dimension_numbers = #tpu.dot_dimension_numbers<[1], [0], [0], [1], [0, 0, 1, 1], [], []>} : vector<8x32xbf16>, vector<32x32xbf16>, vector<8x32xf32> -> vector<8x32xf32>
    %c0_22 = arith.constant 0 : index
    %c0_23 = arith.constant 0 : index
    %38 = vector.load %arg10[%c0_22, %c0_23] : memref<1x32xf32, #tpu.memory_space<vmem>>, vector<1x32xf32>
    %39 = vector.broadcast %38 : vector<1x32xf32> to vector<8x32xf32>
    %40 = arith.addf %37, %39 : vector<8x32xf32>
    %41 = arith.truncf %40 : vector<8x32xf32> to vector<8x32xbf16>
    %c0_24 = arith.constant 0 : index
    %c0_25 = arith.constant 0 : index
    %42 = vector.load %arg11[%c0_24, %c0_25] : memref<32x32xbf16, #tpu.memory_space<vmem>>, vector<32x32xbf16>
    %cst_26 = arith.constant dense<0.000000e+00> : vector<8x32xf32>
    %43 = tpu.matmul %28, %42, %cst_26 {dimension_numbers = #tpu.dot_dimension_numbers<[1], [0], [0], [1], [0, 0, 1, 1], [], []>} : vector<8x32xbf16>, vector<32x32xbf16>, vector<8x32xf32> -> vector<8x32xf32>
    %c0_27 = arith.constant 0 : index
    %c0_28 = arith.constant 0 : index
    %44 = vector.load %arg12[%c0_27, %c0_28] : memref<1x32xf32, #tpu.memory_space<vmem>>, vector<1x32xf32>
    %45 = vector.broadcast %44 : vector<1x32xf32> to vector<8x32xf32>
    %46 = arith.addf %43, %45 : vector<8x32xf32>
    %47 = arith.truncf %46 : vector<8x32xf32> to vector<8x32xbf16>
    %c0_29 = arith.constant 0 : index
    %c0_30 = arith.constant 0 : index
    %c0_31 = arith.constant 0 : index
    %48 = vector.load %arg4[%c0_29, %c0_30, %c0_31] : memref<1x1x8xf32, #tpu.memory_space<vmem>>, vector<1x1x8xf32>
    %49 = vector.shape_cast %48 : vector<1x1x8xf32> to vector<1x8xf32>
    %cst_32 = arith.constant 1.000000e+00 : f32
    %50 = vector.broadcast %cst_32 : f32 to vector<1x8xf32>
    %51 = arith.subf %49, %50 : vector<1x8xf32>
    %cst_33 = arith.constant 1.000000e+09 : f32
    %52 = vector.broadcast %cst_33 : f32 to vector<1x8xf32>
    %53 = arith.mulf %51, %52 : vector<1x8xf32>
    %cst_34 = arith.constant 0.000000e+00 : f32
    %54 = vector.broadcast %cst_34 : f32 to vector<8x32xf32>
    %55 = vector.extract_strided_slice %35 {offsets = [0, 0], sizes = [8, 8], strides = [1, 1]} : vector<8x32xbf16> to vector<8x8xbf16>
    %56 = vector.extract_strided_slice %41 {offsets = [0, 0], sizes = [8, 8], strides = [1, 1]} : vector<8x32xbf16> to vector<8x8xbf16>
    %cst_35 = arith.constant dense<0.000000e+00> : vector<8x8xf32>
    %57 = tpu.matmul %55, %56, %cst_35 {dimension_numbers = #tpu.dot_dimension_numbers<[1], [1], [0], [0], [0, 0, 1, 0], [], []>} : vector<8x8xbf16>, vector<8x8xbf16>, vector<8x8xf32> -> vector<8x8xf32>
    %cst_36 = arith.constant 0.353553385 : f32
    %58 = vector.broadcast %cst_36 : f32 to vector<8x8xf32>
    %59 = arith.mulf %57, %58 : vector<8x8xf32>
    %60 = vector.broadcast %53 : vector<1x8xf32> to vector<8x8xf32>
    %61 = arith.addf %59, %60 : vector<8x8xf32>
    %cst_37 = arith.constant dense<0xFF800000> : vector<8xf32>
    %62 = vector.multi_reduction <maximumf>, %61, %cst_37 [1] : vector<8x8xf32> to vector<8xf32>
    %63 = vector.shape_cast %62 : vector<8xf32> to vector<8x1xf32>
    %64 = vector.broadcast %63 : vector<8x1xf32> to vector<8x8xf32>
    %65 = arith.subf %61, %64 : vector<8x8xf32>
    %66 = math.exp %65 : vector<8x8xf32>
    %cst_38 = arith.constant dense<0.000000e+00> : vector<8xf32>
    %67 = vector.multi_reduction <add>, %66, %cst_38 [1] : vector<8x8xf32> to vector<8xf32>
    %68 = vector.shape_cast %67 : vector<8xf32> to vector<8x1xf32>
    %69 = tpu.reciprocal %68 {approx = true} : vector<8x1xf32> -> vector<8x1xf32>
    %70 = vector.broadcast %69 : vector<8x1xf32> to vector<8x8xf32>
    %71 = arith.mulf %66, %70 : vector<8x8xf32>
    %72 = arith.truncf %71 : vector<8x8xf32> to vector<8x8xbf16>
    %73 = vector.extract_strided_slice %47 {offsets = [0, 0], sizes = [8, 8], strides = [1, 1]} : vector<8x32xbf16> to vector<8x8xbf16>
    %cst_39 = arith.constant dense<0.000000e+00> : vector<8x8xf32>
    %74 = tpu.matmul %72, %73, %cst_39 {dimension_numbers = #tpu.dot_dimension_numbers<[1], [0], [0], [1], [0, 0, 1, 1], [], []>} : vector<8x8xbf16>, vector<8x8xbf16>, vector<8x8xf32> -> vector<8x8xf32>
    %75 = arith.truncf %74 : vector<8x8xf32> to vector<8x8xbf16>
    %c0_40 = arith.constant 0 : index
    %c0_41 = arith.constant 0 : index
    %76 = vector.load %arg13[%c0_40, %c0_41] : memref<32x32xbf16, #tpu.memory_space<vmem>>, vector<8x32xbf16>
    %cst_42 = arith.constant dense<0.000000e+00> : vector<8x32xf32>
    %77 = tpu.matmul %75, %76, %cst_42 {dimension_numbers = #tpu.dot_dimension_numbers<[1], [0], [0], [1], [0, 0, 1, 1], [], []>} : vector<8x8xbf16>, vector<8x32xbf16>, vector<8x32xf32> -> vector<8x32xf32>
    %78 = arith.addf %54, %77 : vector<8x32xf32>
    %79 = vector.extract_strided_slice %35 {offsets = [0, 8], sizes = [8, 8], strides = [1, 1]} : vector<8x32xbf16> to vector<8x8xbf16>
    %80 = vector.extract_strided_slice %41 {offsets = [0, 8], sizes = [8, 8], strides = [1, 1]} : vector<8x32xbf16> to vector<8x8xbf16>
    %cst_43 = arith.constant dense<0.000000e+00> : vector<8x8xf32>
    %81 = tpu.matmul %79, %80, %cst_43 {dimension_numbers = #tpu.dot_dimension_numbers<[1], [1], [0], [0], [0, 0, 1, 0], [], []>} : vector<8x8xbf16>, vector<8x8xbf16>, vector<8x8xf32> -> vector<8x8xf32>
    %cst_44 = arith.constant 0.353553385 : f32
    %82 = vector.broadcast %cst_44 : f32 to vector<8x8xf32>
    %83 = arith.mulf %81, %82 : vector<8x8xf32>
    %84 = vector.broadcast %53 : vector<1x8xf32> to vector<8x8xf32>
    %85 = arith.addf %83, %84 : vector<8x8xf32>
    %cst_45 = arith.constant dense<0xFF800000> : vector<8xf32>
    %86 = vector.multi_reduction <maximumf>, %85, %cst_45 [1] : vector<8x8xf32> to vector<8xf32>
    %87 = vector.shape_cast %86 : vector<8xf32> to vector<8x1xf32>
    %88 = vector.broadcast %87 : vector<8x1xf32> to vector<8x8xf32>
    %89 = arith.subf %85, %88 : vector<8x8xf32>
    %90 = math.exp %89 : vector<8x8xf32>
    %cst_46 = arith.constant dense<0.000000e+00> : vector<8xf32>
    %91 = vector.multi_reduction <add>, %90, %cst_46 [1] : vector<8x8xf32> to vector<8xf32>
    %92 = vector.shape_cast %91 : vector<8xf32> to vector<8x1xf32>
    %93 = tpu.reciprocal %92 {approx = true} : vector<8x1xf32> -> vector<8x1xf32>
    %94 = vector.broadcast %93 : vector<8x1xf32> to vector<8x8xf32>
    %95 = arith.mulf %90, %94 : vector<8x8xf32>
    %96 = arith.truncf %95 : vector<8x8xf32> to vector<8x8xbf16>
    %97 = vector.extract_strided_slice %47 {offsets = [0, 8], sizes = [8, 8], strides = [1, 1]} : vector<8x32xbf16> to vector<8x8xbf16>
    %cst_47 = arith.constant dense<0.000000e+00> : vector<8x8xf32>
    %98 = tpu.matmul %96, %97, %cst_47 {dimension_numbers = #tpu.dot_dimension_numbers<[1], [0], [0], [1], [0, 0, 1, 1], [], []>} : vector<8x8xbf16>, vector<8x8xbf16>, vector<8x8xf32> -> vector<8x8xf32>
    %99 = arith.truncf %98 : vector<8x8xf32> to vector<8x8xbf16>
    %c8 = arith.constant 8 : index
    %c0_48 = arith.constant 0 : index
    %100 = vector.load %arg13[%c8, %c0_48] : memref<32x32xbf16, #tpu.memory_space<vmem>>, vector<8x32xbf16>
    %cst_49 = arith.constant dense<0.000000e+00> : vector<8x32xf32>
    %101 = tpu.matmul %99, %100, %cst_49 {dimension_numbers = #tpu.dot_dimension_numbers<[1], [0], [0], [1], [0, 0, 1, 1], [], []>} : vector<8x8xbf16>, vector<8x32xbf16>, vector<8x32xf32> -> vector<8x32xf32>
    %102 = arith.addf %78, %101 : vector<8x32xf32>
    %103 = vector.extract_strided_slice %35 {offsets = [0, 16], sizes = [8, 8], strides = [1, 1]} : vector<8x32xbf16> to vector<8x8xbf16>
    %104 = vector.extract_strided_slice %41 {offsets = [0, 16], sizes = [8, 8], strides = [1, 1]} : vector<8x32xbf16> to vector<8x8xbf16>
    %cst_50 = arith.constant dense<0.000000e+00> : vector<8x8xf32>
    %105 = tpu.matmul %103, %104, %cst_50 {dimension_numbers = #tpu.dot_dimension_numbers<[1], [1], [0], [0], [0, 0, 1, 0], [], []>} : vector<8x8xbf16>, vector<8x8xbf16>, vector<8x8xf32> -> vector<8x8xf32>
    %cst_51 = arith.constant 0.353553385 : f32
    %106 = vector.broadcast %cst_51 : f32 to vector<8x8xf32>
    %107 = arith.mulf %105, %106 : vector<8x8xf32>
    %108 = vector.broadcast %53 : vector<1x8xf32> to vector<8x8xf32>
    %109 = arith.addf %107, %108 : vector<8x8xf32>
    %cst_52 = arith.constant dense<0xFF800000> : vector<8xf32>
    %110 = vector.multi_reduction <maximumf>, %109, %cst_52 [1] : vector<8x8xf32> to vector<8xf32>
    %111 = vector.shape_cast %110 : vector<8xf32> to vector<8x1xf32>
    %112 = vector.broadcast %111 : vector<8x1xf32> to vector<8x8xf32>
    %113 = arith.subf %109, %112 : vector<8x8xf32>
    %114 = math.exp %113 : vector<8x8xf32>
    %cst_53 = arith.constant dense<0.000000e+00> : vector<8xf32>
    %115 = vector.multi_reduction <add>, %114, %cst_53 [1] : vector<8x8xf32> to vector<8xf32>
    %116 = vector.shape_cast %115 : vector<8xf32> to vector<8x1xf32>
    %117 = tpu.reciprocal %116 {approx = true} : vector<8x1xf32> -> vector<8x1xf32>
    %118 = vector.broadcast %117 : vector<8x1xf32> to vector<8x8xf32>
    %119 = arith.mulf %114, %118 : vector<8x8xf32>
    %120 = arith.truncf %119 : vector<8x8xf32> to vector<8x8xbf16>
    %121 = vector.extract_strided_slice %47 {offsets = [0, 16], sizes = [8, 8], strides = [1, 1]} : vector<8x32xbf16> to vector<8x8xbf16>
    %cst_54 = arith.constant dense<0.000000e+00> : vector<8x8xf32>
    %122 = tpu.matmul %120, %121, %cst_54 {dimension_numbers = #tpu.dot_dimension_numbers<[1], [0], [0], [1], [0, 0, 1, 1], [], []>} : vector<8x8xbf16>, vector<8x8xbf16>, vector<8x8xf32> -> vector<8x8xf32>
    %123 = arith.truncf %122 : vector<8x8xf32> to vector<8x8xbf16>
    %c16 = arith.constant 16 : index
    %c0_55 = arith.constant 0 : index
    %124 = vector.load %arg13[%c16, %c0_55] : memref<32x32xbf16, #tpu.memory_space<vmem>>, vector<8x32xbf16>
    %cst_56 = arith.constant dense<0.000000e+00> : vector<8x32xf32>
    %125 = tpu.matmul %123, %124, %cst_56 {dimension_numbers = #tpu.dot_dimension_numbers<[1], [0], [0], [1], [0, 0, 1, 1], [], []>} : vector<8x8xbf16>, vector<8x32xbf16>, vector<8x32xf32> -> vector<8x32xf32>
    %126 = arith.addf %102, %125 : vector<8x32xf32>
    %127 = vector.extract_strided_slice %35 {offsets = [0, 24], sizes = [8, 8], strides = [1, 1]} : vector<8x32xbf16> to vector<8x8xbf16>
    %128 = vector.extract_strided_slice %41 {offsets = [0, 24], sizes = [8, 8], strides = [1, 1]} : vector<8x32xbf16> to vector<8x8xbf16>
    %cst_57 = arith.constant dense<0.000000e+00> : vector<8x8xf32>
    %129 = tpu.matmul %127, %128, %cst_57 {dimension_numbers = #tpu.dot_dimension_numbers<[1], [1], [0], [0], [0, 0, 1, 0], [], []>} : vector<8x8xbf16>, vector<8x8xbf16>, vector<8x8xf32> -> vector<8x8xf32>
    %cst_58 = arith.constant 0.353553385 : f32
    %130 = vector.broadcast %cst_58 : f32 to vector<8x8xf32>
    %131 = arith.mulf %129, %130 : vector<8x8xf32>
    %132 = vector.broadcast %53 : vector<1x8xf32> to vector<8x8xf32>
    %133 = arith.addf %131, %132 : vector<8x8xf32>
    %cst_59 = arith.constant dense<0xFF800000> : vector<8xf32>
    %134 = vector.multi_reduction <maximumf>, %133, %cst_59 [1] : vector<8x8xf32> to vector<8xf32>
    %135 = vector.shape_cast %134 : vector<8xf32> to vector<8x1xf32>
    %136 = vector.broadcast %135 : vector<8x1xf32> to vector<8x8xf32>
    %137 = arith.subf %133, %136 : vector<8x8xf32>
    %138 = math.exp %137 : vector<8x8xf32>
    %cst_60 = arith.constant dense<0.000000e+00> : vector<8xf32>
    %139 = vector.multi_reduction <add>, %138, %cst_60 [1] : vector<8x8xf32> to vector<8xf32>
    %140 = vector.shape_cast %139 : vector<8xf32> to vector<8x1xf32>
    %141 = tpu.reciprocal %140 {approx = true} : vector<8x1xf32> -> vector<8x1xf32>
    %142 = vector.broadcast %141 : vector<8x1xf32> to vector<8x8xf32>
    %143 = arith.mulf %138, %142 : vector<8x8xf32>
    %144 = arith.truncf %143 : vector<8x8xf32> to vector<8x8xbf16>
    %145 = vector.extract_strided_slice %47 {offsets = [0, 24], sizes = [8, 8], strides = [1, 1]} : vector<8x32xbf16> to vector<8x8xbf16>
    %cst_61 = arith.constant dense<0.000000e+00> : vector<8x8xf32>
    %146 = tpu.matmul %144, %145, %cst_61 {dimension_numbers = #tpu.dot_dimension_numbers<[1], [0], [0], [1], [0, 0, 1, 1], [], []>} : vector<8x8xbf16>, vector<8x8xbf16>, vector<8x8xf32> -> vector<8x8xf32>
    %147 = arith.truncf %146 : vector<8x8xf32> to vector<8x8xbf16>
    %c24 = arith.constant 24 : index
    %c0_62 = arith.constant 0 : index
    %148 = vector.load %arg13[%c24, %c0_62] : memref<32x32xbf16, #tpu.memory_space<vmem>>, vector<8x32xbf16>
    %cst_63 = arith.constant dense<0.000000e+00> : vector<8x32xf32>
    %149 = tpu.matmul %147, %148, %cst_63 {dimension_numbers = #tpu.dot_dimension_numbers<[1], [0], [0], [1], [0, 0, 1, 1], [], []>} : vector<8x8xbf16>, vector<8x32xbf16>, vector<8x32xf32> -> vector<8x32xf32>
    %150 = arith.addf %126, %149 : vector<8x32xf32>
    %151 = arith.addf %1, %150 : vector<8x32xf32>
    %c0_64 = arith.constant 0 : index
    %c0_65 = arith.constant 0 : index
    %152 = vector.load %arg14[%c0_64, %c0_65] : memref<1x32xf32, #tpu.memory_space<vmem>>, vector<1x32xf32>
    %153 = vector.broadcast %152 : vector<1x32xf32> to vector<8x32xf32>
    %154 = arith.addf %151, %153 : vector<8x32xf32>
    %c0_66 = arith.constant 0 : index
    %c0_67 = arith.constant 0 : index
    %c0_68 = arith.constant 0 : index
    %155 = vector.load %arg15[%c0_66, %c0_67, %c0_68] : memref<1x8x32xf32, #tpu.memory_space<vmem>>, vector<1x8x32xf32>
    %156 = vector.shape_cast %155 : vector<1x8x32xf32> to vector<8x32xf32>
    %157 = vector.shape_cast %154 : vector<8x32xf32> to vector<1x8x32xf32>
    tpu.vector_store %arg15[%c0_66, %c0_67, %c0_68], %157 {strides = array<i32>} : memref<1x8x32xf32, #tpu.memory_space<vmem>>, vector<1x8x32xf32>,
    return
  }
  func.func @transform_0(%arg0: i32, %arg1: i32) -> (i32, i32, i32) {
    %c0_i32 = arith.constant 0 : i32
    %c0_i32_0 = arith.constant 0 : i32
    return %arg0, %arg1, %c0_i32 : i32, i32, i32
  }
  func.func @transform_1(%arg0: i32, %arg1: i32) -> (i32, i32, i32) {
    %c0_i32 = arith.constant 0 : i32
    %c0_i32_0 = arith.constant 0 : i32
    %c0_i32_1 = arith.constant 0 : i32
    return %arg0, %c0_i32, %c0_i32_0 : i32, i32, i32
  }
  func.func @transform_2(%arg0: i32, %arg1: i32) -> (i32, i32, i32) {
    %c0_i32 = arith.constant 0 : i32
    %c0_i32_0 = arith.constant 0 : i32
    %c0_i32_1 = arith.constant 0 : i32
    return %arg0, %c0_i32, %c0_i32_0 : i32, i32, i32
  }
  func.func @transform_3(%arg0: i32, %arg1: i32) -> (i32, i32) {
    %c0_i32 = arith.constant 0 : i32
    %c0_i32_0 = arith.constant 0 : i32
    %c0_i32_1 = arith.constant 0 : i32
    return %c0_i32, %c0_i32_0 : i32, i32
  }
  func.func @transform_4(%arg0: i32, %arg1: i32) -> (i32, i32) {
    %c0_i32 = arith.constant 0 : i32
    %c0_i32_0 = arith.constant 0 : i32
    %c0_i32_1 = arith.constant 0 : i32
    return %c0_i32, %c0_i32_0 : i32, i32
  }
  func.func @transform_5(%arg0: i32, %arg1: i32) -> (i32, i32) {
    %c0_i32 = arith.constant 0 : i32
    %c0_i32_0 = arith.constant 0 : i32
    %c0_i32_1 = arith.constant 0 : i32
    return %c0_i32, %c0_i32_0 : i32, i32
  }
  func.func @transform_6(%arg0: i32, %arg1: i32) -> (i32, i32) {
    %c0_i32 = arith.constant 0 : i32
    %c0_i32_0 = arith.constant 0 : i32
    %c0_i32_1 = arith.constant 0 : i32
    return %c0_i32, %c0_i32_0 : i32, i32
  }
  func.func @transform_7(%arg0: i32, %arg1: i32) -> (i32, i32) {
    %c0_i32 = arith.constant 0 : i32
    %c0_i32_0 = arith.constant 0 : i32
    %c0_i32_1 = arith.constant 0 : i32
    return %c0_i32, %c0_i32_0 : i32, i32
  }
  func.func @transform_8(%arg0: i32, %arg1: i32) -> (i32, i32) {
    %c0_i32 = arith.constant 0 : i32
    %c0_i32_0 = arith.constant 0 : i32
    %c0_i32_1 = arith.constant 0 : i32
    return %c0_i32, %c0_i32_0 : i32, i32
  }
  func.func @transform_9(%arg0: i32, %arg1: i32) -> (i32, i32) {
    %c0_i32 = arith.constant 0 : i32
    %c0_i32_0 = arith.constant 0 : i32
    %c0_i32_1 = arith.constant 0 : i32
    return %c0_i32, %c0_i32_0 : i32, i32
  }
  func.func @transform_10(%arg0: i32, %arg1: i32) -> (i32, i32) {
    %c0_i32 = arith.constant 0 : i32
    %c0_i32_0 = arith.constant 0 : i32
    %c0_i32_1 = arith.constant 0 : i32
    return %c0_i32, %c0_i32_0 : i32, i32
  }
  func.func @transform_11(%arg0: i32, %arg1: i32) -> (i32, i32) {
    %c0_i32 = arith.constant 0 : i32
    %c0_i32_0 = arith.constant 0 : i32
    %c0_i32_1 = arith.constant 0 : i32
    return %c0_i32, %c0_i32_0 : i32, i32
  }
  func.func @transform_12(%arg0: i32, %arg1: i32) -> (i32, i32) {
    %c0_i32 = arith.constant 0 : i32
    %c0_i32_0 = arith.constant 0 : i32
    %c0_i32_1 = arith.constant 0 : i32
    return %c0_i32, %c0_i32_0 : i32, i32
  }
  func.func @transform_13(%arg0: i32, %arg1: i32) -> (i32, i32, i32) {
    %c0_i32 = arith.constant 0 : i32
    %c0_i32_0 = arith.constant 0 : i32
    return %arg0, %arg1, %c0_i32 : i32, i32, i32
  }
}

module attributes {stable_mosaic.version = 11 : i64} {
  func.func @_ffn_sublayer_kernel(%arg0: i32, %arg1: memref<16x32xf32, #tpu.memory_space<vmem>>, %arg2: memref<1x32xf32, #tpu.memory_space<vmem>>, %arg3: memref<1x32xf32, #tpu.memory_space<vmem>>, %arg4: memref<32x64xbf16, #tpu.memory_space<vmem>>, %arg5: memref<1x64xf32, #tpu.memory_space<vmem>>, %arg6: memref<64x32xbf16, #tpu.memory_space<vmem>>, %arg7: memref<1x32xf32, #tpu.memory_space<vmem>>, %arg8: memref<16x32xf32, #tpu.memory_space<vmem>>) attributes {dimension_semantics = [#tpu.dimension_semantics<parallel>], iteration_bounds = array<i64: 1>, scalar_prefetch = 0 : i64, scratch_operands = 0 : i64, tpu.core_type = #tpu.core_type<tc>, window_params = [{transform_indices = @transform_0, window_bounds = array<i64: 16, 32>}, {pipeline_mode = #tpu.pipeline_mode<synchronous>, transform_indices = @transform_1, window_bounds = array<i64: 1, 32>}, {pipeline_mode = #tpu.pipeline_mode<synchronous>, transform_indices = @transform_2, window_bounds = array<i64: 1, 32>}, {pipeline_mode = #tpu.pipeline_mode<synchronous>, transform_indices = @transform_3, window_bounds = array<i64: 32, 64>}, {pipeline_mode = #tpu.pipeline_mode<synchronous>, transform_indices = @transform_4, window_bounds = array<i64: 1, 64>}, {pipeline_mode = #tpu.pipeline_mode<synchronous>, transform_indices = @transform_5, window_bounds = array<i64: 64, 32>}, {pipeline_mode = #tpu.pipeline_mode<synchronous>, transform_indices = @transform_6, window_bounds = array<i64: 1, 32>}, {transform_indices = @transform_7, window_bounds = array<i64: 16, 32>}]} {
    %c0 = arith.constant 0 : index
    %c0_0 = arith.constant 0 : index
    %0 = vector.load %arg1[%c0, %c0_0] : memref<16x32xf32, #tpu.memory_space<vmem>>, vector<16x32xf32>
    %c0_1 = arith.constant 0 : index
    %c0_2 = arith.constant 0 : index
    %1 = vector.load %arg2[%c0_1, %c0_2] : memref<1x32xf32, #tpu.memory_space<vmem>>, vector<1x32xf32>
    %c0_3 = arith.constant 0 : index
    %c0_4 = arith.constant 0 : index
    %2 = vector.load %arg3[%c0_3, %c0_4] : memref<1x32xf32, #tpu.memory_space<vmem>>, vector<1x32xf32>
    %cst = arith.constant dense<0.000000e+00> : vector<16xf32>
    %3 = vector.multi_reduction <add>, %0, %cst [1] : vector<16x32xf32> to vector<16xf32>
    %4 = vector.shape_cast %3 : vector<16xf32> to vector<16x1xf32>
    %cst_5 = arith.constant 3.200000e+01 : f32
    %5 = vector.broadcast %cst_5 : f32 to vector<16x1xf32>
    %6 = arith.divf %4, %5 : vector<16x1xf32>
    %7 = vector.broadcast %6 : vector<16x1xf32> to vector<16x32xf32>
    %8 = arith.subf %0, %7 : vector<16x32xf32>
    %9 = arith.mulf %8, %8 : vector<16x32xf32>
    %cst_6 = arith.constant dense<0.000000e+00> : vector<16xf32>
    %10 = vector.multi_reduction <add>, %9, %cst_6 [1] : vector<16x32xf32> to vector<16xf32>
    %11 = vector.shape_cast %10 : vector<16xf32> to vector<16x1xf32>
    %cst_7 = arith.constant 0.0322580636 : f32
    %12 = vector.broadcast %cst_7 : f32 to vector<16x1xf32>
    %13 = arith.mulf %11, %12 : vector<16x1xf32>
    %14 = math.sqrt %13 : vector<16x1xf32>
    %15 = vector.broadcast %1 : vector<1x32xf32> to vector<16x32xf32>
    %16 = arith.mulf %15, %8 : vector<16x32xf32>
    %cst_8 = arith.constant 9.99999997E-7 : f32
    %17 = vector.broadcast %cst_8 : f32 to vector<16x1xf32>
    %18 = arith.addf %14, %17 : vector<16x1xf32>
    %cst_9 = arith.constant 1.000000e+00 : f32
    %19 = vector.broadcast %cst_9 : f32 to vector<16x1xf32>
    %20 = arith.divf %19, %18 : vector<16x1xf32>
    %21 = vector.broadcast %20 : vector<16x1xf32> to vector<16x32xf32>
    %22 = arith.mulf %16, %21 : vector<16x32xf32>
    %23 = vector.broadcast %2 : vector<1x32xf32> to vector<16x32xf32>
    %24 = arith.addf %22, %23 : vector<16x32xf32>
    %25 = arith.truncf %24 : vector<16x32xf32> to vector<16x32xbf16>
    %c0_10 = arith.constant 0 : index
    %c0_11 = arith.constant 0 : index
    %26 = vector.load %arg4[%c0_10, %c0_11] : memref<32x64xbf16, #tpu.memory_space<vmem>>, vector<32x64xbf16>
    %cst_12 = arith.constant dense<0.000000e+00> : vector<16x64xf32>
    %27 = tpu.matmul %25, %26, %cst_12 {dimension_numbers = #tpu.dot_dimension_numbers<[1], [0], [0], [1], [0, 0, 1, 1], [], []>} : vector<16x32xbf16>, vector<32x64xbf16>, vector<16x64xf32> -> vector<16x64xf32>
    %c0_13 = arith.constant 0 : index
    %c0_14 = arith.constant 0 : index
    %28 = vector.load %arg5[%c0_13, %c0_14] : memref<1x64xf32, #tpu.memory_space<vmem>>, vector<1x64xf32>
    %29 = vector.broadcast %28 : vector<1x64xf32> to vector<16x64xf32>
    %30 = arith.addf %27, %29 : vector<16x64xf32>
    %cst_15 = arith.constant 0.000000e+00 : f32
    %31 = vector.broadcast %cst_15 : f32 to vector<16x64xf32>
    %32 = arith.maximumf %30, %31 : vector<16x64xf32>
    %33 = arith.truncf %32 : vector<16x64xf32> to vector<16x64xbf16>
    %c0_16 = arith.constant 0 : index
    %c0_17 = arith.constant 0 : index
    %34 = vector.load %arg6[%c0_16, %c0_17] : memref<64x32xbf16, #tpu.memory_space<vmem>>, vector<64x32xbf16>
    %cst_18 = arith.constant dense<0.000000e+00> : vector<16x32xf32>
    %35 = tpu.matmul %33, %34, %cst_18 {dimension_numbers = #tpu.dot_dimension_numbers<[1], [0], [0], [1], [0, 0, 1, 1], [], []>} : vector<16x64xbf16>, vector<64x32xbf16>, vector<16x32xf32> -> vector<16x32xf32>
    %c0_19 = arith.constant 0 : index
    %c0_20 = arith.constant 0 : index
    %36 = vector.load %arg7[%c0_19, %c0_20] : memref<1x32xf32, #tpu.memory_space<vmem>>, vector<1x32xf32>
    %37 = vector.broadcast %36 : vector<1x32xf32> to vector<16x32xf32>
    %38 = arith.addf %35, %37 : vector<16x32xf32>
    %39 = arith.addf %0, %38 : vector<16x32xf32>
    %c0_21 = arith.constant 0 : index
    %c0_22 = arith.constant 0 : index
    %40 = vector.load %arg8[%c0_21, %c0_22] : memref<16x32xf32, #tpu.memory_space<vmem>>, vector<16x32xf32>
    tpu.vector_store %arg8[%c0_21, %c0_22], %39 {strides = array<i32>} : memref<16x32xf32, #tpu.memory_space<vmem>>, vector<16x32xf32>,
    return
  }
  func.func @transform_0(%arg0: i32) -> (i32, i32) {
    %c0_i32 = arith.constant 0 : i32
    %c0_i32_0 = arith.constant 0 : i32
    return %arg0, %c0_i32 : i32, i32
  }
  func.func @transform_1(%arg0: i32) -> (i32, i32) {
    %c0_i32 = arith.constant 0 : i32
    %c0_i32_0 = arith.constant 0 : i32
    %c0_i32_1 = arith.constant 0 : i32
    return %c0_i32, %c0_i32_0 : i32, i32
  }
  func.func @transform_2(%arg0: i32) -> (i32, i32) {
    %c0_i32 = arith.constant 0 : i32
    %c0_i32_0 = arith.constant 0 : i32
    %c0_i32_1 = arith.constant 0 : i32
    return %c0_i32, %c0_i32_0 : i32, i32
  }
  func.func @transform_3(%arg0: i32) -> (i32, i32) {
    %c0_i32 = arith.constant 0 : i32
    %c0_i32_0 = arith.constant 0 : i32
    %c0_i32_1 = arith.constant 0 : i32
    return %c0_i32, %c0_i32_0 : i32, i32
  }
  func.func @transform_4(%arg0: i32) -> (i32, i32) {
    %c0_i32 = arith.constant 0 : i32
    %c0_i32_0 = arith.constant 0 : i32
    %c0_i32_1 = arith.constant 0 : i32
    return %c0_i32, %c0_i32_0 : i32, i32
  }
  func.func @transform_5(%arg0: i32) -> (i32, i32) {
    %c0_i32 = arith.constant 0 : i32
    %c0_i32_0 = arith.constant 0 : i32
    %c0_i32_1 = arith.constant 0 : i32
    return %c0_i32, %c0_i32_0 : i32, i32
  }
  func.func @transform_6(%arg0: i32) -> (i32, i32) {
    %c0_i32 = arith.constant 0 : i32
    %c0_i32_0 = arith.constant 0 : i32
    %c0_i32_1 = arith.constant 0 : i32
    return %c0_i32, %c0_i32_0 : i32, i32
  }
  func.func @transform_7(%arg0: i32) -> (i32, i32) {
    %c0_i32 = arith.constant 0 : i32
    %c0_i32_0 = arith.constant 0 : i32
    return %arg0, %c0_i32 : i32, i32
  }
}

module attributes {stable_mosaic.version = 11 : i64} {
  func.func @_attn_sublayer_kernel(%arg0: i32, %arg1: i32, %arg2: memref<1x8x32xf32, #tpu.memory_space<vmem>>, %arg3: memref<1x8x32xf32, #tpu.memory_space<vmem>>, %arg4: memref<1x32xf32, #tpu.memory_space<vmem>>, %arg5: memref<1x32xf32, #tpu.memory_space<vmem>>, %arg6: memref<32x32xbf16, #tpu.memory_space<vmem>>, %arg7: memref<1x32xf32, #tpu.memory_space<vmem>>, %arg8: memref<32x32xbf16, #tpu.memory_space<vmem>>, %arg9: memref<1x32xf32, #tpu.memory_space<vmem>>, %arg10: memref<32x32xbf16, #tpu.memory_space<vmem>>, %arg11: memref<1x32xf32, #tpu.memory_space<vmem>>, %arg12: memref<32x32xbf16, #tpu.memory_space<vmem>>, %arg13: memref<1x32xf32, #tpu.memory_space<vmem>>, %arg14: memref<1x8x32xf32, #tpu.memory_space<vmem>>) attributes {dimension_semantics = [#tpu.dimension_semantics<parallel>, #tpu.dimension_semantics<parallel>], iteration_bounds = array<i64: 2, 1>, scalar_prefetch = 0 : i64, scratch_operands = 0 : i64, tpu.core_type = #tpu.core_type<tc>, window_params = [{transform_indices = @transform_0, window_bounds = array<i64: 1, 8, 32>}, {transform_indices = @transform_1, window_bounds = array<i64: 1, 8, 32>}, {pipeline_mode = #tpu.pipeline_mode<synchronous>, transform_indices = @transform_2, window_bounds = array<i64: 1, 32>}, {pipeline_mode = #tpu.pipeline_mode<synchronous>, transform_indices = @transform_3, window_bounds = array<i64: 1, 32>}, {pipeline_mode = #tpu.pipeline_mode<synchronous>, transform_indices = @transform_4, window_bounds = array<i64: 32, 32>}, {pipeline_mode = #tpu.pipeline_mode<synchronous>, transform_indices = @transform_5, window_bounds = array<i64: 1, 32>}, {pipeline_mode = #tpu.pipeline_mode<synchronous>, transform_indices = @transform_6, window_bounds = array<i64: 32, 32>}, {pipeline_mode = #tpu.pipeline_mode<synchronous>, transform_indices = @transform_7, window_bounds = array<i64: 1, 32>}, {pipeline_mode = #tpu.pipeline_mode<synchronous>, transform_indices = @transform_8, window_bounds = array<i64: 32, 32>}, {pipeline_mode = #tpu.pipeline_mode<synchronous>, transform_indices = @transform_9, window_bounds = array<i64: 1, 32>}, {pipeline_mode = #tpu.pipeline_mode<synchronous>, transform_indices = @transform_10, window_bounds = array<i64: 32, 32>}, {pipeline_mode = #tpu.pipeline_mode<synchronous>, transform_indices = @transform_11, window_bounds = array<i64: 1, 32>}, {transform_indices = @transform_12, window_bounds = array<i64: 1, 8, 32>}]} {
    %c0 = arith.constant 0 : index
    %c0_0 = arith.constant 0 : index
    %c0_1 = arith.constant 0 : index
    %0 = vector.load %arg2[%c0, %c0_0, %c0_1] : memref<1x8x32xf32, #tpu.memory_space<vmem>>, vector<1x8x32xf32>
    %1 = vector.shape_cast %0 : vector<1x8x32xf32> to vector<8x32xf32>
    %c0_2 = arith.constant 0 : index
    %c0_3 = arith.constant 0 : index
    %2 = vector.load %arg4[%c0_2, %c0_3] : memref<1x32xf32, #tpu.memory_space<vmem>>, vector<1x32xf32>
    %c0_4 = arith.constant 0 : index
    %c0_5 = arith.constant 0 : index
    %3 = vector.load %arg5[%c0_4, %c0_5] : memref<1x32xf32, #tpu.memory_space<vmem>>, vector<1x32xf32>
    %cst = arith.constant dense<0.000000e+00> : vector<8xf32>
    %4 = vector.multi_reduction <add>, %1, %cst [1] : vector<8x32xf32> to vector<8xf32>
    %5 = vector.shape_cast %4 : vector<8xf32> to vector<8x1xf32>
    %cst_6 = arith.constant 3.200000e+01 : f32
    %6 = vector.broadcast %cst_6 : f32 to vector<8x1xf32>
    %7 = arith.divf %5, %6 : vector<8x1xf32>
    %8 = vector.broadcast %7 : vector<8x1xf32> to vector<8x32xf32>
    %9 = arith.subf %1, %8 : vector<8x32xf32>
    %10 = arith.mulf %9, %9 : vector<8x32xf32>
    %cst_7 = arith.constant dense<0.000000e+00> : vector<8xf32>
    %11 = vector.multi_reduction <add>, %10, %cst_7 [1] : vector<8x32xf32> to vector<8xf32>
    %12 = vector.shape_cast %11 : vector<8xf32> to vector<8x1xf32>
    %cst_8 = arith.constant 0.0322580636 : f32
    %13 = vector.broadcast %cst_8 : f32 to vector<8x1xf32>
    %14 = arith.mulf %12, %13 : vector<8x1xf32>
    %15 = math.sqrt %14 : vector<8x1xf32>
    %16 = vector.broadcast %2 : vector<1x32xf32> to vector<8x32xf32>
    %17 = arith.mulf %16, %9 : vector<8x32xf32>
    %cst_9 = arith.constant 9.99999997E-7 : f32
    %18 = vector.broadcast %cst_9 : f32 to vector<8x1xf32>
    %19 = arith.addf %15, %18 : vector<8x1xf32>
    %cst_10 = arith.constant 1.000000e+00 : f32
    %20 = vector.broadcast %cst_10 : f32 to vector<8x1xf32>
    %21 = arith.divf %20, %19 : vector<8x1xf32>
    %22 = vector.broadcast %21 : vector<8x1xf32> to vector<8x32xf32>
    %23 = arith.mulf %17, %22 : vector<8x32xf32>
    %24 = vector.broadcast %3 : vector<1x32xf32> to vector<8x32xf32>
    %25 = arith.addf %23, %24 : vector<8x32xf32>
    %c0_11 = arith.constant 0 : index
    %c0_12 = arith.constant 0 : index
    %c0_13 = arith.constant 0 : index
    %26 = vector.load %arg3[%c0_11, %c0_12, %c0_13] : memref<1x8x32xf32, #tpu.memory_space<vmem>>, vector<1x8x32xf32>
    %27 = vector.shape_cast %26 : vector<1x8x32xf32> to vector<8x32xf32>
    %cst_14 = arith.constant dense<0.000000e+00> : vector<8xf32>
    %28 = vector.multi_reduction <add>, %27, %cst_14 [1] : vector<8x32xf32> to vector<8xf32>
    %29 = vector.shape_cast %28 : vector<8xf32> to vector<8x1xf32>
    %cst_15 = arith.constant 3.200000e+01 : f32
    %30 = vector.broadcast %cst_15 : f32 to vector<8x1xf32>
    %31 = arith.divf %29, %30 : vector<8x1xf32>
    %32 = vector.broadcast %31 : vector<8x1xf32> to vector<8x32xf32>
    %33 = arith.subf %27, %32 : vector<8x32xf32>
    %34 = arith.mulf %33, %33 : vector<8x32xf32>
    %cst_16 = arith.constant dense<0.000000e+00> : vector<8xf32>
    %35 = vector.multi_reduction <add>, %34, %cst_16 [1] : vector<8x32xf32> to vector<8xf32>
    %36 = vector.shape_cast %35 : vector<8xf32> to vector<8x1xf32>
    %cst_17 = arith.constant 0.0322580636 : f32
    %37 = vector.broadcast %cst_17 : f32 to vector<8x1xf32>
    %38 = arith.mulf %36, %37 : vector<8x1xf32>
    %39 = math.sqrt %38 : vector<8x1xf32>
    %40 = vector.broadcast %2 : vector<1x32xf32> to vector<8x32xf32>
    %41 = arith.mulf %40, %33 : vector<8x32xf32>
    %cst_18 = arith.constant 9.99999997E-7 : f32
    %42 = vector.broadcast %cst_18 : f32 to vector<8x1xf32>
    %43 = arith.addf %39, %42 : vector<8x1xf32>
    %cst_19 = arith.constant 1.000000e+00 : f32
    %44 = vector.broadcast %cst_19 : f32 to vector<8x1xf32>
    %45 = arith.divf %44, %43 : vector<8x1xf32>
    %46 = vector.broadcast %45 : vector<8x1xf32> to vector<8x32xf32>
    %47 = arith.mulf %41, %46 : vector<8x32xf32>
    %48 = vector.broadcast %3 : vector<1x32xf32> to vector<8x32xf32>
    %49 = arith.addf %47, %48 : vector<8x32xf32>
    %50 = arith.truncf %49 : vector<8x32xf32> to vector<8x32xbf16>
    %51 = arith.truncf %25 : vector<8x32xf32> to vector<8x32xbf16>
    %c0_20 = arith.constant 0 : index
    %c0_21 = arith.constant 0 : index
    %52 = vector.load %arg6[%c0_20, %c0_21] : memref<32x32xbf16, #tpu.memory_space<vmem>>, vector<32x32xbf16>
    %cst_22 = arith.constant dense<0.000000e+00> : vector<8x32xf32>
    %53 = tpu.matmul %51, %52, %cst_22 {dimension_numbers = #tpu.dot_dimension_numbers<[1], [0], [0], [1], [0, 0, 1, 1], [], []>} : vector<8x32xbf16>, vector<32x32xbf16>, vector<8x32xf32> -> vector<8x32xf32>
    %c0_23 = arith.constant 0 : index
    %c0_24 = arith.constant 0 : index
    %54 = vector.load %arg7[%c0_23, %c0_24] : memref<1x32xf32, #tpu.memory_space<vmem>>, vector<1x32xf32>
    %55 = vector.broadcast %54 : vector<1x32xf32> to vector<8x32xf32>
    %56 = arith.addf %53, %55 : vector<8x32xf32>
    %57 = arith.truncf %56 : vector<8x32xf32> to vector<8x32xbf16>
    %c0_25 = arith.constant 0 : index
    %c0_26 = arith.constant 0 : index
    %58 = vector.load %arg8[%c0_25, %c0_26] : memref<32x32xbf16, #tpu.memory_space<vmem>>, vector<32x32xbf16>
    %cst_27 = arith.constant dense<0.000000e+00> : vector<8x32xf32>
    %59 = tpu.matmul %50, %58, %cst_27 {dimension_numbers = #tpu.dot_dimension_numbers<[1], [0], [0], [1], [0, 0, 1, 1], [], []>} : vector<8x32xbf16>, vector<32x32xbf16>, vector<8x32xf32> -> vector<8x32xf32>
    %c0_28 = arith.constant 0 : index
    %c0_29 = arith.constant 0 : index
    %60 = vector.load %arg9[%c0_28, %c0_29] : memref<1x32xf32, #tpu.memory_space<vmem>>, vector<1x32xf32>
    %61 = vector.broadcast %60 : vector<1x32xf32> to vector<8x32xf32>
    %62 = arith.addf %59, %61 : vector<8x32xf32>
    %63 = arith.truncf %62 : vector<8x32xf32> to vector<8x32xbf16>
    %c0_30 = arith.constant 0 : index
    %c0_31 = arith.constant 0 : index
    %64 = vector.load %arg10[%c0_30, %c0_31] : memref<32x32xbf16, #tpu.memory_space<vmem>>, vector<32x32xbf16>
    %cst_32 = arith.constant dense<0.000000e+00> : vector<8x32xf32>
    %65 = tpu.matmul %50, %64, %cst_32 {dimension_numbers = #tpu.dot_dimension_numbers<[1], [0], [0], [1], [0, 0, 1, 1], [], []>} : vector<8x32xbf16>, vector<32x32xbf16>, vector<8x32xf32> -> vector<8x32xf32>
    %c0_33 = arith.constant 0 : index
    %c0_34 = arith.constant 0 : index
    %66 = vector.load %arg11[%c0_33, %c0_34] : memref<1x32xf32, #tpu.memory_space<vmem>>, vector<1x32xf32>
    %67 = vector.broadcast %66 : vector<1x32xf32> to vector<8x32xf32>
    %68 = arith.addf %65, %67 : vector<8x32xf32>
    %69 = arith.truncf %68 : vector<8x32xf32> to vector<8x32xbf16>
    %c8_i32 = arith.constant 8 : i32
    %70 = arith.muli %arg1, %c8_i32 : i32
    %71 = tpu.iota {dimensions = array<i32: 0>} : vector<8x8xi32>
    %72 = vector.broadcast %70 : i32 to vector<8x8xi32>
    %73 = arith.addi %72, %71 : vector<8x8xi32>
    %74 = tpu.iota {dimensions = array<i32: 1>} : vector<8x8xi32>
    %75 = arith.cmpi sge, %73, %74 : vector<8x8xi32>
    %cst_35 = arith.constant 0.000000e+00 : f32
    %cst_36 = arith.constant -1.000000e+09 : f32
    %76 = vector.broadcast %cst_35 : f32 to vector<8x8xf32>
    %77 = vector.broadcast %cst_36 : f32 to vector<8x8xf32>
    %78 = arith.select %75, %76, %77 : vector<8x8xi1>, vector<8x8xf32>
    %cst_37 = arith.constant 0.000000e+00 : f32
    %79 = vector.broadcast %cst_37 : f32 to vector<8x32xf32>
    %80 = vector.extract_strided_slice %57 {offsets = [0, 0], sizes = [8, 8], strides = [1, 1]} : vector<8x32xbf16> to vector<8x8xbf16>
    %81 = vector.extract_strided_slice %63 {offsets = [0, 0], sizes = [8, 8], strides = [1, 1]} : vector<8x32xbf16> to vector<8x8xbf16>
    %cst_38 = arith.constant dense<0.000000e+00> : vector<8x8xf32>
    %82 = tpu.matmul %80, %81, %cst_38 {dimension_numbers = #tpu.dot_dimension_numbers<[1], [1], [0], [0], [0, 0, 1, 0], [], []>} : vector<8x8xbf16>, vector<8x8xbf16>, vector<8x8xf32> -> vector<8x8xf32>
    %cst_39 = arith.constant 0.353553385 : f32
    %83 = vector.broadcast %cst_39 : f32 to vector<8x8xf32>
    %84 = arith.mulf %82, %83 : vector<8x8xf32>
    %85 = arith.addf %84, %78 : vector<8x8xf32>
    %cst_40 = arith.constant dense<0xFF800000> : vector<8xf32>
    %86 = vector.multi_reduction <maximumf>, %85, %cst_40 [1] : vector<8x8xf32> to vector<8xf32>
    %87 = vector.shape_cast %86 : vector<8xf32> to vector<8x1xf32>
    %88 = vector.broadcast %87 : vector<8x1xf32> to vector<8x8xf32>
    %89 = arith.subf %85, %88 : vector<8x8xf32>
    %90 = math.exp %89 : vector<8x8xf32>
    %cst_41 = arith.constant dense<0.000000e+00> : vector<8xf32>
    %91 = vector.multi_reduction <add>, %90, %cst_41 [1] : vector<8x8xf32> to vector<8xf32>
    %92 = vector.shape_cast %91 : vector<8xf32> to vector<8x1xf32>
    %93 = tpu.reciprocal %92 {approx = true} : vector<8x1xf32> -> vector<8x1xf32>
    %94 = vector.broadcast %93 : vector<8x1xf32> to vector<8x8xf32>
    %95 = arith.mulf %90, %94 : vector<8x8xf32>
    %96 = arith.truncf %95 : vector<8x8xf32> to vector<8x8xbf16>
    %97 = vector.extract_strided_slice %69 {offsets = [0, 0], sizes = [8, 8], strides = [1, 1]} : vector<8x32xbf16> to vector<8x8xbf16>
    %cst_42 = arith.constant dense<0.000000e+00> : vector<8x8xf32>
    %98 = tpu.matmul %96, %97, %cst_42 {dimension_numbers = #tpu.dot_dimension_numbers<[1], [0], [0], [1], [0, 0, 1, 1], [], []>} : vector<8x8xbf16>, vector<8x8xbf16>, vector<8x8xf32> -> vector<8x8xf32>
    %99 = arith.truncf %98 : vector<8x8xf32> to vector<8x8xbf16>
    %c0_43 = arith.constant 0 : index
    %c0_44 = arith.constant 0 : index
    %100 = vector.load %arg12[%c0_43, %c0_44] : memref<32x32xbf16, #tpu.memory_space<vmem>>, vector<8x32xbf16>
    %cst_45 = arith.constant dense<0.000000e+00> : vector<8x32xf32>
    %101 = tpu.matmul %99, %100, %cst_45 {dimension_numbers = #tpu.dot_dimension_numbers<[1], [0], [0], [1], [0, 0, 1, 1], [], []>} : vector<8x8xbf16>, vector<8x32xbf16>, vector<8x32xf32> -> vector<8x32xf32>
    %102 = arith.addf %79, %101 : vector<8x32xf32>
    %103 = vector.extract_strided_slice %57 {offsets = [0, 8], sizes = [8, 8], strides = [1, 1]} : vector<8x32xbf16> to vector<8x8xbf16>
    %104 = vector.extract_strided_slice %63 {offsets = [0, 8], sizes = [8, 8], strides = [1, 1]} : vector<8x32xbf16> to vector<8x8xbf16>
    %cst_46 = arith.constant dense<0.000000e+00> : vector<8x8xf32>
    %105 = tpu.matmul %103, %104, %cst_46 {dimension_numbers = #tpu.dot_dimension_numbers<[1], [1], [0], [0], [0, 0, 1, 0], [], []>} : vector<8x8xbf16>, vector<8x8xbf16>, vector<8x8xf32> -> vector<8x8xf32>
    %cst_47 = arith.constant 0.353553385 : f32
    %106 = vector.broadcast %cst_47 : f32 to vector<8x8xf32>
    %107 = arith.mulf %105, %106 : vector<8x8xf32>
    %108 = arith.addf %107, %78 : vector<8x8xf32>
    %cst_48 = arith.constant dense<0xFF800000> : vector<8xf32>
    %109 = vector.multi_reduction <maximumf>, %108, %cst_48 [1] : vector<8x8xf32> to vector<8xf32>
    %110 = vector.shape_cast %109 : vector<8xf32> to vector<8x1xf32>
    %111 = vector.broadcast %110 : vector<8x1xf32> to vector<8x8xf32>
    %112 = arith.subf %108, %111 : vector<8x8xf32>
    %113 = math.exp %112 : vector<8x8xf32>
    %cst_49 = arith.constant dense<0.000000e+00> : vector<8xf32>
    %114 = vector.multi_reduction <add>, %113, %cst_49 [1] : vector<8x8xf32> to vector<8xf32>
    %115 = vector.shape_cast %114 : vector<8xf32> to vector<8x1xf32>
    %116 = tpu.reciprocal %115 {approx = true} : vector<8x1xf32> -> vector<8x1xf32>
    %117 = vector.broadcast %116 : vector<8x1xf32> to vector<8x8xf32>
    %118 = arith.mulf %113, %117 : vector<8x8xf32>
    %119 = arith.truncf %118 : vector<8x8xf32> to vector<8x8xbf16>
    %120 = vector.extract_strided_slice %69 {offsets = [0, 8], sizes = [8, 8], strides = [1, 1]} : vector<8x32xbf16> to vector<8x8xbf16>
    %cst_50 = arith.constant dense<0.000000e+00> : vector<8x8xf32>
    %121 = tpu.matmul %119, %120, %cst_50 {dimension_numbers = #tpu.dot_dimension_numbers<[1], [0], [0], [1], [0, 0, 1, 1], [], []>} : vector<8x8xbf16>, vector<8x8xbf16>, vector<8x8xf32> -> vector<8x8xf32>
    %122 = arith.truncf %121 : vector<8x8xf32> to vector<8x8xbf16>
    %c8 = arith.constant 8 : index
    %c0_51 = arith.constant 0 : index
    %123 = vector.load %arg12[%c8, %c0_51] : memref<32x32xbf16, #tpu.memory_space<vmem>>, vector<8x32xbf16>
    %cst_52 = arith.constant dense<0.000000e+00> : vector<8x32xf32>
    %124 = tpu.matmul %122, %123, %cst_52 {dimension_numbers = #tpu.dot_dimension_numbers<[1], [0], [0], [1], [0, 0, 1, 1], [], []>} : vector<8x8xbf16>, vector<8x32xbf16>, vector<8x32xf32> -> vector<8x32xf32>
    %125 = arith.addf %102, %124 : vector<8x32xf32>
    %126 = vector.extract_strided_slice %57 {offsets = [0, 16], sizes = [8, 8], strides = [1, 1]} : vector<8x32xbf16> to vector<8x8xbf16>
    %127 = vector.extract_strided_slice %63 {offsets = [0, 16], sizes = [8, 8], strides = [1, 1]} : vector<8x32xbf16> to vector<8x8xbf16>
    %cst_53 = arith.constant dense<0.000000e+00> : vector<8x8xf32>
    %128 = tpu.matmul %126, %127, %cst_53 {dimension_numbers = #tpu.dot_dimension_numbers<[1], [1], [0], [0], [0, 0, 1, 0], [], []>} : vector<8x8xbf16>, vector<8x8xbf16>, vector<8x8xf32> -> vector<8x8xf32>
    %cst_54 = arith.constant 0.353553385 : f32
    %129 = vector.broadcast %cst_54 : f32 to vector<8x8xf32>
    %130 = arith.mulf %128, %129 : vector<8x8xf32>
    %131 = arith.addf %130, %78 : vector<8x8xf32>
    %cst_55 = arith.constant dense<0xFF800000> : vector<8xf32>
    %132 = vector.multi_reduction <maximumf>, %131, %cst_55 [1] : vector<8x8xf32> to vector<8xf32>
    %133 = vector.shape_cast %132 : vector<8xf32> to vector<8x1xf32>
    %134 = vector.broadcast %133 : vector<8x1xf32> to vector<8x8xf32>
    %135 = arith.subf %131, %134 : vector<8x8xf32>
    %136 = math.exp %135 : vector<8x8xf32>
    %cst_56 = arith.constant dense<0.000000e+00> : vector<8xf32>
    %137 = vector.multi_reduction <add>, %136, %cst_56 [1] : vector<8x8xf32> to vector<8xf32>
    %138 = vector.shape_cast %137 : vector<8xf32> to vector<8x1xf32>
    %139 = tpu.reciprocal %138 {approx = true} : vector<8x1xf32> -> vector<8x1xf32>
    %140 = vector.broadcast %139 : vector<8x1xf32> to vector<8x8xf32>
    %141 = arith.mulf %136, %140 : vector<8x8xf32>
    %142 = arith.truncf %141 : vector<8x8xf32> to vector<8x8xbf16>
    %143 = vector.extract_strided_slice %69 {offsets = [0, 16], sizes = [8, 8], strides = [1, 1]} : vector<8x32xbf16> to vector<8x8xbf16>
    %cst_57 = arith.constant dense<0.000000e+00> : vector<8x8xf32>
    %144 = tpu.matmul %142, %143, %cst_57 {dimension_numbers = #tpu.dot_dimension_numbers<[1], [0], [0], [1], [0, 0, 1, 1], [], []>} : vector<8x8xbf16>, vector<8x8xbf16>, vector<8x8xf32> -> vector<8x8xf32>
    %145 = arith.truncf %144 : vector<8x8xf32> to vector<8x8xbf16>
    %c16 = arith.constant 16 : index
    %c0_58 = arith.constant 0 : index
    %146 = vector.load %arg12[%c16, %c0_58] : memref<32x32xbf16, #tpu.memory_space<vmem>>, vector<8x32xbf16>
    %cst_59 = arith.constant dense<0.000000e+00> : vector<8x32xf32>
    %147 = tpu.matmul %145, %146, %cst_59 {dimension_numbers = #tpu.dot_dimension_numbers<[1], [0], [0], [1], [0, 0, 1, 1], [], []>} : vector<8x8xbf16>, vector<8x32xbf16>, vector<8x32xf32> -> vector<8x32xf32>
    %148 = arith.addf %125, %147 : vector<8x32xf32>
    %149 = vector.extract_strided_slice %57 {offsets = [0, 24], sizes = [8, 8], strides = [1, 1]} : vector<8x32xbf16> to vector<8x8xbf16>
    %150 = vector.extract_strided_slice %63 {offsets = [0, 24], sizes = [8, 8], strides = [1, 1]} : vector<8x32xbf16> to vector<8x8xbf16>
    %cst_60 = arith.constant dense<0.000000e+00> : vector<8x8xf32>
    %151 = tpu.matmul %149, %150, %cst_60 {dimension_numbers = #tpu.dot_dimension_numbers<[1], [1], [0], [0], [0, 0, 1, 0], [], []>} : vector<8x8xbf16>, vector<8x8xbf16>, vector<8x8xf32> -> vector<8x8xf32>
    %cst_61 = arith.constant 0.353553385 : f32
    %152 = vector.broadcast %cst_61 : f32 to vector<8x8xf32>
    %153 = arith.mulf %151, %152 : vector<8x8xf32>
    %154 = arith.addf %153, %78 : vector<8x8xf32>
    %cst_62 = arith.constant dense<0xFF800000> : vector<8xf32>
    %155 = vector.multi_reduction <maximumf>, %154, %cst_62 [1] : vector<8x8xf32> to vector<8xf32>
    %156 = vector.shape_cast %155 : vector<8xf32> to vector<8x1xf32>
    %157 = vector.broadcast %156 : vector<8x1xf32> to vector<8x8xf32>
    %158 = arith.subf %154, %157 : vector<8x8xf32>
    %159 = math.exp %158 : vector<8x8xf32>
    %cst_63 = arith.constant dense<0.000000e+00> : vector<8xf32>
    %160 = vector.multi_reduction <add>, %159, %cst_63 [1] : vector<8x8xf32> to vector<8xf32>
    %161 = vector.shape_cast %160 : vector<8xf32> to vector<8x1xf32>
    %162 = tpu.reciprocal %161 {approx = true} : vector<8x1xf32> -> vector<8x1xf32>
    %163 = vector.broadcast %162 : vector<8x1xf32> to vector<8x8xf32>
    %164 = arith.mulf %159, %163 : vector<8x8xf32>
    %165 = arith.truncf %164 : vector<8x8xf32> to vector<8x8xbf16>
    %166 = vector.extract_strided_slice %69 {offsets = [0, 24], sizes = [8, 8], strides = [1, 1]} : vector<8x32xbf16> to vector<8x8xbf16>
    %cst_64 = arith.constant dense<0.000000e+00> : vector<8x8xf32>
    %167 = tpu.matmul %165, %166, %cst_64 {dimension_numbers = #tpu.dot_dimension_numbers<[1], [0], [0], [1], [0, 0, 1, 1], [], []>} : vector<8x8xbf16>, vector<8x8xbf16>, vector<8x8xf32> -> vector<8x8xf32>
    %168 = arith.truncf %167 : vector<8x8xf32> to vector<8x8xbf16>
    %c24 = arith.constant 24 : index
    %c0_65 = arith.constant 0 : index
    %169 = vector.load %arg12[%c24, %c0_65] : memref<32x32xbf16, #tpu.memory_space<vmem>>, vector<8x32xbf16>
    %cst_66 = arith.constant dense<0.000000e+00> : vector<8x32xf32>
    %170 = tpu.matmul %168, %169, %cst_66 {dimension_numbers = #tpu.dot_dimension_numbers<[1], [0], [0], [1], [0, 0, 1, 1], [], []>} : vector<8x8xbf16>, vector<8x32xbf16>, vector<8x32xf32> -> vector<8x32xf32>
    %171 = arith.addf %148, %170 : vector<8x32xf32>
    %172 = arith.addf %1, %171 : vector<8x32xf32>
    %c0_67 = arith.constant 0 : index
    %c0_68 = arith.constant 0 : index
    %173 = vector.load %arg13[%c0_67, %c0_68] : memref<1x32xf32, #tpu.memory_space<vmem>>, vector<1x32xf32>
    %174 = vector.broadcast %173 : vector<1x32xf32> to vector<8x32xf32>
    %175 = arith.addf %172, %174 : vector<8x32xf32>
    %c0_69 = arith.constant 0 : index
    %c0_70 = arith.constant 0 : index
    %c0_71 = arith.constant 0 : index
    %176 = vector.load %arg14[%c0_69, %c0_70, %c0_71] : memref<1x8x32xf32, #tpu.memory_space<vmem>>, vector<1x8x32xf32>
    %177 = vector.shape_cast %176 : vector<1x8x32xf32> to vector<8x32xf32>
    %178 = vector.shape_cast %175 : vector<8x32xf32> to vector<1x8x32xf32>
    tpu.vector_store %arg14[%c0_69, %c0_70, %c0_71], %178 {strides = array<i32>} : memref<1x8x32xf32, #tpu.memory_space<vmem>>, vector<1x8x32xf32>,
    return
  }
  func.func @transform_0(%arg0: i32, %arg1: i32) -> (i32, i32, i32) {
    %c0_i32 = arith.constant 0 : i32
    %c0_i32_0 = arith.constant 0 : i32
    return %arg0, %arg1, %c0_i32 : i32, i32, i32
  }
  func.func @transform_1(%arg0: i32, %arg1: i32) -> (i32, i32, i32) {
    %c0_i32 = arith.constant 0 : i32
    %c0_i32_0 = arith.constant 0 : i32
    %c0_i32_1 = arith.constant 0 : i32
    return %arg0, %c0_i32, %c0_i32_0 : i32, i32, i32
  }
  func.func @transform_2(%arg0: i32, %arg1: i32) -> (i32, i32) {
    %c0_i32 = arith.constant 0 : i32
    %c0_i32_0 = arith.constant 0 : i32
    %c0_i32_1 = arith.constant 0 : i32
    return %c0_i32, %c0_i32_0 : i32, i32
  }
  func.func @transform_3(%arg0: i32, %arg1: i32) -> (i32, i32) {
    %c0_i32 = arith.constant 0 : i32
    %c0_i32_0 = arith.constant 0 : i32
    %c0_i32_1 = arith.constant 0 : i32
    return %c0_i32, %c0_i32_0 : i32, i32
  }
  func.func @transform_4(%arg0: i32, %arg1: i32) -> (i32, i32) {
    %c0_i32 = arith.constant 0 : i32
    %c0_i32_0 = arith.constant 0 : i32
    %c0_i32_1 = arith.constant 0 : i32
    return %c0_i32, %c0_i32_0 : i32, i32
  }
  func.func @transform_5(%arg0: i32, %arg1: i32) -> (i32, i32) {
    %c0_i32 = arith.constant 0 : i32
    %c0_i32_0 = arith.constant 0 : i32
    %c0_i32_1 = arith.constant 0 : i32
    return %c0_i32, %c0_i32_0 : i32, i32
  }
  func.func @transform_6(%arg0: i32, %arg1: i32) -> (i32, i32) {
    %c0_i32 = arith.constant 0 : i32
    %c0_i32_0 = arith.constant 0 : i32
    %c0_i32_1 = arith.constant 0 : i32
    return %c0_i32, %c0_i32_0 : i32, i32
  }
  func.func @transform_7(%arg0: i32, %arg1: i32) -> (i32, i32) {
    %c0_i32 = arith.constant 0 : i32
    %c0_i32_0 = arith.constant 0 : i32
    %c0_i32_1 = arith.constant 0 : i32
    return %c0_i32, %c0_i32_0 : i32, i32
  }
  func.func @transform_8(%arg0: i32, %arg1: i32) -> (i32, i32) {
    %c0_i32 = arith.constant 0 : i32
    %c0_i32_0 = arith.constant 0 : i32
    %c0_i32_1 = arith.constant 0 : i32
    return %c0_i32, %c0_i32_0 : i32, i32
  }
  func.func @transform_9(%arg0: i32, %arg1: i32) -> (i32, i32) {
    %c0_i32 = arith.constant 0 : i32
    %c0_i32_0 = arith.constant 0 : i32
    %c0_i32_1 = arith.constant 0 : i32
    return %c0_i32, %c0_i32_0 : i32, i32
  }
  func.func @transform_10(%arg0: i32, %arg1: i32) -> (i32, i32) {
    %c0_i32 = arith.constant 0 : i32
    %c0_i32_0 = arith.constant 0 : i32
    %c0_i32_1 = arith.constant 0 : i32
    return %c0_i32, %c0_i32_0 : i32, i32
  }
  func.func @transform_11(%arg0: i32, %arg1: i32) -> (i32, i32) {
    %c0_i32 = arith.constant 0 : i32
    %c0_i32_0 = arith.constant 0 : i32
    %c0_i32_1 = arith.constant 0 : i32
    return %c0_i32, %c0_i32_0 : i32, i32
  }
  func.func @transform_12(%arg0: i32, %arg1: i32) -> (i32, i32, i32) {
    %c0_i32 = arith.constant 0 : i32
    %c0_i32_0 = arith.constant 0 : i32
    return %arg0, %arg1, %c0_i32 : i32, i32, i32
  }
}

module attributes {stable_mosaic.version = 11 : i64} {
  func.func @_ln_kernel(%arg0: i32, %arg1: memref<16x32xf32, #tpu.memory_space<vmem>>, %arg2: memref<1x32xf32, #tpu.memory_space<vmem>>, %arg3: memref<1x32xf32, #tpu.memory_space<vmem>>, %arg4: memref<16x32xf32, #tpu.memory_space<vmem>>) attributes {dimension_semantics = [#tpu.dimension_semantics<parallel>], iteration_bounds = array<i64: 1>, scalar_prefetch = 0 : i64, scratch_operands = 0 : i64, tpu.core_type = #tpu.core_type<tc>, window_params = [{transform_indices = @transform_0, window_bounds = array<i64: 16, 32>}, {pipeline_mode = #tpu.pipeline_mode<synchronous>, transform_indices = @transform_1, window_bounds = array<i64: 1, 32>}, {pipeline_mode = #tpu.pipeline_mode<synchronous>, transform_indices = @transform_2, window_bounds = array<i64: 1, 32>}, {transform_indices = @transform_3, window_bounds = array<i64: 16, 32>}]} {
    %c0 = arith.constant 0 : index
    %c0_0 = arith.constant 0 : index
    %0 = vector.load %arg1[%c0, %c0_0] : memref<16x32xf32, #tpu.memory_space<vmem>>, vector<16x32xf32>
    %c0_1 = arith.constant 0 : index
    %c0_2 = arith.constant 0 : index
    %1 = vector.load %arg2[%c0_1, %c0_2] : memref<1x32xf32, #tpu.memory_space<vmem>>, vector<1x32xf32>
    %c0_3 = arith.constant 0 : index
    %c0_4 = arith.constant 0 : index
    %2 = vector.load %arg3[%c0_3, %c0_4] : memref<1x32xf32, #tpu.memory_space<vmem>>, vector<1x32xf32>
    %cst = arith.constant dense<0.000000e+00> : vector<16xf32>
    %3 = vector.multi_reduction <add>, %0, %cst [1] : vector<16x32xf32> to vector<16xf32>
    %4 = vector.shape_cast %3 : vector<16xf32> to vector<16x1xf32>
    %cst_5 = arith.constant 3.200000e+01 : f32
    %5 = vector.broadcast %cst_5 : f32 to vector<16x1xf32>
    %6 = arith.divf %4, %5 : vector<16x1xf32>
    %7 = vector.broadcast %6 : vector<16x1xf32> to vector<16x32xf32>
    %8 = arith.subf %0, %7 : vector<16x32xf32>
    %9 = arith.mulf %8, %8 : vector<16x32xf32>
    %cst_6 = arith.constant dense<0.000000e+00> : vector<16xf32>
    %10 = vector.multi_reduction <add>, %9, %cst_6 [1] : vector<16x32xf32> to vector<16xf32>
    %11 = vector.shape_cast %10 : vector<16xf32> to vector<16x1xf32>
    %cst_7 = arith.constant 0.0322580636 : f32
    %12 = vector.broadcast %cst_7 : f32 to vector<16x1xf32>
    %13 = arith.mulf %11, %12 : vector<16x1xf32>
    %14 = math.sqrt %13 : vector<16x1xf32>
    %15 = vector.broadcast %1 : vector<1x32xf32> to vector<16x32xf32>
    %16 = arith.mulf %15, %8 : vector<16x32xf32>
    %cst_8 = arith.constant 9.99999997E-7 : f32
    %17 = vector.broadcast %cst_8 : f32 to vector<16x1xf32>
    %18 = arith.addf %14, %17 : vector<16x1xf32>
    %cst_9 = arith.constant 1.000000e+00 : f32
    %19 = vector.broadcast %cst_9 : f32 to vector<16x1xf32>
    %20 = arith.divf %19, %18 : vector<16x1xf32>
    %21 = vector.broadcast %20 : vector<16x1xf32> to vector<16x32xf32>
    %22 = arith.mulf %16, %21 : vector<16x32xf32>
    %23 = vector.broadcast %2 : vector<1x32xf32> to vector<16x32xf32>
    %24 = arith.addf %22, %23 : vector<16x32xf32>
    %c0_10 = arith.constant 0 : index
    %c0_11 = arith.constant 0 : index
    %25 = vector.load %arg4[%c0_10, %c0_11] : memref<16x32xf32, #tpu.memory_space<vmem>>, vector<16x32xf32>
    tpu.vector_store %arg4[%c0_10, %c0_11], %24 {strides = array<i32>} : memref<16x32xf32, #tpu.memory_space<vmem>>, vector<16x32xf32>,
    return
  }
  func.func @transform_0(%arg0: i32) -> (i32, i32) {
    %c0_i32 = arith.constant 0 : i32
    %c0_i32_0 = arith.constant 0 : i32
    return %arg0, %c0_i32 : i32, i32
  }
  func.func @transform_1(%arg0: i32) -> (i32, i32) {
    %c0_i32 = arith.constant 0 : i32
    %c0_i32_0 = arith.constant 0 : i32
    %c0_i32_1 = arith.constant 0 : i32
    return %c0_i32, %c0_i32_0 : i32, i32
  }
  func.func @transform_2(%arg0: i32) -> (i32, i32) {
    %c0_i32 = arith.constant 0 : i32
    %c0_i32_0 = arith.constant 0 : i32
    %c0_i32_1 = arith.constant 0 : i32
    return %c0_i32, %c0_i32_0 : i32, i32
  }
  func.func @transform_3(%arg0: i32) -> (i32, i32) {
    %c0_i32 = arith.constant 0 : i32
    %c0_i32_0 = arith.constant 0 : i32
    return %arg0, %c0_i32 : i32, i32
  }
}

module attributes {stable_mosaic.version = 11 : i64} {
  func.func @_ffn_sublayer_kernel(%arg0: i32, %arg1: memref<16x32xf32, #tpu.memory_space<vmem>>, %arg2: memref<1x32xf32, #tpu.memory_space<vmem>>, %arg3: memref<1x32xf32, #tpu.memory_space<vmem>>, %arg4: memref<32x64xbf16, #tpu.memory_space<vmem>>, %arg5: memref<1x64xf32, #tpu.memory_space<vmem>>, %arg6: memref<64x32xbf16, #tpu.memory_space<vmem>>, %arg7: memref<1x32xf32, #tpu.memory_space<vmem>>, %arg8: memref<16x32xf32, #tpu.memory_space<vmem>>) attributes {dimension_semantics = [#tpu.dimension_semantics<parallel>], iteration_bounds = array<i64: 1>, scalar_prefetch = 0 : i64, scratch_operands = 0 : i64, tpu.core_type = #tpu.core_type<tc>, window_params = [{transform_indices = @transform_0, window_bounds = array<i64: 16, 32>}, {pipeline_mode = #tpu.pipeline_mode<synchronous>, transform_indices = @transform_1, window_bounds = array<i64: 1, 32>}, {pipeline_mode = #tpu.pipeline_mode<synchronous>, transform_indices = @transform_2, window_bounds = array<i64: 1, 32>}, {pipeline_mode = #tpu.pipeline_mode<synchronous>, transform_indices = @transform_3, window_bounds = array<i64: 32, 64>}, {pipeline_mode = #tpu.pipeline_mode<synchronous>, transform_indices = @transform_4, window_bounds = array<i64: 1, 64>}, {pipeline_mode = #tpu.pipeline_mode<synchronous>, transform_indices = @transform_5, window_bounds = array<i64: 64, 32>}, {pipeline_mode = #tpu.pipeline_mode<synchronous>, transform_indices = @transform_6, window_bounds = array<i64: 1, 32>}, {transform_indices = @transform_7, window_bounds = array<i64: 16, 32>}]} {
    %c0 = arith.constant 0 : index
    %c0_0 = arith.constant 0 : index
    %0 = vector.load %arg1[%c0, %c0_0] : memref<16x32xf32, #tpu.memory_space<vmem>>, vector<16x32xf32>
    %c0_1 = arith.constant 0 : index
    %c0_2 = arith.constant 0 : index
    %1 = vector.load %arg2[%c0_1, %c0_2] : memref<1x32xf32, #tpu.memory_space<vmem>>, vector<1x32xf32>
    %c0_3 = arith.constant 0 : index
    %c0_4 = arith.constant 0 : index
    %2 = vector.load %arg3[%c0_3, %c0_4] : memref<1x32xf32, #tpu.memory_space<vmem>>, vector<1x32xf32>
    %cst = arith.constant dense<0.000000e+00> : vector<16xf32>
    %3 = vector.multi_reduction <add>, %0, %cst [1] : vector<16x32xf32> to vector<16xf32>
    %4 = vector.shape_cast %3 : vector<16xf32> to vector<16x1xf32>
    %cst_5 = arith.constant 3.200000e+01 : f32
    %5 = vector.broadcast %cst_5 : f32 to vector<16x1xf32>
    %6 = arith.divf %4, %5 : vector<16x1xf32>
    %7 = vector.broadcast %6 : vector<16x1xf32> to vector<16x32xf32>
    %8 = arith.subf %0, %7 : vector<16x32xf32>
    %9 = arith.mulf %8, %8 : vector<16x32xf32>
    %cst_6 = arith.constant dense<0.000000e+00> : vector<16xf32>
    %10 = vector.multi_reduction <add>, %9, %cst_6 [1] : vector<16x32xf32> to vector<16xf32>
    %11 = vector.shape_cast %10 : vector<16xf32> to vector<16x1xf32>
    %cst_7 = arith.constant 0.0322580636 : f32
    %12 = vector.broadcast %cst_7 : f32 to vector<16x1xf32>
    %13 = arith.mulf %11, %12 : vector<16x1xf32>
    %14 = math.sqrt %13 : vector<16x1xf32>
    %15 = vector.broadcast %1 : vector<1x32xf32> to vector<16x32xf32>
    %16 = arith.mulf %15, %8 : vector<16x32xf32>
    %cst_8 = arith.constant 9.99999997E-7 : f32
    %17 = vector.broadcast %cst_8 : f32 to vector<16x1xf32>
    %18 = arith.addf %14, %17 : vector<16x1xf32>
    %cst_9 = arith.constant 1.000000e+00 : f32
    %19 = vector.broadcast %cst_9 : f32 to vector<16x1xf32>
    %20 = arith.divf %19, %18 : vector<16x1xf32>
    %21 = vector.broadcast %20 : vector<16x1xf32> to vector<16x32xf32>
    %22 = arith.mulf %16, %21 : vector<16x32xf32>
    %23 = vector.broadcast %2 : vector<1x32xf32> to vector<16x32xf32>
    %24 = arith.addf %22, %23 : vector<16x32xf32>
    %25 = arith.truncf %24 : vector<16x32xf32> to vector<16x32xbf16>
    %c0_10 = arith.constant 0 : index
    %c0_11 = arith.constant 0 : index
    %26 = vector.load %arg4[%c0_10, %c0_11] : memref<32x64xbf16, #tpu.memory_space<vmem>>, vector<32x64xbf16>
    %cst_12 = arith.constant dense<0.000000e+00> : vector<16x64xf32>
    %27 = tpu.matmul %25, %26, %cst_12 {dimension_numbers = #tpu.dot_dimension_numbers<[1], [0], [0], [1], [0, 0, 1, 1], [], []>} : vector<16x32xbf16>, vector<32x64xbf16>, vector<16x64xf32> -> vector<16x64xf32>
    %c0_13 = arith.constant 0 : index
    %c0_14 = arith.constant 0 : index
    %28 = vector.load %arg5[%c0_13, %c0_14] : memref<1x64xf32, #tpu.memory_space<vmem>>, vector<1x64xf32>
    %29 = vector.broadcast %28 : vector<1x64xf32> to vector<16x64xf32>
    %30 = arith.addf %27, %29 : vector<16x64xf32>
    %cst_15 = arith.constant 0.000000e+00 : f32
    %31 = vector.broadcast %cst_15 : f32 to vector<16x64xf32>
    %32 = arith.maximumf %30, %31 : vector<16x64xf32>
    %33 = arith.truncf %32 : vector<16x64xf32> to vector<16x64xbf16>
    %c0_16 = arith.constant 0 : index
    %c0_17 = arith.constant 0 : index
    %34 = vector.load %arg6[%c0_16, %c0_17] : memref<64x32xbf16, #tpu.memory_space<vmem>>, vector<64x32xbf16>
    %cst_18 = arith.constant dense<0.000000e+00> : vector<16x32xf32>
    %35 = tpu.matmul %33, %34, %cst_18 {dimension_numbers = #tpu.dot_dimension_numbers<[1], [0], [0], [1], [0, 0, 1, 1], [], []>} : vector<16x64xbf16>, vector<64x32xbf16>, vector<16x32xf32> -> vector<16x32xf32>
    %c0_19 = arith.constant 0 : index
    %c0_20 = arith.constant 0 : index
    %36 = vector.load %arg7[%c0_19, %c0_20] : memref<1x32xf32, #tpu.memory_space<vmem>>, vector<1x32xf32>
    %37 = vector.broadcast %36 : vector<1x32xf32> to vector<16x32xf32>
    %38 = arith.addf %35, %37 : vector<16x32xf32>
    %39 = arith.addf %0, %38 : vector<16x32xf32>
    %c0_21 = arith.constant 0 : index
    %c0_22 = arith.constant 0 : index
    %40 = vector.load %arg8[%c0_21, %c0_22] : memref<16x32xf32, #tpu.memory_space<vmem>>, vector<16x32xf32>
    tpu.vector_store %arg8[%c0_21, %c0_22], %39 {strides = array<i32>} : memref<16x32xf32, #tpu.memory_space<vmem>>, vector<16x32xf32>,
    return
  }
  func.func @transform_0(%arg0: i32) -> (i32, i32) {
    %c0_i32 = arith.constant 0 : i32
    %c0_i32_0 = arith.constant 0 : i32
    return %arg0, %c0_i32 : i32, i32
  }
  func.func @transform_1(%arg0: i32) -> (i32, i32) {
    %c0_i32 = arith.constant 0 : i32
    %c0_i32_0 = arith.constant 0 : i32
    %c0_i32_1 = arith.constant 0 : i32
    return %c0_i32, %c0_i32_0 : i32, i32
  }
  func.func @transform_2(%arg0: i32) -> (i32, i32) {
    %c0_i32 = arith.constant 0 : i32
    %c0_i32_0 = arith.constant 0 : i32
    %c0_i32_1 = arith.constant 0 : i32
    return %c0_i32, %c0_i32_0 : i32, i32
  }
  func.func @transform_3(%arg0: i32) -> (i32, i32) {
    %c0_i32 = arith.constant 0 : i32
    %c0_i32_0 = arith.constant 0 : i32
    %c0_i32_1 = arith.constant 0 : i32
    return %c0_i32, %c0_i32_0 : i32, i32
  }
  func.func @transform_4(%arg0: i32) -> (i32, i32) {
    %c0_i32 = arith.constant 0 : i32
    %c0_i32_0 = arith.constant 0 : i32
    %c0_i32_1 = arith.constant 0 : i32
    return %c0_i32, %c0_i32_0 : i32, i32
  }
  func.func @transform_5(%arg0: i32) -> (i32, i32) {
    %c0_i32 = arith.constant 0 : i32
    %c0_i32_0 = arith.constant 0 : i32
    %c0_i32_1 = arith.constant 0 : i32
    return %c0_i32, %c0_i32_0 : i32, i32
  }
  func.func @transform_6(%arg0: i32) -> (i32, i32) {
    %c0_i32 = arith.constant 0 : i32
    %c0_i32_0 = arith.constant 0 : i32
    %c0_i32_1 = arith.constant 0 : i32
    return %c0_i32, %c0_i32_0 : i32, i32
  }
  func.func @transform_7(%arg0: i32) -> (i32, i32) {
    %c0_i32 = arith.constant 0 : i32
    %c0_i32_0 = arith.constant 0 : i32
    return %arg0, %c0_i32 : i32, i32
  }
}

module attributes {stable_mosaic.version = 11 : i64} {
  func.func @_attn_sublayer_kernel(%arg0: i32, %arg1: i32, %arg2: memref<1x8x32xf32, #tpu.memory_space<vmem>>, %arg3: memref<1x8x32xf32, #tpu.memory_space<vmem>>, %arg4: memref<1x1x8xf32, #tpu.memory_space<vmem>>, %arg5: memref<1x32xf32, #tpu.memory_space<vmem>>, %arg6: memref<1x32xf32, #tpu.memory_space<vmem>>, %arg7: memref<32x32xbf16, #tpu.memory_space<vmem>>, %arg8: memref<1x32xf32, #tpu.memory_space<vmem>>, %arg9: memref<32x32xbf16, #tpu.memory_space<vmem>>, %arg10: memref<1x32xf32, #tpu.memory_space<vmem>>, %arg11: memref<32x32xbf16, #tpu.memory_space<vmem>>, %arg12: memref<1x32xf32, #tpu.memory_space<vmem>>, %arg13: memref<32x32xbf16, #tpu.memory_space<vmem>>, %arg14: memref<1x32xf32, #tpu.memory_space<vmem>>, %arg15: memref<1x8x32xf32, #tpu.memory_space<vmem>>) attributes {dimension_semantics = [#tpu.dimension_semantics<parallel>, #tpu.dimension_semantics<parallel>], iteration_bounds = array<i64: 2, 1>, scalar_prefetch = 0 : i64, scratch_operands = 0 : i64, tpu.core_type = #tpu.core_type<tc>, window_params = [{transform_indices = @transform_0, window_bounds = array<i64: 1, 8, 32>}, {transform_indices = @transform_1, window_bounds = array<i64: 1, 8, 32>}, {transform_indices = @transform_2, window_bounds = array<i64: 1, 1, 8>}, {pipeline_mode = #tpu.pipeline_mode<synchronous>, transform_indices = @transform_3, window_bounds = array<i64: 1, 32>}, {pipeline_mode = #tpu.pipeline_mode<synchronous>, transform_indices = @transform_4, window_bounds = array<i64: 1, 32>}, {pipeline_mode = #tpu.pipeline_mode<synchronous>, transform_indices = @transform_5, window_bounds = array<i64: 32, 32>}, {pipeline_mode = #tpu.pipeline_mode<synchronous>, transform_indices = @transform_6, window_bounds = array<i64: 1, 32>}, {pipeline_mode = #tpu.pipeline_mode<synchronous>, transform_indices = @transform_7, window_bounds = array<i64: 32, 32>}, {pipeline_mode = #tpu.pipeline_mode<synchronous>, transform_indices = @transform_8, window_bounds = array<i64: 1, 32>}, {pipeline_mode = #tpu.pipeline_mode<synchronous>, transform_indices = @transform_9, window_bounds = array<i64: 32, 32>}, {pipeline_mode = #tpu.pipeline_mode<synchronous>, transform_indices = @transform_10, window_bounds = array<i64: 1, 32>}, {pipeline_mode = #tpu.pipeline_mode<synchronous>, transform_indices = @transform_11, window_bounds = array<i64: 32, 32>}, {pipeline_mode = #tpu.pipeline_mode<synchronous>, transform_indices = @transform_12, window_bounds = array<i64: 1, 32>}, {transform_indices = @transform_13, window_bounds = array<i64: 1, 8, 32>}]} {
    %c0 = arith.constant 0 : index
    %c0_0 = arith.constant 0 : index
    %c0_1 = arith.constant 0 : index
    %0 = vector.load %arg2[%c0, %c0_0, %c0_1] : memref<1x8x32xf32, #tpu.memory_space<vmem>>, vector<1x8x32xf32>
    %1 = vector.shape_cast %0 : vector<1x8x32xf32> to vector<8x32xf32>
    %c0_2 = arith.constant 0 : index
    %c0_3 = arith.constant 0 : index
    %2 = vector.load %arg5[%c0_2, %c0_3] : memref<1x32xf32, #tpu.memory_space<vmem>>, vector<1x32xf32>
    %c0_4 = arith.constant 0 : index
    %c0_5 = arith.constant 0 : index
    %3 = vector.load %arg6[%c0_4, %c0_5] : memref<1x32xf32, #tpu.memory_space<vmem>>, vector<1x32xf32>
    %cst = arith.constant dense<0.000000e+00> : vector<8xf32>
    %4 = vector.multi_reduction <add>, %1, %cst [1] : vector<8x32xf32> to vector<8xf32>
    %5 = vector.shape_cast %4 : vector<8xf32> to vector<8x1xf32>
    %cst_6 = arith.constant 3.200000e+01 : f32
    %6 = vector.broadcast %cst_6 : f32 to vector<8x1xf32>
    %7 = arith.divf %5, %6 : vector<8x1xf32>
    %8 = vector.broadcast %7 : vector<8x1xf32> to vector<8x32xf32>
    %9 = arith.subf %1, %8 : vector<8x32xf32>
    %10 = arith.mulf %9, %9 : vector<8x32xf32>
    %cst_7 = arith.constant dense<0.000000e+00> : vector<8xf32>
    %11 = vector.multi_reduction <add>, %10, %cst_7 [1] : vector<8x32xf32> to vector<8xf32>
    %12 = vector.shape_cast %11 : vector<8xf32> to vector<8x1xf32>
    %cst_8 = arith.constant 0.0322580636 : f32
    %13 = vector.broadcast %cst_8 : f32 to vector<8x1xf32>
    %14 = arith.mulf %12, %13 : vector<8x1xf32>
    %15 = math.sqrt %14 : vector<8x1xf32>
    %16 = vector.broadcast %2 : vector<1x32xf32> to vector<8x32xf32>
    %17 = arith.mulf %16, %9 : vector<8x32xf32>
    %cst_9 = arith.constant 9.99999997E-7 : f32
    %18 = vector.broadcast %cst_9 : f32 to vector<8x1xf32>
    %19 = arith.addf %15, %18 : vector<8x1xf32>
    %cst_10 = arith.constant 1.000000e+00 : f32
    %20 = vector.broadcast %cst_10 : f32 to vector<8x1xf32>
    %21 = arith.divf %20, %19 : vector<8x1xf32>
    %22 = vector.broadcast %21 : vector<8x1xf32> to vector<8x32xf32>
    %23 = arith.mulf %17, %22 : vector<8x32xf32>
    %24 = vector.broadcast %3 : vector<1x32xf32> to vector<8x32xf32>
    %25 = arith.addf %23, %24 : vector<8x32xf32>
    %c0_11 = arith.constant 0 : index
    %c0_12 = arith.constant 0 : index
    %c0_13 = arith.constant 0 : index
    %26 = vector.load %arg3[%c0_11, %c0_12, %c0_13] : memref<1x8x32xf32, #tpu.memory_space<vmem>>, vector<1x8x32xf32>
    %27 = vector.shape_cast %26 : vector<1x8x32xf32> to vector<8x32xf32>
    %28 = arith.truncf %27 : vector<8x32xf32> to vector<8x32xbf16>
    %29 = arith.truncf %25 : vector<8x32xf32> to vector<8x32xbf16>
    %c0_14 = arith.constant 0 : index
    %c0_15 = arith.constant 0 : index
    %30 = vector.load %arg7[%c0_14, %c0_15] : memref<32x32xbf16, #tpu.memory_space<vmem>>, vector<32x32xbf16>
    %cst_16 = arith.constant dense<0.000000e+00> : vector<8x32xf32>
    %31 = tpu.matmul %29, %30, %cst_16 {dimension_numbers = #tpu.dot_dimension_numbers<[1], [0], [0], [1], [0, 0, 1, 1], [], []>} : vector<8x32xbf16>, vector<32x32xbf16>, vector<8x32xf32> -> vector<8x32xf32>
    %c0_17 = arith.constant 0 : index
    %c0_18 = arith.constant 0 : index
    %32 = vector.load %arg8[%c0_17, %c0_18] : memref<1x32xf32, #tpu.memory_space<vmem>>, vector<1x32xf32>
    %33 = vector.broadcast %32 : vector<1x32xf32> to vector<8x32xf32>
    %34 = arith.addf %31, %33 : vector<8x32xf32>
    %35 = arith.truncf %34 : vector<8x32xf32> to vector<8x32xbf16>
    %c0_19 = arith.constant 0 : index
    %c0_20 = arith.constant 0 : index
    %36 = vector.load %arg9[%c0_19, %c0_20] : memref<32x32xbf16, #tpu.memory_space<vmem>>, vector<32x32xbf16>
    %cst_21 = arith.constant dense<0.000000e+00> : vector<8x32xf32>
    %37 = tpu.matmul %28, %36, %cst_21 {dimension_numbers = #tpu.dot_dimension_numbers<[1], [0], [0], [1], [0, 0, 1, 1], [], []>} : vector<8x32xbf16>, vector<32x32xbf16>, vector<8x32xf32> -> vector<8x32xf32>
    %c0_22 = arith.constant 0 : index
    %c0_23 = arith.constant 0 : index
    %38 = vector.load %arg10[%c0_22, %c0_23] : memref<1x32xf32, #tpu.memory_space<vmem>>, vector<1x32xf32>
    %39 = vector.broadcast %38 : vector<1x32xf32> to vector<8x32xf32>
    %40 = arith.addf %37, %39 : vector<8x32xf32>
    %41 = arith.truncf %40 : vector<8x32xf32> to vector<8x32xbf16>
    %c0_24 = arith.constant 0 : index
    %c0_25 = arith.constant 0 : index
    %42 = vector.load %arg11[%c0_24, %c0_25] : memref<32x32xbf16, #tpu.memory_space<vmem>>, vector<32x32xbf16>
    %cst_26 = arith.constant dense<0.000000e+00> : vector<8x32xf32>
    %43 = tpu.matmul %28, %42, %cst_26 {dimension_numbers = #tpu.dot_dimension_numbers<[1], [0], [0], [1], [0, 0, 1, 1], [], []>} : vector<8x32xbf16>, vector<32x32xbf16>, vector<8x32xf32> -> vector<8x32xf32>
    %c0_27 = arith.constant 0 : index
    %c0_28 = arith.constant 0 : index
    %44 = vector.load %arg12[%c0_27, %c0_28] : memref<1x32xf32, #tpu.memory_space<vmem>>, vector<1x32xf32>
    %45 = vector.broadcast %44 : vector<1x32xf32> to vector<8x32xf32>
    %46 = arith.addf %43, %45 : vector<8x32xf32>
    %47 = arith.truncf %46 : vector<8x32xf32> to vector<8x32xbf16>
    %c0_29 = arith.constant 0 : index
    %c0_30 = arith.constant 0 : index
    %c0_31 = arith.constant 0 : index
    %48 = vector.load %arg4[%c0_29, %c0_30, %c0_31] : memref<1x1x8xf32, #tpu.memory_space<vmem>>, vector<1x1x8xf32>
    %49 = vector.shape_cast %48 : vector<1x1x8xf32> to vector<1x8xf32>
    %cst_32 = arith.constant 1.000000e+00 : f32
    %50 = vector.broadcast %cst_32 : f32 to vector<1x8xf32>
    %51 = arith.subf %49, %50 : vector<1x8xf32>
    %cst_33 = arith.constant 1.000000e+09 : f32
    %52 = vector.broadcast %cst_33 : f32 to vector<1x8xf32>
    %53 = arith.mulf %51, %52 : vector<1x8xf32>
    %cst_34 = arith.constant 0.000000e+00 : f32
    %54 = vector.broadcast %cst_34 : f32 to vector<8x32xf32>
    %55 = vector.extract_strided_slice %35 {offsets = [0, 0], sizes = [8, 8], strides = [1, 1]} : vector<8x32xbf16> to vector<8x8xbf16>
    %56 = vector.extract_strided_slice %41 {offsets = [0, 0], sizes = [8, 8], strides = [1, 1]} : vector<8x32xbf16> to vector<8x8xbf16>
    %cst_35 = arith.constant dense<0.000000e+00> : vector<8x8xf32>
    %57 = tpu.matmul %55, %56, %cst_35 {dimension_numbers = #tpu.dot_dimension_numbers<[1], [1], [0], [0], [0, 0, 1, 0], [], []>} : vector<8x8xbf16>, vector<8x8xbf16>, vector<8x8xf32> -> vector<8x8xf32>
    %cst_36 = arith.constant 0.353553385 : f32
    %58 = vector.broadcast %cst_36 : f32 to vector<8x8xf32>
    %59 = arith.mulf %57, %58 : vector<8x8xf32>
    %60 = vector.broadcast %53 : vector<1x8xf32> to vector<8x8xf32>
    %61 = arith.addf %59, %60 : vector<8x8xf32>
    %cst_37 = arith.constant dense<0xFF800000> : vector<8xf32>
    %62 = vector.multi_reduction <maximumf>, %61, %cst_37 [1] : vector<8x8xf32> to vector<8xf32>
    %63 = vector.shape_cast %62 : vector<8xf32> to vector<8x1xf32>
    %64 = vector.broadcast %63 : vector<8x1xf32> to vector<8x8xf32>
    %65 = arith.subf %61, %64 : vector<8x8xf32>
    %66 = math.exp %65 : vector<8x8xf32>
    %cst_38 = arith.constant dense<0.000000e+00> : vector<8xf32>
    %67 = vector.multi_reduction <add>, %66, %cst_38 [1] : vector<8x8xf32> to vector<8xf32>
    %68 = vector.shape_cast %67 : vector<8xf32> to vector<8x1xf32>
    %69 = tpu.reciprocal %68 {approx = true} : vector<8x1xf32> -> vector<8x1xf32>
    %70 = vector.broadcast %69 : vector<8x1xf32> to vector<8x8xf32>
    %71 = arith.mulf %66, %70 : vector<8x8xf32>
    %72 = arith.truncf %71 : vector<8x8xf32> to vector<8x8xbf16>
    %73 = vector.extract_strided_slice %47 {offsets = [0, 0], sizes = [8, 8], strides = [1, 1]} : vector<8x32xbf16> to vector<8x8xbf16>
    %cst_39 = arith.constant dense<0.000000e+00> : vector<8x8xf32>
    %74 = tpu.matmul %72, %73, %cst_39 {dimension_numbers = #tpu.dot_dimension_numbers<[1], [0], [0], [1], [0, 0, 1, 1], [], []>} : vector<8x8xbf16>, vector<8x8xbf16>, vector<8x8xf32> -> vector<8x8xf32>
    %75 = arith.truncf %74 : vector<8x8xf32> to vector<8x8xbf16>
    %c0_40 = arith.constant 0 : index
    %c0_41 = arith.constant 0 : index
    %76 = vector.load %arg13[%c0_40, %c0_41] : memref<32x32xbf16, #tpu.memory_space<vmem>>, vector<8x32xbf16>
    %cst_42 = arith.constant dense<0.000000e+00> : vector<8x32xf32>
    %77 = tpu.matmul %75, %76, %cst_42 {dimension_numbers = #tpu.dot_dimension_numbers<[1], [0], [0], [1], [0, 0, 1, 1], [], []>} : vector<8x8xbf16>, vector<8x32xbf16>, vector<8x32xf32> -> vector<8x32xf32>
    %78 = arith.addf %54, %77 : vector<8x32xf32>
    %79 = vector.extract_strided_slice %35 {offsets = [0, 8], sizes = [8, 8], strides = [1, 1]} : vector<8x32xbf16> to vector<8x8xbf16>
    %80 = vector.extract_strided_slice %41 {offsets = [0, 8], sizes = [8, 8], strides = [1, 1]} : vector<8x32xbf16> to vector<8x8xbf16>
    %cst_43 = arith.constant dense<0.000000e+00> : vector<8x8xf32>
    %81 = tpu.matmul %79, %80, %cst_43 {dimension_numbers = #tpu.dot_dimension_numbers<[1], [1], [0], [0], [0, 0, 1, 0], [], []>} : vector<8x8xbf16>, vector<8x8xbf16>, vector<8x8xf32> -> vector<8x8xf32>
    %cst_44 = arith.constant 0.353553385 : f32
    %82 = vector.broadcast %cst_44 : f32 to vector<8x8xf32>
    %83 = arith.mulf %81, %82 : vector<8x8xf32>
    %84 = vector.broadcast %53 : vector<1x8xf32> to vector<8x8xf32>
    %85 = arith.addf %83, %84 : vector<8x8xf32>
    %cst_45 = arith.constant dense<0xFF800000> : vector<8xf32>
    %86 = vector.multi_reduction <maximumf>, %85, %cst_45 [1] : vector<8x8xf32> to vector<8xf32>
    %87 = vector.shape_cast %86 : vector<8xf32> to vector<8x1xf32>
    %88 = vector.broadcast %87 : vector<8x1xf32> to vector<8x8xf32>
    %89 = arith.subf %85, %88 : vector<8x8xf32>
    %90 = math.exp %89 : vector<8x8xf32>
    %cst_46 = arith.constant dense<0.000000e+00> : vector<8xf32>
    %91 = vector.multi_reduction <add>, %90, %cst_46 [1] : vector<8x8xf32> to vector<8xf32>
    %92 = vector.shape_cast %91 : vector<8xf32> to vector<8x1xf32>
    %93 = tpu.reciprocal %92 {approx = true} : vector<8x1xf32> -> vector<8x1xf32>
    %94 = vector.broadcast %93 : vector<8x1xf32> to vector<8x8xf32>
    %95 = arith.mulf %90, %94 : vector<8x8xf32>
    %96 = arith.truncf %95 : vector<8x8xf32> to vector<8x8xbf16>
    %97 = vector.extract_strided_slice %47 {offsets = [0, 8], sizes = [8, 8], strides = [1, 1]} : vector<8x32xbf16> to vector<8x8xbf16>
    %cst_47 = arith.constant dense<0.000000e+00> : vector<8x8xf32>
    %98 = tpu.matmul %96, %97, %cst_47 {dimension_numbers = #tpu.dot_dimension_numbers<[1], [0], [0], [1], [0, 0, 1, 1], [], []>} : vector<8x8xbf16>, vector<8x8xbf16>, vector<8x8xf32> -> vector<8x8xf32>
    %99 = arith.truncf %98 : vector<8x8xf32> to vector<8x8xbf16>
    %c8 = arith.constant 8 : index
    %c0_48 = arith.constant 0 : index
    %100 = vector.load %arg13[%c8, %c0_48] : memref<32x32xbf16, #tpu.memory_space<vmem>>, vector<8x32xbf16>
    %cst_49 = arith.constant dense<0.000000e+00> : vector<8x32xf32>
    %101 = tpu.matmul %99, %100, %cst_49 {dimension_numbers = #tpu.dot_dimension_numbers<[1], [0], [0], [1], [0, 0, 1, 1], [], []>} : vector<8x8xbf16>, vector<8x32xbf16>, vector<8x32xf32> -> vector<8x32xf32>
    %102 = arith.addf %78, %101 : vector<8x32xf32>
    %103 = vector.extract_strided_slice %35 {offsets = [0, 16], sizes = [8, 8], strides = [1, 1]} : vector<8x32xbf16> to vector<8x8xbf16>
    %104 = vector.extract_strided_slice %41 {offsets = [0, 16], sizes = [8, 8], strides = [1, 1]} : vector<8x32xbf16> to vector<8x8xbf16>
    %cst_50 = arith.constant dense<0.000000e+00> : vector<8x8xf32>
    %105 = tpu.matmul %103, %104, %cst_50 {dimension_numbers = #tpu.dot_dimension_numbers<[1], [1], [0], [0], [0, 0, 1, 0], [], []>} : vector<8x8xbf16>, vector<8x8xbf16>, vector<8x8xf32> -> vector<8x8xf32>
    %cst_51 = arith.constant 0.353553385 : f32
    %106 = vector.broadcast %cst_51 : f32 to vector<8x8xf32>
    %107 = arith.mulf %105, %106 : vector<8x8xf32>
    %108 = vector.broadcast %53 : vector<1x8xf32> to vector<8x8xf32>
    %109 = arith.addf %107, %108 : vector<8x8xf32>
    %cst_52 = arith.constant dense<0xFF800000> : vector<8xf32>
    %110 = vector.multi_reduction <maximumf>, %109, %cst_52 [1] : vector<8x8xf32> to vector<8xf32>
    %111 = vector.shape_cast %110 : vector<8xf32> to vector<8x1xf32>
    %112 = vector.broadcast %111 : vector<8x1xf32> to vector<8x8xf32>
    %113 = arith.subf %109, %112 : vector<8x8xf32>
    %114 = math.exp %113 : vector<8x8xf32>
    %cst_53 = arith.constant dense<0.000000e+00> : vector<8xf32>
    %115 = vector.multi_reduction <add>, %114, %cst_53 [1] : vector<8x8xf32> to vector<8xf32>
    %116 = vector.shape_cast %115 : vector<8xf32> to vector<8x1xf32>
    %117 = tpu.reciprocal %116 {approx = true} : vector<8x1xf32> -> vector<8x1xf32>
    %118 = vector.broadcast %117 : vector<8x1xf32> to vector<8x8xf32>
    %119 = arith.mulf %114, %118 : vector<8x8xf32>
    %120 = arith.truncf %119 : vector<8x8xf32> to vector<8x8xbf16>
    %121 = vector.extract_strided_slice %47 {offsets = [0, 16], sizes = [8, 8], strides = [1, 1]} : vector<8x32xbf16> to vector<8x8xbf16>
    %cst_54 = arith.constant dense<0.000000e+00> : vector<8x8xf32>
    %122 = tpu.matmul %120, %121, %cst_54 {dimension_numbers = #tpu.dot_dimension_numbers<[1], [0], [0], [1], [0, 0, 1, 1], [], []>} : vector<8x8xbf16>, vector<8x8xbf16>, vector<8x8xf32> -> vector<8x8xf32>
    %123 = arith.truncf %122 : vector<8x8xf32> to vector<8x8xbf16>
    %c16 = arith.constant 16 : index
    %c0_55 = arith.constant 0 : index
    %124 = vector.load %arg13[%c16, %c0_55] : memref<32x32xbf16, #tpu.memory_space<vmem>>, vector<8x32xbf16>
    %cst_56 = arith.constant dense<0.000000e+00> : vector<8x32xf32>
    %125 = tpu.matmul %123, %124, %cst_56 {dimension_numbers = #tpu.dot_dimension_numbers<[1], [0], [0], [1], [0, 0, 1, 1], [], []>} : vector<8x8xbf16>, vector<8x32xbf16>, vector<8x32xf32> -> vector<8x32xf32>
    %126 = arith.addf %102, %125 : vector<8x32xf32>
    %127 = vector.extract_strided_slice %35 {offsets = [0, 24], sizes = [8, 8], strides = [1, 1]} : vector<8x32xbf16> to vector<8x8xbf16>
    %128 = vector.extract_strided_slice %41 {offsets = [0, 24], sizes = [8, 8], strides = [1, 1]} : vector<8x32xbf16> to vector<8x8xbf16>
    %cst_57 = arith.constant dense<0.000000e+00> : vector<8x8xf32>
    %129 = tpu.matmul %127, %128, %cst_57 {dimension_numbers = #tpu.dot_dimension_numbers<[1], [1], [0], [0], [0, 0, 1, 0], [], []>} : vector<8x8xbf16>, vector<8x8xbf16>, vector<8x8xf32> -> vector<8x8xf32>
    %cst_58 = arith.constant 0.353553385 : f32
    %130 = vector.broadcast %cst_58 : f32 to vector<8x8xf32>
    %131 = arith.mulf %129, %130 : vector<8x8xf32>
    %132 = vector.broadcast %53 : vector<1x8xf32> to vector<8x8xf32>
    %133 = arith.addf %131, %132 : vector<8x8xf32>
    %cst_59 = arith.constant dense<0xFF800000> : vector<8xf32>
    %134 = vector.multi_reduction <maximumf>, %133, %cst_59 [1] : vector<8x8xf32> to vector<8xf32>
    %135 = vector.shape_cast %134 : vector<8xf32> to vector<8x1xf32>
    %136 = vector.broadcast %135 : vector<8x1xf32> to vector<8x8xf32>
    %137 = arith.subf %133, %136 : vector<8x8xf32>
    %138 = math.exp %137 : vector<8x8xf32>
    %cst_60 = arith.constant dense<0.000000e+00> : vector<8xf32>
    %139 = vector.multi_reduction <add>, %138, %cst_60 [1] : vector<8x8xf32> to vector<8xf32>
    %140 = vector.shape_cast %139 : vector<8xf32> to vector<8x1xf32>
    %141 = tpu.reciprocal %140 {approx = true} : vector<8x1xf32> -> vector<8x1xf32>
    %142 = vector.broadcast %141 : vector<8x1xf32> to vector<8x8xf32>
    %143 = arith.mulf %138, %142 : vector<8x8xf32>
    %144 = arith.truncf %143 : vector<8x8xf32> to vector<8x8xbf16>
    %145 = vector.extract_strided_slice %47 {offsets = [0, 24], sizes = [8, 8], strides = [1, 1]} : vector<8x32xbf16> to vector<8x8xbf16>
    %cst_61 = arith.constant dense<0.000000e+00> : vector<8x8xf32>
    %146 = tpu.matmul %144, %145, %cst_61 {dimension_numbers = #tpu.dot_dimension_numbers<[1], [0], [0], [1], [0, 0, 1, 1], [], []>} : vector<8x8xbf16>, vector<8x8xbf16>, vector<8x8xf32> -> vector<8x8xf32>
    %147 = arith.truncf %146 : vector<8x8xf32> to vector<8x8xbf16>
    %c24 = arith.constant 24 : index
    %c0_62 = arith.constant 0 : index
    %148 = vector.load %arg13[%c24, %c0_62] : memref<32x32xbf16, #tpu.memory_space<vmem>>, vector<8x32xbf16>
    %cst_63 = arith.constant dense<0.000000e+00> : vector<8x32xf32>
    %149 = tpu.matmul %147, %148, %cst_63 {dimension_numbers = #tpu.dot_dimension_numbers<[1], [0], [0], [1], [0, 0, 1, 1], [], []>} : vector<8x8xbf16>, vector<8x32xbf16>, vector<8x32xf32> -> vector<8x32xf32>
    %150 = arith.addf %126, %149 : vector<8x32xf32>
    %151 = arith.addf %1, %150 : vector<8x32xf32>
    %c0_64 = arith.constant 0 : index
    %c0_65 = arith.constant 0 : index
    %152 = vector.load %arg14[%c0_64, %c0_65] : memref<1x32xf32, #tpu.memory_space<vmem>>, vector<1x32xf32>
    %153 = vector.broadcast %152 : vector<1x32xf32> to vector<8x32xf32>
    %154 = arith.addf %151, %153 : vector<8x32xf32>
    %c0_66 = arith.constant 0 : index
    %c0_67 = arith.constant 0 : index
    %c0_68 = arith.constant 0 : index
    %155 = vector.load %arg15[%c0_66, %c0_67, %c0_68] : memref<1x8x32xf32, #tpu.memory_space<vmem>>, vector<1x8x32xf32>
    %156 = vector.shape_cast %155 : vector<1x8x32xf32> to vector<8x32xf32>
    %157 = vector.shape_cast %154 : vector<8x32xf32> to vector<1x8x32xf32>
    tpu.vector_store %arg15[%c0_66, %c0_67, %c0_68], %157 {strides = array<i32>} : memref<1x8x32xf32, #tpu.memory_space<vmem>>, vector<1x8x32xf32>,
    return
  }
  func.func @transform_0(%arg0: i32, %arg1: i32) -> (i32, i32, i32) {
    %c0_i32 = arith.constant 0 : i32
    %c0_i32_0 = arith.constant 0 : i32
    return %arg0, %arg1, %c0_i32 : i32, i32, i32
  }
  func.func @transform_1(%arg0: i32, %arg1: i32) -> (i32, i32, i32) {
    %c0_i32 = arith.constant 0 : i32
    %c0_i32_0 = arith.constant 0 : i32
    %c0_i32_1 = arith.constant 0 : i32
    return %arg0, %c0_i32, %c0_i32_0 : i32, i32, i32
  }
  func.func @transform_2(%arg0: i32, %arg1: i32) -> (i32, i32, i32) {
    %c0_i32 = arith.constant 0 : i32
    %c0_i32_0 = arith.constant 0 : i32
    %c0_i32_1 = arith.constant 0 : i32
    return %arg0, %c0_i32, %c0_i32_0 : i32, i32, i32
  }
  func.func @transform_3(%arg0: i32, %arg1: i32) -> (i32, i32) {
    %c0_i32 = arith.constant 0 : i32
    %c0_i32_0 = arith.constant 0 : i32
    %c0_i32_1 = arith.constant 0 : i32
    return %c0_i32, %c0_i32_0 : i32, i32
  }
  func.func @transform_4(%arg0: i32, %arg1: i32) -> (i32, i32) {
    %c0_i32 = arith.constant 0 : i32
    %c0_i32_0 = arith.constant 0 : i32
    %c0_i32_1 = arith.constant 0 : i32
    return %c0_i32, %c0_i32_0 : i32, i32
  }
  func.func @transform_5(%arg0: i32, %arg1: i32) -> (i32, i32) {
    %c0_i32 = arith.constant 0 : i32
    %c0_i32_0 = arith.constant 0 : i32
    %c0_i32_1 = arith.constant 0 : i32
    return %c0_i32, %c0_i32_0 : i32, i32
  }
  func.func @transform_6(%arg0: i32, %arg1: i32) -> (i32, i32) {
    %c0_i32 = arith.constant 0 : i32
    %c0_i32_0 = arith.constant 0 : i32
    %c0_i32_1 = arith.constant 0 : i32
    return %c0_i32, %c0_i32_0 : i32, i32
  }
  func.func @transform_7(%arg0: i32, %arg1: i32) -> (i32, i32) {
    %c0_i32 = arith.constant 0 : i32
    %c0_i32_0 = arith.constant 0 : i32
    %c0_i32_1 = arith.constant 0 : i32
    return %c0_i32, %c0_i32_0 : i32, i32
  }
  func.func @transform_8(%arg0: i32, %arg1: i32) -> (i32, i32) {
    %c0_i32 = arith.constant 0 : i32
    %c0_i32_0 = arith.constant 0 : i32
    %c0_i32_1 = arith.constant 0 : i32
    return %c0_i32, %c0_i32_0 : i32, i32
  }
  func.func @transform_9(%arg0: i32, %arg1: i32) -> (i32, i32) {
    %c0_i32 = arith.constant 0 : i32
    %c0_i32_0 = arith.constant 0 : i32
    %c0_i32_1 = arith.constant 0 : i32
    return %c0_i32, %c0_i32_0 : i32, i32
  }
  func.func @transform_10(%arg0: i32, %arg1: i32) -> (i32, i32) {
    %c0_i32 = arith.constant 0 : i32
    %c0_i32_0 = arith.constant 0 : i32
    %c0_i32_1 = arith.constant 0 : i32
    return %c0_i32, %c0_i32_0 : i32, i32
  }
  func.func @transform_11(%arg0: i32, %arg1: i32) -> (i32, i32) {
    %c0_i32 = arith.constant 0 : i32
    %c0_i32_0 = arith.constant 0 : i32
    %c0_i32_1 = arith.constant 0 : i32
    return %c0_i32, %c0_i32_0 : i32, i32
  }
  func.func @transform_12(%arg0: i32, %arg1: i32) -> (i32, i32) {
    %c0_i32 = arith.constant 0 : i32
    %c0_i32_0 = arith.constant 0 : i32
    %c0_i32_1 = arith.constant 0 : i32
    return %c0_i32, %c0_i32_0 : i32, i32
  }
  func.func @transform_13(%arg0: i32, %arg1: i32) -> (i32, i32, i32) {
    %c0_i32 = arith.constant 0 : i32
    %c0_i32_0 = arith.constant 0 : i32
    return %arg0, %arg1, %c0_i32 : i32, i32, i32
  }
}

</mosaic_0001>

<llo_original>
// kernel: decoder_forward.7
$region0: #{decoder_forward.7}
  #allocation0 [shape = 'u32[]', space=smem, size = 0x4, offset = 0x4, fixed_abs, tag = 'smem constant byte address 0x4 - core index']
  #allocation1 [shape = 'u32[72,128]{1,0:T(1,128)}', space=vmem, size = 0x9000, scoped, tag = 'internal scratch']
  %s0 = inlined_call_operand.vmem [shape: f32[2,8,32], index: 0, kind: input, shape index: {}, may-alias: {0,1}]
  %s1 = inlined_call_operand.vmem [shape: f32[2,8,32], index: 1, kind: input, shape index: {}, may-alias: {0,1}]
  %s2 = inlined_call_operand.hbm [shape: f32[1,32], index: 2, kind: input, shape index: {}]
  %s3 = inlined_call_operand.hbm [shape: f32[1,32], index: 3, kind: input, shape index: {}]
  %s4 = inlined_call_operand.vmem [shape: bf16[32,32], index: 4, kind: input, shape index: {}]
  %s5 = inlined_call_operand.hbm [shape: f32[1,32], index: 5, kind: input, shape index: {}]
  %s6 = inlined_call_operand.hbm [shape: bf16[32,32], index: 6, kind: input, shape index: {}]
  %s7 = inlined_call_operand.hbm [shape: f32[1,32], index: 7, kind: input, shape index: {}]
  %s8 = inlined_call_operand.hbm [shape: bf16[32,32], index: 8, kind: input, shape index: {}]
  %s9 = inlined_call_operand.hbm [shape: f32[1,32], index: 9, kind: input, shape index: {}]
  %s10 = inlined_call_operand.hbm [shape: bf16[32,32], index: 10, kind: input, shape index: {}]
  %s11 = inlined_call_operand.hbm [shape: f32[1,32], index: 11, kind: input, shape index: {}]
  %s12 = inlined_call_operand.vmem [shape: f32[2,8,32], index: 12, kind: output, shape index: {}]
  %s13 = sld [smem:[#allocation0]]
  $region117: #{decoder_forward.7} parent=0
    _
  %s15 = ssub.s32 1, %s13
  %s16 = scalar_select 0, %s15, %s13
  $region1: #{decoder_forward.7} parent=0
    #allocation2 [shape = 'u8[512]{0}', space=vmem, size = 0x400, scoped, tag = 'input window, operand 2, single buffered']
    #allocation3 [shape = 's32[2]{0}', space=sflag, size = 0x8, scoped, tag = 'scoped memory for decoder_forward.7']
    #allocation4 [shape = 'u8[512]{0}', space=vmem, size = 0x400, scoped, tag = 'input window, operand 3, single buffered']
    #allocation5 [shape = 's32[1]{0}', space=sflag, size = 0x4, scoped, tag = 'scoped memory for decoder_forward.7']
    #allocation6 [shape = 'u8[512]{0}', space=vmem, size = 0x400, scoped, tag = 'input window, operand 5, single buffered']
    #allocation7 [shape = 'u8[8192]{0}', space=vmem, size = 0x2000, scoped, tag = 'input window, operand 6, single buffered']
    #allocation8 [shape = 's32[1]{0}', space=sflag, size = 0x4, scoped, tag = 'scoped memory for decoder_forward.7']
    #allocation9 [shape = 'u8[512]{0}', space=vmem, size = 0x400, scoped, tag = 'input window, operand 7, single buffered']
    #allocation10 [shape = 'u8[8192]{0}', space=vmem, size = 0x2000, scoped, tag = 'input window, operand 8, single buffered']
    #allocation11 [shape = 's32[1]{0}', space=sflag, size = 0x4, scoped, tag = 'scoped memory for decoder_forward.7']
    #allocation12 [shape = 'u8[512]{0}', space=vmem, size = 0x400, scoped, tag = 'input window, operand 9, single buffered']
    #allocation13 [shape = 'u8[8192]{0}', space=vmem, size = 0x2000, scoped, tag = 'input window, operand 10, single buffered']
    #allocation14 [shape = 's32[1]{0}', space=sflag, size = 0x4, scoped, tag = 'scoped memory for decoder_forward.7']
    #allocation15 [shape = 'u8[512]{0}', space=vmem, size = 0x400, scoped, tag = 'input window, operand 11, single buffered']
    %17 = vsyncpa [#allocation3], 0
    %18 = vsyncpa [#allocation5], 0
    %19 = vsyncpa [#allocation8], 0
    %20 = vsyncpa [#allocation11], 0
    %21 = vsyncpa [#allocation14], 0
    loop: start=0, step=1, limit=4
    $region2: #{decoder_forward.7} parent=1 // loop_pre_header
      _
    $region3: #{decoder_forward.7} parent=1 // loop_header
      %s23 = sphi 0, %s27
      %p24 = scmp.ge.s32.totalorder %s23, 4
      %s30 = sphi 0, %s42
      %s31 = sphi 0, %s38
      %s32 = sphi 0, %s30
      %s33 = sphi 0, %s31
      %s34 = sphi 0, %s32
      %s35 = sphi 0, %s33
      %s47 = sphi 0, %s49
      %s50 = sphi 0, %s47
      %s51 = sphi 0, %s50
      %s67 = sphi 0, %s51
      %s73 = sphi 0, %s75
      %s76 = sphi 0, %s73
      %s77 = sphi 0, %s76
      %s93 = sphi 0, %s77
      %s97 = sphi 0, %s97
      %s99 = sphi 0, %s97
      %s100 = sphi 0, %s99
      %s114 = sphi 0, %s100
      %s118 = sphi 0, %s118
      %s120 = sphi 0, %s118
      %s121 = sphi 0, %s120
      %s135 = sphi 0, %s121
      %s139 = sphi 0, %s139
      %s141 = sphi 0, %s139
      %s142 = sphi 0, %s141
      %s156 = sphi 0, %s142
      %s160 = sphi 0, %s160
      %s162 = sphi 0, %s160
      %s163 = sphi 0, %s162
      %s177 = sphi 0, %s163
      %s181 = sphi 0, %s181
      %s183 = sphi 0, %s181
      %s184 = sphi 0, %s183
      %s198 = sphi 0, %s184
      %s202 = sphi 0, %s202
      %s204 = sphi 0, %s202
      %s205 = sphi 0, %s204
      %s219 = sphi 0, %s205
      %s223 = sphi 0, %s223
      %s225 = sphi 0, %s223
      %s226 = sphi 0, %s225
      %s240 = sphi 0, %s226
      %s244 = sphi 0, %s244
      %s246 = sphi 0, %s244
      %s247 = sphi 0, %s246
      %s261 = sphi 0, %s247
      %s265 = sphi 0, %s265
      %s267 = sphi 0, %s265
      %s268 = sphi 0, %s267
      %s282 = sphi 0, %s268
      %s286 = sphi 0, %s286
      %s288 = sphi 0, %s286
      %s289 = sphi 0, %s288
      %s303 = sphi 0, %s289
      %s311 = sphi 0, %s313
      %s314 = sphi 0, %s311
      %s315 = sphi 0, %s314
      %s331 = sphi 0, %s315
    $region4: #{decoder_forward.7} parent=1 // loop_header_branch
      %26 = sbr.rel (%p24) target = $region8
    $region5: #{decoder_forward.7} parent=1 // loop_body
      %s28 = ssub.s32 %s23, 1
      %s29 = ssub.s32 %s23, 2
      %s36 = sadd.s32 1, %s31
      %p37 = scmp.ge.s32.totalorder %s36, 1
      %s38 = scalar_select %p37, 0, %s36
      %s39 = sadd.s32 1, %s30
      %s40 = scalar_select %p37, %s39, %s30
      %p41 = scmp.ge.s32.totalorder %s40, 2
      %s42 = scalar_select %p41, 0, %s40
      %s43 = ssub.s32 %s30, %s42
      %s44 = ssub.s32 %s31, %s38
      %s45 = sor.u32 %s43, %s44
      %p46 = scmp.eq.s32.totalorder %s45, 0
      %s48 = sadd.s32 %s47, 1
      %s49 = scalar_select %p46, %s47, %s48
      %p52 = pneg %p46
      %p53 = scmp.eq.s32.totalorder %s23, 1
      %p54 = por %p52, %p53
      %p55 = scmp.ne.s32.totalorder %s47, %s50
      %p56 = scmp.eq.s32.totalorder %s23, 0
      %p57 = por %p55, %p56
      %p58 = scmp.ne.s32.totalorder %s47, %s50
      %p59 = scmp.eq.s32.totalorder %s28, 1
      %p60 = por %p58, %p59
      %p61 = scmp.ne.s32.totalorder %s50, %s51
      %p62 = scmp.eq.s32.totalorder %s28, 0
      %p63 = por %p61, %p62
      %p64 = scmp.ne.s32.totalorder %s50, %s51
      %p65 = scmp.eq.s32.totalorder %s29, 1
      %p66 = por %p64, %p65
      %p68 = scmp.ne.s32.totalorder %s51, %s67
      %p69 = scmp.eq.s32.totalorder %s29, 0
      %p70 = por %p68, %p69
      %s71 = ssub.s32 %s30, %s42
      %p72 = scmp.eq.s32.totalorder %s71, 0
      %s74 = sadd.s32 %s73, 1
      %s75 = scalar_select %p72, %s73, %s74
      %p78 = pneg %p72
      %p79 = scmp.eq.s32.totalorder %s23, 1
      %p80 = por %p78, %p79
      %p81 = scmp.ne.s32.totalorder %s73, %s76
      %p82 = scmp.eq.s32.totalorder %s23, 0
      %p83 = por %p81, %p82
      %p84 = scmp.ne.s32.totalorder %s73, %s76
      %p85 = scmp.eq.s32.totalorder %s28, 1
      %p86 = por %p84, %p85
      %p87 = scmp.ne.s32.totalorder %s76, %s77
      %p88 = scmp.eq.s32.totalorder %s28, 0
      %p89 = por %p87, %p88
      %p90 = scmp.ne.s32.totalorder %s76, %s77
      %p91 = scmp.eq.s32.totalorder %s29, 1
      %p92 = por %p90, %p91
      %p94 = scmp.ne.s32.totalorder %s77, %s93
      %p95 = scmp.eq.s32.totalorder %s29, 0
      %p96 = por %p94, %p95
      %s98 = sadd.s32 %s97, 1
      %p101 = scmp.eq.s32.totalorder %s23, 1
      %p102 = scmp.ne.s32.totalorder %s97, %s99
      %p103 = scmp.eq.s32.totalorder %s23, 0
      %p104 = por %p102, %p103
      %p105 = scmp.ne.s32.totalorder %s97, %s99
      %p106 = scmp.eq.s32.totalorder %s28, 1
      %p107 = por %p105, %p106
      %p108 = scmp.ne.s32.totalorder %s99, %s100
      %p109 = scmp.eq.s32.totalorder %s28, 0
      %p110 = por %p108, %p109
      %p111 = scmp.ne.s32.totalorder %s99, %s100
      %p112 = scmp.eq.s32.totalorder %s29, 1
      %p113 = por %p111, %p112
      %p115 = scmp.ne.s32.totalorder %s100, %s114
      %p116 = scmp.eq.s32.totalorder %s29, 0
      %p117 = por %p115, %p116
      %s119 = sadd.s32 %s118, 1
      %p122 = scmp.eq.s32.totalorder %s23, 1
      %p123 = scmp.ne.s32.totalorder %s118, %s120
      %p124 = scmp.eq.s32.totalorder %s23, 0
      %p125 = por %p123, %p124
      %p126 = scmp.ne.s32.totalorder %s118, %s120
      %p127 = scmp.eq.s32.totalorder %s28, 1
      %p128 = por %p126, %p127
      %p129 = scmp.ne.s32.totalorder %s120, %s121
      %p130 = scmp.eq.s32.totalorder %s28, 0
      %p131 = por %p129, %p130
      %p132 = scmp.ne.s32.totalorder %s120, %s121
      %p133 = scmp.eq.s32.totalorder %s29, 1
      %p134 = por %p132, %p133
      %p136 = scmp.ne.s32.totalorder %s121, %s135
      %p137 = scmp.eq.s32.totalorder %s29, 0
      %p138 = por %p136, %p137
      %s140 = sadd.s32 %s139, 1
      %p143 = scmp.eq.s32.totalorder %s23, 1
      %p144 = scmp.ne.s32.totalorder %s139, %s141
      %p145 = scmp.eq.s32.totalorder %s23, 0
      %p146 = por %p144, %p145
      %p147 = scmp.ne.s32.totalorder %s139, %s141
      %p148 = scmp.eq.s32.totalorder %s28, 1
      %p149 = por %p147, %p148
      %p150 = scmp.ne.s32.totalorder %s141, %s142
      %p151 = scmp.eq.s32.totalorder %s28, 0
      %p152 = por %p150, %p151
      %p153 = scmp.ne.s32.totalorder %s141, %s142
      %p154 = scmp.eq.s32.totalorder %s29, 1
      %p155 = por %p153, %p154
      %p157 = scmp.ne.s32.totalorder %s142, %s156
      %p158 = scmp.eq.s32.totalorder %s29, 0
      %p159 = por %p157, %p158
      %s161 = sadd.s32 %s160, 1
      %p164 = scmp.eq.s32.totalorder %s23, 1
      %p165 = scmp.ne.s32.totalorder %s160, %s162
      %p166 = scmp.eq.s32.totalorder %s23, 0
      %p167 = por %p165, %p166
      %p168 = scmp.ne.s32.totalorder %s160, %s162
      %p169 = scmp.eq.s32.totalorder %s28, 1
      %p170 = por %p168, %p169
      %p171 = scmp.ne.s32.totalorder %s162, %s163
      %p172 = scmp.eq.s32.totalorder %s28, 0
      %p173 = por %p171, %p172
      %p174 = scmp.ne.s32.totalorder %s162, %s163
      %p175 = scmp.eq.s32.totalorder %s29, 1
      %p176 = por %p174, %p175
      %p178 = scmp.ne.s32.totalorder %s163, %s177
      %p179 = scmp.eq.s32.totalorder %s29, 0
      %p180 = por %p178, %p179
      %s182 = sadd.s32 %s181, 1
      %p185 = scmp.eq.s32.totalorder %s23, 1
      %p186 = scmp.ne.s32.totalorder %s181, %s183
      %p187 = scmp.eq.s32.totalorder %s23, 0
      %p188 = por %p186, %p187
      %p189 = scmp.ne.s32.totalorder %s181, %s183
      %p190 = scmp.eq.s32.totalorder %s28, 1
      %p191 = por %p189, %p190
      %p192 = scmp.ne.s32.totalorder %s183, %s184
      %p193 = scmp.eq.s32.totalorder %s28, 0
      %p194 = por %p192, %p193
      %p195 = scmp.ne.s32.totalorder %s183, %s184
      %p196 = scmp.eq.s32.totalorder %s29, 1
      %p197 = por %p195, %p196
      %p199 = scmp.ne.s32.totalorder %s184, %s198
      %p200 = scmp.eq.s32.totalorder %s29, 0
      %p201 = por %p199, %p200
      %s203 = sadd.s32 %s202, 1
      %p206 = scmp.eq.s32.totalorder %s23, 1
      %p207 = scmp.ne.s32.totalorder %s202, %s204
      %p208 = scmp.eq.s32.totalorder %s23, 0
      %p209 = por %p207, %p208
      %p210 = scmp.ne.s32.totalorder %s202, %s204
      %p211 = scmp.eq.s32.totalorder %s28, 1
      %p212 = por %p210, %p211
      %p213 = scmp.ne.s32.totalorder %s204, %s205
      %p214 = scmp.eq.s32.totalorder %s28, 0
      %p215 = por %p213, %p214
      %p216 = scmp.ne.s32.totalorder %s204, %s205
      %p217 = scmp.eq.s32.totalorder %s29, 1
      %p218 = por %p216, %p217
      %p220 = scmp.ne.s32.totalorder %s205, %s219
      %p221 = scmp.eq.s32.totalorder %s29, 0
      %p222 = por %p220, %p221
      %s224 = sadd.s32 %s223, 1
      %p227 = scmp.eq.s32.totalorder %s23, 1
      %p228 = scmp.ne.s32.totalorder %s223, %s225
      %p229 = scmp.eq.s32.totalorder %s23, 0
      %p230 = por %p228, %p229
      %p231 = scmp.ne.s32.totalorder %s223, %s225
      %p232 = scmp.eq.s32.totalorder %s28, 1
      %p233 = por %p231, %p232
      %p234 = scmp.ne.s32.totalorder %s225, %s226
      %p235 = scmp.eq.s32.totalorder %s28, 0
      %p236 = por %p234, %p235
      %p237 = scmp.ne.s32.totalorder %s225, %s226
      %p238 = scmp.eq.s32.totalorder %s29, 1
      %p239 = por %p237, %p238
      %p241 = scmp.ne.s32.totalorder %s226, %s240
      %p242 = scmp.eq.s32.totalorder %s29, 0
      %p243 = por %p241, %p242
      %s245 = sadd.s32 %s244, 1
      %p248 = scmp.eq.s32.totalorder %s23, 1
      %p249 = scmp.ne.s32.totalorder %s244, %s246
      %p250 = scmp.eq.s32.totalorder %s23, 0
      %p251 = por %p249, %p250
      %p252 = scmp.ne.s32.totalorder %s244, %s246
      %p253 = scmp.eq.s32.totalorder %s28, 1
      %p254 = por %p252, %p253
      %p255 = scmp.ne.s32.totalorder %s246, %s247
      %p256 = scmp.eq.s32.totalorder %s28, 0
      %p257 = por %p255, %p256
      %p258 = scmp.ne.s32.totalorder %s246, %s247
      %p259 = scmp.eq.s32.totalorder %s29, 1
      %p260 = por %p258, %p259
      %p262 = scmp.ne.s32.totalorder %s247, %s261
      %p263 = scmp.eq.s32.totalorder %s29, 0
      %p264 = por %p262, %p263
      %s266 = sadd.s32 %s265, 1
      %p269 = scmp.eq.s32.totalorder %s23, 1
      %p270 = scmp.ne.s32.totalorder %s265, %s267
      %p271 = scmp.eq.s32.totalorder %s23, 0
      %p272 = por %p270, %p271
      %p273 = scmp.ne.s32.totalorder %s265, %s267
      %p274 = scmp.eq.s32.totalorder %s28, 1
      %p275 = por %p273, %p274
      %p276 = scmp.ne.s32.totalorder %s267, %s268
      %p277 = scmp.eq.s32.totalorder %s28, 0
      %p278 = por %p276, %p277
      %p279 = scmp.ne.s32.totalorder %s267, %s268
      %p280 = scmp.eq.s32.totalorder %s29, 1
      %p281 = por %p279, %p280
      %p283 = scmp.ne.s32.totalorder %s268, %s282
      %p284 = scmp.eq.s32.totalorder %s29, 0
      %p285 = por %p283, %p284
      %s287 = sadd.s32 %s286, 1
      %p290 = scmp.eq.s32.totalorder %s23, 1
      %p291 = scmp.ne.s32.totalorder %s286, %s288
      %p292 = scmp.eq.s32.totalorder %s23, 0
      %p293 = por %p291, %p292
      %p294 = scmp.ne.s32.totalorder %s286, %s288
      %p295 = scmp.eq.s32.totalorder %s28, 1
      %p296 = por %p294, %p295
      %p297 = scmp.ne.s32.totalorder %s288, %s289
      %p298 = scmp.eq.s32.totalorder %s28, 0
      %p299 = por %p297, %p298
      %p300 = scmp.ne.s32.totalorder %s288, %s289
      %p301 = scmp.eq.s32.totalorder %s29, 1
      %p302 = por %p300, %p301
      %p304 = scmp.ne.s32.totalorder %s289, %s303
      %p305 = scmp.eq.s32.totalorder %s29, 0
      %p306 = por %p304, %p305
      %s307 = ssub.s32 %s30, %s42
      %s308 = ssub.s32 %s31, %s38
      %s309 = sor.u32 %s307, %s308
      %p310 = scmp.eq.s32.totalorder %s309, 0
      %s312 = sadd.s32 %s311, 1
      %s313 = scalar_select %p310, %s311, %s312
      %p316 = pneg %p310
      %p317 = scmp.eq.s32.totalorder %s23, 1
      %p318 = por %p316, %p317
      %p319 = scmp.ne.s32.totalorder %s311, %s314
      %p320 = scmp.eq.s32.totalorder %s23, 0
      %p321 = por %p319, %p320
      %p322 = scmp.ne.s32.totalorder %s311, %s314
      %p323 = scmp.eq.s32.totalorder %s28, 1
      %p324 = por %p322, %p323
      %p325 = scmp.ne.s32.totalorder %s314, %s315
      %p326 = scmp.eq.s32.totalorder %s28, 0
      %p327 = por %p325, %p326
      %p328 = scmp.ne.s32.totalorder %s314, %s315
      %p329 = scmp.eq.s32.totalorder %s29, 1
      %p330 = por %p328, %p329
      %p332 = scmp.ne.s32.totalorder %s315, %s331
      %p333 = scmp.eq.s32.totalorder %s29, 0
      %p334 = por %p332, %p333
      %p335 = scmp.le.s32.totalorder 1, %s23
      %p336 = scmp.lt.s32.totalorder %s23, 3
      %p337 = pnand %p335, %p336
      %p338 = pneg %p337
      // Predicated region
      $region9: #{decoder_forward.7} parent=5 // pred_check
        _
      $region10: #{decoder_forward.7} parent=5 // pred_check_branch
        %340 = sbr.rel (%p337) target = $region12
      $region11: #{decoder_forward.7} parent=5 // pred_region
        %s341 = ssub.s32 %s23, 1
        // Predicated region
        $region13: #{decoder_forward.7} parent=11 // pred_check
          %p342 = pneg %p110
        $region14: #{decoder_forward.7} parent=11 // pred_check_branch
          %344 = sbr.rel (%p342) target = $region16
        $region15: #{decoder_forward.7} parent=11 // pred_region
          %346 = vsyncadd [#allocation3], 0
          %s348 = sshll.u32 %s2, 4
          %s349 = int_to_ptr.hbm [resolvable:$true] %s348
          %s350 = sshll.u32 [#allocation2], 4
          %s351 = int_to_ptr.vmem [resolvable:$true] %s350
          %353 = dma.hbm_to_vmem [thread:$0]  %s349, 16, %s351, [#allocation3]
        $region16: #{decoder_forward.7} parent=11 // pred_fallthru
          _
        // Predicated region
        $region17: #{decoder_forward.7} parent=11 // pred_check
          %p354 = pneg %p131
        $region18: #{decoder_forward.7} parent=11 // pred_check_branch
          %356 = sbr.rel (%p354) target = $region20
        $region19: #{decoder_forward.7} parent=11 // pred_region
          %358 = vsyncadd [#allocation5], 0
          %s360 = sshll.u32 %s3, 4
          %s361 = int_to_ptr.hbm [resolvable:$true] %s360
          %s362 = sshll.u32 [#allocation4], 4
          %s363 = int_to_ptr.vmem [resolvable:$true] %s362
          %365 = dma.hbm_to_vmem [thread:$0]  %s361, 16, %s363, [#allocation5]
        $region20: #{decoder_forward.7} parent=11 // pred_fallthru
          _
        // Predicated region
        $region21: #{decoder_forward.7} parent=11 // pred_check
          %p366 = pneg %p152
        $region22: #{decoder_forward.7} parent=11 // pred_check_branch
          %368 = sbr.rel (%p366) target = $region24
        $region23: #{decoder_forward.7} parent=11 // pred_region
          _
        $region24: #{decoder_forward.7} parent=11 // pred_fallthru
          _
        // Predicated region
        $region25: #{decoder_forward.7} parent=11 // pred_check
          %p369 = pneg %p173
        $region26: #{decoder_forward.7} parent=11 // pred_check_branch
          %371 = sbr.rel (%p369) target = $region28
        $region27: #{decoder_forward.7} parent=11 // pred_region
          %373 = vsyncadd [#allocation5], 0
          %s375 = sshll.u32 %s5, 4
          %s376 = int_to_ptr.hbm [resolvable:$true] %s375
          %s377 = sshll.u32 [#allocation6], 4
          %s378 = int_to_ptr.vmem [resolvable:$true] %s377
          %380 = dma.hbm_to_vmem [thread:$0]  %s376, 16, %s378, [#allocation5]
        $region28: #{decoder_forward.7} parent=11 // pred_fallthru
          _
        // Predicated region
        $region29: #{decoder_forward.7} parent=11 // pred_check
          %p381 = pneg %p194
        $region30: #{decoder_forward.7} parent=11 // pred_check_branch
          %383 = sbr.rel (%p381) target = $region32
        $region31: #{decoder_forward.7} parent=11 // pred_region
          %385 = vsyncadd [#allocation8], 0
          %s386 = sshll.u32 %s6, 4
          %s387 = int_to_ptr.hbm [resolvable:$true] %s386
          %s388 = sshll.u32 [#allocation7], 4
          %s389 = int_to_ptr.vmem [resolvable:$true] %s388
          %394 = dma.hbm_to_vmem [thread:$0]  %s387, 256, %s389, [#allocation8], 64, 64, 4
        $region32: #{decoder_forward.7} parent=11 // pred_fallthru
          _
        // Predicated region
        $region33: #{decoder_forward.7} parent=11 // pred_check
          %p395 = pneg %p215
        $region34: #{decoder_forward.7} parent=11 // pred_check_branch
          %397 = sbr.rel (%p395) target = $region36
        $region35: #{decoder_forward.7} parent=11 // pred_region
          %399 = vsyncadd [#allocation8], 0
          %s401 = sshll.u32 %s7, 4
          %s402 = int_to_ptr.hbm [resolvable:$true] %s401
          %s403 = sshll.u32 [#allocation9], 4
          %s404 = int_to_ptr.vmem [resolvable:$true] %s403
          %406 = dma.hbm_to_vmem [thread:$0]  %s402, 16, %s404, [#allocation8]
        $region36: #{decoder_forward.7} parent=11 // pred_fallthru
          _
        // Predicated region
        $region37: #{decoder_forward.7} parent=11 // pred_check
          %p407 = pneg %p236
        $region38: #{decoder_forward.7} parent=11 // pred_check_branch
          %409 = sbr.rel (%p407) target = $region40
        $region39: #{decoder_forward.7} parent=11 // pred_region
          %411 = vsyncadd [#allocation11], 0
          %s412 = sshll.u32 %s8, 4
          %s413 = int_to_ptr.hbm [resolvable:$true] %s412
          %s414 = sshll.u32 [#allocation10], 4
          %s415 = int_to_ptr.vmem [resolvable:$true] %s414
          %420 = dma.hbm_to_vmem [thread:$0]  %s413, 256, %s415, [#allocation11], 64, 64, 4
        $region40: #{decoder_forward.7} parent=11 // pred_fallthru
          _
        // Predicated region
        $region41: #{decoder_forward.7} parent=11 // pred_check
          %p421 = pneg %p257
        $region42: #{decoder_forward.7} parent=11 // pred_check_branch
          %423 = sbr.rel (%p421) target = $region44
        $region43: #{decoder_forward.7} parent=11 // pred_region
          %425 = vsyncadd [#allocation11], 0
          %s427 = sshll.u32 %s9, 4
          %s428 = int_to_ptr.hbm [resolvable:$true] %s427
          %s429 = sshll.u32 [#allocation12], 4
          %s430 = int_to_ptr.vmem [resolvable:$true] %s429
          %432 = dma.hbm_to_vmem [thread:$0]  %s428, 16, %s430, [#allocation11]
        $region44: #{decoder_forward.7} parent=11 // pred_fallthru
          _
        // Predicated region
        $region45: #{decoder_forward.7} parent=11 // pred_check
          %p433 = pneg %p278
        $region46: #{decoder_forward.7} parent=11 // pred_check_branch
          %435 = sbr.rel (%p433) target = $region48
        $region47: #{decoder_forward.7} parent=11 // pred_region
          %437 = vsyncadd [#allocation14], 0
          %s438 = sshll.u32 %s10, 4
          %s439 = int_to_ptr.hbm [resolvable:$true] %s438
          %s440 = sshll.u32 [#allocation13], 4
          %s441 = int_to_ptr.vmem [resolvable:$true] %s440
          %446 = dma.hbm_to_vmem [thread:$0]  %s439, 256, %s441, [#allocation14], 64, 64, 4
        $region48: #{decoder_forward.7} parent=11 // pred_fallthru
          _
        // Predicated region
        $region49: #{decoder_forward.7} parent=11 // pred_check
          %p447 = pneg %p299
        $region50: #{decoder_forward.7} parent=11 // pred_check_branch
          %449 = sbr.rel (%p447) target = $region52
        $region51: #{decoder_forward.7} parent=11 // pred_region
          %451 = vsyncadd [#allocation14], 0
          %s453 = sshll.u32 %s11, 4
          %s454 = int_to_ptr.hbm [resolvable:$true] %s453
          %s455 = sshll.u32 [#allocation15], 4
          %s456 = int_to_ptr.vmem [resolvable:$true] %s455
          %458 = dma.hbm_to_vmem [thread:$0]  %s454, 16, %s456, [#allocation14]
        $region52: #{decoder_forward.7} parent=11 // pred_fallthru
          _
      $region12: #{decoder_forward.7} parent=5 // pred_fallthru
        _
      %p459 = scmp.lt.s32.totalorder %s23, 2
      // Predicated region
      $region53: #{decoder_forward.7} parent=5 // pred_check
        %p460 = pneg %p459
      $region54: #{decoder_forward.7} parent=5 // pred_check_branch
        %462 = sbr.rel (%p460) target = $region56
      $region55: #{decoder_forward.7} parent=5 // pred_region
        // Predicated region
        $region57: #{decoder_forward.7} parent=55 // pred_check
          %p463 = pneg %p57
        $region58: #{decoder_forward.7} parent=55 // pred_check_branch
          %465 = sbr.rel (%p463) target = $region60
        $region59: #{decoder_forward.7} parent=55 // pred_region
          %p466 = scmp.lt.s32.totalorder %s30, 1
          %s467 = scalar_select %p466, %s30, 1
          %p468 = scmp.lt.s32.totalorder %s31, 0
          %s469 = scalar_select %p468, %s31, 0
          %s470 = sadd.s32 %s469, %s467
          %s471 = smul.addr %s470, 8
          %s472 = scalar_lea.vmem %s0, %s471
        $region60: #{decoder_forward.7} parent=55 // pred_fallthru
          _
        // Predicated region
        $region61: #{decoder_forward.7} parent=55 // pred_check
          %p473 = pneg %p83
        $region62: #{decoder_forward.7} parent=55 // pred_check_branch
          %475 = sbr.rel (%p473) target = $region64
        $region63: #{decoder_forward.7} parent=55 // pred_region
          %p476 = scmp.lt.s32.totalorder %s30, 1
          %s477 = scalar_select %p476, %s30, 1
          %s478 = smul.addr %s477, 8
          %s479 = scalar_lea.vmem %s1, %s478
        $region64: #{decoder_forward.7} parent=55 // pred_fallthru
          _
      $region56: #{decoder_forward.7} parent=5 // pred_fallthru
        _
      %p480 = scmp.le.s32.totalorder 1, %s23
      %p481 = scmp.lt.s32.totalorder %s23, 3
      %p482 = pnand %p480, %p481
      %p483 = pneg %p482
      // Predicated region
      $region65: #{decoder_forward.7} parent=5 // pred_check
        _
      $region66: #{decoder_forward.7} parent=5 // pred_check_branch
        %485 = sbr.rel (%p482) target = $region68
      $region67: #{decoder_forward.7} parent=5 // pred_region
        %s486 = ssub.s32 %s23, 1
        // Predicated region
        $region69: #{decoder_forward.7} parent=67 // pred_check
          %p487 = pneg %p110
        $region70: #{decoder_forward.7} parent=67 // pred_check_branch
          %489 = sbr.rel (%p487) target = $region72
        $region71: #{decoder_forward.7} parent=67 // pred_region
          %491 = dma.done [#allocation3], 16
        $region72: #{decoder_forward.7} parent=67 // pred_fallthru
          _
        // Predicated region
        $region73: #{decoder_forward.7} parent=67 // pred_check
          %p492 = pneg %p131
        $region74: #{decoder_forward.7} parent=67 // pred_check_branch
          %494 = sbr.rel (%p492) target = $region76
        $region75: #{decoder_forward.7} parent=67 // pred_region
          %496 = dma.done [#allocation5], 16
        $region76: #{decoder_forward.7} parent=67 // pred_fallthru
          _
        // Predicated region
        $region77: #{decoder_forward.7} parent=67 // pred_check
          %p497 = pneg %p173
        $region78: #{decoder_forward.7} parent=67 // pred_check_branch
          %499 = sbr.rel (%p497) target = $region80
        $region79: #{decoder_forward.7} parent=67 // pred_region
          %501 = dma.done [#allocation5], 16
        $region80: #{decoder_forward.7} parent=67 // pred_fallthru
          _
        // Predicated region
        $region81: #{decoder_forward.7} parent=67 // pred_check
          %p502 = pneg %p194
        $region82: #{decoder_forward.7} parent=67 // pred_check_branch
          %504 = sbr.rel (%p502) target = $region84
        $region83: #{decoder_forward.7} parent=67 // pred_region
          %506 = dma.done [#allocation8], 256
        $region84: #{decoder_forward.7} parent=67 // pred_fallthru
          _
        // Predicated region
        $region85: #{decoder_forward.7} parent=67 // pred_check
          %p507 = pneg %p215
        $region86: #{decoder_forward.7} parent=67 // pred_check_branch
          %509 = sbr.rel (%p507) target = $region88
        $region87: #{decoder_forward.7} parent=67 // pred_region
          %511 = dma.done [#allocation8], 16
        $region88: #{decoder_forward.7} parent=67 // pred_fallthru
          _
        // Predicated region
        $region89: #{decoder_forward.7} parent=67 // pred_check
          %p512 = pneg %p236
        $region90: #{decoder_forward.7} parent=67 // pred_check_branch
          %514 = sbr.rel (%p512) target = $region92
        $region91: #{decoder_forward.7} parent=67 // pred_region
          %516 = dma.done [#allocation11], 256
        $region92: #{decoder_forward.7} parent=67 // pred_fallthru
          _
        // Predicated region
        $region93: #{decoder_forward.7} parent=67 // pred_check
          %p517 = pneg %p257
        $region94: #{decoder_forward.7} parent=67 // pred_check_branch
          %519 = sbr.rel (%p517) target = $region96
        $region95: #{decoder_forward.7} parent=67 // pred_region
          %521 = dma.done [#allocation11], 16
        $region96: #{decoder_forward.7} parent=67 // pred_fallthru
          _
        // Predicated region
        $region97: #{decoder_forward.7} parent=67 // pred_check
          %p522 = pneg %p278
        $region98: #{decoder_forward.7} parent=67 // pred_check_branch
          %524 = sbr.rel (%p522) target = $region100
        $region99: #{decoder_forward.7} parent=67 // pred_region
          %526 = dma.done [#allocation14], 256
        $region100: #{decoder_forward.7} parent=67 // pred_fallthru
          _
        // Predicated region
        $region101: #{decoder_forward.7} parent=67 // pred_check
          %p527 = pneg %p299
        $region102: #{decoder_forward.7} parent=67 // pred_check_branch
          %529 = sbr.rel (%p527) target = $region104
        $region103: #{decoder_forward.7} parent=67 // pred_region
          %531 = dma.done [#allocation14], 16
        $region104: #{decoder_forward.7} parent=67 // pred_fallthru
          _
        %p532 = scmp.lt.s32.totalorder %s32, 1
        %s533 = scalar_select %p532, %s32, 1
        %p534 = scmp.lt.s32.totalorder %s33, 0
        %s535 = scalar_select %p534, %s33, 0
        %s536 = sadd.s32 %s535, %s533
        %s537 = smul.addr %s536, 8
        %s538 = scalar_lea.vmem %s0, %s537
        %p539 = pneg %p63
        %p540 = pneg %p60
        %p541 = scmp.lt.s32.totalorder %s32, 1
        %s542 = scalar_select %p541, %s32, 1
        %s543 = smul.addr %s542, 8
        %s544 = scalar_lea.vmem %s1, %s543
        %p545 = pneg %p89
        %p546 = pneg %p86
        %p547 = pneg %p110
        %p548 = pneg %p107
        %p549 = pneg %p131
        %p550 = pneg %p128
        %p551 = pneg %p152
        %p552 = pneg %p149
        %p553 = pneg %p173
        %p554 = pneg %p170
        %p555 = pneg %p194
        %p556 = pneg %p191
        %p557 = pneg %p215
        %p558 = pneg %p212
        %p559 = pneg %p236
        %p560 = pneg %p233
        %p561 = pneg %p257
        %p562 = pneg %p254
        %p563 = pneg %p278
        %p564 = pneg %p275
        %p565 = pneg %p299
        %p566 = pneg %p296
        %p567 = pneg %p327
        %p568 = pneg %p324
        %p569 = scmp.lt.s32.totalorder %s32, 1
        %s570 = scalar_select %p569, %s32, 1
        %p571 = scmp.lt.s32.totalorder %s33, 0
        %s572 = scalar_select %p571, %s33, 0
        %s573 = sadd.s32 %s572, %s570
        %s574 = smul.addr %s573, 8
        %s575 = scalar_lea.vmem %s12, %s574
        %p576 = scmp.lt.s32.totalorder %s32, 1
        %s577 = scalar_select %p576, %s32, 1
        %p578 = scmp.lt.s32.totalorder %s33, 0
        %s579 = scalar_select %p578, %s33, 0
        %s580 = sadd.s32 %s579, %s577
        %s581 = smul.addr %s580, 8
        %s582 = scalar_lea.vmem %s0, %s581
        %p583 = scmp.lt.s32.totalorder %s32, 1
        %s584 = scalar_select %p583, %s32, 1
        %s585 = smul.addr %s584, 8
        %s586 = scalar_lea.vmem %s1, %s585
        %p587 = scmp.lt.s32.totalorder %s32, 1
        %s588 = scalar_select %p587, %s32, 1
        %p589 = scmp.lt.s32.totalorder %s33, 0
        %s590 = scalar_select %p589, %s33, 0
        %s591 = sadd.s32 %s590, %s588
        %s592 = smul.addr %s591, 8
        %s593 = scalar_lea.vmem %s12, %s592
        %v595 = vld [vmem:[%s582] sm:$0xff]
        %v596 = vld [vmem:[#allocation2] sm:$0x1]
        %v597 = vld [vmem:[#allocation4] sm:$0x1]
        %vm598 = vcmask 261120
        %v599 = vsel %vm598, %v595, 0.0
        %600 = vadd.xlane.f32.xlu0 %v599
        %v601 = vpop.xlane.xlu0 %600
        %v602 = vrcp.pop 32.0
        %v603 = vmul.f32 32.0, %v602
        %v604 = vsub.f32 1.0, %v603
        %v605 = vmul.f32 %v602, %v604
        %v606 = vadd.f32 %v602, %v605
        %vm607 = vweird.f32 %v602
        %v608 = vsel %vm607, %v602, %v606
        %v609 = vmul.f32 %v601, %v608
        %v610 = vsub.f32 %v595, %v609
        %v611 = vmul.f32 %v610, %v610
        %v612 = vsel %vm598, %v611, 0.0
        %613 = vadd.xlane.f32.xlu0 %v612
        %v614 = vpop.xlane.xlu0 %613
        %v615 = vmul.f32 %v614, 0.032258064
        %v616 = vrsqrt.pop %v615
        %v617 = vmul.f32 %v616, %v615
        %v618 = vmul.f32 %v617, %v616
        %v619 = vmul.f32 0.5, %v618
        %v620 = vsub.f32 1.5, %v619
        %v621 = vmul.f32 %v616, %v620
        %v622 = vmul.f32 %v615, %v621
        %vm623 = vcmp.eq.f32.partialorder %v615, inf
        %v624 = vsel %vm623, %v615, %v622
        %vm625 = vcmp.eq.f32.partialorder %v615, 0.0
        %v626 = vand.u32 %v615, 2147483648
        %v627 = vsel %vm625, %v626, %v624
        %v629 = vperm.slane %v596, 0
        %v631 = vmul.f32 %v629, %v610
        %v632 = vadd.f32 %v627, 1e-06
        %v633 = vrcp.pop %v632
        %v634 = vmul.f32 %v632, %v633
        %v635 = vsub.f32 1.0, %v634
        %v636 = vmul.f32 %v633, %v635
        %v637 = vadd.f32 %v633, %v636
        %vm638 = vweird.f32 %v632
        %vm639 = vweird.f32 %v633
        %vm640 = vmor %vm638, %vm639
        %v641 = vsel %vm640, %v633, %v637
        %v642 = vand.u32 2147483647, %v632
        %vm643 = vcmp.eq.f32.partialorder %v642, 8.507059e+37
        %v644 = vand.u32 %v632, 2147483648
        %v645 = vor.u32 1.1754944e-38, %v644
        %v646 = vsel %vm643, %v645, %v641
        %v647 = vmul.f32 1.0, %v646
        %v648 = vmul.f32 %v631, %v647
        %v650 = vperm.slane %v597, 0
        %v652 = vadd.f32 %v648, %v650
        %v653 = vld [vmem:[%s586] sm:$0xff]
        %v654 = vsel %vm598, %v653, 0.0
        %655 = vadd.xlane.f32.xlu0 %v654
        %v656 = vpop.xlane.xlu0 %655
        %v657 = vmul.f32 %v656, %v608
        %v658 = vsub.f32 %v653, %v657
        %v659 = vmul.f32 %v658, %v658
        %v660 = vsel %vm598, %v659, 0.0
        %661 = vadd.xlane.f32.xlu0 %v660
        %v662 = vpop.xlane.xlu0 %661
        %v663 = vmul.f32 %v662, 0.032258064
        %v664 = vrsqrt.pop %v663
        %v665 = vmul.f32 %v664, %v663
        %v666 = vmul.f32 %v665, %v664
        %v667 = vmul.f32 0.5, %v666
        %v668 = vsub.f32 1.5, %v667
        %v669 = vmul.f32 %v664, %v668
        %v670 = vmul.f32 %v663, %v669
        %vm671 = vcmp.eq.f32.partialorder %v663, inf
        %v672 = vsel %vm671, %v663, %v670
        %vm673 = vcmp.eq.f32.partialorder %v663, 0.0
        %v674 = vand.u32 %v663, 2147483648
        %v675 = vsel %vm673, %v674, %v672
        %v676 = vmul.f32 %v629, %v658
        %v677 = vadd.f32 %v675, 1e-06
        %v678 = vrcp.pop %v677
        %v679 = vmul.f32 %v677, %v678
        %v680 = vsub.f32 1.0, %v679
        %v681 = vmul.f32 %v678, %v680
        %v682 = vadd.f32 %v678, %v681
        %vm683 = vweird.f32 %v677
        %vm684 = vweird.f32 %v678
        %vm685 = vmor %vm683, %vm684
        %v686 = vsel %vm685, %v678, %v682
        %v687 = vand.u32 2147483647, %v677
        %vm688 = vcmp.eq.f32.partialorder %v687, 8.507059e+37
        %v689 = vand.u32 %v677, 2147483648
        %v690 = vor.u32 1.1754944e-38, %v689
        %v691 = vsel %vm688, %v690, %v686
        %v692 = vmul.f32 1.0, %v691
        %v693 = vmul.f32 %v676, %v692
        %v694 = vadd.f32 %v693, %v650
        %v695 = vpack.c.bf16 %v694, %v694
        %v696 = vpack.c.bf16 %v652, %v652
        %v697 = vld [vmem:[%s4] sm:$0xf]
        %v698 = vld [vmem:[%s4 + $0x4] sm:$0xf]
        %v699 = vld [vmem:[%s4 + $0x8] sm:$0xf]
        %v700 = vld [vmem:[%s4 + $0xc] sm:$0xf]
        %v701 = vld [vmem:[#allocation6] sm:$0x1]
        %v703 = vperm.slane %v701, 0
        %v709 = vunpack.c.l.b16 %v697
        %v710 = vunpack.c.l.b16 %v698
        %v711 = vunpack.c.l.b16 %v699
        %v712 = vunpack.c.l.b16 %v700
        %v713 = vpack.c.b16 %v710, %v709
        %v714 = vpack.c.b16 %v712, %v711
        %v718 = vsel %vm598, %v696, 0
        %720 = vmatpush.bf16.msra.mxu0 0
        %721 = vmatpush.bf16.msra.mxu0 0
        %722 = vmatpush.bf16.msra.mxu0 0
        %723 = vmatpush.bf16.msra.mxu0 0
        %724 = vmatpush.bf16.msra.mxu0 0
        %725 = vmatpush.bf16.msra.mxu0 0
        %726 = vmatpush.bf16.msra.mxu0 %v714
        %727 = vmatpush.bf16.msra.mxu0 %v713
        %728 = vmatmul.bf16.gmra.mxu0 %v718
        %v729 = vpop.f32.mrf.mxu0
        %v730 = vadd.f32 %v703, %v729
        %v731 = vpop.f32.mrf.mxu0
        %732 = vdwg.mxu0
        %v733 = vpack.c.bf16 %v730, %v730
        %v734 = vld [vmem:[#allocation7] sm:$0xf]
        %v735 = vld [vmem:[#allocation7 + $0x4] sm:$0xf]
        %v736 = vld [vmem:[#allocation7 + $0x8] sm:$0xf]
        %v737 = vld [vmem:[#allocation7 + $0xc] sm:$0xf]
        %v738 = vld [vmem:[#allocation9] sm:$0x1]
        %v740 = vperm.slane %v738, 0
        %v746 = vunpack.c.l.b16 %v734
        %v747 = vunpack.c.l.b16 %v735
        %v748 = vunpack.c.l.b16 %v736
        %v749 = vunpack.c.l.b16 %v737
        %v750 = vpack.c.b16 %v747, %v746
        %v751 = vpack.c.b16 %v749, %v748
        %v755 = vsel %vm598, %v695, 0
        %757 = vmatpush.bf16.msra.mxu0 0
        %758 = vmatpush.bf16.msra.mxu0 0
        %759 = vmatpush.bf16.msra.mxu0 0
        %760 = vmatpush.bf16.msra.mxu0 0
        %761 = vmatpush.bf16.msra.mxu0 0
        %762 = vmatpush.bf16.msra.mxu0 0
        %763 = vmatpush.bf16.msra.mxu0 %v751
        %764 = vmatpush.bf16.msra.mxu0 %v750
        %765 = vmatmul.bf16.gmra.mxu0 %v755
        %v766 = vpop.f32.mrf.mxu0
        %v767 = vadd.f32 %v740, %v766
        %v768 = vpop.f32.mrf.mxu0
        %769 = vdwg.mxu0
        %v770 = vpack.c.bf16 %v767, %v767
        %v771 = vld [vmem:[#allocation10] sm:$0xf]
        %v772 = vld [vmem:[#allocation10 + $0x4] sm:$0xf]
        %v773 = vld [vmem:[#allocation10 + $0x8] sm:$0xf]
        %v774 = vld [vmem:[#allocation10 + $0xc] sm:$0xf]
        %v775 = vld [vmem:[#allocation12] sm:$0x1]
        %v777 = vperm.slane %v775, 0
        %v783 = vunpack.c.l.b16 %v771
        %v784 = vunpack.c.l.b16 %v772
        %v785 = vunpack.c.l.b16 %v773
        %v786 = vunpack.c.l.b16 %v774
        %v787 = vpack.c.b16 %v784, %v783
        %v788 = vpack.c.b16 %v786, %v785
        %791 = vmatpush.bf16.msra.mxu0 0
        %792 = vmatpush.bf16.msra.mxu0 0
        %793 = vmatpush.bf16.msra.mxu0 0
        %794 = vmatpush.bf16.msra.mxu0 0
        %795 = vmatpush.bf16.msra.mxu0 0
        %796 = vmatpush.bf16.msra.mxu0 0
        %797 = vmatpush.bf16.msra.mxu0 %v788
        %798 = vmatpush.bf16.msra.mxu0 %v787
        %799 = vmatmul.bf16.gmra.mxu0 %v755
        %v800 = vpop.f32.mrf.mxu0
        %v801 = vadd.f32 %v777, %v800
        %v802 = vpop.f32.mrf.mxu0
        %803 = vdwg.mxu0
        %v804 = vpack.c.bf16 %v801, %v801
        %s805 = smul.u32 %s33, 8
        %v806 = vlaneseq
        %v807 = vshrl.u32 %v806, 7
        %v808 = vstv %s805
        %v809 = vadd.s32 %v808, %v807
        %v810 = vlaneseq
        %v811 = vand.u32 %v810, 127
        %vm812 = vcmp.ge.s32.totalorder %v809, %v811
        %v813 = vsel %vm812, 0.0, -1e+09
        %vm814 = vcmask 64512
        %v816 = vsel %vm814, %v733, 0
        %v819 = vsel %vm814, %v770, 0
        %821 = vmatpush.bf16.xpose.msra.mxu0 0
        %822 = vmatpush.bf16.xpose.msra.mxu0 0
        %823 = vmatpush.bf16.xpose.msra.mxu0 0
        %824 = vmatpush.bf16.xpose.msra.mxu0 0
        %825 = vmatpush.bf16.xpose.msra.mxu0 0
        %826 = vmatpush.bf16.xpose.msra.mxu0 0
        %827 = vmatpush.bf16.xpose.msra.mxu0 0
        %828 = vmatpush.bf16.xpose.msra.mxu0 %v819
        %829 = vmatmul.bf16.gmra.mxu0 %v816
        %v830 = vpop.f32.mrf.mxu0
        %v831 = vadd.f32 0.0, %v830
        %v832 = vpop.f32.mrf.mxu0
        %833 = vdwg.mxu0
        %v834 = vmul.f32 %v831, 0.35355338
        %v835 = vadd.f32 %v834, %v813
        %v836 = vsel %vm814, %v835, -inf
        %837 = vmax.xlane.f32.xlu0 %v836
        %v838 = vpop.xlane.xlu0 %837
        %v839 = vsub.f32 %v835, %v838
        %v840 = vmul.f32 %v839, 1.442695
        %v841 = vpow.pop %v840
        %v842 = vsel %vm814, %v841, 0.0
        %843 = vadd.xlane.f32.xlu0 %v842
        %v844 = vpop.xlane.xlu0 %843
        %v845 = vrcp.pop %v844
        %v846 = vmul.f32 %v841, %v845
        %v847 = vpack.c.bf16 %v846, %v846
        %v849 = vsel %vm814, %v847, 0
        %vm851 = vcmask 1043456
        %v853 = vsel %vm851, %v804, 0
        %855 = vmatpush.bf16.msra.mxu0 0
        %856 = vmatpush.bf16.msra.mxu0 0
        %857 = vmatpush.bf16.msra.mxu0 0
        %858 = vmatpush.bf16.msra.mxu0 0
        %859 = vmatpush.bf16.msra.mxu0 0
        %860 = vmatpush.bf16.msra.mxu0 0
        %861 = vmatpush.bf16.msra.mxu0 0
        %862 = vmatpush.bf16.msra.mxu0 %v853
        %863 = vmatmul.bf16.gmra.mxu0 %v849
        %v864 = vpop.f32.mrf.mxu0
        %v865 = vadd.f32 0.0, %v864
        %v866 = vpop.f32.mrf.mxu0
        %867 = vdwg.mxu0
        %v868 = vpack.c.bf16 %v865, %v865
        %v869 = vld [vmem:[#allocation13] sm:$0xf]
        %v871 = vunpack.c.l.b16 %v733
        %v872 = vpack.c.b16 %v871, %v871
        %873 = vrot.lane.b32.xlu0 %v872, 120
        %v874 = vpop.permute.xlu0 %873
        %v876 = vunpack.c.l.b16 %v770
        %v877 = vpack.c.b16 %v876, %v876
        %878 = vrot.lane.b32.xlu0 %v877, 120
        %v879 = vpop.permute.xlu0 %878
        %v881 = vsel %vm814, %v874, 0
        %v884 = vsel %vm814, %v879, 0
        %886 = vmatpush.bf16.xpose.msra.mxu0 0
        %887 = vmatpush.bf16.xpose.msra.mxu0 0
        %888 = vmatpush.bf16.xpose.msra.mxu0 0
        %889 = vmatpush.bf16.xpose.msra.mxu0 0
        %890 = vmatpush.bf16.xpose.msra.mxu0 0
        %891 = vmatpush.bf16.xpose.msra.mxu0 0
        %892 = vmatpush.bf16.xpose.msra.mxu0 0
        %893 = vmatpush.bf16.xpose.msra.mxu0 %v884
        %894 = vmatmul.bf16.gmra.mxu0 %v881
        %v895 = vpop.f32.mrf.mxu0
        %v896 = vadd.f32 0.0, %v895
        %v897 = vpop.f32.mrf.mxu0
        %898 = vdwg.mxu0
        %v899 = vmul.f32 %v896, 0.35355338
        %v900 = vadd.f32 %v899, %v813
        %v901 = vsel %vm814, %v900, -inf
        %902 = vmax.xlane.f32.xlu0 %v901
        %v903 = vpop.xlane.xlu0 %902
        %v904 = vsub.f32 %v900, %v903
        %v905 = vmul.f32 %v904, 1.442695
        %v906 = vpow.pop %v905
        %v907 = vsel %vm814, %v906, 0.0
        %908 = vadd.xlane.f32.xlu0 %v907
        %v909 = vpop.xlane.xlu0 %908
        %v910 = vrcp.pop %v909
        %v911 = vmul.f32 %v906, %v910
        %v912 = vpack.c.bf16 %v911, %v911
        %v914 = vunpack.c.l.b16 %v804
        %v915 = vpack.c.b16 %v914, %v914
        %916 = vrot.lane.b32.xlu0 %v915, 120
        %v917 = vpop.permute.xlu0 %916
        %v919 = vsel %vm814, %v912, 0
        %v922 = vsel %vm851, %v917, 0
        %924 = vmatpush.bf16.msra.mxu0 0
        %925 = vmatpush.bf16.msra.mxu0 0
        %926 = vmatpush.bf16.msra.mxu0 0
        %927 = vmatpush.bf16.msra.mxu0 0
        %928 = vmatpush.bf16.msra.mxu0 0
        %929 = vmatpush.bf16.msra.mxu0 0
        %930 = vmatpush.bf16.msra.mxu0 0
        %931 = vmatpush.bf16.msra.mxu0 %v922
        %932 = vmatmul.bf16.gmra.mxu0 %v919
        %v933 = vpop.f32.mrf.mxu0
        %v934 = vadd.f32 0.0, %v933
        %v935 = vpop.f32.mrf.mxu0
        %936 = vdwg.mxu0
        %v937 = vpack.c.bf16 %v934, %v934
        %v938 = vld [vmem:[#allocation13 + $0x4] sm:$0xf]
        %v940 = vsel %vm814, %v937, 0
        %v943 = vsel %vm851, %v938, 0
        %945 = vmatpush.bf16.msra.mxu0 0
        %946 = vmatpush.bf16.msra.mxu0 0
        %947 = vmatpush.bf16.msra.mxu0 0
        %948 = vmatpush.bf16.msra.mxu0 0
        %949 = vmatpush.bf16.msra.mxu0 0
        %950 = vmatpush.bf16.msra.mxu0 0
        %951 = vmatpush.bf16.msra.mxu0 0
        %952 = vmatpush.bf16.msra.mxu0 %v943
        %953 = vmatmul.bf16.gmra.mxu0 %v940
        %v954 = vpop.f32.mrf.mxu0
        %v955 = vadd.f32 0.0, %v954
        %v956 = vpop.f32.mrf.mxu0
        %957 = vdwg.mxu0
        %v959 = vsel %vm814, %v868, 0
        %v962 = vsel %vm851, %v869, 0
        %964 = vmatpush.bf16.msra.mxu0 0
        %965 = vmatpush.bf16.msra.mxu0 0
        %966 = vmatpush.bf16.msra.mxu0 0
        %967 = vmatpush.bf16.msra.mxu0 0
        %968 = vmatpush.bf16.msra.mxu0 0
        %969 = vmatpush.bf16.msra.mxu0 0
        %970 = vmatpush.bf16.msra.mxu0 0
        %971 = vmatpush.bf16.msra.mxu0 %v962
        %972 = vmatmul.bf16.gmra.mxu0 %v959
        %v973 = vpop.f32.mrf.mxu0
        %v974 = vadd.f32 %v955, %v973
        %v975 = vpop.f32.mrf.mxu0
        %976 = vdwg.mxu0
        %977 = vrot.lane.b32.xlu0 %v872, 112
        %v978 = vpop.permute.xlu0 %977
        %979 = vrot.lane.b32.xlu0 %v877, 112
        %v980 = vpop.permute.xlu0 %979
        %v982 = vsel %vm814, %v978, 0
        %v985 = vsel %vm814, %v980, 0
        %987 = vmatpush.bf16.xpose.msra.mxu0 0
        %988 = vmatpush.bf16.xpose.msra.mxu0 0
        %989 = vmatpush.bf16.xpose.msra.mxu0 0
        %990 = vmatpush.bf16.xpose.msra.mxu0 0
        %991 = vmatpush.bf16.xpose.msra.mxu0 0
        %992 = vmatpush.bf16.xpose.msra.mxu0 0
        %993 = vmatpush.bf16.xpose.msra.mxu0 0
        %994 = vmatpush.bf16.xpose.msra.mxu0 %v985
        %995 = vmatmul.bf16.gmra.mxu0 %v982
        %v996 = vpop.f32.mrf.mxu0
        %v997 = vadd.f32 0.0, %v996
        %v998 = vpop.f32.mrf.mxu0
        %999 = vdwg.mxu0
        %v1000 = vmul.f32 %v997, 0.35355338
        %v1001 = vadd.f32 %v1000, %v813
        %v1002 = vsel %vm814, %v1001, -inf
        %1003 = vmax.xlane.f32.xlu0 %v1002
        %v1004 = vpop.xlane.xlu0 %1003
        %v1005 = vsub.f32 %v1001, %v1004
        %v1006 = vmul.f32 %v1005, 1.442695
        %v1007 = vpow.pop %v1006
        %v1008 = vsel %vm814, %v1007, 0.0
        %1009 = vadd.xlane.f32.xlu0 %v1008
        %v1010 = vpop.xlane.xlu0 %1009
        %v1011 = vrcp.pop %v1010
        %v1012 = vmul.f32 %v1007, %v1011
        %v1013 = vpack.c.bf16 %v1012, %v1012
        %1014 = vrot.lane.b32.xlu0 %v915, 112
        %v1015 = vpop.permute.xlu0 %1014
        %v1017 = vsel %vm814, %v1013, 0
        %v1020 = vsel %vm851, %v1015, 0
        %1022 = vmatpush.bf16.msra.mxu0 0
        %1023 = vmatpush.bf16.msra.mxu0 0
        %1024 = vmatpush.bf16.msra.mxu0 0
        %1025 = vmatpush.bf16.msra.mxu0 0
        %1026 = vmatpush.bf16.msra.mxu0 0
        %1027 = vmatpush.bf16.msra.mxu0 0
        %1028 = vmatpush.bf16.msra.mxu0 0
        %1029 = vmatpush.bf16.msra.mxu0 %v1020
        %1030 = vmatmul.bf16.gmra.mxu0 %v1017
        %v1031 = vpop.f32.mrf.mxu0
        %v1032 = vadd.f32 0.0, %v1031
        %v1033 = vpop.f32.mrf.mxu0
        %1034 = vdwg.mxu0
        %v1035 = vpack.c.bf16 %v1032, %v1032
        %v1036 = vld [vmem:[#allocation13 + $0x8] sm:$0xf]
        %v1038 = vsel %vm814, %v1035, 0
        %v1041 = vsel %vm851, %v1036, 0
        %1043 = vmatpush.bf16.msra.mxu0 0
        %1044 = vmatpush.bf16.msra.mxu0 0
        %1045 = vmatpush.bf16.msra.mxu0 0
        %1046 = vmatpush.bf16.msra.mxu0 0
        %1047 = vmatpush.bf16.msra.mxu0 0
        %1048 = vmatpush.bf16.msra.mxu0 0
        %1049 = vmatpush.bf16.msra.mxu0 0
        %1050 = vmatpush.bf16.msra.mxu0 %v1041
        %1051 = vmatmul.bf16.gmra.mxu0 %v1038
        %v1052 = vpop.f32.mrf.mxu0
        %v1053 = vadd.f32 0.0, %v1052
        %v1054 = vpop.f32.mrf.mxu0
        %1055 = vdwg.mxu0
        %v1056 = vadd.f32 %v974, %v1053
        %1057 = vrot.lane.b32.xlu0 %v872, 104
        %v1058 = vpop.permute.xlu0 %1057
        %1059 = vrot.lane.b32.xlu0 %v877, 104
        %v1060 = vpop.permute.xlu0 %1059
        %v1062 = vsel %vm814, %v1058, 0
        %v1065 = vsel %vm814, %v1060, 0
        %1067 = vmatpush.bf16.xpose.msra.mxu0 0
        %1068 = vmatpush.bf16.xpose.msra.mxu0 0
        %1069 = vmatpush.bf16.xpose.msra.mxu0 0
        %1070 = vmatpush.bf16.xpose.msra.mxu0 0
        %1071 = vmatpush.bf16.xpose.msra.mxu0 0
        %1072 = vmatpush.bf16.xpose.msra.mxu0 0
        %1073 = vmatpush.bf16.xpose.msra.mxu0 0
        %1074 = vmatpush.bf16.xpose.msra.mxu0 %v1065
        %1075 = vmatmul.bf16.gmra.mxu0 %v1062
        %v1076 = vpop.f32.mrf.mxu0
        %v1077 = vadd.f32 0.0, %v1076
        %v1078 = vpop.f32.mrf.mxu0
        %1079 = vdwg.mxu0
        %v1080 = vmul.f32 %v1077, 0.35355338
        %v1081 = vadd.f32 %v1080, %v813
        %v1082 = vsel %vm814, %v1081, -inf
        %1083 = vmax.xlane.f32.xlu0 %v1082
        %v1084 = vpop.xlane.xlu0 %1083
        %v1085 = vsub.f32 %v1081, %v1084
        %v1086 = vmul.f32 %v1085, 1.442695
        %v1087 = vpow.pop %v1086
        %v1088 = vsel %vm814, %v1087, 0.0
        %1089 = vadd.xlane.f32.xlu0 %v1088
        %v1090 = vpop.xlane.xlu0 %1089
        %v1091 = vrcp.pop %v1090
        %v1092 = vmul.f32 %v1087, %v1091
        %v1093 = vpack.c.bf16 %v1092, %v1092
        %1094 = vrot.lane.b32.xlu0 %v915, 104
        %v1095 = vpop.permute.xlu0 %1094
        %v1097 = vsel %vm814, %v1093, 0
        %v1100 = vsel %vm851, %v1095, 0
        %1102 = vmatpush.bf16.msra.mxu0 0
        %1103 = vmatpush.bf16.msra.mxu0 0
        %1104 = vmatpush.bf16.msra.mxu0 0
        %1105 = vmatpush.bf16.msra.mxu0 0
        %1106 = vmatpush.bf16.msra.mxu0 0
        %1107 = vmatpush.bf16.msra.mxu0 0
        %1108 = vmatpush.bf16.msra.mxu0 0
        %1109 = vmatpush.bf16.msra.mxu0 %v1100
        %1110 = vmatmul.bf16.gmra.mxu0 %v1097
        %v1111 = vpop.f32.mrf.mxu0
        %v1112 = vadd.f32 0.0, %v1111
        %v1113 = vpop.f32.mrf.mxu0
        %1114 = vdwg.mxu0
        %v1115 = vpack.c.bf16 %v1112, %v1112
        %v1116 = vld [vmem:[#allocation13 + $0xc] sm:$0xf]
        %v1118 = vsel %vm814, %v1115, 0
        %v1121 = vsel %vm851, %v1116, 0
        %1123 = vmatpush.bf16.msra.mxu0 0
        %1124 = vmatpush.bf16.msra.mxu0 0
        %1125 = vmatpush.bf16.msra.mxu0 0
        %1126 = vmatpush.bf16.msra.mxu0 0
        %1127 = vmatpush.bf16.msra.mxu0 0
        %1128 = vmatpush.bf16.msra.mxu0 0
        %1129 = vmatpush.bf16.msra.mxu0 0
        %1130 = vmatpush.bf16.msra.mxu0 %v1121
        %1131 = vmatmul.bf16.gmra.mxu0 %v1118
        %v1132 = vpop.f32.mrf.mxu0
        %v1133 = vadd.f32 0.0, %v1132
        %v1134 = vpop.f32.mrf.mxu0
        %1135 = vdwg.mxu0
        %v1136 = vadd.f32 %v1056, %v1133
        %v1137 = vadd.f32 %v595, %v1136
        %v1138 = vld [vmem:[#allocation15] sm:$0x1]
        %v1140 = vperm.slane %v1138, 0
        %v1142 = vadd.f32 %v1137, %v1140
        %1143 = vst.msk [vmem:[%s593] sm:$0xff] %vm598, %v1142
        %p1144 = scmp.lt.s32.totalorder %s32, 1
        %s1145 = scalar_select %p1144, %s32, 1
        %p1146 = scmp.lt.s32.totalorder %s33, 0
        %s1147 = scalar_select %p1146, %s33, 0
        %s1148 = sadd.s32 %s1147, %s1145
        %s1149 = smul.addr %s1148, 8
        %s1150 = scalar_lea.vmem %s12, %s1149
        // Predicated region
        $region105: #{decoder_forward.7} parent=67 // pred_check
          %p1151 = pneg %p324
        $region106: #{decoder_forward.7} parent=67 // pred_check_branch
          %1153 = sbr.rel (%p1151) target = $region108
        $region107: #{decoder_forward.7} parent=67 // pred_region
          _
        $region108: #{decoder_forward.7} parent=67 // pred_fallthru
          _
      $region68: #{decoder_forward.7} parent=5 // pred_fallthru
        _
      %p1154 = scmp.le.s32.totalorder 2, %s23
      // Predicated region
      $region109: #{decoder_forward.7} parent=5 // pred_check
        %p1155 = pneg %p1154
      $region110: #{decoder_forward.7} parent=5 // pred_check_branch
        %1157 = sbr.rel (%p1155) target = $region112
      $region111: #{decoder_forward.7} parent=5 // pred_region
        %s1158 = ssub.s32 %s23, 2
        // Predicated region
        $region113: #{decoder_forward.7} parent=111 // pred_check
          %p1159 = pneg %p330
        $region114: #{decoder_forward.7} parent=111 // pred_check_branch
          %1161 = sbr.rel (%p1159) target = $region116
        $region115: #{decoder_forward.7} parent=111 // pred_region
          %p1162 = scmp.lt.s32.totalorder %s34, 1
          %s1163 = scalar_select %p1162, %s34, 1
          %p1164 = scmp.lt.s32.totalorder %s35, 0
          %s1165 = scalar_select %p1164, %s35, 0
          %s1166 = sadd.s32 %s1165, %s1163
          %s1167 = smul.addr %s1166, 8
          %s1168 = scalar_lea.vmem %s12, %s1167
        $region116: #{decoder_forward.7} parent=111 // pred_fallthru
          _
      $region112: #{decoder_forward.7} parent=5 // pred_fallthru
        _
    $region6: #{decoder_forward.7} parent=1 // loop_footer
      %s27 = sadd.s32 1, %s23
    $region7: #{decoder_forward.7} parent=1 // loop_footer_branch
      %22 = sbr.rel target = $region3
    $region8: #{decoder_forward.7} parent=1 // loop_exit
      _
    %1169 = vsyncpa [#allocation3], 1
    %s1170 = scalar_lea.sflag [#allocation3], 1
    %1171 = vsyncpa %s1170, 1
    %1172 = vsyncpa [#allocation5], 1
    %1173 = vsyncpa [#allocation8], 1
    %1174 = vsyncpa [#allocation11], 1
    %1175 = vsyncpa [#allocation14], 1

// kernel: decoder_forward.9
$region0: #{decoder_forward.9}
  #allocation0 [shape = 'u32[]', space=smem, size = 0x4, offset = 0x4, fixed_abs, tag = 'smem constant byte address 0x4 - core index']
  #allocation1 [shape = 'u32[72,128]{1,0:T(1,128)}', space=vmem, size = 0x9000, scoped, tag = 'internal scratch']
  %s0 = inlined_call_operand.vmem [shape: f32[16,32], index: 0, kind: input, shape index: {}]
  %s1 = inlined_call_operand.vmem [shape: f32[1,32], index: 1, kind: input, shape index: {}]
  %s2 = inlined_call_operand.vmem [shape: f32[1,32], index: 2, kind: input, shape index: {}]
  %s3 = inlined_call_operand.vmem [shape: bf16[32,64], index: 3, kind: input, shape index: {}]
  %s4 = inlined_call_operand.hbm [shape: f32[1,64], index: 4, kind: input, shape index: {}]
  %s5 = inlined_call_operand.vmem [shape: bf16[64,32], index: 5, kind: input, shape index: {}]
  %s6 = inlined_call_operand.hbm [shape: f32[1,32], index: 6, kind: input, shape index: {}]
  %s7 = inlined_call_operand.vmem [shape: f32[16,32], index: 7, kind: output, shape index: {}]
  %s8 = sld [smem:[#allocation0]]
  $region46: #{decoder_forward.9} parent=0
    _
  %s10 = ssub.s32 1, %s8
  %s11 = scalar_select 0, %s10, %s8
  $region1: #{decoder_forward.9} parent=0
    #allocation2 [shape = 'u8[512]{0}', space=vmem, size = 0x400, scoped, tag = 'input window, operand 4, single buffered']
    #allocation3 [shape = 's32[1]{0}', space=sflag, size = 0x4, scoped, tag = 'scoped memory for decoder_forward.9']
    #allocation4 [shape = 'u8[512]{0}', space=vmem, size = 0x400, scoped, tag = 'input window, operand 6, single buffered']
    #allocation5 [shape = 's32[1]{0}', space=sflag, size = 0x4, scoped, tag = 'scoped memory for decoder_forward.9']
    %12 = vsyncpa [#allocation3], 0
    %13 = vsyncpa [#allocation5], 0
    // Predicated region
    $region2: #{decoder_forward.9} parent=1 // pred_check
      _
    $region3: #{decoder_forward.9} parent=1 // pred_check_branch
      %15 = sbr.rel (0) target = $region5
    $region4: #{decoder_forward.9} parent=1 // pred_region
      _
    $region5: #{decoder_forward.9} parent=1 // pred_fallthru
      _
    // Predicated region
    $region6: #{decoder_forward.9} parent=1 // pred_check
      _
    $region7: #{decoder_forward.9} parent=1 // pred_check_branch
      %17 = sbr.rel (0) target = $region9
    $region8: #{decoder_forward.9} parent=1 // pred_region
      _
    $region9: #{decoder_forward.9} parent=1 // pred_fallthru
      _
    // Predicated region
    $region10: #{decoder_forward.9} parent=1 // pred_check
      _
    $region11: #{decoder_forward.9} parent=1 // pred_check_branch
      %19 = sbr.rel (0) target = $region13
    $region12: #{decoder_forward.9} parent=1 // pred_region
      _
    $region13: #{decoder_forward.9} parent=1 // pred_fallthru
      _
    // Predicated region
    $region14: #{decoder_forward.9} parent=1 // pred_check
      _
    $region15: #{decoder_forward.9} parent=1 // pred_check_branch
      %21 = sbr.rel (0) target = $region17
    $region16: #{decoder_forward.9} parent=1 // pred_region
      _
    $region17: #{decoder_forward.9} parent=1 // pred_fallthru
      _
    // Predicated region
    $region18: #{decoder_forward.9} parent=1 // pred_check
      _
    $region19: #{decoder_forward.9} parent=1 // pred_check_branch
      %23 = sbr.rel (0) target = $region21
    $region20: #{decoder_forward.9} parent=1 // pred_region
      %25 = vsyncadd [#allocation3], 0
      %s27 = sshll.u32 %s4, 4
      %s28 = int_to_ptr.hbm [resolvable:$true] %s27
      %s29 = sshll.u32 [#allocation2], 4
      %s30 = int_to_ptr.vmem [resolvable:$true] %s29
      %32 = dma.hbm_to_vmem [thread:$0]  %s28, 16, %s30, [#allocation3]
    $region21: #{decoder_forward.9} parent=1 // pred_fallthru
      _
    // Predicated region
    $region22: #{decoder_forward.9} parent=1 // pred_check
      _
    $region23: #{decoder_forward.9} parent=1 // pred_check_branch
      %34 = sbr.rel (0) target = $region25
    $region24: #{decoder_forward.9} parent=1 // pred_region
      _
    $region25: #{decoder_forward.9} parent=1 // pred_fallthru
      _
    // Predicated region
    $region26: #{decoder_forward.9} parent=1 // pred_check
      _
    $region27: #{decoder_forward.9} parent=1 // pred_check_branch
      %36 = sbr.rel (0) target = $region29
    $region28: #{decoder_forward.9} parent=1 // pred_region
      %38 = vsyncadd [#allocation5], 0
      %s40 = sshll.u32 %s6, 4
      %s41 = int_to_ptr.hbm [resolvable:$true] %s40
      %s42 = sshll.u32 [#allocation4], 4
      %s43 = int_to_ptr.vmem [resolvable:$true] %s42
      %45 = dma.hbm_to_vmem [thread:$0]  %s41, 16, %s43, [#allocation5]
    $region29: #{decoder_forward.9} parent=1 // pred_fallthru
      _
    // Predicated region
    $region30: #{decoder_forward.9} parent=1 // pred_check
      _
    $region31: #{decoder_forward.9} parent=1 // pred_check_branch
      %47 = sbr.rel (0) target = $region33
    $region32: #{decoder_forward.9} parent=1 // pred_region
      %49 = dma.done [#allocation3], 16
    $region33: #{decoder_forward.9} parent=1 // pred_fallthru
      _
    // Predicated region
    $region34: #{decoder_forward.9} parent=1 // pred_check
      _
    $region35: #{decoder_forward.9} parent=1 // pred_check_branch
      %51 = sbr.rel (0) target = $region37
    $region36: #{decoder_forward.9} parent=1 // pred_region
      %53 = dma.done [#allocation5], 16
    $region37: #{decoder_forward.9} parent=1 // pred_fallthru
      _
    %v55 = vld [vmem:[%s0] sm:$0xff]
    %v56 = vld [vmem:[%s0 + $0x8] sm:$0xff]
    %v57 = vld [vmem:[%s1] sm:$0x1]
    %v58 = vld [vmem:[%s2] sm:$0x1]
    %vm59 = vcmask 261120
    %v60 = vsel %vm59, %v55, 0.0
    %61 = vadd.xlane.f32.xlu0 %v60
    %v62 = vpop.xlane.xlu0 %61
    %v63 = vsel %vm59, %v56, 0.0
    %64 = vadd.xlane.f32.xlu0 %v63
    %v65 = vpop.xlane.xlu0 %64
    %v66 = vrcp.pop 32.0
    %v67 = vmul.f32 32.0, %v66
    %v68 = vsub.f32 1.0, %v67
    %v69 = vmul.f32 %v66, %v68
    %v70 = vadd.f32 %v66, %v69
    %vm71 = vweird.f32 %v66
    %v72 = vsel %vm71, %v66, %v70
    %v73 = vmul.f32 %v62, %v72
    %v74 = vmul.f32 %v65, %v72
    %v75 = vsub.f32 %v55, %v73
    %v76 = vsub.f32 %v56, %v74
    %v77 = vmul.f32 %v75, %v75
    %v78 = vmul.f32 %v76, %v76
    %v79 = vsel %vm59, %v77, 0.0
    %80 = vadd.xlane.f32.xlu0 %v79
    %v81 = vpop.xlane.xlu0 %80
    %v82 = vsel %vm59, %v78, 0.0
    %83 = vadd.xlane.f32.xlu0 %v82
    %v84 = vpop.xlane.xlu0 %83
    %v85 = vmul.f32 %v81, 0.032258064
    %v86 = vmul.f32 %v84, 0.032258064
    %v87 = vrsqrt.pop %v85
    %v88 = vmul.f32 %v87, %v85
    %v89 = vmul.f32 %v88, %v87
    %v90 = vmul.f32 0.5, %v89
    %v91 = vsub.f32 1.5, %v90
    %v92 = vmul.f32 %v87, %v91
    %v93 = vmul.f32 %v85, %v92
    %vm94 = vcmp.eq.f32.partialorder %v85, inf
    %v95 = vsel %vm94, %v85, %v93
    %vm96 = vcmp.eq.f32.partialorder %v85, 0.0
    %v97 = vand.u32 %v85, 2147483648
    %v98 = vsel %vm96, %v97, %v95
    %v99 = vrsqrt.pop %v86
    %v100 = vmul.f32 %v99, %v86
    %v101 = vmul.f32 %v100, %v99
    %v102 = vmul.f32 0.5, %v101
    %v103 = vsub.f32 1.5, %v102
    %v104 = vmul.f32 %v99, %v103
    %v105 = vmul.f32 %v86, %v104
    %vm106 = vcmp.eq.f32.partialorder %v86, inf
    %v107 = vsel %vm106, %v86, %v105
    %vm108 = vcmp.eq.f32.partialorder %v86, 0.0
    %v109 = vand.u32 %v86, 2147483648
    %v110 = vsel %vm108, %v109, %v107
    %v112 = vperm.slane %v57, 0
    %v114 = vmul.f32 %v112, %v75
    %v115 = vmul.f32 %v112, %v76
    %v116 = vadd.f32 %v98, 1e-06
    %v117 = vadd.f32 %v110, 1e-06
    %v118 = vrcp.pop %v116
    %v119 = vmul.f32 %v116, %v118
    %v120 = vsub.f32 1.0, %v119
    %v121 = vmul.f32 %v118, %v120
    %v122 = vadd.f32 %v118, %v121
    %vm123 = vweird.f32 %v116
    %vm124 = vweird.f32 %v118
    %vm125 = vmor %vm123, %vm124
    %v126 = vsel %vm125, %v118, %v122
    %v127 = vand.u32 2147483647, %v116
    %vm128 = vcmp.eq.f32.partialorder %v127, 8.507059e+37
    %v129 = vand.u32 %v116, 2147483648
    %v130 = vor.u32 1.1754944e-38, %v129
    %v131 = vsel %vm128, %v130, %v126
    %v132 = vmul.f32 1.0, %v131
    %v133 = vrcp.pop %v117
    %v134 = vmul.f32 %v117, %v133
    %v135 = vsub.f32 1.0, %v134
    %v136 = vmul.f32 %v133, %v135
    %v137 = vadd.f32 %v133, %v136
    %vm138 = vweird.f32 %v117
    %vm139 = vweird.f32 %v133
    %vm140 = vmor %vm138, %vm139
    %v141 = vsel %vm140, %v133, %v137
    %v142 = vand.u32 2147483647, %v117
    %vm143 = vcmp.eq.f32.partialorder %v142, 8.507059e+37
    %v144 = vand.u32 %v117, 2147483648
    %v145 = vor.u32 1.1754944e-38, %v144
    %v146 = vsel %vm143, %v145, %v141
    %v147 = vmul.f32 1.0, %v146
    %v148 = vmul.f32 %v114, %v132
    %v149 = vmul.f32 %v115, %v147
    %v151 = vperm.slane %v58, 0
    %v153 = vadd.f32 %v148, %v151
    %v154 = vadd.f32 %v149, %v151
    %v155 = vpack.c.bf16 %v154, %v153
    %v156 = vld [vmem:[%s3] sm:$0xf]
    %v157 = vld [vmem:[%s3 + $0x4] sm:$0xf]
    %v158 = vld [vmem:[%s3 + $0x8] sm:$0xf]
    %v159 = vld [vmem:[%s3 + $0xc] sm:$0xf]
    %v160 = vld [vmem:[#allocation2] sm:$0x1]
    %v162 = vperm.slane %v160, 0
    %v168 = vunpack.c.l.b16 %v156
    %v169 = vunpack.c.l.b16 %v157
    %v170 = vunpack.c.l.b16 %v158
    %v171 = vunpack.c.l.b16 %v159
    %v172 = vpack.c.b16 %v169, %v168
    %v173 = vpack.c.b16 %v171, %v170
    %v177 = vsel %vm59, %v155, 0
    %179 = vmatpush.bf16.msra.mxu0 0
    %180 = vmatpush.bf16.msra.mxu0 0
    %181 = vmatpush.bf16.msra.mxu0 0
    %182 = vmatpush.bf16.msra.mxu0 0
    %183 = vmatpush.bf16.msra.mxu0 0
    %184 = vmatpush.bf16.msra.mxu0 0
    %185 = vmatpush.bf16.msra.mxu0 %v173
    %186 = vmatpush.bf16.msra.mxu0 %v172
    %187 = vmatmul.bf16.gmra.mxu0 %v177
    %v188 = vpop.f32.mrf.mxu0
    %v189 = vadd.f32 %v162, %v188
    %v190 = vpop.f32.mrf.mxu0
    %v191 = vadd.f32 %v162, %v190
    %192 = vdwg.mxu0
    %v193 = vmax.f32 %v189, 0.0
    %v194 = vmax.f32 %v191, 0.0
    %v195 = vpack.c.bf16 %v194, %v193
    %v196 = vld [vmem:[%s5] sm:$0xf]
    %v197 = vld [vmem:[%s5 + $0x4] sm:$0xf]
    %v198 = vld [vmem:[%s5 + $0x8] sm:$0xf]
    %v199 = vld [vmem:[%s5 + $0xc] sm:$0xf]
    %v200 = vld [vmem:[%s5 + $0x10] sm:$0xf]
    %v201 = vld [vmem:[%s5 + $0x14] sm:$0xf]
    %v202 = vld [vmem:[%s5 + $0x18] sm:$0xf]
    %v203 = vld [vmem:[%s5 + $0x1c] sm:$0xf]
    %v204 = vld [vmem:[#allocation4] sm:$0x1]
    %v206 = vperm.slane %v204, 0
    %v216 = vunpack.c.l.b16 %v196
    %v217 = vunpack.c.l.b16 %v197
    %v218 = vunpack.c.l.b16 %v198
    %v219 = vunpack.c.l.b16 %v199
    %v220 = vunpack.c.l.b16 %v200
    %v221 = vunpack.c.l.b16 %v201
    %v222 = vunpack.c.l.b16 %v202
    %v223 = vunpack.c.l.b16 %v203
    %v224 = vpack.c.b16 %v217, %v216
    %v225 = vpack.c.b16 %v219, %v218
    %v226 = vpack.c.b16 %v221, %v220
    %v227 = vpack.c.b16 %v223, %v222
    %vm232 = vcmask 523264
    %v234 = vsel %vm232, %v195, 0
    %236 = vmatpush.bf16.msra.mxu0 0
    %237 = vmatpush.bf16.msra.mxu0 0
    %238 = vmatpush.bf16.msra.mxu0 0
    %239 = vmatpush.bf16.msra.mxu0 0
    %240 = vmatpush.bf16.msra.mxu0 %v227
    %241 = vmatpush.bf16.msra.mxu0 %v226
    %242 = vmatpush.bf16.msra.mxu0 %v225
    %243 = vmatpush.bf16.msra.mxu0 %v224
    %244 = vmatmul.bf16.gmra.mxu0 %v234
    %v245 = vpop.f32.mrf.mxu0
    %v246 = vadd.f32 %v206, %v245
    %v247 = vpop.f32.mrf.mxu0
    %v248 = vadd.f32 %v206, %v247
    %249 = vdwg.mxu0
    %v250 = vadd.f32 %v55, %v246
    %v251 = vadd.f32 %v56, %v248
    %252 = vst.msk [vmem:[%s7] sm:$0xff] %vm59, %v250
    %253 = vst.msk [vmem:[%s7 + $0x8] sm:$0xff] %vm59, %v251
    // Predicated region
    $region38: #{decoder_forward.9} parent=1 // pred_check
      _
    $region39: #{decoder_forward.9} parent=1 // pred_check_branch
      %255 = sbr.rel (0) target = $region41
    $region40: #{decoder_forward.9} parent=1 // pred_region
      _
    $region41: #{decoder_forward.9} parent=1 // pred_fallthru
      _
    // Predicated region
    $region42: #{decoder_forward.9} parent=1 // pred_check
      _
    $region43: #{decoder_forward.9} parent=1 // pred_check_branch
      %257 = sbr.rel (0) target = $region45
    $region44: #{decoder_forward.9} parent=1 // pred_region
      _
    $region45: #{decoder_forward.9} parent=1 // pred_fallthru
      _
    %258 = vsyncpa [#allocation3], 1
    %259 = vsyncpa [#allocation5], 1

// kernel: decoder_forward.8
$region0: #{decoder_forward.8}
  #allocation0 [shape = 'u32[]', space=smem, size = 0x4, offset = 0x4, fixed_abs, tag = 'smem constant byte address 0x4 - core index']
  #allocation1 [shape = 'u32[72,128]{1,0:T(1,128)}', space=vmem, size = 0x9000, scoped, tag = 'internal scratch']
  %s0 = inlined_call_operand.vmem [shape: f32[2,8,32], index: 0, kind: input, shape index: {}]
  %s1 = inlined_call_operand.vmem [shape: f32[2,8,32], index: 1, kind: input, shape index: {}]
  %s2 = inlined_call_operand.vmem [shape: f32[2,1,8], index: 2, kind: input, shape index: {}]
  %s3 = inlined_call_operand.hbm [shape: f32[1,32], index: 3, kind: input, shape index: {}]
  %s4 = inlined_call_operand.hbm [shape: f32[1,32], index: 4, kind: input, shape index: {}]
  %s5 = inlined_call_operand.hbm [shape: bf16[32,32], index: 5, kind: input, shape index: {}]
  %s6 = inlined_call_operand.hbm [shape: f32[1,32], index: 6, kind: input, shape index: {}]
  %s7 = inlined_call_operand.hbm [shape: bf16[32,32], index: 7, kind: input, shape index: {}]
  %s8 = inlined_call_operand.hbm [shape: f32[1,32], index: 8, kind: input, shape index: {}]
  %s9 = inlined_call_operand.hbm [shape: bf16[32,32], index: 9, kind: input, shape index: {}]
  %s10 = inlined_call_operand.hbm [shape: f32[1,32], index: 10, kind: input, shape index: {}]
  %s11 = inlined_call_operand.hbm [shape: bf16[32,32], index: 11, kind: input, shape index: {}]
  %s12 = inlined_call_operand.hbm [shape: f32[1,32], index: 12, kind: input, shape index: {}]
  %s13 = inlined_call_operand.vmem [shape: f32[2,8,32], index: 13, kind: output, shape index: {}]
  %s14 = sld [smem:[#allocation0]]
  $region125: #{decoder_forward.8} parent=0
    _
  %s16 = ssub.s32 1, %s14
  %s17 = scalar_select 0, %s16, %s14
  $region1: #{decoder_forward.8} parent=0
    #allocation2 [shape = 'u8[512]{0}', space=vmem, size = 0x400, scoped, tag = 'input window, operand 3, single buffered']
    #allocation3 [shape = 's32[2]{0}', space=sflag, size = 0x8, scoped, tag = 'scoped memory for decoder_forward.8']
    #allocation4 [shape = 'u8[512]{0}', space=vmem, size = 0x400, scoped, tag = 'input window, operand 4, single buffered']
    #allocation5 [shape = 's32[1]{0}', space=sflag, size = 0x4, scoped, tag = 'scoped memory for decoder_forward.8']
    #allocation6 [shape = 'u8[8192]{0}', space=vmem, size = 0x2000, scoped, tag = 'input window, operand 5, single buffered']
    #allocation7 [shape = 'u8[512]{0}', space=vmem, size = 0x400, scoped, tag = 'input window, operand 6, single buffered']
    #allocation8 [shape = 's32[1]{0}', space=sflag, size = 0x4, scoped, tag = 'scoped memory for decoder_forward.8']
    #allocation9 [shape = 'u8[8192]{0}', space=vmem, size = 0x2000, scoped, tag = 'input window, operand 7, single buffered']
    #allocation10 [shape = 'u8[512]{0}', space=vmem, size = 0x400, scoped, tag = 'input window, operand 8, single buffered']
    #allocation11 [shape = 's32[1]{0}', space=sflag, size = 0x4, scoped, tag = 'scoped memory for decoder_forward.8']
    #allocation12 [shape = 'u8[8192]{0}', space=vmem, size = 0x2000, scoped, tag = 'input window, operand 9, single buffered']
    #allocation13 [shape = 'u8[512]{0}', space=vmem, size = 0x400, scoped, tag = 'input window, operand 10, single buffered']
    #allocation14 [shape = 's32[1]{0}', space=sflag, size = 0x4, scoped, tag = 'scoped memory for decoder_forward.8']
    #allocation15 [shape = 'u8[8192]{0}', space=vmem, size = 0x2000, scoped, tag = 'input window, operand 11, single buffered']
    #allocation16 [shape = 'u8[512]{0}', space=vmem, size = 0x400, scoped, tag = 'input window, operand 12, single buffered']
    #allocation17 [shape = 's32[1]{0}', space=sflag, size = 0x4, scoped, tag = 'scoped memory for decoder_forward.8']
    %18 = vsyncpa [#allocation3], 0
    %19 = vsyncpa [#allocation5], 0
    %20 = vsyncpa [#allocation8], 0
    %21 = vsyncpa [#allocation11], 0
    %22 = vsyncpa [#allocation14], 0
    %23 = vsyncpa [#allocation17], 0
    loop: start=0, step=1, limit=4
    $region2: #{decoder_forward.8} parent=1 // loop_pre_header
      _
    $region3: #{decoder_forward.8} parent=1 // loop_header
      %s25 = sphi 0, %s29
      %p26 = scmp.ge.s32.totalorder %s25, 4
      %s32 = sphi 0, %s44
      %s33 = sphi 0, %s40
      %s34 = sphi 0, %s32
      %s35 = sphi 0, %s33
      %s36 = sphi 0, %s34
      %s37 = sphi 0, %s35
      %s49 = sphi 0, %s51
      %s52 = sphi 0, %s49
      %s53 = sphi 0, %s52
      %s69 = sphi 0, %s53
      %s75 = sphi 0, %s77
      %s78 = sphi 0, %s75
      %s79 = sphi 0, %s78
      %s95 = sphi 0, %s79
      %s101 = sphi 0, %s103
      %s104 = sphi 0, %s101
      %s105 = sphi 0, %s104
      %s121 = sphi 0, %s105
      %s125 = sphi 0, %s125
      %s127 = sphi 0, %s125
      %s128 = sphi 0, %s127
      %s142 = sphi 0, %s128
      %s146 = sphi 0, %s146
      %s148 = sphi 0, %s146
      %s149 = sphi 0, %s148
      %s163 = sphi 0, %s149
      %s167 = sphi 0, %s167
      %s169 = sphi 0, %s167
      %s170 = sphi 0, %s169
      %s184 = sphi 0, %s170
      %s188 = sphi 0, %s188
      %s190 = sphi 0, %s188
      %s191 = sphi 0, %s190
      %s205 = sphi 0, %s191
      %s209 = sphi 0, %s209
      %s211 = sphi 0, %s209
      %s212 = sphi 0, %s211
      %s226 = sphi 0, %s212
      %s230 = sphi 0, %s230
      %s232 = sphi 0, %s230
      %s233 = sphi 0, %s232
      %s247 = sphi 0, %s233
      %s251 = sphi 0, %s251
      %s253 = sphi 0, %s251
      %s254 = sphi 0, %s253
      %s268 = sphi 0, %s254
      %s272 = sphi 0, %s272
      %s274 = sphi 0, %s272
      %s275 = sphi 0, %s274
      %s289 = sphi 0, %s275
      %s293 = sphi 0, %s293
      %s295 = sphi 0, %s293
      %s296 = sphi 0, %s295
      %s310 = sphi 0, %s296
      %s314 = sphi 0, %s314
      %s316 = sphi 0, %s314
      %s317 = sphi 0, %s316
      %s331 = sphi 0, %s317
      %s339 = sphi 0, %s341
      %s342 = sphi 0, %s339
      %s343 = sphi 0, %s342
      %s359 = sphi 0, %s343
    $region4: #{decoder_forward.8} parent=1 // loop_header_branch
      %28 = sbr.rel (%p26) target = $region8
    $region5: #{decoder_forward.8} parent=1 // loop_body
      %s30 = ssub.s32 %s25, 1
      %s31 = ssub.s32 %s25, 2
      %s38 = sadd.s32 1, %s33
      %p39 = scmp.ge.s32.totalorder %s38, 1
      %s40 = scalar_select %p39, 0, %s38
      %s41 = sadd.s32 1, %s32
      %s42 = scalar_select %p39, %s41, %s32
      %p43 = scmp.ge.s32.totalorder %s42, 2
      %s44 = scalar_select %p43, 0, %s42
      %s45 = ssub.s32 %s32, %s44
      %s46 = ssub.s32 %s33, %s40
      %s47 = sor.u32 %s45, %s46
      %p48 = scmp.eq.s32.totalorder %s47, 0
      %s50 = sadd.s32 %s49, 1
      %s51 = scalar_select %p48, %s49, %s50
      %p54 = pneg %p48
      %p55 = scmp.eq.s32.totalorder %s25, 1
      %p56 = por %p54, %p55
      %p57 = scmp.ne.s32.totalorder %s49, %s52
      %p58 = scmp.eq.s32.totalorder %s25, 0
      %p59 = por %p57, %p58
      %p60 = scmp.ne.s32.totalorder %s49, %s52
      %p61 = scmp.eq.s32.totalorder %s30, 1
      %p62 = por %p60, %p61
      %p63 = scmp.ne.s32.totalorder %s52, %s53
      %p64 = scmp.eq.s32.totalorder %s30, 0
      %p65 = por %p63, %p64
      %p66 = scmp.ne.s32.totalorder %s52, %s53
      %p67 = scmp.eq.s32.totalorder %s31, 1
      %p68 = por %p66, %p67
      %p70 = scmp.ne.s32.totalorder %s53, %s69
      %p71 = scmp.eq.s32.totalorder %s31, 0
      %p72 = por %p70, %p71
      %s73 = ssub.s32 %s32, %s44
      %p74 = scmp.eq.s32.totalorder %s73, 0
      %s76 = sadd.s32 %s75, 1
      %s77 = scalar_select %p74, %s75, %s76
      %p80 = pneg %p74
      %p81 = scmp.eq.s32.totalorder %s25, 1
      %p82 = por %p80, %p81
      %p83 = scmp.ne.s32.totalorder %s75, %s78
      %p84 = scmp.eq.s32.totalorder %s25, 0
      %p85 = por %p83, %p84
      %p86 = scmp.ne.s32.totalorder %s75, %s78
      %p87 = scmp.eq.s32.totalorder %s30, 1
      %p88 = por %p86, %p87
      %p89 = scmp.ne.s32.totalorder %s78, %s79
      %p90 = scmp.eq.s32.totalorder %s30, 0
      %p91 = por %p89, %p90
      %p92 = scmp.ne.s32.totalorder %s78, %s79
      %p93 = scmp.eq.s32.totalorder %s31, 1
      %p94 = por %p92, %p93
      %p96 = scmp.ne.s32.totalorder %s79, %s95
      %p97 = scmp.eq.s32.totalorder %s31, 0
      %p98 = por %p96, %p97
      %s99 = ssub.s32 %s32, %s44
      %p100 = scmp.eq.s32.totalorder %s99, 0
      %s102 = sadd.s32 %s101, 1
      %s103 = scalar_select %p100, %s101, %s102
      %p106 = pneg %p100
      %p107 = scmp.eq.s32.totalorder %s25, 1
      %p108 = por %p106, %p107
      %p109 = scmp.ne.s32.totalorder %s101, %s104
      %p110 = scmp.eq.s32.totalorder %s25, 0
      %p111 = por %p109, %p110
      %p112 = scmp.ne.s32.totalorder %s101, %s104
      %p113 = scmp.eq.s32.totalorder %s30, 1
      %p114 = por %p112, %p113
      %p115 = scmp.ne.s32.totalorder %s104, %s105
      %p116 = scmp.eq.s32.totalorder %s30, 0
      %p117 = por %p115, %p116
      %p118 = scmp.ne.s32.totalorder %s104, %s105
      %p119 = scmp.eq.s32.totalorder %s31, 1
      %p120 = por %p118, %p119
      %p122 = scmp.ne.s32.totalorder %s105, %s121
      %p123 = scmp.eq.s32.totalorder %s31, 0
      %p124 = por %p122, %p123
      %s126 = sadd.s32 %s125, 1
      %p129 = scmp.eq.s32.totalorder %s25, 1
      %p130 = scmp.ne.s32.totalorder %s125, %s127
      %p131 = scmp.eq.s32.totalorder %s25, 0
      %p132 = por %p130, %p131
      %p133 = scmp.ne.s32.totalorder %s125, %s127
      %p134 = scmp.eq.s32.totalorder %s30, 1
      %p135 = por %p133, %p134
      %p136 = scmp.ne.s32.totalorder %s127, %s128
      %p137 = scmp.eq.s32.totalorder %s30, 0
      %p138 = por %p136, %p137
      %p139 = scmp.ne.s32.totalorder %s127, %s128
      %p140 = scmp.eq.s32.totalorder %s31, 1
      %p141 = por %p139, %p140
      %p143 = scmp.ne.s32.totalorder %s128, %s142
      %p144 = scmp.eq.s32.totalorder %s31, 0
      %p145 = por %p143, %p144
      %s147 = sadd.s32 %s146, 1
      %p150 = scmp.eq.s32.totalorder %s25, 1
      %p151 = scmp.ne.s32.totalorder %s146, %s148
      %p152 = scmp.eq.s32.totalorder %s25, 0
      %p153 = por %p151, %p152
      %p154 = scmp.ne.s32.totalorder %s146, %s148
      %p155 = scmp.eq.s32.totalorder %s30, 1
      %p156 = por %p154, %p155
      %p157 = scmp.ne.s32.totalorder %s148, %s149
      %p158 = scmp.eq.s32.totalorder %s30, 0
      %p159 = por %p157, %p158
      %p160 = scmp.ne.s32.totalorder %s148, %s149
      %p161 = scmp.eq.s32.totalorder %s31, 1
      %p162 = por %p160, %p161
      %p164 = scmp.ne.s32.totalorder %s149, %s163
      %p165 = scmp.eq.s32.totalorder %s31, 0
      %p166 = por %p164, %p165
      %s168 = sadd.s32 %s167, 1
      %p171 = scmp.eq.s32.totalorder %s25, 1
      %p172 = scmp.ne.s32.totalorder %s167, %s169
      %p173 = scmp.eq.s32.totalorder %s25, 0
      %p174 = por %p172, %p173
      %p175 = scmp.ne.s32.totalorder %s167, %s169
      %p176 = scmp.eq.s32.totalorder %s30, 1
      %p177 = por %p175, %p176
      %p178 = scmp.ne.s32.totalorder %s169, %s170
      %p179 = scmp.eq.s32.totalorder %s30, 0
      %p180 = por %p178, %p179
      %p181 = scmp.ne.s32.totalorder %s169, %s170
      %p182 = scmp.eq.s32.totalorder %s31, 1
      %p183 = por %p181, %p182
      %p185 = scmp.ne.s32.totalorder %s170, %s184
      %p186 = scmp.eq.s32.totalorder %s31, 0
      %p187 = por %p185, %p186
      %s189 = sadd.s32 %s188, 1
      %p192 = scmp.eq.s32.totalorder %s25, 1
      %p193 = scmp.ne.s32.totalorder %s188, %s190
      %p194 = scmp.eq.s32.totalorder %s25, 0
      %p195 = por %p193, %p194
      %p196 = scmp.ne.s32.totalorder %s188, %s190
      %p197 = scmp.eq.s32.totalorder %s30, 1
      %p198 = por %p196, %p197
      %p199 = scmp.ne.s32.totalorder %s190, %s191
      %p200 = scmp.eq.s32.totalorder %s30, 0
      %p201 = por %p199, %p200
      %p202 = scmp.ne.s32.totalorder %s190, %s191
      %p203 = scmp.eq.s32.totalorder %s31, 1
      %p204 = por %p202, %p203
      %p206 = scmp.ne.s32.totalorder %s191, %s205
      %p207 = scmp.eq.s32.totalorder %s31, 0
      %p208 = por %p206, %p207
      %s210 = sadd.s32 %s209, 1
      %p213 = scmp.eq.s32.totalorder %s25, 1
      %p214 = scmp.ne.s32.totalorder %s209, %s211
      %p215 = scmp.eq.s32.totalorder %s25, 0
      %p216 = por %p214, %p215
      %p217 = scmp.ne.s32.totalorder %s209, %s211
      %p218 = scmp.eq.s32.totalorder %s30, 1
      %p219 = por %p217, %p218
      %p220 = scmp.ne.s32.totalorder %s211, %s212
      %p221 = scmp.eq.s32.totalorder %s30, 0
      %p222 = por %p220, %p221
      %p223 = scmp.ne.s32.totalorder %s211, %s212
      %p224 = scmp.eq.s32.totalorder %s31, 1
      %p225 = por %p223, %p224
      %p227 = scmp.ne.s32.totalorder %s212, %s226
      %p228 = scmp.eq.s32.totalorder %s31, 0
      %p229 = por %p227, %p228
      %s231 = sadd.s32 %s230, 1
      %p234 = scmp.eq.s32.totalorder %s25, 1
      %p235 = scmp.ne.s32.totalorder %s230, %s232
      %p236 = scmp.eq.s32.totalorder %s25, 0
      %p237 = por %p235, %p236
      %p238 = scmp.ne.s32.totalorder %s230, %s232
      %p239 = scmp.eq.s32.totalorder %s30, 1
      %p240 = por %p238, %p239
      %p241 = scmp.ne.s32.totalorder %s232, %s233
      %p242 = scmp.eq.s32.totalorder %s30, 0
      %p243 = por %p241, %p242
      %p244 = scmp.ne.s32.totalorder %s232, %s233
      %p245 = scmp.eq.s32.totalorder %s31, 1
      %p246 = por %p244, %p245
      %p248 = scmp.ne.s32.totalorder %s233, %s247
      %p249 = scmp.eq.s32.totalorder %s31, 0
      %p250 = por %p248, %p249
      %s252 = sadd.s32 %s251, 1
      %p255 = scmp.eq.s32.totalorder %s25, 1
      %p256 = scmp.ne.s32.totalorder %s251, %s253
      %p257 = scmp.eq.s32.totalorder %s25, 0
      %p258 = por %p256, %p257
      %p259 = scmp.ne.s32.totalorder %s251, %s253
      %p260 = scmp.eq.s32.totalorder %s30, 1
      %p261 = por %p259, %p260
      %p262 = scmp.ne.s32.totalorder %s253, %s254
      %p263 = scmp.eq.s32.totalorder %s30, 0
      %p264 = por %p262, %p263
      %p265 = scmp.ne.s32.totalorder %s253, %s254
      %p266 = scmp.eq.s32.totalorder %s31, 1
      %p267 = por %p265, %p266
      %p269 = scmp.ne.s32.totalorder %s254, %s268
      %p270 = scmp.eq.s32.totalorder %s31, 0
      %p271 = por %p269, %p270
      %s273 = sadd.s32 %s272, 1
      %p276 = scmp.eq.s32.totalorder %s25, 1
      %p277 = scmp.ne.s32.totalorder %s272, %s274
      %p278 = scmp.eq.s32.totalorder %s25, 0
      %p279 = por %p277, %p278
      %p280 = scmp.ne.s32.totalorder %s272, %s274
      %p281 = scmp.eq.s32.totalorder %s30, 1
      %p282 = por %p280, %p281
      %p283 = scmp.ne.s32.totalorder %s274, %s275
      %p284 = scmp.eq.s32.totalorder %s30, 0
      %p285 = por %p283, %p284
      %p286 = scmp.ne.s32.totalorder %s274, %s275
      %p287 = scmp.eq.s32.totalorder %s31, 1
      %p288 = por %p286, %p287
      %p290 = scmp.ne.s32.totalorder %s275, %s289
      %p291 = scmp.eq.s32.totalorder %s31, 0
      %p292 = por %p290, %p291
      %s294 = sadd.s32 %s293, 1
      %p297 = scmp.eq.s32.totalorder %s25, 1
      %p298 = scmp.ne.s32.totalorder %s293, %s295
      %p299 = scmp.eq.s32.totalorder %s25, 0
      %p300 = por %p298, %p299
      %p301 = scmp.ne.s32.totalorder %s293, %s295
      %p302 = scmp.eq.s32.totalorder %s30, 1
      %p303 = por %p301, %p302
      %p304 = scmp.ne.s32.totalorder %s295, %s296
      %p305 = scmp.eq.s32.totalorder %s30, 0
      %p306 = por %p304, %p305
      %p307 = scmp.ne.s32.totalorder %s295, %s296
      %p308 = scmp.eq.s32.totalorder %s31, 1
      %p309 = por %p307, %p308
      %p311 = scmp.ne.s32.totalorder %s296, %s310
      %p312 = scmp.eq.s32.totalorder %s31, 0
      %p313 = por %p311, %p312
      %s315 = sadd.s32 %s314, 1
      %p318 = scmp.eq.s32.totalorder %s25, 1
      %p319 = scmp.ne.s32.totalorder %s314, %s316
      %p320 = scmp.eq.s32.totalorder %s25, 0
      %p321 = por %p319, %p320
      %p322 = scmp.ne.s32.totalorder %s314, %s316
      %p323 = scmp.eq.s32.totalorder %s30, 1
      %p324 = por %p322, %p323
      %p325 = scmp.ne.s32.totalorder %s316, %s317
      %p326 = scmp.eq.s32.totalorder %s30, 0
      %p327 = por %p325, %p326
      %p328 = scmp.ne.s32.totalorder %s316, %s317
      %p329 = scmp.eq.s32.totalorder %s31, 1
      %p330 = por %p328, %p329
      %p332 = scmp.ne.s32.totalorder %s317, %s331
      %p333 = scmp.eq.s32.totalorder %s31, 0
      %p334 = por %p332, %p333
      %s335 = ssub.s32 %s32, %s44
      %s336 = ssub.s32 %s33, %s40
      %s337 = sor.u32 %s335, %s336
      %p338 = scmp.eq.s32.totalorder %s337, 0
      %s340 = sadd.s32 %s339, 1
      %s341 = scalar_select %p338, %s339, %s340
      %p344 = pneg %p338
      %p345 = scmp.eq.s32.totalorder %s25, 1
      %p346 = por %p344, %p345
      %p347 = scmp.ne.s32.totalorder %s339, %s342
      %p348 = scmp.eq.s32.totalorder %s25, 0
      %p349 = por %p347, %p348
      %p350 = scmp.ne.s32.totalorder %s339, %s342
      %p351 = scmp.eq.s32.totalorder %s30, 1
      %p352 = por %p350, %p351
      %p353 = scmp.ne.s32.totalorder %s342, %s343
      %p354 = scmp.eq.s32.totalorder %s30, 0
      %p355 = por %p353, %p354
      %p356 = scmp.ne.s32.totalorder %s342, %s343
      %p357 = scmp.eq.s32.totalorder %s31, 1
      %p358 = por %p356, %p357
      %p360 = scmp.ne.s32.totalorder %s343, %s359
      %p361 = scmp.eq.s32.totalorder %s31, 0
      %p362 = por %p360, %p361
      %p363 = scmp.le.s32.totalorder 1, %s25
      %p364 = scmp.lt.s32.totalorder %s25, 3
      %p365 = pnand %p363, %p364
      %p366 = pneg %p365
      // Predicated region
      $region9: #{decoder_forward.8} parent=5 // pred_check
        _
      $region10: #{decoder_forward.8} parent=5 // pred_check_branch
        %368 = sbr.rel (%p365) target = $region12
      $region11: #{decoder_forward.8} parent=5 // pred_region
        %s369 = ssub.s32 %s25, 1
        // Predicated region
        $region13: #{decoder_forward.8} parent=11 // pred_check
          %p370 = pneg %p138
        $region14: #{decoder_forward.8} parent=11 // pred_check_branch
          %372 = sbr.rel (%p370) target = $region16
        $region15: #{decoder_forward.8} parent=11 // pred_region
          %374 = vsyncadd [#allocation3], 0
          %s376 = sshll.u32 %s3, 4
          %s377 = int_to_ptr.hbm [resolvable:$true] %s376
          %s378 = sshll.u32 [#allocation2], 4
          %s379 = int_to_ptr.vmem [resolvable:$true] %s378
          %381 = dma.hbm_to_vmem [thread:$0]  %s377, 16, %s379, [#allocation3]
        $region16: #{decoder_forward.8} parent=11 // pred_fallthru
          _
        // Predicated region
        $region17: #{decoder_forward.8} parent=11 // pred_check
          %p382 = pneg %p159
        $region18: #{decoder_forward.8} parent=11 // pred_check_branch
          %384 = sbr.rel (%p382) target = $region20
        $region19: #{decoder_forward.8} parent=11 // pred_region
          %386 = vsyncadd [#allocation5], 0
          %s388 = sshll.u32 %s4, 4
          %s389 = int_to_ptr.hbm [resolvable:$true] %s388
          %s390 = sshll.u32 [#allocation4], 4
          %s391 = int_to_ptr.vmem [resolvable:$true] %s390
          %393 = dma.hbm_to_vmem [thread:$0]  %s389, 16, %s391, [#allocation5]
        $region20: #{decoder_forward.8} parent=11 // pred_fallthru
          _
        // Predicated region
        $region21: #{decoder_forward.8} parent=11 // pred_check
          %p394 = pneg %p180
        $region22: #{decoder_forward.8} parent=11 // pred_check_branch
          %396 = sbr.rel (%p394) target = $region24
        $region23: #{decoder_forward.8} parent=11 // pred_region
          %398 = vsyncadd [#allocation5], 0
          %s399 = sshll.u32 %s5, 4
          %s400 = int_to_ptr.hbm [resolvable:$true] %s399
          %s401 = sshll.u32 [#allocation6], 4
          %s402 = int_to_ptr.vmem [resolvable:$true] %s401
          %407 = dma.hbm_to_vmem [thread:$0]  %s400, 256, %s402, [#allocation5], 64, 64, 4
        $region24: #{decoder_forward.8} parent=11 // pred_fallthru
          _
        // Predicated region
        $region25: #{decoder_forward.8} parent=11 // pred_check
          %p408 = pneg %p201
        $region26: #{decoder_forward.8} parent=11 // pred_check_branch
          %410 = sbr.rel (%p408) target = $region28
        $region27: #{decoder_forward.8} parent=11 // pred_region
          %412 = vsyncadd [#allocation8], 0
          %s414 = sshll.u32 %s6, 4
          %s415 = int_to_ptr.hbm [resolvable:$true] %s414
          %s416 = sshll.u32 [#allocation7], 4
          %s417 = int_to_ptr.vmem [resolvable:$true] %s416
          %419 = dma.hbm_to_vmem [thread:$0]  %s415, 16, %s417, [#allocation8]
        $region28: #{decoder_forward.8} parent=11 // pred_fallthru
          _
        // Predicated region
        $region29: #{decoder_forward.8} parent=11 // pred_check
          %p420 = pneg %p222
        $region30: #{decoder_forward.8} parent=11 // pred_check_branch
          %422 = sbr.rel (%p420) target = $region32
        $region31: #{decoder_forward.8} parent=11 // pred_region
          %424 = vsyncadd [#allocation8], 0
          %s425 = sshll.u32 %s7, 4
          %s426 = int_to_ptr.hbm [resolvable:$true] %s425
          %s427 = sshll.u32 [#allocation9], 4
          %s428 = int_to_ptr.vmem [resolvable:$true] %s427
          %433 = dma.hbm_to_vmem [thread:$0]  %s426, 256, %s428, [#allocation8], 64, 64, 4
        $region32: #{decoder_forward.8} parent=11 // pred_fallthru
          _
        // Predicated region
        $region33: #{decoder_forward.8} parent=11 // pred_check
          %p434 = pneg %p243
        $region34: #{decoder_forward.8} parent=11 // pred_check_branch
          %436 = sbr.rel (%p434) target = $region36
        $region35: #{decoder_forward.8} parent=11 // pred_region
          %438 = vsyncadd [#allocation11], 0
          %s440 = sshll.u32 %s8, 4
          %s441 = int_to_ptr.hbm [resolvable:$true] %s440
          %s442 = sshll.u32 [#allocation10], 4
          %s443 = int_to_ptr.vmem [resolvable:$true] %s442
          %445 = dma.hbm_to_vmem [thread:$0]  %s441, 16, %s443, [#allocation11]
        $region36: #{decoder_forward.8} parent=11 // pred_fallthru
          _
        // Predicated region
        $region37: #{decoder_forward.8} parent=11 // pred_check
          %p446 = pneg %p264
        $region38: #{decoder_forward.8} parent=11 // pred_check_branch
          %448 = sbr.rel (%p446) target = $region40
        $region39: #{decoder_forward.8} parent=11 // pred_region
          %450 = vsyncadd [#allocation11], 0
          %s451 = sshll.u32 %s9, 4
          %s452 = int_to_ptr.hbm [resolvable:$true] %s451
          %s453 = sshll.u32 [#allocation12], 4
          %s454 = int_to_ptr.vmem [resolvable:$true] %s453
          %459 = dma.hbm_to_vmem [thread:$0]  %s452, 256, %s454, [#allocation11], 64, 64, 4
        $region40: #{decoder_forward.8} parent=11 // pred_fallthru
          _
        // Predicated region
        $region41: #{decoder_forward.8} parent=11 // pred_check
          %p460 = pneg %p285
        $region42: #{decoder_forward.8} parent=11 // pred_check_branch
          %462 = sbr.rel (%p460) target = $region44
        $region43: #{decoder_forward.8} parent=11 // pred_region
          %464 = vsyncadd [#allocation14], 0
          %s466 = sshll.u32 %s10, 4
          %s467 = int_to_ptr.hbm [resolvable:$true] %s466
          %s468 = sshll.u32 [#allocation13], 4
          %s469 = int_to_ptr.vmem [resolvable:$true] %s468
          %471 = dma.hbm_to_vmem [thread:$0]  %s467, 16, %s469, [#allocation14]
        $region44: #{decoder_forward.8} parent=11 // pred_fallthru
          _
        // Predicated region
        $region45: #{decoder_forward.8} parent=11 // pred_check
          %p472 = pneg %p306
        $region46: #{decoder_forward.8} parent=11 // pred_check_branch
          %474 = sbr.rel (%p472) target = $region48
        $region47: #{decoder_forward.8} parent=11 // pred_region
          %476 = vsyncadd [#allocation14], 0
          %s477 = sshll.u32 %s11, 4
          %s478 = int_to_ptr.hbm [resolvable:$true] %s477
          %s479 = sshll.u32 [#allocation15], 4
          %s480 = int_to_ptr.vmem [resolvable:$true] %s479
          %485 = dma.hbm_to_vmem [thread:$0]  %s478, 256, %s480, [#allocation14], 64, 64, 4
        $region48: #{decoder_forward.8} parent=11 // pred_fallthru
          _
        // Predicated region
        $region49: #{decoder_forward.8} parent=11 // pred_check
          %p486 = pneg %p327
        $region50: #{decoder_forward.8} parent=11 // pred_check_branch
          %488 = sbr.rel (%p486) target = $region52
        $region51: #{decoder_forward.8} parent=11 // pred_region
          %490 = vsyncadd [#allocation17], 0
          %s492 = sshll.u32 %s12, 4
          %s493 = int_to_ptr.hbm [resolvable:$true] %s492
          %s494 = sshll.u32 [#allocation16], 4
          %s495 = int_to_ptr.vmem [resolvable:$true] %s494
          %497 = dma.hbm_to_vmem [thread:$0]  %s493, 16, %s495, [#allocation17]
        $region52: #{decoder_forward.8} parent=11 // pred_fallthru
          _
      $region12: #{decoder_forward.8} parent=5 // pred_fallthru
        _
      %p498 = scmp.lt.s32.totalorder %s25, 2
      // Predicated region
      $region53: #{decoder_forward.8} parent=5 // pred_check
        %p499 = pneg %p498
      $region54: #{decoder_forward.8} parent=5 // pred_check_branch
        %501 = sbr.rel (%p499) target = $region56
      $region55: #{decoder_forward.8} parent=5 // pred_region
        // Predicated region
        $region57: #{decoder_forward.8} parent=55 // pred_check
          %p502 = pneg %p59
        $region58: #{decoder_forward.8} parent=55 // pred_check_branch
          %504 = sbr.rel (%p502) target = $region60
        $region59: #{decoder_forward.8} parent=55 // pred_region
          %p505 = scmp.lt.s32.totalorder %s32, 1
          %s506 = scalar_select %p505, %s32, 1
          %p507 = scmp.lt.s32.totalorder %s33, 0
          %s508 = scalar_select %p507, %s33, 0
          %s509 = sadd.s32 %s508, %s506
          %s510 = smul.addr %s509, 8
          %s511 = scalar_lea.vmem %s0, %s510
        $region60: #{decoder_forward.8} parent=55 // pred_fallthru
          _
        // Predicated region
        $region61: #{decoder_forward.8} parent=55 // pred_check
          %p512 = pneg %p85
        $region62: #{decoder_forward.8} parent=55 // pred_check_branch
          %514 = sbr.rel (%p512) target = $region64
        $region63: #{decoder_forward.8} parent=55 // pred_region
          %p515 = scmp.lt.s32.totalorder %s32, 1
          %s516 = scalar_select %p515, %s32, 1
          %s517 = smul.addr %s516, 8
          %s518 = scalar_lea.vmem %s1, %s517
        $region64: #{decoder_forward.8} parent=55 // pred_fallthru
          _
        // Predicated region
        $region65: #{decoder_forward.8} parent=55 // pred_check
          %p519 = pneg %p111
        $region66: #{decoder_forward.8} parent=55 // pred_check_branch
          %521 = sbr.rel (%p519) target = $region68
        $region67: #{decoder_forward.8} parent=55 // pred_region
          %p522 = scmp.lt.s32.totalorder %s32, 1
          %s523 = scalar_select %p522, %s32, 1
          %s524 = scalar_lea.vmem %s2, %s523
        $region68: #{decoder_forward.8} parent=55 // pred_fallthru
          _
      $region56: #{decoder_forward.8} parent=5 // pred_fallthru
        _
      %p525 = scmp.le.s32.totalorder 1, %s25
      %p526 = scmp.lt.s32.totalorder %s25, 3
      %p527 = pnand %p525, %p526
      %p528 = pneg %p527
      // Predicated region
      $region69: #{decoder_forward.8} parent=5 // pred_check
        _
      $region70: #{decoder_forward.8} parent=5 // pred_check_branch
        %530 = sbr.rel (%p527) target = $region72
      $region71: #{decoder_forward.8} parent=5 // pred_region
        %s531 = ssub.s32 %s25, 1
        // Predicated region
        $region73: #{decoder_forward.8} parent=71 // pred_check
          %p532 = pneg %p138
        $region74: #{decoder_forward.8} parent=71 // pred_check_branch
          %534 = sbr.rel (%p532) target = $region76
        $region75: #{decoder_forward.8} parent=71 // pred_region
          %536 = dma.done [#allocation3], 16
        $region76: #{decoder_forward.8} parent=71 // pred_fallthru
          _
        // Predicated region
        $region77: #{decoder_forward.8} parent=71 // pred_check
          %p537 = pneg %p159
        $region78: #{decoder_forward.8} parent=71 // pred_check_branch
          %539 = sbr.rel (%p537) target = $region80
        $region79: #{decoder_forward.8} parent=71 // pred_region
          %541 = dma.done [#allocation5], 16
        $region80: #{decoder_forward.8} parent=71 // pred_fallthru
          _
        // Predicated region
        $region81: #{decoder_forward.8} parent=71 // pred_check
          %p542 = pneg %p180
        $region82: #{decoder_forward.8} parent=71 // pred_check_branch
          %544 = sbr.rel (%p542) target = $region84
        $region83: #{decoder_forward.8} parent=71 // pred_region
          %546 = dma.done [#allocation5], 256
        $region84: #{decoder_forward.8} parent=71 // pred_fallthru
          _
        // Predicated region
        $region85: #{decoder_forward.8} parent=71 // pred_check
          %p547 = pneg %p201
        $region86: #{decoder_forward.8} parent=71 // pred_check_branch
          %549 = sbr.rel (%p547) target = $region88
        $region87: #{decoder_forward.8} parent=71 // pred_region
          %551 = dma.done [#allocation8], 16
        $region88: #{decoder_forward.8} parent=71 // pred_fallthru
          _
        // Predicated region
        $region89: #{decoder_forward.8} parent=71 // pred_check
          %p552 = pneg %p222
        $region90: #{decoder_forward.8} parent=71 // pred_check_branch
          %554 = sbr.rel (%p552) target = $region92
        $region91: #{decoder_forward.8} parent=71 // pred_region
          %556 = dma.done [#allocation8], 256
        $region92: #{decoder_forward.8} parent=71 // pred_fallthru
          _
        // Predicated region
        $region93: #{decoder_forward.8} parent=71 // pred_check
          %p557 = pneg %p243
        $region94: #{decoder_forward.8} parent=71 // pred_check_branch
          %559 = sbr.rel (%p557) target = $region96
        $region95: #{decoder_forward.8} parent=71 // pred_region
          %561 = dma.done [#allocation11], 16
        $region96: #{decoder_forward.8} parent=71 // pred_fallthru
          _
        // Predicated region
        $region97: #{decoder_forward.8} parent=71 // pred_check
          %p562 = pneg %p264
        $region98: #{decoder_forward.8} parent=71 // pred_check_branch
          %564 = sbr.rel (%p562) target = $region100
        $region99: #{decoder_forward.8} parent=71 // pred_region
          %566 = dma.done [#allocation11], 256
        $region100: #{decoder_forward.8} parent=71 // pred_fallthru
          _
        // Predicated region
        $region101: #{decoder_forward.8} parent=71 // pred_check
          %p567 = pneg %p285
        $region102: #{decoder_forward.8} parent=71 // pred_check_branch
          %569 = sbr.rel (%p567) target = $region104
        $region103: #{decoder_forward.8} parent=71 // pred_region
          %571 = dma.done [#allocation14], 16
        $region104: #{decoder_forward.8} parent=71 // pred_fallthru
          _
        // Predicated region
        $region105: #{decoder_forward.8} parent=71 // pred_check
          %p572 = pneg %p306
        $region106: #{decoder_forward.8} parent=71 // pred_check_branch
          %574 = sbr.rel (%p572) target = $region108
        $region107: #{decoder_forward.8} parent=71 // pred_region
          %576 = dma.done [#allocation14], 256
        $region108: #{decoder_forward.8} parent=71 // pred_fallthru
          _
        // Predicated region
        $region109: #{decoder_forward.8} parent=71 // pred_check
          %p577 = pneg %p327
        $region110: #{decoder_forward.8} parent=71 // pred_check_branch
          %579 = sbr.rel (%p577) target = $region112
        $region111: #{decoder_forward.8} parent=71 // pred_region
          %581 = dma.done [#allocation17], 16
        $region112: #{decoder_forward.8} parent=71 // pred_fallthru
          _
        %p582 = scmp.lt.s32.totalorder %s34, 1
        %s583 = scalar_select %p582, %s34, 1
        %p584 = scmp.lt.s32.totalorder %s35, 0
        %s585 = scalar_select %p584, %s35, 0
        %s586 = sadd.s32 %s585, %s583
        %s587 = smul.addr %s586, 8
        %s588 = scalar_lea.vmem %s0, %s587
        %p589 = pneg %p65
        %p590 = pneg %p62
        %p591 = scmp.lt.s32.totalorder %s34, 1
        %s592 = scalar_select %p591, %s34, 1
        %s593 = smul.addr %s592, 8
        %s594 = scalar_lea.vmem %s1, %s593
        %p595 = pneg %p91
        %p596 = pneg %p88
        %p597 = scmp.lt.s32.totalorder %s34, 1
        %s598 = scalar_select %p597, %s34, 1
        %s599 = scalar_lea.vmem %s2, %s598
        %p600 = pneg %p117
        %p601 = pneg %p114
        %p602 = pneg %p138
        %p603 = pneg %p135
        %p604 = pneg %p159
        %p605 = pneg %p156
        %p606 = pneg %p180
        %p607 = pneg %p177
        %p608 = pneg %p201
        %p609 = pneg %p198
        %p610 = pneg %p222
        %p611 = pneg %p219
        %p612 = pneg %p243
        %p613 = pneg %p240
        %p614 = pneg %p264
        %p615 = pneg %p261
        %p616 = pneg %p285
        %p617 = pneg %p282
        %p618 = pneg %p306
        %p619 = pneg %p303
        %p620 = pneg %p327
        %p621 = pneg %p324
        %p622 = pneg %p355
        %p623 = pneg %p352
        %p624 = scmp.lt.s32.totalorder %s34, 1
        %s625 = scalar_select %p624, %s34, 1
        %p626 = scmp.lt.s32.totalorder %s35, 0
        %s627 = scalar_select %p626, %s35, 0
        %s628 = sadd.s32 %s627, %s625
        %s629 = smul.addr %s628, 8
        %s630 = scalar_lea.vmem %s13, %s629
        %p631 = scmp.lt.s32.totalorder %s34, 1
        %s632 = scalar_select %p631, %s34, 1
        %p633 = scmp.lt.s32.totalorder %s35, 0
        %s634 = scalar_select %p633, %s35, 0
        %s635 = sadd.s32 %s634, %s632
        %s636 = smul.addr %s635, 8
        %s637 = scalar_lea.vmem %s0, %s636
        %p638 = scmp.lt.s32.totalorder %s34, 1
        %s639 = scalar_select %p638, %s34, 1
        %s640 = smul.addr %s639, 8
        %s641 = scalar_lea.vmem %s1, %s640
        %p642 = scmp.lt.s32.totalorder %s34, 1
        %s643 = scalar_select %p642, %s34, 1
        %s644 = scalar_lea.vmem %s2, %s643
        %p645 = scmp.lt.s32.totalorder %s34, 1
        %s646 = scalar_select %p645, %s34, 1
        %p647 = scmp.lt.s32.totalorder %s35, 0
        %s648 = scalar_select %p647, %s35, 0
        %s649 = sadd.s32 %s648, %s646
        %s650 = smul.addr %s649, 8
        %s651 = scalar_lea.vmem %s13, %s650
        %v653 = vld [vmem:[%s637] sm:$0xff]
        %v654 = vld [vmem:[#allocation2] sm:$0x1]
        %v655 = vld [vmem:[#allocation4] sm:$0x1]
        %vm656 = vcmask 261120
        %v657 = vsel %vm656, %v653, 0.0
        %658 = vadd.xlane.f32.xlu0 %v657
        %v659 = vpop.xlane.xlu0 %658
        %v660 = vrcp.pop 32.0
        %v661 = vmul.f32 32.0, %v660
        %v662 = vsub.f32 1.0, %v661
        %v663 = vmul.f32 %v660, %v662
        %v664 = vadd.f32 %v660, %v663
        %vm665 = vweird.f32 %v660
        %v666 = vsel %vm665, %v660, %v664
        %v667 = vmul.f32 %v659, %v666
        %v668 = vsub.f32 %v653, %v667
        %v669 = vmul.f32 %v668, %v668
        %v670 = vsel %vm656, %v669, 0.0
        %671 = vadd.xlane.f32.xlu0 %v670
        %v672 = vpop.xlane.xlu0 %671
        %v673 = vmul.f32 %v672, 0.032258064
        %v674 = vrsqrt.pop %v673
        %v675 = vmul.f32 %v674, %v673
        %v676 = vmul.f32 %v675, %v674
        %v677 = vmul.f32 0.5, %v676
        %v678 = vsub.f32 1.5, %v677
        %v679 = vmul.f32 %v674, %v678
        %v680 = vmul.f32 %v673, %v679
        %vm681 = vcmp.eq.f32.partialorder %v673, inf
        %v682 = vsel %vm681, %v673, %v680
        %vm683 = vcmp.eq.f32.partialorder %v673, 0.0
        %v684 = vand.u32 %v673, 2147483648
        %v685 = vsel %vm683, %v684, %v682
        %v687 = vperm.slane %v654, 0
        %v689 = vmul.f32 %v687, %v668
        %v690 = vadd.f32 %v685, 1e-06
        %v691 = vrcp.pop %v690
        %v692 = vmul.f32 %v690, %v691
        %v693 = vsub.f32 1.0, %v692
        %v694 = vmul.f32 %v691, %v693
        %v695 = vadd.f32 %v691, %v694
        %vm696 = vweird.f32 %v690
        %vm697 = vweird.f32 %v691
        %vm698 = vmor %vm696, %vm697
        %v699 = vsel %vm698, %v691, %v695
        %v700 = vand.u32 2147483647, %v690
        %vm701 = vcmp.eq.f32.partialorder %v700, 8.507059e+37
        %v702 = vand.u32 %v690, 2147483648
        %v703 = vor.u32 1.1754944e-38, %v702
        %v704 = vsel %vm701, %v703, %v699
        %v705 = vmul.f32 1.0, %v704
        %v706 = vmul.f32 %v689, %v705
        %v708 = vperm.slane %v655, 0
        %v710 = vadd.f32 %v706, %v708
        %v711 = vld [vmem:[%s641] sm:$0xff]
        %v712 = vpack.c.bf16 %v711, %v711
        %v713 = vpack.c.bf16 %v710, %v710
        %v714 = vld [vmem:[#allocation6] sm:$0xf]
        %v715 = vld [vmem:[#allocation6 + $0x4] sm:$0xf]
        %v716 = vld [vmem:[#allocation6 + $0x8] sm:$0xf]
        %v717 = vld [vmem:[#allocation6 + $0xc] sm:$0xf]
        %v718 = vld [vmem:[#allocation7] sm:$0x1]
        %v720 = vperm.slane %v718, 0
        %v726 = vunpack.c.l.b16 %v714
        %v727 = vunpack.c.l.b16 %v715
        %v728 = vunpack.c.l.b16 %v716
        %v729 = vunpack.c.l.b16 %v717
        %v730 = vpack.c.b16 %v727, %v726
        %v731 = vpack.c.b16 %v729, %v728
        %v735 = vsel %vm656, %v713, 0
        %737 = vmatpush.bf16.msra.mxu0 0
        %738 = vmatpush.bf16.msra.mxu0 0
        %739 = vmatpush.bf16.msra.mxu0 0
        %740 = vmatpush.bf16.msra.mxu0 0
        %741 = vmatpush.bf16.msra.mxu0 0
        %742 = vmatpush.bf16.msra.mxu0 0
        %743 = vmatpush.bf16.msra.mxu0 %v731
        %744 = vmatpush.bf16.msra.mxu0 %v730
        %745 = vmatmul.bf16.gmra.mxu0 %v735
        %v746 = vpop.f32.mrf.mxu0
        %v747 = vadd.f32 %v720, %v746
        %v748 = vpop.f32.mrf.mxu0
        %749 = vdwg.mxu0
        %v750 = vpack.c.bf16 %v747, %v747
        %v751 = vld [vmem:[#allocation9] sm:$0xf]
        %v752 = vld [vmem:[#allocation9 + $0x4] sm:$0xf]
        %v753 = vld [vmem:[#allocation9 + $0x8] sm:$0xf]
        %v754 = vld [vmem:[#allocation9 + $0xc] sm:$0xf]
        %v755 = vld [vmem:[#allocation10] sm:$0x1]
        %v757 = vperm.slane %v755, 0
        %v763 = vunpack.c.l.b16 %v751
        %v764 = vunpack.c.l.b16 %v752
        %v765 = vunpack.c.l.b16 %v753
        %v766 = vunpack.c.l.b16 %v754
        %v767 = vpack.c.b16 %v764, %v763
        %v768 = vpack.c.b16 %v766, %v765
        %v772 = vsel %vm656, %v712, 0
        %774 = vmatpush.bf16.msra.mxu0 0
        %775 = vmatpush.bf16.msra.mxu0 0
        %776 = vmatpush.bf16.msra.mxu0 0
        %777 = vmatpush.bf16.msra.mxu0 0
        %778 = vmatpush.bf16.msra.mxu0 0
        %779 = vmatpush.bf16.msra.mxu0 0
        %780 = vmatpush.bf16.msra.mxu0 %v768
        %781 = vmatpush.bf16.msra.mxu0 %v767
        %782 = vmatmul.bf16.gmra.mxu0 %v772
        %v783 = vpop.f32.mrf.mxu0
        %v784 = vadd.f32 %v757, %v783
        %v785 = vpop.f32.mrf.mxu0
        %786 = vdwg.mxu0
        %v787 = vpack.c.bf16 %v784, %v784
        %v788 = vld [vmem:[#allocation12] sm:$0xf]
        %v789 = vld [vmem:[#allocation12 + $0x4] sm:$0xf]
        %v790 = vld [vmem:[#allocation12 + $0x8] sm:$0xf]
        %v791 = vld [vmem:[#allocation12 + $0xc] sm:$0xf]
        %v792 = vld [vmem:[#allocation13] sm:$0x1]
        %v794 = vperm.slane %v792, 0
        %v800 = vunpack.c.l.b16 %v788
        %v801 = vunpack.c.l.b16 %v789
        %v802 = vunpack.c.l.b16 %v790
        %v803 = vunpack.c.l.b16 %v791
        %v804 = vpack.c.b16 %v801, %v800
        %v805 = vpack.c.b16 %v803, %v802
        %808 = vmatpush.bf16.msra.mxu0 0
        %809 = vmatpush.bf16.msra.mxu0 0
        %810 = vmatpush.bf16.msra.mxu0 0
        %811 = vmatpush.bf16.msra.mxu0 0
        %812 = vmatpush.bf16.msra.mxu0 0
        %813 = vmatpush.bf16.msra.mxu0 0
        %814 = vmatpush.bf16.msra.mxu0 %v805
        %815 = vmatpush.bf16.msra.mxu0 %v804
        %816 = vmatmul.bf16.gmra.mxu0 %v772
        %v817 = vpop.f32.mrf.mxu0
        %v818 = vadd.f32 %v794, %v817
        %v819 = vpop.f32.mrf.mxu0
        %820 = vdwg.mxu0
        %v821 = vpack.c.bf16 %v818, %v818
        %v822 = vld [vmem:[%s644] sm:$0x1]
        %v823 = vsub.f32 %v822, 1.0
        %v824 = vmul.f32 %v823, 1e+09
        %vm825 = vcmask 64512
        %v827 = vsel %vm825, %v750, 0
        %v830 = vsel %vm825, %v787, 0
        %832 = vmatpush.bf16.xpose.msra.mxu0 0
        %833 = vmatpush.bf16.xpose.msra.mxu0 0
        %834 = vmatpush.bf16.xpose.msra.mxu0 0
        %835 = vmatpush.bf16.xpose.msra.mxu0 0
        %836 = vmatpush.bf16.xpose.msra.mxu0 0
        %837 = vmatpush.bf16.xpose.msra.mxu0 0
        %838 = vmatpush.bf16.xpose.msra.mxu0 0
        %839 = vmatpush.bf16.xpose.msra.mxu0 %v830
        %840 = vmatmul.bf16.gmra.mxu0 %v827
        %v841 = vpop.f32.mrf.mxu0
        %v842 = vadd.f32 0.0, %v841
        %v843 = vpop.f32.mrf.mxu0
        %844 = vdwg.mxu0
        %v845 = vmul.f32 %v842, 0.35355338
        %v847 = vperm.slane %v824, 0
        %v849 = vadd.f32 %v845, %v847
        %v850 = vsel %vm825, %v849, -inf
        %851 = vmax.xlane.f32.xlu0 %v850
        %v852 = vpop.xlane.xlu0 %851
        %v853 = vsub.f32 %v849, %v852
        %v854 = vmul.f32 %v853, 1.442695
        %v855 = vpow.pop %v854
        %v856 = vsel %vm825, %v855, 0.0
        %857 = vadd.xlane.f32.xlu0 %v856
        %v858 = vpop.xlane.xlu0 %857
        %v859 = vrcp.pop %v858
        %v860 = vmul.f32 %v855, %v859
        %v861 = vpack.c.bf16 %v860, %v860
        %v863 = vsel %vm825, %v861, 0
        %vm865 = vcmask 1043456
        %v867 = vsel %vm865, %v821, 0
        %869 = vmatpush.bf16.msra.mxu0 0
        %870 = vmatpush.bf16.msra.mxu0 0
        %871 = vmatpush.bf16.msra.mxu0 0
        %872 = vmatpush.bf16.msra.mxu0 0
        %873 = vmatpush.bf16.msra.mxu0 0
        %874 = vmatpush.bf16.msra.mxu0 0
        %875 = vmatpush.bf16.msra.mxu0 0
        %876 = vmatpush.bf16.msra.mxu0 %v867
        %877 = vmatmul.bf16.gmra.mxu0 %v863
        %v878 = vpop.f32.mrf.mxu0
        %v879 = vadd.f32 0.0, %v878
        %v880 = vpop.f32.mrf.mxu0
        %881 = vdwg.mxu0
        %v882 = vpack.c.bf16 %v879, %v879
        %v883 = vld [vmem:[#allocation15] sm:$0xf]
        %v885 = vunpack.c.l.b16 %v750
        %v886 = vpack.c.b16 %v885, %v885
        %887 = vrot.lane.b32.xlu0 %v886, 120
        %v888 = vpop.permute.xlu0 %887
        %v890 = vunpack.c.l.b16 %v787
        %v891 = vpack.c.b16 %v890, %v890
        %892 = vrot.lane.b32.xlu0 %v891, 120
        %v893 = vpop.permute.xlu0 %892
        %v895 = vsel %vm825, %v888, 0
        %v898 = vsel %vm825, %v893, 0
        %900 = vmatpush.bf16.xpose.msra.mxu0 0
        %901 = vmatpush.bf16.xpose.msra.mxu0 0
        %902 = vmatpush.bf16.xpose.msra.mxu0 0
        %903 = vmatpush.bf16.xpose.msra.mxu0 0
        %904 = vmatpush.bf16.xpose.msra.mxu0 0
        %905 = vmatpush.bf16.xpose.msra.mxu0 0
        %906 = vmatpush.bf16.xpose.msra.mxu0 0
        %907 = vmatpush.bf16.xpose.msra.mxu0 %v898
        %908 = vmatmul.bf16.gmra.mxu0 %v895
        %v909 = vpop.f32.mrf.mxu0
        %v910 = vadd.f32 0.0, %v909
        %v911 = vpop.f32.mrf.mxu0
        %912 = vdwg.mxu0
        %v913 = vmul.f32 %v910, 0.35355338
        %v914 = vadd.f32 %v913, %v847
        %v915 = vsel %vm825, %v914, -inf
        %916 = vmax.xlane.f32.xlu0 %v915
        %v917 = vpop.xlane.xlu0 %916
        %v918 = vsub.f32 %v914, %v917
        %v919 = vmul.f32 %v918, 1.442695
        %v920 = vpow.pop %v919
        %v921 = vsel %vm825, %v920, 0.0
        %922 = vadd.xlane.f32.xlu0 %v921
        %v923 = vpop.xlane.xlu0 %922
        %v924 = vrcp.pop %v923
        %v925 = vmul.f32 %v920, %v924
        %v926 = vpack.c.bf16 %v925, %v925
        %v928 = vunpack.c.l.b16 %v821
        %v929 = vpack.c.b16 %v928, %v928
        %930 = vrot.lane.b32.xlu0 %v929, 120
        %v931 = vpop.permute.xlu0 %930
        %v933 = vsel %vm825, %v926, 0
        %v936 = vsel %vm865, %v931, 0
        %938 = vmatpush.bf16.msra.mxu0 0
        %939 = vmatpush.bf16.msra.mxu0 0
        %940 = vmatpush.bf16.msra.mxu0 0
        %941 = vmatpush.bf16.msra.mxu0 0
        %942 = vmatpush.bf16.msra.mxu0 0
        %943 = vmatpush.bf16.msra.mxu0 0
        %944 = vmatpush.bf16.msra.mxu0 0
        %945 = vmatpush.bf16.msra.mxu0 %v936
        %946 = vmatmul.bf16.gmra.mxu0 %v933
        %v947 = vpop.f32.mrf.mxu0
        %v948 = vadd.f32 0.0, %v947
        %v949 = vpop.f32.mrf.mxu0
        %950 = vdwg.mxu0
        %v951 = vpack.c.bf16 %v948, %v948
        %v952 = vld [vmem:[#allocation15 + $0x4] sm:$0xf]
        %v954 = vsel %vm825, %v951, 0
        %v957 = vsel %vm865, %v952, 0
        %959 = vmatpush.bf16.msra.mxu0 0
        %960 = vmatpush.bf16.msra.mxu0 0
        %961 = vmatpush.bf16.msra.mxu0 0
        %962 = vmatpush.bf16.msra.mxu0 0
        %963 = vmatpush.bf16.msra.mxu0 0
        %964 = vmatpush.bf16.msra.mxu0 0
        %965 = vmatpush.bf16.msra.mxu0 0
        %966 = vmatpush.bf16.msra.mxu0 %v957
        %967 = vmatmul.bf16.gmra.mxu0 %v954
        %v968 = vpop.f32.mrf.mxu0
        %v969 = vadd.f32 0.0, %v968
        %v970 = vpop.f32.mrf.mxu0
        %971 = vdwg.mxu0
        %v973 = vsel %vm825, %v882, 0
        %v976 = vsel %vm865, %v883, 0
        %978 = vmatpush.bf16.msra.mxu0 0
        %979 = vmatpush.bf16.msra.mxu0 0
        %980 = vmatpush.bf16.msra.mxu0 0
        %981 = vmatpush.bf16.msra.mxu0 0
        %982 = vmatpush.bf16.msra.mxu0 0
        %983 = vmatpush.bf16.msra.mxu0 0
        %984 = vmatpush.bf16.msra.mxu0 0
        %985 = vmatpush.bf16.msra.mxu0 %v976
        %986 = vmatmul.bf16.gmra.mxu0 %v973
        %v987 = vpop.f32.mrf.mxu0
        %v988 = vadd.f32 %v969, %v987
        %v989 = vpop.f32.mrf.mxu0
        %990 = vdwg.mxu0
        %991 = vrot.lane.b32.xlu0 %v886, 112
        %v992 = vpop.permute.xlu0 %991
        %993 = vrot.lane.b32.xlu0 %v891, 112
        %v994 = vpop.permute.xlu0 %993
        %v996 = vsel %vm825, %v992, 0
        %v999 = vsel %vm825, %v994, 0
        %1001 = vmatpush.bf16.xpose.msra.mxu0 0
        %1002 = vmatpush.bf16.xpose.msra.mxu0 0
        %1003 = vmatpush.bf16.xpose.msra.mxu0 0
        %1004 = vmatpush.bf16.xpose.msra.mxu0 0
        %1005 = vmatpush.bf16.xpose.msra.mxu0 0
        %1006 = vmatpush.bf16.xpose.msra.mxu0 0
        %1007 = vmatpush.bf16.xpose.msra.mxu0 0
        %1008 = vmatpush.bf16.xpose.msra.mxu0 %v999
        %1009 = vmatmul.bf16.gmra.mxu0 %v996
        %v1010 = vpop.f32.mrf.mxu0
        %v1011 = vadd.f32 0.0, %v1010
        %v1012 = vpop.f32.mrf.mxu0
        %1013 = vdwg.mxu0
        %v1014 = vmul.f32 %v1011, 0.35355338
        %v1015 = vadd.f32 %v1014, %v847
        %v1016 = vsel %vm825, %v1015, -inf
        %1017 = vmax.xlane.f32.xlu0 %v1016
        %v1018 = vpop.xlane.xlu0 %1017
        %v1019 = vsub.f32 %v1015, %v1018
        %v1020 = vmul.f32 %v1019, 1.442695
        %v1021 = vpow.pop %v1020
        %v1022 = vsel %vm825, %v1021, 0.0
        %1023 = vadd.xlane.f32.xlu0 %v1022
        %v1024 = vpop.xlane.xlu0 %1023
        %v1025 = vrcp.pop %v1024
        %v1026 = vmul.f32 %v1021, %v1025
        %v1027 = vpack.c.bf16 %v1026, %v1026
        %1028 = vrot.lane.b32.xlu0 %v929, 112
        %v1029 = vpop.permute.xlu0 %1028
        %v1031 = vsel %vm825, %v1027, 0
        %v1034 = vsel %vm865, %v1029, 0
        %1036 = vmatpush.bf16.msra.mxu0 0
        %1037 = vmatpush.bf16.msra.mxu0 0
        %1038 = vmatpush.bf16.msra.mxu0 0
        %1039 = vmatpush.bf16.msra.mxu0 0
        %1040 = vmatpush.bf16.msra.mxu0 0
        %1041 = vmatpush.bf16.msra.mxu0 0
        %1042 = vmatpush.bf16.msra.mxu0 0
        %1043 = vmatpush.bf16.msra.mxu0 %v1034
        %1044 = vmatmul.bf16.gmra.mxu0 %v1031
        %v1045 = vpop.f32.mrf.mxu0
        %v1046 = vadd.f32 0.0, %v1045
        %v1047 = vpop.f32.mrf.mxu0
        %1048 = vdwg.mxu0
        %v1049 = vpack.c.bf16 %v1046, %v1046
        %v1050 = vld [vmem:[#allocation15 + $0x8] sm:$0xf]
        %v1052 = vsel %vm825, %v1049, 0
        %v1055 = vsel %vm865, %v1050, 0
        %1057 = vmatpush.bf16.msra.mxu0 0
        %1058 = vmatpush.bf16.msra.mxu0 0
        %1059 = vmatpush.bf16.msra.mxu0 0
        %1060 = vmatpush.bf16.msra.mxu0 0
        %1061 = vmatpush.bf16.msra.mxu0 0
        %1062 = vmatpush.bf16.msra.mxu0 0
        %1063 = vmatpush.bf16.msra.mxu0 0
        %1064 = vmatpush.bf16.msra.mxu0 %v1055
        %1065 = vmatmul.bf16.gmra.mxu0 %v1052
        %v1066 = vpop.f32.mrf.mxu0
        %v1067 = vadd.f32 0.0, %v1066
        %v1068 = vpop.f32.mrf.mxu0
        %1069 = vdwg.mxu0
        %v1070 = vadd.f32 %v988, %v1067
        %1071 = vrot.lane.b32.xlu0 %v886, 104
        %v1072 = vpop.permute.xlu0 %1071
        %1073 = vrot.lane.b32.xlu0 %v891, 104
        %v1074 = vpop.permute.xlu0 %1073
        %v1076 = vsel %vm825, %v1072, 0
        %v1079 = vsel %vm825, %v1074, 0
        %1081 = vmatpush.bf16.xpose.msra.mxu0 0
        %1082 = vmatpush.bf16.xpose.msra.mxu0 0
        %1083 = vmatpush.bf16.xpose.msra.mxu0 0
        %1084 = vmatpush.bf16.xpose.msra.mxu0 0
        %1085 = vmatpush.bf16.xpose.msra.mxu0 0
        %1086 = vmatpush.bf16.xpose.msra.mxu0 0
        %1087 = vmatpush.bf16.xpose.msra.mxu0 0
        %1088 = vmatpush.bf16.xpose.msra.mxu0 %v1079
        %1089 = vmatmul.bf16.gmra.mxu0 %v1076
        %v1090 = vpop.f32.mrf.mxu0
        %v1091 = vadd.f32 0.0, %v1090
        %v1092 = vpop.f32.mrf.mxu0
        %1093 = vdwg.mxu0
        %v1094 = vmul.f32 %v1091, 0.35355338
        %v1095 = vadd.f32 %v1094, %v847
        %v1096 = vsel %vm825, %v1095, -inf
        %1097 = vmax.xlane.f32.xlu0 %v1096
        %v1098 = vpop.xlane.xlu0 %1097
        %v1099 = vsub.f32 %v1095, %v1098
        %v1100 = vmul.f32 %v1099, 1.442695
        %v1101 = vpow.pop %v1100
        %v1102 = vsel %vm825, %v1101, 0.0
        %1103 = vadd.xlane.f32.xlu0 %v1102
        %v1104 = vpop.xlane.xlu0 %1103
        %v1105 = vrcp.pop %v1104
        %v1106 = vmul.f32 %v1101, %v1105
        %v1107 = vpack.c.bf16 %v1106, %v1106
        %1108 = vrot.lane.b32.xlu0 %v929, 104
        %v1109 = vpop.permute.xlu0 %1108
        %v1111 = vsel %vm825, %v1107, 0
        %v1114 = vsel %vm865, %v1109, 0
        %1116 = vmatpush.bf16.msra.mxu0 0
        %1117 = vmatpush.bf16.msra.mxu0 0
        %1118 = vmatpush.bf16.msra.mxu0 0
        %1119 = vmatpush.bf16.msra.mxu0 0
        %1120 = vmatpush.bf16.msra.mxu0 0
        %1121 = vmatpush.bf16.msra.mxu0 0
        %1122 = vmatpush.bf16.msra.mxu0 0
        %1123 = vmatpush.bf16.msra.mxu0 %v1114
        %1124 = vmatmul.bf16.gmra.mxu0 %v1111
        %v1125 = vpop.f32.mrf.mxu0
        %v1126 = vadd.f32 0.0, %v1125
        %v1127 = vpop.f32.mrf.mxu0
        %1128 = vdwg.mxu0
        %v1129 = vpack.c.bf16 %v1126, %v1126
        %v1130 = vld [vmem:[#allocation15 + $0xc] sm:$0xf]
        %v1132 = vsel %vm825, %v1129, 0
        %v1135 = vsel %vm865, %v1130, 0
        %1137 = vmatpush.bf16.msra.mxu0 0
        %1138 = vmatpush.bf16.msra.mxu0 0
        %1139 = vmatpush.bf16.msra.mxu0 0
        %1140 = vmatpush.bf16.msra.mxu0 0
        %1141 = vmatpush.bf16.msra.mxu0 0
        %1142 = vmatpush.bf16.msra.mxu0 0
        %1143 = vmatpush.bf16.msra.mxu0 0
        %1144 = vmatpush.bf16.msra.mxu0 %v1135
        %1145 = vmatmul.bf16.gmra.mxu0 %v1132
        %v1146 = vpop.f32.mrf.mxu0
        %v1147 = vadd.f32 0.0, %v1146
        %v1148 = vpop.f32.mrf.mxu0
        %1149 = vdwg.mxu0
        %v1150 = vadd.f32 %v1070, %v1147
        %v1151 = vadd.f32 %v653, %v1150
        %v1152 = vld [vmem:[#allocation16] sm:$0x1]
        %v1154 = vperm.slane %v1152, 0
        %v1156 = vadd.f32 %v1151, %v1154
        %1157 = vst.msk [vmem:[%s651] sm:$0xff] %vm656, %v1156
        %p1158 = scmp.lt.s32.totalorder %s34, 1
        %s1159 = scalar_select %p1158, %s34, 1
        %p1160 = scmp.lt.s32.totalorder %s35, 0
        %s1161 = scalar_select %p1160, %s35, 0
        %s1162 = sadd.s32 %s1161, %s1159
        %s1163 = smul.addr %s1162, 8
        %s1164 = scalar_lea.vmem %s13, %s1163
        // Predicated region
        $region113: #{decoder_forward.8} parent=71 // pred_check
          %p1165 = pneg %p352
        $region114: #{decoder_forward.8} parent=71 // pred_check_branch
          %1167 = sbr.rel (%p1165) target = $region116
        $region115: #{decoder_forward.8} parent=71 // pred_region
          _
        $region116: #{decoder_forward.8} parent=71 // pred_fallthru
          _
      $region72: #{decoder_forward.8} parent=5 // pred_fallthru
        _
      %p1168 = scmp.le.s32.totalorder 2, %s25
      // Predicated region
      $region117: #{decoder_forward.8} parent=5 // pred_check
        %p1169 = pneg %p1168
      $region118: #{decoder_forward.8} parent=5 // pred_check_branch
        %1171 = sbr.rel (%p1169) target = $region120
      $region119: #{decoder_forward.8} parent=5 // pred_region
        %s1172 = ssub.s32 %s25, 2
        // Predicated region
        $region121: #{decoder_forward.8} parent=119 // pred_check
          %p1173 = pneg %p358
        $region122: #{decoder_forward.8} parent=119 // pred_check_branch
          %1175 = sbr.rel (%p1173) target = $region124
        $region123: #{decoder_forward.8} parent=119 // pred_region
          %p1176 = scmp.lt.s32.totalorder %s36, 1
          %s1177 = scalar_select %p1176, %s36, 1
          %p1178 = scmp.lt.s32.totalorder %s37, 0
          %s1179 = scalar_select %p1178, %s37, 0
          %s1180 = sadd.s32 %s1179, %s1177
          %s1181 = smul.addr %s1180, 8
          %s1182 = scalar_lea.vmem %s13, %s1181
        $region124: #{decoder_forward.8} parent=119 // pred_fallthru
          _
      $region120: #{decoder_forward.8} parent=5 // pred_fallthru
        _
    $region6: #{decoder_forward.8} parent=1 // loop_footer
      %s29 = sadd.s32 1, %s25
    $region7: #{decoder_forward.8} parent=1 // loop_footer_branch
      %24 = sbr.rel target = $region3
    $region8: #{decoder_forward.8} parent=1 // loop_exit
      _
    %1183 = vsyncpa [#allocation3], 1
    %s1184 = scalar_lea.sflag [#allocation3], 1
    %1185 = vsyncpa %s1184, 1
    %1186 = vsyncpa [#allocation5], 1
    %1187 = vsyncpa [#allocation8], 1
    %1188 = vsyncpa [#allocation11], 1
    %1189 = vsyncpa [#allocation14], 1
    %1190 = vsyncpa [#allocation17], 1

// kernel: decoder_forward.10
$region0: #{decoder_forward.10}
  #allocation0 [shape = 'u32[]', space=smem, size = 0x4, offset = 0x4, fixed_abs, tag = 'smem constant byte address 0x4 - core index']
  #allocation1 [shape = 'u32[72,128]{1,0:T(1,128)}', space=vmem, size = 0x9000, scoped, tag = 'internal scratch']
  %s0 = inlined_call_operand.vmem [shape: f32[2,8,32], index: 0, kind: input, shape index: {}, may-alias: {0,1}]
  %s1 = inlined_call_operand.vmem [shape: f32[2,8,32], index: 1, kind: input, shape index: {}, may-alias: {0,1}]
  %s2 = inlined_call_operand.hbm [shape: f32[1,32], index: 2, kind: input, shape index: {}]
  %s3 = inlined_call_operand.hbm [shape: f32[1,32], index: 3, kind: input, shape index: {}]
  %s4 = inlined_call_operand.vmem [shape: bf16[32,32], index: 4, kind: input, shape index: {}]
  %s5 = inlined_call_operand.hbm [shape: f32[1,32], index: 5, kind: input, shape index: {}]
  %s6 = inlined_call_operand.vmem [shape: bf16[32,32], index: 6, kind: input, shape index: {}]
  %s7 = inlined_call_operand.hbm [shape: f32[1,32], index: 7, kind: input, shape index: {}]
  %s8 = inlined_call_operand.hbm [shape: bf16[32,32], index: 8, kind: input, shape index: {}]
  %s9 = inlined_call_operand.hbm [shape: f32[1,32], index: 9, kind: input, shape index: {}]
  %s10 = inlined_call_operand.hbm [shape: bf16[32,32], index: 10, kind: input, shape index: {}]
  %s11 = inlined_call_operand.hbm [shape: f32[1,32], index: 11, kind: input, shape index: {}]
  %s12 = inlined_call_operand.vmem [shape: f32[2,8,32], index: 12, kind: output, shape index: {}]
  %s13 = sld [smem:[#allocation0]]
  $region113: #{decoder_forward.10} parent=0
    _
  %s15 = ssub.s32 1, %s13
  %s16 = scalar_select 0, %s15, %s13
  $region1: #{decoder_forward.10} parent=0
    #allocation2 [shape = 'u8[512]{0}', space=vmem, size = 0x400, scoped, tag = 'input window, operand 2, single buffered']
    #allocation3 [shape = 's32[2]{0}', space=sflag, size = 0x8, scoped, tag = 'scoped memory for decoder_forward.10']
    #allocation4 [shape = 'u8[512]{0}', space=vmem, size = 0x400, scoped, tag = 'input window, operand 3, single buffered']
    #allocation5 [shape = 's32[1]{0}', space=sflag, size = 0x4, scoped, tag = 'scoped memory for decoder_forward.10']
    #allocation6 [shape = 'u8[512]{0}', space=vmem, size = 0x400, scoped, tag = 'input window, operand 5, single buffered']
    #allocation7 [shape = 'u8[512]{0}', space=vmem, size = 0x400, scoped, tag = 'input window, operand 7, single buffered']
    #allocation8 [shape = 's32[1]{0}', space=sflag, size = 0x4, scoped, tag = 'scoped memory for decoder_forward.10']
    #allocation9 [shape = 'u8[8192]{0}', space=vmem, size = 0x2000, scoped, tag = 'input window, operand 8, single buffered']
    #allocation10 [shape = 'u8[512]{0}', space=vmem, size = 0x400, scoped, tag = 'input window, operand 9, single buffered']
    #allocation11 [shape = 's32[1]{0}', space=sflag, size = 0x4, scoped, tag = 'scoped memory for decoder_forward.10']
    #allocation12 [shape = 'u8[8192]{0}', space=vmem, size = 0x2000, scoped, tag = 'input window, operand 10, single buffered']
    #allocation13 [shape = 'u8[512]{0}', space=vmem, size = 0x400, scoped, tag = 'input window, operand 11, single buffered']
    #allocation14 [shape = 's32[1]{0}', space=sflag, size = 0x4, scoped, tag = 'scoped memory for decoder_forward.10']
    %17 = vsyncpa [#allocation3], 0
    %18 = vsyncpa [#allocation5], 0
    %19 = vsyncpa [#allocation8], 0
    %20 = vsyncpa [#allocation11], 0
    %21 = vsyncpa [#allocation14], 0
    loop: start=0, step=1, limit=4
    $region2: #{decoder_forward.10} parent=1 // loop_pre_header
      _
    $region3: #{decoder_forward.10} parent=1 // loop_header
      %s23 = sphi 0, %s27
      %p24 = scmp.ge.s32.totalorder %s23, 4
      %s30 = sphi 0, %s42
      %s31 = sphi 0, %s38
      %s32 = sphi 0, %s30
      %s33 = sphi 0, %s31
      %s34 = sphi 0, %s32
      %s35 = sphi 0, %s33
      %s47 = sphi 0, %s49
      %s50 = sphi 0, %s47
      %s51 = sphi 0, %s50
      %s67 = sphi 0, %s51
      %s73 = sphi 0, %s75
      %s76 = sphi 0, %s73
      %s77 = sphi 0, %s76
      %s93 = sphi 0, %s77
      %s97 = sphi 0, %s97
      %s99 = sphi 0, %s97
      %s100 = sphi 0, %s99
      %s114 = sphi 0, %s100
      %s118 = sphi 0, %s118
      %s120 = sphi 0, %s118
      %s121 = sphi 0, %s120
      %s135 = sphi 0, %s121
      %s139 = sphi 0, %s139
      %s141 = sphi 0, %s139
      %s142 = sphi 0, %s141
      %s156 = sphi 0, %s142
      %s160 = sphi 0, %s160
      %s162 = sphi 0, %s160
      %s163 = sphi 0, %s162
      %s177 = sphi 0, %s163
      %s181 = sphi 0, %s181
      %s183 = sphi 0, %s181
      %s184 = sphi 0, %s183
      %s198 = sphi 0, %s184
      %s202 = sphi 0, %s202
      %s204 = sphi 0, %s202
      %s205 = sphi 0, %s204
      %s219 = sphi 0, %s205
      %s223 = sphi 0, %s223
      %s225 = sphi 0, %s223
      %s226 = sphi 0, %s225
      %s240 = sphi 0, %s226
      %s244 = sphi 0, %s244
      %s246 = sphi 0, %s244
      %s247 = sphi 0, %s246
      %s261 = sphi 0, %s247
      %s265 = sphi 0, %s265
      %s267 = sphi 0, %s265
      %s268 = sphi 0, %s267
      %s282 = sphi 0, %s268
      %s286 = sphi 0, %s286
      %s288 = sphi 0, %s286
      %s289 = sphi 0, %s288
      %s303 = sphi 0, %s289
      %s311 = sphi 0, %s313
      %s314 = sphi 0, %s311
      %s315 = sphi 0, %s314
      %s331 = sphi 0, %s315
    $region4: #{decoder_forward.10} parent=1 // loop_header_branch
      %26 = sbr.rel (%p24) target = $region8
    $region5: #{decoder_forward.10} parent=1 // loop_body
      %s28 = ssub.s32 %s23, 1
      %s29 = ssub.s32 %s23, 2
      %s36 = sadd.s32 1, %s31
      %p37 = scmp.ge.s32.totalorder %s36, 1
      %s38 = scalar_select %p37, 0, %s36
      %s39 = sadd.s32 1, %s30
      %s40 = scalar_select %p37, %s39, %s30
      %p41 = scmp.ge.s32.totalorder %s40, 2
      %s42 = scalar_select %p41, 0, %s40
      %s43 = ssub.s32 %s30, %s42
      %s44 = ssub.s32 %s31, %s38
      %s45 = sor.u32 %s43, %s44
      %p46 = scmp.eq.s32.totalorder %s45, 0
      %s48 = sadd.s32 %s47, 1
      %s49 = scalar_select %p46, %s47, %s48
      %p52 = pneg %p46
      %p53 = scmp.eq.s32.totalorder %s23, 1
      %p54 = por %p52, %p53
      %p55 = scmp.ne.s32.totalorder %s47, %s50
      %p56 = scmp.eq.s32.totalorder %s23, 0
      %p57 = por %p55, %p56
      %p58 = scmp.ne.s32.totalorder %s47, %s50
      %p59 = scmp.eq.s32.totalorder %s28, 1
      %p60 = por %p58, %p59
      %p61 = scmp.ne.s32.totalorder %s50, %s51
      %p62 = scmp.eq.s32.totalorder %s28, 0
      %p63 = por %p61, %p62
      %p64 = scmp.ne.s32.totalorder %s50, %s51
      %p65 = scmp.eq.s32.totalorder %s29, 1
      %p66 = por %p64, %p65
      %p68 = scmp.ne.s32.totalorder %s51, %s67
      %p69 = scmp.eq.s32.totalorder %s29, 0
      %p70 = por %p68, %p69
      %s71 = ssub.s32 %s30, %s42
      %p72 = scmp.eq.s32.totalorder %s71, 0
      %s74 = sadd.s32 %s73, 1
      %s75 = scalar_select %p72, %s73, %s74
      %p78 = pneg %p72
      %p79 = scmp.eq.s32.totalorder %s23, 1
      %p80 = por %p78, %p79
      %p81 = scmp.ne.s32.totalorder %s73, %s76
      %p82 = scmp.eq.s32.totalorder %s23, 0
      %p83 = por %p81, %p82
      %p84 = scmp.ne.s32.totalorder %s73, %s76
      %p85 = scmp.eq.s32.totalorder %s28, 1
      %p86 = por %p84, %p85
      %p87 = scmp.ne.s32.totalorder %s76, %s77
      %p88 = scmp.eq.s32.totalorder %s28, 0
      %p89 = por %p87, %p88
      %p90 = scmp.ne.s32.totalorder %s76, %s77
      %p91 = scmp.eq.s32.totalorder %s29, 1
      %p92 = por %p90, %p91
      %p94 = scmp.ne.s32.totalorder %s77, %s93
      %p95 = scmp.eq.s32.totalorder %s29, 0
      %p96 = por %p94, %p95
      %s98 = sadd.s32 %s97, 1
      %p101 = scmp.eq.s32.totalorder %s23, 1
      %p102 = scmp.ne.s32.totalorder %s97, %s99
      %p103 = scmp.eq.s32.totalorder %s23, 0
      %p104 = por %p102, %p103
      %p105 = scmp.ne.s32.totalorder %s97, %s99
      %p106 = scmp.eq.s32.totalorder %s28, 1
      %p107 = por %p105, %p106
      %p108 = scmp.ne.s32.totalorder %s99, %s100
      %p109 = scmp.eq.s32.totalorder %s28, 0
      %p110 = por %p108, %p109
      %p111 = scmp.ne.s32.totalorder %s99, %s100
      %p112 = scmp.eq.s32.totalorder %s29, 1
      %p113 = por %p111, %p112
      %p115 = scmp.ne.s32.totalorder %s100, %s114
      %p116 = scmp.eq.s32.totalorder %s29, 0
      %p117 = por %p115, %p116
      %s119 = sadd.s32 %s118, 1
      %p122 = scmp.eq.s32.totalorder %s23, 1
      %p123 = scmp.ne.s32.totalorder %s118, %s120
      %p124 = scmp.eq.s32.totalorder %s23, 0
      %p125 = por %p123, %p124
      %p126 = scmp.ne.s32.totalorder %s118, %s120
      %p127 = scmp.eq.s32.totalorder %s28, 1
      %p128 = por %p126, %p127
      %p129 = scmp.ne.s32.totalorder %s120, %s121
      %p130 = scmp.eq.s32.totalorder %s28, 0
      %p131 = por %p129, %p130
      %p132 = scmp.ne.s32.totalorder %s120, %s121
      %p133 = scmp.eq.s32.totalorder %s29, 1
      %p134 = por %p132, %p133
      %p136 = scmp.ne.s32.totalorder %s121, %s135
      %p137 = scmp.eq.s32.totalorder %s29, 0
      %p138 = por %p136, %p137
      %s140 = sadd.s32 %s139, 1
      %p143 = scmp.eq.s32.totalorder %s23, 1
      %p144 = scmp.ne.s32.totalorder %s139, %s141
      %p145 = scmp.eq.s32.totalorder %s23, 0
      %p146 = por %p144, %p145
      %p147 = scmp.ne.s32.totalorder %s139, %s141
      %p148 = scmp.eq.s32.totalorder %s28, 1
      %p149 = por %p147, %p148
      %p150 = scmp.ne.s32.totalorder %s141, %s142
      %p151 = scmp.eq.s32.totalorder %s28, 0
      %p152 = por %p150, %p151
      %p153 = scmp.ne.s32.totalorder %s141, %s142
      %p154 = scmp.eq.s32.totalorder %s29, 1
      %p155 = por %p153, %p154
      %p157 = scmp.ne.s32.totalorder %s142, %s156
      %p158 = scmp.eq.s32.totalorder %s29, 0
      %p159 = por %p157, %p158
      %s161 = sadd.s32 %s160, 1
      %p164 = scmp.eq.s32.totalorder %s23, 1
      %p165 = scmp.ne.s32.totalorder %s160, %s162
      %p166 = scmp.eq.s32.totalorder %s23, 0
      %p167 = por %p165, %p166
      %p168 = scmp.ne.s32.totalorder %s160, %s162
      %p169 = scmp.eq.s32.totalorder %s28, 1
      %p170 = por %p168, %p169
      %p171 = scmp.ne.s32.totalorder %s162, %s163
      %p172 = scmp.eq.s32.totalorder %s28, 0
      %p173 = por %p171, %p172
      %p174 = scmp.ne.s32.totalorder %s162, %s163
      %p175 = scmp.eq.s32.totalorder %s29, 1
      %p176 = por %p174, %p175
      %p178 = scmp.ne.s32.totalorder %s163, %s177
      %p179 = scmp.eq.s32.totalorder %s29, 0
      %p180 = por %p178, %p179
      %s182 = sadd.s32 %s181, 1
      %p185 = scmp.eq.s32.totalorder %s23, 1
      %p186 = scmp.ne.s32.totalorder %s181, %s183
      %p187 = scmp.eq.s32.totalorder %s23, 0
      %p188 = por %p186, %p187
      %p189 = scmp.ne.s32.totalorder %s181, %s183
      %p190 = scmp.eq.s32.totalorder %s28, 1
      %p191 = por %p189, %p190
      %p192 = scmp.ne.s32.totalorder %s183, %s184
      %p193 = scmp.eq.s32.totalorder %s28, 0
      %p194 = por %p192, %p193
      %p195 = scmp.ne.s32.totalorder %s183, %s184
      %p196 = scmp.eq.s32.totalorder %s29, 1
      %p197 = por %p195, %p196
      %p199 = scmp.ne.s32.totalorder %s184, %s198
      %p200 = scmp.eq.s32.totalorder %s29, 0
      %p201 = por %p199, %p200
      %s203 = sadd.s32 %s202, 1
      %p206 = scmp.eq.s32.totalorder %s23, 1
      %p207 = scmp.ne.s32.totalorder %s202, %s204
      %p208 = scmp.eq.s32.totalorder %s23, 0
      %p209 = por %p207, %p208
      %p210 = scmp.ne.s32.totalorder %s202, %s204
      %p211 = scmp.eq.s32.totalorder %s28, 1
      %p212 = por %p210, %p211
      %p213 = scmp.ne.s32.totalorder %s204, %s205
      %p214 = scmp.eq.s32.totalorder %s28, 0
      %p215 = por %p213, %p214
      %p216 = scmp.ne.s32.totalorder %s204, %s205
      %p217 = scmp.eq.s32.totalorder %s29, 1
      %p218 = por %p216, %p217
      %p220 = scmp.ne.s32.totalorder %s205, %s219
      %p221 = scmp.eq.s32.totalorder %s29, 0
      %p222 = por %p220, %p221
      %s224 = sadd.s32 %s223, 1
      %p227 = scmp.eq.s32.totalorder %s23, 1
      %p228 = scmp.ne.s32.totalorder %s223, %s225
      %p229 = scmp.eq.s32.totalorder %s23, 0
      %p230 = por %p228, %p229
      %p231 = scmp.ne.s32.totalorder %s223, %s225
      %p232 = scmp.eq.s32.totalorder %s28, 1
      %p233 = por %p231, %p232
      %p234 = scmp.ne.s32.totalorder %s225, %s226
      %p235 = scmp.eq.s32.totalorder %s28, 0
      %p236 = por %p234, %p235
      %p237 = scmp.ne.s32.totalorder %s225, %s226
      %p238 = scmp.eq.s32.totalorder %s29, 1
      %p239 = por %p237, %p238
      %p241 = scmp.ne.s32.totalorder %s226, %s240
      %p242 = scmp.eq.s32.totalorder %s29, 0
      %p243 = por %p241, %p242
      %s245 = sadd.s32 %s244, 1
      %p248 = scmp.eq.s32.totalorder %s23, 1
      %p249 = scmp.ne.s32.totalorder %s244, %s246
      %p250 = scmp.eq.s32.totalorder %s23, 0
      %p251 = por %p249, %p250
      %p252 = scmp.ne.s32.totalorder %s244, %s246
      %p253 = scmp.eq.s32.totalorder %s28, 1
      %p254 = por %p252, %p253
      %p255 = scmp.ne.s32.totalorder %s246, %s247
      %p256 = scmp.eq.s32.totalorder %s28, 0
      %p257 = por %p255, %p256
      %p258 = scmp.ne.s32.totalorder %s246, %s247
      %p259 = scmp.eq.s32.totalorder %s29, 1
      %p260 = por %p258, %p259
      %p262 = scmp.ne.s32.totalorder %s247, %s261
      %p263 = scmp.eq.s32.totalorder %s29, 0
      %p264 = por %p262, %p263
      %s266 = sadd.s32 %s265, 1
      %p269 = scmp.eq.s32.totalorder %s23, 1
      %p270 = scmp.ne.s32.totalorder %s265, %s267
      %p271 = scmp.eq.s32.totalorder %s23, 0
      %p272 = por %p270, %p271
      %p273 = scmp.ne.s32.totalorder %s265, %s267
      %p274 = scmp.eq.s32.totalorder %s28, 1
      %p275 = por %p273, %p274
      %p276 = scmp.ne.s32.totalorder %s267, %s268
      %p277 = scmp.eq.s32.totalorder %s28, 0
      %p278 = por %p276, %p277
      %p279 = scmp.ne.s32.totalorder %s267, %s268
      %p280 = scmp.eq.s32.totalorder %s29, 1
      %p281 = por %p279, %p280
      %p283 = scmp.ne.s32.totalorder %s268, %s282
      %p284 = scmp.eq.s32.totalorder %s29, 0
      %p285 = por %p283, %p284
      %s287 = sadd.s32 %s286, 1
      %p290 = scmp.eq.s32.totalorder %s23, 1
      %p291 = scmp.ne.s32.totalorder %s286, %s288
      %p292 = scmp.eq.s32.totalorder %s23, 0
      %p293 = por %p291, %p292
      %p294 = scmp.ne.s32.totalorder %s286, %s288
      %p295 = scmp.eq.s32.totalorder %s28, 1
      %p296 = por %p294, %p295
      %p297 = scmp.ne.s32.totalorder %s288, %s289
      %p298 = scmp.eq.s32.totalorder %s28, 0
      %p299 = por %p297, %p298
      %p300 = scmp.ne.s32.totalorder %s288, %s289
      %p301 = scmp.eq.s32.totalorder %s29, 1
      %p302 = por %p300, %p301
      %p304 = scmp.ne.s32.totalorder %s289, %s303
      %p305 = scmp.eq.s32.totalorder %s29, 0
      %p306 = por %p304, %p305
      %s307 = ssub.s32 %s30, %s42
      %s308 = ssub.s32 %s31, %s38
      %s309 = sor.u32 %s307, %s308
      %p310 = scmp.eq.s32.totalorder %s309, 0
      %s312 = sadd.s32 %s311, 1
      %s313 = scalar_select %p310, %s311, %s312
      %p316 = pneg %p310
      %p317 = scmp.eq.s32.totalorder %s23, 1
      %p318 = por %p316, %p317
      %p319 = scmp.ne.s32.totalorder %s311, %s314
      %p320 = scmp.eq.s32.totalorder %s23, 0
      %p321 = por %p319, %p320
      %p322 = scmp.ne.s32.totalorder %s311, %s314
      %p323 = scmp.eq.s32.totalorder %s28, 1
      %p324 = por %p322, %p323
      %p325 = scmp.ne.s32.totalorder %s314, %s315
      %p326 = scmp.eq.s32.totalorder %s28, 0
      %p327 = por %p325, %p326
      %p328 = scmp.ne.s32.totalorder %s314, %s315
      %p329 = scmp.eq.s32.totalorder %s29, 1
      %p330 = por %p328, %p329
      %p332 = scmp.ne.s32.totalorder %s315, %s331
      %p333 = scmp.eq.s32.totalorder %s29, 0
      %p334 = por %p332, %p333
      %p335 = scmp.le.s32.totalorder 1, %s23
      %p336 = scmp.lt.s32.totalorder %s23, 3
      %p337 = pnand %p335, %p336
      %p338 = pneg %p337
      // Predicated region
      $region9: #{decoder_forward.10} parent=5 // pred_check
        _
      $region10: #{decoder_forward.10} parent=5 // pred_check_branch
        %340 = sbr.rel (%p337) target = $region12
      $region11: #{decoder_forward.10} parent=5 // pred_region
        %s341 = ssub.s32 %s23, 1
        // Predicated region
        $region13: #{decoder_forward.10} parent=11 // pred_check
          %p342 = pneg %p110
        $region14: #{decoder_forward.10} parent=11 // pred_check_branch
          %344 = sbr.rel (%p342) target = $region16
        $region15: #{decoder_forward.10} parent=11 // pred_region
          %346 = vsyncadd [#allocation3], 0
          %s348 = sshll.u32 %s2, 4
          %s349 = int_to_ptr.hbm [resolvable:$true] %s348
          %s350 = sshll.u32 [#allocation2], 4
          %s351 = int_to_ptr.vmem [resolvable:$true] %s350
          %353 = dma.hbm_to_vmem [thread:$0]  %s349, 16, %s351, [#allocation3]
        $region16: #{decoder_forward.10} parent=11 // pred_fallthru
          _
        // Predicated region
        $region17: #{decoder_forward.10} parent=11 // pred_check
          %p354 = pneg %p131
        $region18: #{decoder_forward.10} parent=11 // pred_check_branch
          %356 = sbr.rel (%p354) target = $region20
        $region19: #{decoder_forward.10} parent=11 // pred_region
          %358 = vsyncadd [#allocation5], 0
          %s360 = sshll.u32 %s3, 4
          %s361 = int_to_ptr.hbm [resolvable:$true] %s360
          %s362 = sshll.u32 [#allocation4], 4
          %s363 = int_to_ptr.vmem [resolvable:$true] %s362
          %365 = dma.hbm_to_vmem [thread:$0]  %s361, 16, %s363, [#allocation5]
        $region20: #{decoder_forward.10} parent=11 // pred_fallthru
          _
        // Predicated region
        $region21: #{decoder_forward.10} parent=11 // pred_check
          %p366 = pneg %p152
        $region22: #{decoder_forward.10} parent=11 // pred_check_branch
          %368 = sbr.rel (%p366) target = $region24
        $region23: #{decoder_forward.10} parent=11 // pred_region
          _
        $region24: #{decoder_forward.10} parent=11 // pred_fallthru
          _
        // Predicated region
        $region25: #{decoder_forward.10} parent=11 // pred_check
          %p369 = pneg %p173
        $region26: #{decoder_forward.10} parent=11 // pred_check_branch
          %371 = sbr.rel (%p369) target = $region28
        $region27: #{decoder_forward.10} parent=11 // pred_region
          %373 = vsyncadd [#allocation5], 0
          %s375 = sshll.u32 %s5, 4
          %s376 = int_to_ptr.hbm [resolvable:$true] %s375
          %s377 = sshll.u32 [#allocation6], 4
          %s378 = int_to_ptr.vmem [resolvable:$true] %s377
          %380 = dma.hbm_to_vmem [thread:$0]  %s376, 16, %s378, [#allocation5]
        $region28: #{decoder_forward.10} parent=11 // pred_fallthru
          _
        // Predicated region
        $region29: #{decoder_forward.10} parent=11 // pred_check
          %p381 = pneg %p194
        $region30: #{decoder_forward.10} parent=11 // pred_check_branch
          %383 = sbr.rel (%p381) target = $region32
        $region31: #{decoder_forward.10} parent=11 // pred_region
          _
        $region32: #{decoder_forward.10} parent=11 // pred_fallthru
          _
        // Predicated region
        $region33: #{decoder_forward.10} parent=11 // pred_check
          %p384 = pneg %p215
        $region34: #{decoder_forward.10} parent=11 // pred_check_branch
          %386 = sbr.rel (%p384) target = $region36
        $region35: #{decoder_forward.10} parent=11 // pred_region
          %388 = vsyncadd [#allocation8], 0
          %s390 = sshll.u32 %s7, 4
          %s391 = int_to_ptr.hbm [resolvable:$true] %s390
          %s392 = sshll.u32 [#allocation7], 4
          %s393 = int_to_ptr.vmem [resolvable:$true] %s392
          %395 = dma.hbm_to_vmem [thread:$0]  %s391, 16, %s393, [#allocation8]
        $region36: #{decoder_forward.10} parent=11 // pred_fallthru
          _
        // Predicated region
        $region37: #{decoder_forward.10} parent=11 // pred_check
          %p396 = pneg %p236
        $region38: #{decoder_forward.10} parent=11 // pred_check_branch
          %398 = sbr.rel (%p396) target = $region40
        $region39: #{decoder_forward.10} parent=11 // pred_region
          %400 = vsyncadd [#allocation8], 0
          %s401 = sshll.u32 %s8, 4
          %s402 = int_to_ptr.hbm [resolvable:$true] %s401
          %s403 = sshll.u32 [#allocation9], 4
          %s404 = int_to_ptr.vmem [resolvable:$true] %s403
          %409 = dma.hbm_to_vmem [thread:$0]  %s402, 256, %s404, [#allocation8], 64, 64, 4
        $region40: #{decoder_forward.10} parent=11 // pred_fallthru
          _
        // Predicated region
        $region41: #{decoder_forward.10} parent=11 // pred_check
          %p410 = pneg %p257
        $region42: #{decoder_forward.10} parent=11 // pred_check_branch
          %412 = sbr.rel (%p410) target = $region44
        $region43: #{decoder_forward.10} parent=11 // pred_region
          %414 = vsyncadd [#allocation11], 0
          %s416 = sshll.u32 %s9, 4
          %s417 = int_to_ptr.hbm [resolvable:$true] %s416
          %s418 = sshll.u32 [#allocation10], 4
          %s419 = int_to_ptr.vmem [resolvable:$true] %s418
          %421 = dma.hbm_to_vmem [thread:$0]  %s417, 16, %s419, [#allocation11]
        $region44: #{decoder_forward.10} parent=11 // pred_fallthru
          _
        // Predicated region
        $region45: #{decoder_forward.10} parent=11 // pred_check
          %p422 = pneg %p278
        $region46: #{decoder_forward.10} parent=11 // pred_check_branch
          %424 = sbr.rel (%p422) target = $region48
        $region47: #{decoder_forward.10} parent=11 // pred_region
          %426 = vsyncadd [#allocation11], 0
          %s427 = sshll.u32 %s10, 4
          %s428 = int_to_ptr.hbm [resolvable:$true] %s427
          %s429 = sshll.u32 [#allocation12], 4
          %s430 = int_to_ptr.vmem [resolvable:$true] %s429
          %435 = dma.hbm_to_vmem [thread:$0]  %s428, 256, %s430, [#allocation11], 64, 64, 4
        $region48: #{decoder_forward.10} parent=11 // pred_fallthru
          _
        // Predicated region
        $region49: #{decoder_forward.10} parent=11 // pred_check
          %p436 = pneg %p299
        $region50: #{decoder_forward.10} parent=11 // pred_check_branch
          %438 = sbr.rel (%p436) target = $region52
        $region51: #{decoder_forward.10} parent=11 // pred_region
          %440 = vsyncadd [#allocation14], 0
          %s442 = sshll.u32 %s11, 4
          %s443 = int_to_ptr.hbm [resolvable:$true] %s442
          %s444 = sshll.u32 [#allocation13], 4
          %s445 = int_to_ptr.vmem [resolvable:$true] %s444
          %447 = dma.hbm_to_vmem [thread:$0]  %s443, 16, %s445, [#allocation14]
        $region52: #{decoder_forward.10} parent=11 // pred_fallthru
          _
      $region12: #{decoder_forward.10} parent=5 // pred_fallthru
        _
      %p448 = scmp.lt.s32.totalorder %s23, 2
      // Predicated region
      $region53: #{decoder_forward.10} parent=5 // pred_check
        %p449 = pneg %p448
      $region54: #{decoder_forward.10} parent=5 // pred_check_branch
        %451 = sbr.rel (%p449) target = $region56
      $region55: #{decoder_forward.10} parent=5 // pred_region
        // Predicated region
        $region57: #{decoder_forward.10} parent=55 // pred_check
          %p452 = pneg %p57
        $region58: #{decoder_forward.10} parent=55 // pred_check_branch
          %454 = sbr.rel (%p452) target = $region60
        $region59: #{decoder_forward.10} parent=55 // pred_region
          %p455 = scmp.lt.s32.totalorder %s30, 1
          %s456 = scalar_select %p455, %s30, 1
          %p457 = scmp.lt.s32.totalorder %s31, 0
          %s458 = scalar_select %p457, %s31, 0
          %s459 = sadd.s32 %s458, %s456
          %s460 = smul.addr %s459, 8
          %s461 = scalar_lea.vmem %s0, %s460
        $region60: #{decoder_forward.10} parent=55 // pred_fallthru
          _
        // Predicated region
        $region61: #{decoder_forward.10} parent=55 // pred_check
          %p462 = pneg %p83
        $region62: #{decoder_forward.10} parent=55 // pred_check_branch
          %464 = sbr.rel (%p462) target = $region64
        $region63: #{decoder_forward.10} parent=55 // pred_region
          %p465 = scmp.lt.s32.totalorder %s30, 1
          %s466 = scalar_select %p465, %s30, 1
          %s467 = smul.addr %s466, 8
          %s468 = scalar_lea.vmem %s1, %s467
        $region64: #{decoder_forward.10} parent=55 // pred_fallthru
          _
      $region56: #{decoder_forward.10} parent=5 // pred_fallthru
        _
      %p469 = scmp.le.s32.totalorder 1, %s23
      %p470 = scmp.lt.s32.totalorder %s23, 3
      %p471 = pnand %p469, %p470
      %p472 = pneg %p471
      // Predicated region
      $region65: #{decoder_forward.10} parent=5 // pred_check
        _
      $region66: #{decoder_forward.10} parent=5 // pred_check_branch
        %474 = sbr.rel (%p471) target = $region68
      $region67: #{decoder_forward.10} parent=5 // pred_region
        %s475 = ssub.s32 %s23, 1
        // Predicated region
        $region69: #{decoder_forward.10} parent=67 // pred_check
          %p476 = pneg %p110
        $region70: #{decoder_forward.10} parent=67 // pred_check_branch
          %478 = sbr.rel (%p476) target = $region72
        $region71: #{decoder_forward.10} parent=67 // pred_region
          %480 = dma.done [#allocation3], 16
        $region72: #{decoder_forward.10} parent=67 // pred_fallthru
          _
        // Predicated region
        $region73: #{decoder_forward.10} parent=67 // pred_check
          %p481 = pneg %p131
        $region74: #{decoder_forward.10} parent=67 // pred_check_branch
          %483 = sbr.rel (%p481) target = $region76
        $region75: #{decoder_forward.10} parent=67 // pred_region
          %485 = dma.done [#allocation5], 16
        $region76: #{decoder_forward.10} parent=67 // pred_fallthru
          _
        // Predicated region
        $region77: #{decoder_forward.10} parent=67 // pred_check
          %p486 = pneg %p173
        $region78: #{decoder_forward.10} parent=67 // pred_check_branch
          %488 = sbr.rel (%p486) target = $region80
        $region79: #{decoder_forward.10} parent=67 // pred_region
          %490 = dma.done [#allocation5], 16
        $region80: #{decoder_forward.10} parent=67 // pred_fallthru
          _
        // Predicated region
        $region81: #{decoder_forward.10} parent=67 // pred_check
          %p491 = pneg %p215
        $region82: #{decoder_forward.10} parent=67 // pred_check_branch
          %493 = sbr.rel (%p491) target = $region84
        $region83: #{decoder_forward.10} parent=67 // pred_region
          %495 = dma.done [#allocation8], 16
        $region84: #{decoder_forward.10} parent=67 // pred_fallthru
          _
        // Predicated region
        $region85: #{decoder_forward.10} parent=67 // pred_check
          %p496 = pneg %p236
        $region86: #{decoder_forward.10} parent=67 // pred_check_branch
          %498 = sbr.rel (%p496) target = $region88
        $region87: #{decoder_forward.10} parent=67 // pred_region
          %500 = dma.done [#allocation8], 256
        $region88: #{decoder_forward.10} parent=67 // pred_fallthru
          _
        // Predicated region
        $region89: #{decoder_forward.10} parent=67 // pred_check
          %p501 = pneg %p257
        $region90: #{decoder_forward.10} parent=67 // pred_check_branch
          %503 = sbr.rel (%p501) target = $region92
        $region91: #{decoder_forward.10} parent=67 // pred_region
          %505 = dma.done [#allocation11], 16
        $region92: #{decoder_forward.10} parent=67 // pred_fallthru
          _
        // Predicated region
        $region93: #{decoder_forward.10} parent=67 // pred_check
          %p506 = pneg %p278
        $region94: #{decoder_forward.10} parent=67 // pred_check_branch
          %508 = sbr.rel (%p506) target = $region96
        $region95: #{decoder_forward.10} parent=67 // pred_region
          %510 = dma.done [#allocation11], 256
        $region96: #{decoder_forward.10} parent=67 // pred_fallthru
          _
        // Predicated region
        $region97: #{decoder_forward.10} parent=67 // pred_check
          %p511 = pneg %p299
        $region98: #{decoder_forward.10} parent=67 // pred_check_branch
          %513 = sbr.rel (%p511) target = $region100
        $region99: #{decoder_forward.10} parent=67 // pred_region
          %515 = dma.done [#allocation14], 16
        $region100: #{decoder_forward.10} parent=67 // pred_fallthru
          _
        %p516 = scmp.lt.s32.totalorder %s32, 1
        %s517 = scalar_select %p516, %s32, 1
        %p518 = scmp.lt.s32.totalorder %s33, 0
        %s519 = scalar_select %p518, %s33, 0
        %s520 = sadd.s32 %s519, %s517
        %s521 = smul.addr %s520, 8
        %s522 = scalar_lea.vmem %s0, %s521
        %p523 = pneg %p63
        %p524 = pneg %p60
        %p525 = scmp.lt.s32.totalorder %s32, 1
        %s526 = scalar_select %p525, %s32, 1
        %s527 = smul.addr %s526, 8
        %s528 = scalar_lea.vmem %s1, %s527
        %p529 = pneg %p89
        %p530 = pneg %p86
        %p531 = pneg %p110
        %p532 = pneg %p107
        %p533 = pneg %p131
        %p534 = pneg %p128
        %p535 = pneg %p152
        %p536 = pneg %p149
        %p537 = pneg %p173
        %p538 = pneg %p170
        %p539 = pneg %p194
        %p540 = pneg %p191
        %p541 = pneg %p215
        %p542 = pneg %p212
        %p543 = pneg %p236
        %p544 = pneg %p233
        %p545 = pneg %p257
        %p546 = pneg %p254
        %p547 = pneg %p278
        %p548 = pneg %p275
        %p549 = pneg %p299
        %p550 = pneg %p296
        %p551 = pneg %p327
        %p552 = pneg %p324
        %p553 = scmp.lt.s32.totalorder %s32, 1
        %s554 = scalar_select %p553, %s32, 1
        %p555 = scmp.lt.s32.totalorder %s33, 0
        %s556 = scalar_select %p555, %s33, 0
        %s557 = sadd.s32 %s556, %s554
        %s558 = smul.addr %s557, 8
        %s559 = scalar_lea.vmem %s12, %s558
        %p560 = scmp.lt.s32.totalorder %s32, 1
        %s561 = scalar_select %p560, %s32, 1
        %p562 = scmp.lt.s32.totalorder %s33, 0
        %s563 = scalar_select %p562, %s33, 0
        %s564 = sadd.s32 %s563, %s561
        %s565 = smul.addr %s564, 8
        %s566 = scalar_lea.vmem %s0, %s565
        %p567 = scmp.lt.s32.totalorder %s32, 1
        %s568 = scalar_select %p567, %s32, 1
        %s569 = smul.addr %s568, 8
        %s570 = scalar_lea.vmem %s1, %s569
        %p571 = scmp.lt.s32.totalorder %s32, 1
        %s572 = scalar_select %p571, %s32, 1
        %p573 = scmp.lt.s32.totalorder %s33, 0
        %s574 = scalar_select %p573, %s33, 0
        %s575 = sadd.s32 %s574, %s572
        %s576 = smul.addr %s575, 8
        %s577 = scalar_lea.vmem %s12, %s576
        %v579 = vld [vmem:[%s566] sm:$0xff]
        %v580 = vld [vmem:[#allocation2] sm:$0x1]
        %v581 = vld [vmem:[#allocation4] sm:$0x1]
        %vm582 = vcmask 261120
        %v583 = vsel %vm582, %v579, 0.0
        %584 = vadd.xlane.f32.xlu0 %v583
        %v585 = vpop.xlane.xlu0 %584
        %v586 = vrcp.pop 32.0
        %v587 = vmul.f32 32.0, %v586
        %v588 = vsub.f32 1.0, %v587
        %v589 = vmul.f32 %v586, %v588
        %v590 = vadd.f32 %v586, %v589
        %vm591 = vweird.f32 %v586
        %v592 = vsel %vm591, %v586, %v590
        %v593 = vmul.f32 %v585, %v592
        %v594 = vsub.f32 %v579, %v593
        %v595 = vmul.f32 %v594, %v594
        %v596 = vsel %vm582, %v595, 0.0
        %597 = vadd.xlane.f32.xlu0 %v596
        %v598 = vpop.xlane.xlu0 %597
        %v599 = vmul.f32 %v598, 0.032258064
        %v600 = vrsqrt.pop %v599
        %v601 = vmul.f32 %v600, %v599
        %v602 = vmul.f32 %v601, %v600
        %v603 = vmul.f32 0.5, %v602
        %v604 = vsub.f32 1.5, %v603
        %v605 = vmul.f32 %v600, %v604
        %v606 = vmul.f32 %v599, %v605
        %vm607 = vcmp.eq.f32.partialorder %v599, inf
        %v608 = vsel %vm607, %v599, %v606
        %vm609 = vcmp.eq.f32.partialorder %v599, 0.0
        %v610 = vand.u32 %v599, 2147483648
        %v611 = vsel %vm609, %v610, %v608
        %v613 = vperm.slane %v580, 0
        %v615 = vmul.f32 %v613, %v594
        %v616 = vadd.f32 %v611, 1e-06
        %v617 = vrcp.pop %v616
        %v618 = vmul.f32 %v616, %v617
        %v619 = vsub.f32 1.0, %v618
        %v620 = vmul.f32 %v617, %v619
        %v621 = vadd.f32 %v617, %v620
        %vm622 = vweird.f32 %v616
        %vm623 = vweird.f32 %v617
        %vm624 = vmor %vm622, %vm623
        %v625 = vsel %vm624, %v617, %v621
        %v626 = vand.u32 2147483647, %v616
        %vm627 = vcmp.eq.f32.partialorder %v626, 8.507059e+37
        %v628 = vand.u32 %v616, 2147483648
        %v629 = vor.u32 1.1754944e-38, %v628
        %v630 = vsel %vm627, %v629, %v625
        %v631 = vmul.f32 1.0, %v630
        %v632 = vmul.f32 %v615, %v631
        %v634 = vperm.slane %v581, 0
        %v636 = vadd.f32 %v632, %v634
        %v637 = vld [vmem:[%s570] sm:$0xff]
        %v638 = vsel %vm582, %v637, 0.0
        %639 = vadd.xlane.f32.xlu0 %v638
        %v640 = vpop.xlane.xlu0 %639
        %v641 = vmul.f32 %v640, %v592
        %v642 = vsub.f32 %v637, %v641
        %v643 = vmul.f32 %v642, %v642
        %v644 = vsel %vm582, %v643, 0.0
        %645 = vadd.xlane.f32.xlu0 %v644
        %v646 = vpop.xlane.xlu0 %645
        %v647 = vmul.f32 %v646, 0.032258064
        %v648 = vrsqrt.pop %v647
        %v649 = vmul.f32 %v648, %v647
        %v650 = vmul.f32 %v649, %v648
        %v651 = vmul.f32 0.5, %v650
        %v652 = vsub.f32 1.5, %v651
        %v653 = vmul.f32 %v648, %v652
        %v654 = vmul.f32 %v647, %v653
        %vm655 = vcmp.eq.f32.partialorder %v647, inf
        %v656 = vsel %vm655, %v647, %v654
        %vm657 = vcmp.eq.f32.partialorder %v647, 0.0
        %v658 = vand.u32 %v647, 2147483648
        %v659 = vsel %vm657, %v658, %v656
        %v660 = vmul.f32 %v613, %v642
        %v661 = vadd.f32 %v659, 1e-06
        %v662 = vrcp.pop %v661
        %v663 = vmul.f32 %v661, %v662
        %v664 = vsub.f32 1.0, %v663
        %v665 = vmul.f32 %v662, %v664
        %v666 = vadd.f32 %v662, %v665
        %vm667 = vweird.f32 %v661
        %vm668 = vweird.f32 %v662
        %vm669 = vmor %vm667, %vm668
        %v670 = vsel %vm669, %v662, %v666
        %v671 = vand.u32 2147483647, %v661
        %vm672 = vcmp.eq.f32.partialorder %v671, 8.507059e+37
        %v673 = vand.u32 %v661, 2147483648
        %v674 = vor.u32 1.1754944e-38, %v673
        %v675 = vsel %vm672, %v674, %v670
        %v676 = vmul.f32 1.0, %v675
        %v677 = vmul.f32 %v660, %v676
        %v678 = vadd.f32 %v677, %v634
        %v679 = vpack.c.bf16 %v678, %v678
        %v680 = vpack.c.bf16 %v636, %v636
        %v681 = vld [vmem:[%s4] sm:$0xf]
        %v682 = vld [vmem:[%s4 + $0x4] sm:$0xf]
        %v683 = vld [vmem:[%s4 + $0x8] sm:$0xf]
        %v684 = vld [vmem:[%s4 + $0xc] sm:$0xf]
        %v685 = vld [vmem:[#allocation6] sm:$0x1]
        %v687 = vperm.slane %v685, 0
        %v693 = vunpack.c.l.b16 %v681
        %v694 = vunpack.c.l.b16 %v682
        %v695 = vunpack.c.l.b16 %v683
        %v696 = vunpack.c.l.b16 %v684
        %v697 = vpack.c.b16 %v694, %v693
        %v698 = vpack.c.b16 %v696, %v695
        %v702 = vsel %vm582, %v680, 0
        %704 = vmatpush.bf16.msra.mxu0 0
        %705 = vmatpush.bf16.msra.mxu0 0
        %706 = vmatpush.bf16.msra.mxu0 0
        %707 = vmatpush.bf16.msra.mxu0 0
        %708 = vmatpush.bf16.msra.mxu0 0
        %709 = vmatpush.bf16.msra.mxu0 0
        %710 = vmatpush.bf16.msra.mxu0 %v698
        %711 = vmatpush.bf16.msra.mxu0 %v697
        %712 = vmatmul.bf16.gmra.mxu0 %v702
        %v713 = vpop.f32.mrf.mxu0
        %v714 = vadd.f32 %v687, %v713
        %v715 = vpop.f32.mrf.mxu0
        %716 = vdwg.mxu0
        %v717 = vpack.c.bf16 %v714, %v714
        %v718 = vld [vmem:[%s6] sm:$0xf]
        %v719 = vld [vmem:[%s6 + $0x4] sm:$0xf]
        %v720 = vld [vmem:[%s6 + $0x8] sm:$0xf]
        %v721 = vld [vmem:[%s6 + $0xc] sm:$0xf]
        %v722 = vld [vmem:[#allocation7] sm:$0x1]
        %v724 = vperm.slane %v722, 0
        %v730 = vunpack.c.l.b16 %v718
        %v731 = vunpack.c.l.b16 %v719
        %v732 = vunpack.c.l.b16 %v720
        %v733 = vunpack.c.l.b16 %v721
        %v734 = vpack.c.b16 %v731, %v730
        %v735 = vpack.c.b16 %v733, %v732
        %v739 = vsel %vm582, %v679, 0
        %741 = vmatpush.bf16.msra.mxu0 0
        %742 = vmatpush.bf16.msra.mxu0 0
        %743 = vmatpush.bf16.msra.mxu0 0
        %744 = vmatpush.bf16.msra.mxu0 0
        %745 = vmatpush.bf16.msra.mxu0 0
        %746 = vmatpush.bf16.msra.mxu0 0
        %747 = vmatpush.bf16.msra.mxu0 %v735
        %748 = vmatpush.bf16.msra.mxu0 %v734
        %749 = vmatmul.bf16.gmra.mxu0 %v739
        %v750 = vpop.f32.mrf.mxu0
        %v751 = vadd.f32 %v724, %v750
        %v752 = vpop.f32.mrf.mxu0
        %753 = vdwg.mxu0
        %v754 = vpack.c.bf16 %v751, %v751
        %v755 = vld [vmem:[#allocation9] sm:$0xf]
        %v756 = vld [vmem:[#allocation9 + $0x4] sm:$0xf]
        %v757 = vld [vmem:[#allocation9 + $0x8] sm:$0xf]
        %v758 = vld [vmem:[#allocation9 + $0xc] sm:$0xf]
        %v759 = vld [vmem:[#allocation10] sm:$0x1]
        %v761 = vperm.slane %v759, 0
        %v767 = vunpack.c.l.b16 %v755
        %v768 = vunpack.c.l.b16 %v756
        %v769 = vunpack.c.l.b16 %v757
        %v770 = vunpack.c.l.b16 %v758
        %v771 = vpack.c.b16 %v768, %v767
        %v772 = vpack.c.b16 %v770, %v769
        %775 = vmatpush.bf16.msra.mxu0 0
        %776 = vmatpush.bf16.msra.mxu0 0
        %777 = vmatpush.bf16.msra.mxu0 0
        %778 = vmatpush.bf16.msra.mxu0 0
        %779 = vmatpush.bf16.msra.mxu0 0
        %780 = vmatpush.bf16.msra.mxu0 0
        %781 = vmatpush.bf16.msra.mxu0 %v772
        %782 = vmatpush.bf16.msra.mxu0 %v771
        %783 = vmatmul.bf16.gmra.mxu0 %v739
        %v784 = vpop.f32.mrf.mxu0
        %v785 = vadd.f32 %v761, %v784
        %v786 = vpop.f32.mrf.mxu0
        %787 = vdwg.mxu0
        %v788 = vpack.c.bf16 %v785, %v785
        %s789 = smul.u32 %s33, 8
        %v790 = vlaneseq
        %v791 = vshrl.u32 %v790, 7
        %v792 = vstv %s789
        %v793 = vadd.s32 %v792, %v791
        %v794 = vlaneseq
        %v795 = vand.u32 %v794, 127
        %vm796 = vcmp.ge.s32.totalorder %v793, %v795
        %v797 = vsel %vm796, 0.0, -1e+09
        %vm798 = vcmask 64512
        %v800 = vsel %vm798, %v717, 0
        %v803 = vsel %vm798, %v754, 0
        %805 = vmatpush.bf16.xpose.msra.mxu0 0
        %806 = vmatpush.bf16.xpose.msra.mxu0 0
        %807 = vmatpush.bf16.xpose.msra.mxu0 0
        %808 = vmatpush.bf16.xpose.msra.mxu0 0
        %809 = vmatpush.bf16.xpose.msra.mxu0 0
        %810 = vmatpush.bf16.xpose.msra.mxu0 0
        %811 = vmatpush.bf16.xpose.msra.mxu0 0
        %812 = vmatpush.bf16.xpose.msra.mxu0 %v803
        %813 = vmatmul.bf16.gmra.mxu0 %v800
        %v814 = vpop.f32.mrf.mxu0
        %v815 = vadd.f32 0.0, %v814
        %v816 = vpop.f32.mrf.mxu0
        %817 = vdwg.mxu0
        %v818 = vmul.f32 %v815, 0.35355338
        %v819 = vadd.f32 %v818, %v797
        %v820 = vsel %vm798, %v819, -inf
        %821 = vmax.xlane.f32.xlu0 %v820
        %v822 = vpop.xlane.xlu0 %821
        %v823 = vsub.f32 %v819, %v822
        %v824 = vmul.f32 %v823, 1.442695
        %v825 = vpow.pop %v824
        %v826 = vsel %vm798, %v825, 0.0
        %827 = vadd.xlane.f32.xlu0 %v826
        %v828 = vpop.xlane.xlu0 %827
        %v829 = vrcp.pop %v828
        %v830 = vmul.f32 %v825, %v829
        %v831 = vpack.c.bf16 %v830, %v830
        %v833 = vsel %vm798, %v831, 0
        %vm835 = vcmask 1043456
        %v837 = vsel %vm835, %v788, 0
        %839 = vmatpush.bf16.msra.mxu0 0
        %840 = vmatpush.bf16.msra.mxu0 0
        %841 = vmatpush.bf16.msra.mxu0 0
        %842 = vmatpush.bf16.msra.mxu0 0
        %843 = vmatpush.bf16.msra.mxu0 0
        %844 = vmatpush.bf16.msra.mxu0 0
        %845 = vmatpush.bf16.msra.mxu0 0
        %846 = vmatpush.bf16.msra.mxu0 %v837
        %847 = vmatmul.bf16.gmra.mxu0 %v833
        %v848 = vpop.f32.mrf.mxu0
        %v849 = vadd.f32 0.0, %v848
        %v850 = vpop.f32.mrf.mxu0
        %851 = vdwg.mxu0
        %v852 = vpack.c.bf16 %v849, %v849
        %v853 = vld [vmem:[#allocation12] sm:$0xf]
        %v855 = vunpack.c.l.b16 %v717
        %v856 = vpack.c.b16 %v855, %v855
        %857 = vrot.lane.b32.xlu0 %v856, 120
        %v858 = vpop.permute.xlu0 %857
        %v860 = vunpack.c.l.b16 %v754
        %v861 = vpack.c.b16 %v860, %v860
        %862 = vrot.lane.b32.xlu0 %v861, 120
        %v863 = vpop.permute.xlu0 %862
        %v865 = vsel %vm798, %v858, 0
        %v868 = vsel %vm798, %v863, 0
        %870 = vmatpush.bf16.xpose.msra.mxu0 0
        %871 = vmatpush.bf16.xpose.msra.mxu0 0
        %872 = vmatpush.bf16.xpose.msra.mxu0 0
        %873 = vmatpush.bf16.xpose.msra.mxu0 0
        %874 = vmatpush.bf16.xpose.msra.mxu0 0
        %875 = vmatpush.bf16.xpose.msra.mxu0 0
        %876 = vmatpush.bf16.xpose.msra.mxu0 0
        %877 = vmatpush.bf16.xpose.msra.mxu0 %v868
        %878 = vmatmul.bf16.gmra.mxu0 %v865
        %v879 = vpop.f32.mrf.mxu0
        %v880 = vadd.f32 0.0, %v879
        %v881 = vpop.f32.mrf.mxu0
        %882 = vdwg.mxu0
        %v883 = vmul.f32 %v880, 0.35355338
        %v884 = vadd.f32 %v883, %v797
        %v885 = vsel %vm798, %v884, -inf
        %886 = vmax.xlane.f32.xlu0 %v885
        %v887 = vpop.xlane.xlu0 %886
        %v888 = vsub.f32 %v884, %v887
        %v889 = vmul.f32 %v888, 1.442695
        %v890 = vpow.pop %v889
        %v891 = vsel %vm798, %v890, 0.0
        %892 = vadd.xlane.f32.xlu0 %v891
        %v893 = vpop.xlane.xlu0 %892
        %v894 = vrcp.pop %v893
        %v895 = vmul.f32 %v890, %v894
        %v896 = vpack.c.bf16 %v895, %v895
        %v898 = vunpack.c.l.b16 %v788
        %v899 = vpack.c.b16 %v898, %v898
        %900 = vrot.lane.b32.xlu0 %v899, 120
        %v901 = vpop.permute.xlu0 %900
        %v903 = vsel %vm798, %v896, 0
        %v906 = vsel %vm835, %v901, 0
        %908 = vmatpush.bf16.msra.mxu0 0
        %909 = vmatpush.bf16.msra.mxu0 0
        %910 = vmatpush.bf16.msra.mxu0 0
        %911 = vmatpush.bf16.msra.mxu0 0
        %912 = vmatpush.bf16.msra.mxu0 0
        %913 = vmatpush.bf16.msra.mxu0 0
        %914 = vmatpush.bf16.msra.mxu0 0
        %915 = vmatpush.bf16.msra.mxu0 %v906
        %916 = vmatmul.bf16.gmra.mxu0 %v903
        %v917 = vpop.f32.mrf.mxu0
        %v918 = vadd.f32 0.0, %v917
        %v919 = vpop.f32.mrf.mxu0
        %920 = vdwg.mxu0
        %v921 = vpack.c.bf16 %v918, %v918
        %v922 = vld [vmem:[#allocation12 + $0x4] sm:$0xf]
        %v924 = vsel %vm798, %v921, 0
        %v927 = vsel %vm835, %v922, 0
        %929 = vmatpush.bf16.msra.mxu0 0
        %930 = vmatpush.bf16.msra.mxu0 0
        %931 = vmatpush.bf16.msra.mxu0 0
        %932 = vmatpush.bf16.msra.mxu0 0
        %933 = vmatpush.bf16.msra.mxu0 0
        %934 = vmatpush.bf16.msra.mxu0 0
        %935 = vmatpush.bf16.msra.mxu0 0
        %936 = vmatpush.bf16.msra.mxu0 %v927
        %937 = vmatmul.bf16.gmra.mxu0 %v924
        %v938 = vpop.f32.mrf.mxu0
        %v939 = vadd.f32 0.0, %v938
        %v940 = vpop.f32.mrf.mxu0
        %941 = vdwg.mxu0
        %v943 = vsel %vm798, %v852, 0
        %v946 = vsel %vm835, %v853, 0
        %948 = vmatpush.bf16.msra.mxu0 0
        %949 = vmatpush.bf16.msra.mxu0 0
        %950 = vmatpush.bf16.msra.mxu0 0
        %951 = vmatpush.bf16.msra.mxu0 0
        %952 = vmatpush.bf16.msra.mxu0 0
        %953 = vmatpush.bf16.msra.mxu0 0
        %954 = vmatpush.bf16.msra.mxu0 0
        %955 = vmatpush.bf16.msra.mxu0 %v946
        %956 = vmatmul.bf16.gmra.mxu0 %v943
        %v957 = vpop.f32.mrf.mxu0
        %v958 = vadd.f32 %v939, %v957
        %v959 = vpop.f32.mrf.mxu0
        %960 = vdwg.mxu0
        %961 = vrot.lane.b32.xlu0 %v856, 112
        %v962 = vpop.permute.xlu0 %961
        %963 = vrot.lane.b32.xlu0 %v861, 112
        %v964 = vpop.permute.xlu0 %963
        %v966 = vsel %vm798, %v962, 0
        %v969 = vsel %vm798, %v964, 0
        %971 = vmatpush.bf16.xpose.msra.mxu0 0
        %972 = vmatpush.bf16.xpose.msra.mxu0 0
        %973 = vmatpush.bf16.xpose.msra.mxu0 0
        %974 = vmatpush.bf16.xpose.msra.mxu0 0
        %975 = vmatpush.bf16.xpose.msra.mxu0 0
        %976 = vmatpush.bf16.xpose.msra.mxu0 0
        %977 = vmatpush.bf16.xpose.msra.mxu0 0
        %978 = vmatpush.bf16.xpose.msra.mxu0 %v969
        %979 = vmatmul.bf16.gmra.mxu0 %v966
        %v980 = vpop.f32.mrf.mxu0
        %v981 = vadd.f32 0.0, %v980
        %v982 = vpop.f32.mrf.mxu0
        %983 = vdwg.mxu0
        %v984 = vmul.f32 %v981, 0.35355338
        %v985 = vadd.f32 %v984, %v797
        %v986 = vsel %vm798, %v985, -inf
        %987 = vmax.xlane.f32.xlu0 %v986
        %v988 = vpop.xlane.xlu0 %987
        %v989 = vsub.f32 %v985, %v988
        %v990 = vmul.f32 %v989, 1.442695
        %v991 = vpow.pop %v990
        %v992 = vsel %vm798, %v991, 0.0
        %993 = vadd.xlane.f32.xlu0 %v992
        %v994 = vpop.xlane.xlu0 %993
        %v995 = vrcp.pop %v994
        %v996 = vmul.f32 %v991, %v995
        %v997 = vpack.c.bf16 %v996, %v996
        %998 = vrot.lane.b32.xlu0 %v899, 112
        %v999 = vpop.permute.xlu0 %998
        %v1001 = vsel %vm798, %v997, 0
        %v1004 = vsel %vm835, %v999, 0
        %1006 = vmatpush.bf16.msra.mxu0 0
        %1007 = vmatpush.bf16.msra.mxu0 0
        %1008 = vmatpush.bf16.msra.mxu0 0
        %1009 = vmatpush.bf16.msra.mxu0 0
        %1010 = vmatpush.bf16.msra.mxu0 0
        %1011 = vmatpush.bf16.msra.mxu0 0
        %1012 = vmatpush.bf16.msra.mxu0 0
        %1013 = vmatpush.bf16.msra.mxu0 %v1004
        %1014 = vmatmul.bf16.gmra.mxu0 %v1001
        %v1015 = vpop.f32.mrf.mxu0
        %v1016 = vadd.f32 0.0, %v1015
        %v1017 = vpop.f32.mrf.mxu0
        %1018 = vdwg.mxu0
        %v1019 = vpack.c.bf16 %v1016, %v1016
        %v1020 = vld [vmem:[#allocation12 + $0x8] sm:$0xf]
        %v1022 = vsel %vm798, %v1019, 0
        %v1025 = vsel %vm835, %v1020, 0
        %1027 = vmatpush.bf16.msra.mxu0 0
        %1028 = vmatpush.bf16.msra.mxu0 0
        %1029 = vmatpush.bf16.msra.mxu0 0
        %1030 = vmatpush.bf16.msra.mxu0 0
        %1031 = vmatpush.bf16.msra.mxu0 0
        %1032 = vmatpush.bf16.msra.mxu0 0
        %1033 = vmatpush.bf16.msra.mxu0 0
        %1034 = vmatpush.bf16.msra.mxu0 %v1025
        %1035 = vmatmul.bf16.gmra.mxu0 %v1022
        %v1036 = vpop.f32.mrf.mxu0
        %v1037 = vadd.f32 0.0, %v1036
        %v1038 = vpop.f32.mrf.mxu0
        %1039 = vdwg.mxu0
        %v1040 = vadd.f32 %v958, %v1037
        %1041 = vrot.lane.b32.xlu0 %v856, 104
        %v1042 = vpop.permute.xlu0 %1041
        %1043 = vrot.lane.b32.xlu0 %v861, 104
        %v1044 = vpop.permute.xlu0 %1043
        %v1046 = vsel %vm798, %v1042, 0
        %v1049 = vsel %vm798, %v1044, 0
        %1051 = vmatpush.bf16.xpose.msra.mxu0 0
        %1052 = vmatpush.bf16.xpose.msra.mxu0 0
        %1053 = vmatpush.bf16.xpose.msra.mxu0 0
        %1054 = vmatpush.bf16.xpose.msra.mxu0 0
        %1055 = vmatpush.bf16.xpose.msra.mxu0 0
        %1056 = vmatpush.bf16.xpose.msra.mxu0 0
        %1057 = vmatpush.bf16.xpose.msra.mxu0 0
        %1058 = vmatpush.bf16.xpose.msra.mxu0 %v1049
        %1059 = vmatmul.bf16.gmra.mxu0 %v1046
        %v1060 = vpop.f32.mrf.mxu0
        %v1061 = vadd.f32 0.0, %v1060
        %v1062 = vpop.f32.mrf.mxu0
        %1063 = vdwg.mxu0
        %v1064 = vmul.f32 %v1061, 0.35355338
        %v1065 = vadd.f32 %v1064, %v797
        %v1066 = vsel %vm798, %v1065, -inf
        %1067 = vmax.xlane.f32.xlu0 %v1066
        %v1068 = vpop.xlane.xlu0 %1067
        %v1069 = vsub.f32 %v1065, %v1068
        %v1070 = vmul.f32 %v1069, 1.442695
        %v1071 = vpow.pop %v1070
        %v1072 = vsel %vm798, %v1071, 0.0
        %1073 = vadd.xlane.f32.xlu0 %v1072
        %v1074 = vpop.xlane.xlu0 %1073
        %v1075 = vrcp.pop %v1074
        %v1076 = vmul.f32 %v1071, %v1075
        %v1077 = vpack.c.bf16 %v1076, %v1076
        %1078 = vrot.lane.b32.xlu0 %v899, 104
        %v1079 = vpop.permute.xlu0 %1078
        %v1081 = vsel %vm798, %v1077, 0
        %v1084 = vsel %vm835, %v1079, 0
        %1086 = vmatpush.bf16.msra.mxu0 0
        %1087 = vmatpush.bf16.msra.mxu0 0
        %1088 = vmatpush.bf16.msra.mxu0 0
        %1089 = vmatpush.bf16.msra.mxu0 0
        %1090 = vmatpush.bf16.msra.mxu0 0
        %1091 = vmatpush.bf16.msra.mxu0 0
        %1092 = vmatpush.bf16.msra.mxu0 0
        %1093 = vmatpush.bf16.msra.mxu0 %v1084
        %1094 = vmatmul.bf16.gmra.mxu0 %v1081
        %v1095 = vpop.f32.mrf.mxu0
        %v1096 = vadd.f32 0.0, %v1095
        %v1097 = vpop.f32.mrf.mxu0
        %1098 = vdwg.mxu0
        %v1099 = vpack.c.bf16 %v1096, %v1096
        %v1100 = vld [vmem:[#allocation12 + $0xc] sm:$0xf]
        %v1102 = vsel %vm798, %v1099, 0
        %v1105 = vsel %vm835, %v1100, 0
        %1107 = vmatpush.bf16.msra.mxu0 0
        %1108 = vmatpush.bf16.msra.mxu0 0
        %1109 = vmatpush.bf16.msra.mxu0 0
        %1110 = vmatpush.bf16.msra.mxu0 0
        %1111 = vmatpush.bf16.msra.mxu0 0
        %1112 = vmatpush.bf16.msra.mxu0 0
        %1113 = vmatpush.bf16.msra.mxu0 0
        %1114 = vmatpush.bf16.msra.mxu0 %v1105
        %1115 = vmatmul.bf16.gmra.mxu0 %v1102
        %v1116 = vpop.f32.mrf.mxu0
        %v1117 = vadd.f32 0.0, %v1116
        %v1118 = vpop.f32.mrf.mxu0
        %1119 = vdwg.mxu0
        %v1120 = vadd.f32 %v1040, %v1117
        %v1121 = vadd.f32 %v579, %v1120
        %v1122 = vld [vmem:[#allocation13] sm:$0x1]
        %v1124 = vperm.slane %v1122, 0
        %v1126 = vadd.f32 %v1121, %v1124
        %1127 = vst.msk [vmem:[%s577] sm:$0xff] %vm582, %v1126
        %p1128 = scmp.lt.s32.totalorder %s32, 1
        %s1129 = scalar_select %p1128, %s32, 1
        %p1130 = scmp.lt.s32.totalorder %s33, 0
        %s1131 = scalar_select %p1130, %s33, 0
        %s1132 = sadd.s32 %s1131, %s1129
        %s1133 = smul.addr %s1132, 8
        %s1134 = scalar_lea.vmem %s12, %s1133
        // Predicated region
        $region101: #{decoder_forward.10} parent=67 // pred_check
          %p1135 = pneg %p324
        $region102: #{decoder_forward.10} parent=67 // pred_check_branch
          %1137 = sbr.rel (%p1135) target = $region104
        $region103: #{decoder_forward.10} parent=67 // pred_region
          _
        $region104: #{decoder_forward.10} parent=67 // pred_fallthru
          _
      $region68: #{decoder_forward.10} parent=5 // pred_fallthru
        _
      %p1138 = scmp.le.s32.totalorder 2, %s23
      // Predicated region
      $region105: #{decoder_forward.10} parent=5 // pred_check
        %p1139 = pneg %p1138
      $region106: #{decoder_forward.10} parent=5 // pred_check_branch
        %1141 = sbr.rel (%p1139) target = $region108
      $region107: #{decoder_forward.10} parent=5 // pred_region
        %s1142 = ssub.s32 %s23, 2
        // Predicated region
        $region109: #{decoder_forward.10} parent=107 // pred_check
          %p1143 = pneg %p330
        $region110: #{decoder_forward.10} parent=107 // pred_check_branch
          %1145 = sbr.rel (%p1143) target = $region112
        $region111: #{decoder_forward.10} parent=107 // pred_region
          %p1146 = scmp.lt.s32.totalorder %s34, 1
          %s1147 = scalar_select %p1146, %s34, 1
          %p1148 = scmp.lt.s32.totalorder %s35, 0
          %s1149 = scalar_select %p1148, %s35, 0
          %s1150 = sadd.s32 %s1149, %s1147
          %s1151 = smul.addr %s1150, 8
          %s1152 = scalar_lea.vmem %s12, %s1151
        $region112: #{decoder_forward.10} parent=107 // pred_fallthru
          _
      $region108: #{decoder_forward.10} parent=5 // pred_fallthru
        _
    $region6: #{decoder_forward.10} parent=1 // loop_footer
      %s27 = sadd.s32 1, %s23
    $region7: #{decoder_forward.10} parent=1 // loop_footer_branch
      %22 = sbr.rel target = $region3
    $region8: #{decoder_forward.10} parent=1 // loop_exit
      _
    %1153 = vsyncpa [#allocation3], 1
    %s1154 = scalar_lea.sflag [#allocation3], 1
    %1155 = vsyncpa %s1154, 1
    %1156 = vsyncpa [#allocation5], 1
    %1157 = vsyncpa [#allocation8], 1
    %1158 = vsyncpa [#allocation11], 1
    %1159 = vsyncpa [#allocation14], 1

// kernel: decoder_forward.13
$region0: #{decoder_forward.13}
  #allocation0 [shape = 'u32[]', space=smem, size = 0x4, offset = 0x4, fixed_abs, tag = 'smem constant byte address 0x4 - core index']
  #allocation1 [shape = 'u32[72,128]{1,0:T(1,128)}', space=vmem, size = 0x9000, scoped, tag = 'internal scratch']
  %s0 = inlined_call_operand.vmem [shape: f32[16,32], index: 0, kind: input, shape index: {}]
  %s1 = inlined_call_operand.vmem [shape: f32[1,32], index: 1, kind: input, shape index: {}]
  %s2 = inlined_call_operand.vmem [shape: f32[1,32], index: 2, kind: input, shape index: {}]
  %s3 = inlined_call_operand.hbm [shape: f32[16,32], index: 3, kind: output, shape index: {}]
  %s4 = sld [smem:[#allocation0]]
  $region22: #{decoder_forward.13} parent=0
    _
  %s6 = ssub.s32 1, %s4
  %s7 = scalar_select 0, %s6, %s4
  $region1: #{decoder_forward.13} parent=0
    #allocation2 [shape = 'u8[8192]{0}', space=vmem, size = 0x2000, scoped, tag = 'output window, operand 0, single buffered']
    #allocation3 [shape = 's32[1]{0}', space=sflag, size = 0x4, scoped, tag = 'scoped memory for decoder_forward.13']
    %8 = vsyncpa [#allocation3], 0
    // Predicated region
    $region2: #{decoder_forward.13} parent=1 // pred_check
      _
    $region3: #{decoder_forward.13} parent=1 // pred_check_branch
      %10 = sbr.rel (0) target = $region5
    $region4: #{decoder_forward.13} parent=1 // pred_region
      _
    $region5: #{decoder_forward.13} parent=1 // pred_fallthru
      _
    // Predicated region
    $region6: #{decoder_forward.13} parent=1 // pred_check
      _
    $region7: #{decoder_forward.13} parent=1 // pred_check_branch
      %12 = sbr.rel (0) target = $region9
    $region8: #{decoder_forward.13} parent=1 // pred_region
      _
    $region9: #{decoder_forward.13} parent=1 // pred_fallthru
      _
    // Predicated region
    $region10: #{decoder_forward.13} parent=1 // pred_check
      _
    $region11: #{decoder_forward.13} parent=1 // pred_check_branch
      %14 = sbr.rel (0) target = $region13
    $region12: #{decoder_forward.13} parent=1 // pred_region
      _
    $region13: #{decoder_forward.13} parent=1 // pred_fallthru
      _
    %v15 = vld [vmem:[%s0] sm:$0xff]
    %v16 = vld [vmem:[%s0 + $0x8] sm:$0xff]
    %v17 = vld [vmem:[%s1] sm:$0x1]
    %v18 = vld [vmem:[%s2] sm:$0x1]
    %vm19 = vcmask 261120
    %v20 = vsel %vm19, %v15, 0.0
    %21 = vadd.xlane.f32.xlu0 %v20
    %v22 = vpop.xlane.xlu0 %21
    %v23 = vsel %vm19, %v16, 0.0
    %24 = vadd.xlane.f32.xlu0 %v23
    %v25 = vpop.xlane.xlu0 %24
    %v26 = vrcp.pop 32.0
    %v27 = vmul.f32 32.0, %v26
    %v28 = vsub.f32 1.0, %v27
    %v29 = vmul.f32 %v26, %v28
    %v30 = vadd.f32 %v26, %v29
    %vm31 = vweird.f32 %v26
    %v32 = vsel %vm31, %v26, %v30
    %v33 = vmul.f32 %v22, %v32
    %v34 = vmul.f32 %v25, %v32
    %v35 = vsub.f32 %v15, %v33
    %v36 = vsub.f32 %v16, %v34
    %v37 = vmul.f32 %v35, %v35
    %v38 = vmul.f32 %v36, %v36
    %v39 = vsel %vm19, %v37, 0.0
    %40 = vadd.xlane.f32.xlu0 %v39
    %v41 = vpop.xlane.xlu0 %40
    %v42 = vsel %vm19, %v38, 0.0
    %43 = vadd.xlane.f32.xlu0 %v42
    %v44 = vpop.xlane.xlu0 %43
    %v45 = vmul.f32 %v41, 0.032258064
    %v46 = vmul.f32 %v44, 0.032258064
    %v47 = vrsqrt.pop %v45
    %v48 = vmul.f32 %v47, %v45
    %v49 = vmul.f32 %v48, %v47
    %v50 = vmul.f32 0.5, %v49
    %v51 = vsub.f32 1.5, %v50
    %v52 = vmul.f32 %v47, %v51
    %v53 = vmul.f32 %v45, %v52
    %vm54 = vcmp.eq.f32.partialorder %v45, inf
    %v55 = vsel %vm54, %v45, %v53
    %vm56 = vcmp.eq.f32.partialorder %v45, 0.0
    %v57 = vand.u32 %v45, 2147483648
    %v58 = vsel %vm56, %v57, %v55
    %v59 = vrsqrt.pop %v46
    %v60 = vmul.f32 %v59, %v46
    %v61 = vmul.f32 %v60, %v59
    %v62 = vmul.f32 0.5, %v61
    %v63 = vsub.f32 1.5, %v62
    %v64 = vmul.f32 %v59, %v63
    %v65 = vmul.f32 %v46, %v64
    %vm66 = vcmp.eq.f32.partialorder %v46, inf
    %v67 = vsel %vm66, %v46, %v65
    %vm68 = vcmp.eq.f32.partialorder %v46, 0.0
    %v69 = vand.u32 %v46, 2147483648
    %v70 = vsel %vm68, %v69, %v67
    %v72 = vperm.slane %v17, 0
    %v74 = vmul.f32 %v72, %v35
    %v75 = vmul.f32 %v72, %v36
    %v76 = vadd.f32 %v58, 1e-06
    %v77 = vadd.f32 %v70, 1e-06
    %v78 = vrcp.pop %v76
    %v79 = vmul.f32 %v76, %v78
    %v80 = vsub.f32 1.0, %v79
    %v81 = vmul.f32 %v78, %v80
    %v82 = vadd.f32 %v78, %v81
    %vm83 = vweird.f32 %v76
    %vm84 = vweird.f32 %v78
    %vm85 = vmor %vm83, %vm84
    %v86 = vsel %vm85, %v78, %v82
    %v87 = vand.u32 2147483647, %v76
    %vm88 = vcmp.eq.f32.partialorder %v87, 8.507059e+37
    %v89 = vand.u32 %v76, 2147483648
    %v90 = vor.u32 1.1754944e-38, %v89
    %v91 = vsel %vm88, %v90, %v86
    %v92 = vmul.f32 1.0, %v91
    %v93 = vrcp.pop %v77
    %v94 = vmul.f32 %v77, %v93
    %v95 = vsub.f32 1.0, %v94
    %v96 = vmul.f32 %v93, %v95
    %v97 = vadd.f32 %v93, %v96
    %vm98 = vweird.f32 %v77
    %vm99 = vweird.f32 %v93
    %vm100 = vmor %vm98, %vm99
    %v101 = vsel %vm100, %v93, %v97
    %v102 = vand.u32 2147483647, %v77
    %vm103 = vcmp.eq.f32.partialorder %v102, 8.507059e+37
    %v104 = vand.u32 %v77, 2147483648
    %v105 = vor.u32 1.1754944e-38, %v104
    %v106 = vsel %vm103, %v105, %v101
    %v107 = vmul.f32 1.0, %v106
    %v108 = vmul.f32 %v74, %v92
    %v109 = vmul.f32 %v75, %v107
    %v111 = vperm.slane %v18, 0
    %v113 = vadd.f32 %v108, %v111
    %v114 = vadd.f32 %v109, %v111
    %115 = vst.msk [vmem:[#allocation2] sm:$0xff] %vm19, %v113
    %116 = vst.msk [vmem:[#allocation2 + $0x8] sm:$0xff] %vm19, %v114
    // Predicated region
    $region14: #{decoder_forward.13} parent=1 // pred_check
      _
    $region15: #{decoder_forward.13} parent=1 // pred_check_branch
      %118 = sbr.rel (0) target = $region17
    $region16: #{decoder_forward.13} parent=1 // pred_region
      %120 = vsyncadd [#allocation3], 0
      %s121 = sshll.u32 [#allocation2], 4
      %s122 = int_to_ptr.vmem [resolvable:$true] %s121
      %s123 = sshll.u32 %s3, 4
      %s124 = int_to_ptr.hbm [resolvable:$true] %s123
      %129 = dma.vmem_to_hbm [thread:$0]  %s122, 256, %s124, [#allocation3], 128, 128, 8
    $region17: #{decoder_forward.13} parent=1 // pred_fallthru
      _
    // Predicated region
    $region18: #{decoder_forward.13} parent=1 // pred_check
      _
    $region19: #{decoder_forward.13} parent=1 // pred_check_branch
      %131 = sbr.rel (0) target = $region21
    $region20: #{decoder_forward.13} parent=1 // pred_region
      %133 = dma.done [#allocation3], 256
    $region21: #{decoder_forward.13} parent=1 // pred_fallthru
      _
    %134 = vsyncpa [#allocation3], 1

// kernel: decoder_forward.12
$region0: #{decoder_forward.12}
  #allocation0 [shape = 'u32[]', space=smem, size = 0x4, offset = 0x4, fixed_abs, tag = 'smem constant byte address 0x4 - core index']
  #allocation1 [shape = 'u32[72,128]{1,0:T(1,128)}', space=vmem, size = 0x9000, scoped, tag = 'internal scratch']
  %s0 = inlined_call_operand.vmem [shape: f32[16,32], index: 0, kind: input, shape index: {}]
  %s1 = inlined_call_operand.vmem [shape: f32[1,32], index: 1, kind: input, shape index: {}]
  %s2 = inlined_call_operand.vmem [shape: f32[1,32], index: 2, kind: input, shape index: {}]
  %s3 = inlined_call_operand.vmem [shape: bf16[32,64], index: 3, kind: input, shape index: {}]
  %s4 = inlined_call_operand.vmem [shape: f32[1,64], index: 4, kind: input, shape index: {}]
  %s5 = inlined_call_operand.vmem [shape: bf16[64,32], index: 5, kind: input, shape index: {}]
  %s6 = inlined_call_operand.vmem [shape: f32[1,32], index: 6, kind: input, shape index: {}]
  %s7 = inlined_call_operand.vmem [shape: f32[16,32], index: 7, kind: output, shape index: {}]
  %s8 = sld [smem:[#allocation0]]
  $region38: #{decoder_forward.12} parent=0
    _
  %s10 = ssub.s32 1, %s8
  %s11 = scalar_select 0, %s10, %s8
  // Predicated region
  $region2: #{decoder_forward.12} parent=0 // pred_check
    _
  $region3: #{decoder_forward.12} parent=0 // pred_check_branch
    %13 = sbr.rel (0) target = $region5
  $region4: #{decoder_forward.12} parent=0 // pred_region
    _
  $region5: #{decoder_forward.12} parent=0 // pred_fallthru
    _
  // Predicated region
  $region6: #{decoder_forward.12} parent=0 // pred_check
    _
  $region7: #{decoder_forward.12} parent=0 // pred_check_branch
    %15 = sbr.rel (0) target = $region9
  $region8: #{decoder_forward.12} parent=0 // pred_region
    _
  $region9: #{decoder_forward.12} parent=0 // pred_fallthru
    _
  // Predicated region
  $region10: #{decoder_forward.12} parent=0 // pred_check
    _
  $region11: #{decoder_forward.12} parent=0 // pred_check_branch
    %17 = sbr.rel (0) target = $region13
  $region12: #{decoder_forward.12} parent=0 // pred_region
    _
  $region13: #{decoder_forward.12} parent=0 // pred_fallthru
    _
  // Predicated region
  $region14: #{decoder_forward.12} parent=0 // pred_check
    _
  $region15: #{decoder_forward.12} parent=0 // pred_check_branch
    %19 = sbr.rel (0) target = $region17
  $region16: #{decoder_forward.12} parent=0 // pred_region
    _
  $region17: #{decoder_forward.12} parent=0 // pred_fallthru
    _
  // Predicated region
  $region18: #{decoder_forward.12} parent=0 // pred_check
    _
  $region19: #{decoder_forward.12} parent=0 // pred_check_branch
    %21 = sbr.rel (0) target = $region21
  $region20: #{decoder_forward.12} parent=0 // pred_region
    _
  $region21: #{decoder_forward.12} parent=0 // pred_fallthru
    _
  // Predicated region
  $region22: #{decoder_forward.12} parent=0 // pred_check
    _
  $region23: #{decoder_forward.12} parent=0 // pred_check_branch
    %23 = sbr.rel (0) target = $region25
  $region24: #{decoder_forward.12} parent=0 // pred_region
    _
  $region25: #{decoder_forward.12} parent=0 // pred_fallthru
    _
  // Predicated region
  $region26: #{decoder_forward.12} parent=0 // pred_check
    _
  $region27: #{decoder_forward.12} parent=0 // pred_check_branch
    %25 = sbr.rel (0) target = $region29
  $region28: #{decoder_forward.12} parent=0 // pred_region
    _
  $region29: #{decoder_forward.12} parent=0 // pred_fallthru
    _
  %v27 = vld [vmem:[%s0] sm:$0xff]
  %v28 = vld [vmem:[%s0 + $0x8] sm:$0xff]
  %v29 = vld [vmem:[%s1] sm:$0x1]
  %v30 = vld [vmem:[%s2] sm:$0x1]
  %vm31 = vcmask 261120
  %v32 = vsel %vm31, %v27, 0.0
  %33 = vadd.xlane.f32.xlu0 %v32
  %v34 = vpop.xlane.xlu0 %33
  %v35 = vsel %vm31, %v28, 0.0
  %36 = vadd.xlane.f32.xlu0 %v35
  %v37 = vpop.xlane.xlu0 %36
  %v38 = vrcp.pop 32.0
  %v39 = vmul.f32 32.0, %v38
  %v40 = vsub.f32 1.0, %v39
  %v41 = vmul.f32 %v38, %v40
  %v42 = vadd.f32 %v38, %v41
  %vm43 = vweird.f32 %v38
  %v44 = vsel %vm43, %v38, %v42
  %v45 = vmul.f32 %v34, %v44
  %v46 = vmul.f32 %v37, %v44
  %v47 = vsub.f32 %v27, %v45
  %v48 = vsub.f32 %v28, %v46
  %v49 = vmul.f32 %v47, %v47
  %v50 = vmul.f32 %v48, %v48
  %v51 = vsel %vm31, %v49, 0.0
  %52 = vadd.xlane.f32.xlu0 %v51
  %v53 = vpop.xlane.xlu0 %52
  %v54 = vsel %vm31, %v50, 0.0
  %55 = vadd.xlane.f32.xlu0 %v54
  %v56 = vpop.xlane.xlu0 %55
  %v57 = vmul.f32 %v53, 0.032258064
  %v58 = vmul.f32 %v56, 0.032258064
  %v59 = vrsqrt.pop %v57
  %v60 = vmul.f32 %v59, %v57
  %v61 = vmul.f32 %v60, %v59
  %v62 = vmul.f32 0.5, %v61
  %v63 = vsub.f32 1.5, %v62
  %v64 = vmul.f32 %v59, %v63
  %v65 = vmul.f32 %v57, %v64
  %vm66 = vcmp.eq.f32.partialorder %v57, inf
  %v67 = vsel %vm66, %v57, %v65
  %vm68 = vcmp.eq.f32.partialorder %v57, 0.0
  %v69 = vand.u32 %v57, 2147483648
  %v70 = vsel %vm68, %v69, %v67
  %v71 = vrsqrt.pop %v58
  %v72 = vmul.f32 %v71, %v58
  %v73 = vmul.f32 %v72, %v71
  %v74 = vmul.f32 0.5, %v73
  %v75 = vsub.f32 1.5, %v74
  %v76 = vmul.f32 %v71, %v75
  %v77 = vmul.f32 %v58, %v76
  %vm78 = vcmp.eq.f32.partialorder %v58, inf
  %v79 = vsel %vm78, %v58, %v77
  %vm80 = vcmp.eq.f32.partialorder %v58, 0.0
  %v81 = vand.u32 %v58, 2147483648
  %v82 = vsel %vm80, %v81, %v79
  %v84 = vperm.slane %v29, 0
  %v86 = vmul.f32 %v84, %v47
  %v87 = vmul.f32 %v84, %v48
  %v88 = vadd.f32 %v70, 1e-06
  %v89 = vadd.f32 %v82, 1e-06
  %v90 = vrcp.pop %v88
  %v91 = vmul.f32 %v88, %v90
  %v92 = vsub.f32 1.0, %v91
  %v93 = vmul.f32 %v90, %v92
  %v94 = vadd.f32 %v90, %v93
  %vm95 = vweird.f32 %v88
  %vm96 = vweird.f32 %v90
  %vm97 = vmor %vm95, %vm96
  %v98 = vsel %vm97, %v90, %v94
  %v99 = vand.u32 2147483647, %v88
  %vm100 = vcmp.eq.f32.partialorder %v99, 8.507059e+37
  %v101 = vand.u32 %v88, 2147483648
  %v102 = vor.u32 1.1754944e-38, %v101
  %v103 = vsel %vm100, %v102, %v98
  %v104 = vmul.f32 1.0, %v103
  %v105 = vrcp.pop %v89
  %v106 = vmul.f32 %v89, %v105
  %v107 = vsub.f32 1.0, %v106
  %v108 = vmul.f32 %v105, %v107
  %v109 = vadd.f32 %v105, %v108
  %vm110 = vweird.f32 %v89
  %vm111 = vweird.f32 %v105
  %vm112 = vmor %vm110, %vm111
  %v113 = vsel %vm112, %v105, %v109
  %v114 = vand.u32 2147483647, %v89
  %vm115 = vcmp.eq.f32.partialorder %v114, 8.507059e+37
  %v116 = vand.u32 %v89, 2147483648
  %v117 = vor.u32 1.1754944e-38, %v116
  %v118 = vsel %vm115, %v117, %v113
  %v119 = vmul.f32 1.0, %v118
  %v120 = vmul.f32 %v86, %v104
  %v121 = vmul.f32 %v87, %v119
  %v123 = vperm.slane %v30, 0
  %v125 = vadd.f32 %v120, %v123
  %v126 = vadd.f32 %v121, %v123
  %v127 = vpack.c.bf16 %v126, %v125
  %v128 = vld [vmem:[%s3] sm:$0xf]
  %v129 = vld [vmem:[%s3 + $0x4] sm:$0xf]
  %v130 = vld [vmem:[%s3 + $0x8] sm:$0xf]
  %v131 = vld [vmem:[%s3 + $0xc] sm:$0xf]
  %v132 = vld [vmem:[%s4] sm:$0x1]
  %v134 = vperm.slane %v132, 0
  %v140 = vunpack.c.l.b16 %v128
  %v141 = vunpack.c.l.b16 %v129
  %v142 = vunpack.c.l.b16 %v130
  %v143 = vunpack.c.l.b16 %v131
  %v144 = vpack.c.b16 %v141, %v140
  %v145 = vpack.c.b16 %v143, %v142
  %v149 = vsel %vm31, %v127, 0
  %151 = vmatpush.bf16.msra.mxu0 0
  %152 = vmatpush.bf16.msra.mxu0 0
  %153 = vmatpush.bf16.msra.mxu0 0
  %154 = vmatpush.bf16.msra.mxu0 0
  %155 = vmatpush.bf16.msra.mxu0 0
  %156 = vmatpush.bf16.msra.mxu0 0
  %157 = vmatpush.bf16.msra.mxu0 %v145
  %158 = vmatpush.bf16.msra.mxu0 %v144
  %159 = vmatmul.bf16.gmra.mxu0 %v149
  %v160 = vpop.f32.mrf.mxu0
  %v161 = vadd.f32 %v134, %v160
  %v162 = vpop.f32.mrf.mxu0
  %v163 = vadd.f32 %v134, %v162
  %164 = vdwg.mxu0
  %v165 = vmax.f32 %v161, 0.0
  %v166 = vmax.f32 %v163, 0.0
  %v167 = vpack.c.bf16 %v166, %v165
  %v168 = vld [vmem:[%s5] sm:$0xf]
  %v169 = vld [vmem:[%s5 + $0x4] sm:$0xf]
  %v170 = vld [vmem:[%s5 + $0x8] sm:$0xf]
  %v171 = vld [vmem:[%s5 + $0xc] sm:$0xf]
  %v172 = vld [vmem:[%s5 + $0x10] sm:$0xf]
  %v173 = vld [vmem:[%s5 + $0x14] sm:$0xf]
  %v174 = vld [vmem:[%s5 + $0x18] sm:$0xf]
  %v175 = vld [vmem:[%s5 + $0x1c] sm:$0xf]
  %v176 = vld [vmem:[%s6] sm:$0x1]
  %v178 = vperm.slane %v176, 0
  %v188 = vunpack.c.l.b16 %v168
  %v189 = vunpack.c.l.b16 %v169
  %v190 = vunpack.c.l.b16 %v170
  %v191 = vunpack.c.l.b16 %v171
  %v192 = vunpack.c.l.b16 %v172
  %v193 = vunpack.c.l.b16 %v173
  %v194 = vunpack.c.l.b16 %v174
  %v195 = vunpack.c.l.b16 %v175
  %v196 = vpack.c.b16 %v189, %v188
  %v197 = vpack.c.b16 %v191, %v190
  %v198 = vpack.c.b16 %v193, %v192
  %v199 = vpack.c.b16 %v195, %v194
  %vm204 = vcmask 523264
  %v206 = vsel %vm204, %v167, 0
  %208 = vmatpush.bf16.msra.mxu0 0
  %209 = vmatpush.bf16.msra.mxu0 0
  %210 = vmatpush.bf16.msra.mxu0 0
  %211 = vmatpush.bf16.msra.mxu0 0
  %212 = vmatpush.bf16.msra.mxu0 %v199
  %213 = vmatpush.bf16.msra.mxu0 %v198
  %214 = vmatpush.bf16.msra.mxu0 %v197
  %215 = vmatpush.bf16.msra.mxu0 %v196
  %216 = vmatmul.bf16.gmra.mxu0 %v206
  %v217 = vpop.f32.mrf.mxu0
  %v218 = vadd.f32 %v178, %v217
  %v219 = vpop.f32.mrf.mxu0
  %v220 = vadd.f32 %v178, %v219
  %221 = vdwg.mxu0
  %v222 = vadd.f32 %v27, %v218
  %v223 = vadd.f32 %v28, %v220
  %224 = vst.msk [vmem:[%s7] sm:$0xff] %vm31, %v222
  %225 = vst.msk [vmem:[%s7 + $0x8] sm:$0xff] %vm31, %v223
  // Predicated region
  $region30: #{decoder_forward.12} parent=0 // pred_check
    _
  $region31: #{decoder_forward.12} parent=0 // pred_check_branch
    %227 = sbr.rel (0) target = $region33
  $region32: #{decoder_forward.12} parent=0 // pred_region
    _
  $region33: #{decoder_forward.12} parent=0 // pred_fallthru
    _
  // Predicated region
  $region34: #{decoder_forward.12} parent=0 // pred_check
    _
  $region35: #{decoder_forward.12} parent=0 // pred_check_branch
    %229 = sbr.rel (0) target = $region37
  $region36: #{decoder_forward.12} parent=0 // pred_region
    _
  $region37: #{decoder_forward.12} parent=0 // pred_fallthru
    _

// kernel: decoder_forward.11
$region0: #{decoder_forward.11}
  #allocation0 [shape = 'u32[]', space=smem, size = 0x4, offset = 0x4, fixed_abs, tag = 'smem constant byte address 0x4 - core index']
  #allocation1 [shape = 'u32[72,128]{1,0:T(1,128)}', space=vmem, size = 0x9000, scoped, tag = 'internal scratch']
  %s0 = inlined_call_operand.vmem [shape: f32[2,8,32], index: 0, kind: input, shape index: {}]
  %s1 = inlined_call_operand.vmem [shape: f32[2,8,32], index: 1, kind: input, shape index: {}]
  %s2 = inlined_call_operand.vmem [shape: f32[2,1,8], index: 2, kind: input, shape index: {}]
  %s3 = inlined_call_operand.vmem [shape: f32[1,32], index: 3, kind: input, shape index: {}]
  %s4 = inlined_call_operand.hbm [shape: f32[1,32], index: 4, kind: input, shape index: {}]
  %s5 = inlined_call_operand.hbm [shape: bf16[32,32], index: 5, kind: input, shape index: {}]
  %s6 = inlined_call_operand.vmem [shape: f32[1,32], index: 6, kind: input, shape index: {}]
  %s7 = inlined_call_operand.hbm [shape: bf16[32,32], index: 7, kind: input, shape index: {}]
  %s8 = inlined_call_operand.hbm [shape: f32[1,32], index: 8, kind: input, shape index: {}]
  %s9 = inlined_call_operand.hbm [shape: bf16[32,32], index: 9, kind: input, shape index: {}]
  %s10 = inlined_call_operand.vmem [shape: f32[1,32], index: 10, kind: input, shape index: {}]
  %s11 = inlined_call_operand.hbm [shape: bf16[32,32], index: 11, kind: input, shape index: {}]
  %s12 = inlined_call_operand.hbm [shape: f32[1,32], index: 12, kind: input, shape index: {}]
  %s13 = inlined_call_operand.vmem [shape: f32[2,8,32], index: 13, kind: output, shape index: {}]
  %s14 = sld [smem:[#allocation0]]
  $region113: #{decoder_forward.11} parent=0
    _
  %s16 = ssub.s32 1, %s14
  %s17 = scalar_select 0, %s16, %s14
  $region1: #{decoder_forward.11} parent=0
    #allocation2 [shape = 'u8[512]{0}', space=vmem, size = 0x400, scoped, tag = 'input window, operand 4, single buffered']
    #allocation3 [shape = 's32[2]{0}', space=sflag, size = 0x8, scoped, tag = 'scoped memory for decoder_forward.11']
    #allocation4 [shape = 'u8[8192]{0}', space=vmem, size = 0x2000, scoped, tag = 'input window, operand 5, single buffered']
    #allocation5 [shape = 's32[1]{0}', space=sflag, size = 0x4, scoped, tag = 'scoped memory for decoder_forward.11']
    #allocation6 [shape = 'u8[8192]{0}', space=vmem, size = 0x2000, scoped, tag = 'input window, operand 7, single buffered']
    #allocation7 [shape = 'u8[512]{0}', space=vmem, size = 0x400, scoped, tag = 'input window, operand 8, single buffered']
    #allocation8 [shape = 's32[1]{0}', space=sflag, size = 0x4, scoped, tag = 'scoped memory for decoder_forward.11']
    #allocation9 [shape = 'u8[8192]{0}', space=vmem, size = 0x2000, scoped, tag = 'input window, operand 9, single buffered']
    #allocation10 [shape = 'u8[8192]{0}', space=vmem, size = 0x2000, scoped, tag = 'input window, operand 11, single buffered']
    #allocation11 [shape = 's32[1]{0}', space=sflag, size = 0x4, scoped, tag = 'scoped memory for decoder_forward.11']
    #allocation12 [shape = 'u8[512]{0}', space=vmem, size = 0x400, scoped, tag = 'input window, operand 12, single buffered']
    %18 = vsyncpa [#allocation3], 0
    %19 = vsyncpa [#allocation5], 0
    %20 = vsyncpa [#allocation8], 0
    %21 = vsyncpa [#allocation11], 0
    loop: start=0, step=1, limit=4
    $region2: #{decoder_forward.11} parent=1 // loop_pre_header
      _
    $region3: #{decoder_forward.11} parent=1 // loop_header
      %s23 = sphi 0, %s27
      %p24 = scmp.ge.s32.totalorder %s23, 4
      %s30 = sphi 0, %s42
      %s31 = sphi 0, %s38
      %s32 = sphi 0, %s30
      %s33 = sphi 0, %s31
      %s34 = sphi 0, %s32
      %s35 = sphi 0, %s33
      %s47 = sphi 0, %s49
      %s50 = sphi 0, %s47
      %s51 = sphi 0, %s50
      %s67 = sphi 0, %s51
      %s73 = sphi 0, %s75
      %s76 = sphi 0, %s73
      %s77 = sphi 0, %s76
      %s93 = sphi 0, %s77
      %s99 = sphi 0, %s101
      %s102 = sphi 0, %s99
      %s103 = sphi 0, %s102
      %s119 = sphi 0, %s103
      %s123 = sphi 0, %s123
      %s125 = sphi 0, %s123
      %s126 = sphi 0, %s125
      %s140 = sphi 0, %s126
      %s144 = sphi 0, %s144
      %s146 = sphi 0, %s144
      %s147 = sphi 0, %s146
      %s161 = sphi 0, %s147
      %s165 = sphi 0, %s165
      %s167 = sphi 0, %s165
      %s168 = sphi 0, %s167
      %s182 = sphi 0, %s168
      %s186 = sphi 0, %s186
      %s188 = sphi 0, %s186
      %s189 = sphi 0, %s188
      %s203 = sphi 0, %s189
      %s207 = sphi 0, %s207
      %s209 = sphi 0, %s207
      %s210 = sphi 0, %s209
      %s224 = sphi 0, %s210
      %s228 = sphi 0, %s228
      %s230 = sphi 0, %s228
      %s231 = sphi 0, %s230
      %s245 = sphi 0, %s231
      %s249 = sphi 0, %s249
      %s251 = sphi 0, %s249
      %s252 = sphi 0, %s251
      %s266 = sphi 0, %s252
      %s270 = sphi 0, %s270
      %s272 = sphi 0, %s270
      %s273 = sphi 0, %s272
      %s287 = sphi 0, %s273
      %s291 = sphi 0, %s291
      %s293 = sphi 0, %s291
      %s294 = sphi 0, %s293
      %s308 = sphi 0, %s294
      %s312 = sphi 0, %s312
      %s314 = sphi 0, %s312
      %s315 = sphi 0, %s314
      %s329 = sphi 0, %s315
      %s337 = sphi 0, %s339
      %s340 = sphi 0, %s337
      %s341 = sphi 0, %s340
      %s357 = sphi 0, %s341
    $region4: #{decoder_forward.11} parent=1 // loop_header_branch
      %26 = sbr.rel (%p24) target = $region8
    $region5: #{decoder_forward.11} parent=1 // loop_body
      %s28 = ssub.s32 %s23, 1
      %s29 = ssub.s32 %s23, 2
      %s36 = sadd.s32 1, %s31
      %p37 = scmp.ge.s32.totalorder %s36, 1
      %s38 = scalar_select %p37, 0, %s36
      %s39 = sadd.s32 1, %s30
      %s40 = scalar_select %p37, %s39, %s30
      %p41 = scmp.ge.s32.totalorder %s40, 2
      %s42 = scalar_select %p41, 0, %s40
      %s43 = ssub.s32 %s30, %s42
      %s44 = ssub.s32 %s31, %s38
      %s45 = sor.u32 %s43, %s44
      %p46 = scmp.eq.s32.totalorder %s45, 0
      %s48 = sadd.s32 %s47, 1
      %s49 = scalar_select %p46, %s47, %s48
      %p52 = pneg %p46
      %p53 = scmp.eq.s32.totalorder %s23, 1
      %p54 = por %p52, %p53
      %p55 = scmp.ne.s32.totalorder %s47, %s50
      %p56 = scmp.eq.s32.totalorder %s23, 0
      %p57 = por %p55, %p56
      %p58 = scmp.ne.s32.totalorder %s47, %s50
      %p59 = scmp.eq.s32.totalorder %s28, 1
      %p60 = por %p58, %p59
      %p61 = scmp.ne.s32.totalorder %s50, %s51
      %p62 = scmp.eq.s32.totalorder %s28, 0
      %p63 = por %p61, %p62
      %p64 = scmp.ne.s32.totalorder %s50, %s51
      %p65 = scmp.eq.s32.totalorder %s29, 1
      %p66 = por %p64, %p65
      %p68 = scmp.ne.s32.totalorder %s51, %s67
      %p69 = scmp.eq.s32.totalorder %s29, 0
      %p70 = por %p68, %p69
      %s71 = ssub.s32 %s30, %s42
      %p72 = scmp.eq.s32.totalorder %s71, 0
      %s74 = sadd.s32 %s73, 1
      %s75 = scalar_select %p72, %s73, %s74
      %p78 = pneg %p72
      %p79 = scmp.eq.s32.totalorder %s23, 1
      %p80 = por %p78, %p79
      %p81 = scmp.ne.s32.totalorder %s73, %s76
      %p82 = scmp.eq.s32.totalorder %s23, 0
      %p83 = por %p81, %p82
      %p84 = scmp.ne.s32.totalorder %s73, %s76
      %p85 = scmp.eq.s32.totalorder %s28, 1
      %p86 = por %p84, %p85
      %p87 = scmp.ne.s32.totalorder %s76, %s77
      %p88 = scmp.eq.s32.totalorder %s28, 0
      %p89 = por %p87, %p88
      %p90 = scmp.ne.s32.totalorder %s76, %s77
      %p91 = scmp.eq.s32.totalorder %s29, 1
      %p92 = por %p90, %p91
      %p94 = scmp.ne.s32.totalorder %s77, %s93
      %p95 = scmp.eq.s32.totalorder %s29, 0
      %p96 = por %p94, %p95
      %s97 = ssub.s32 %s30, %s42
      %p98 = scmp.eq.s32.totalorder %s97, 0
      %s100 = sadd.s32 %s99, 1
      %s101 = scalar_select %p98, %s99, %s100
      %p104 = pneg %p98
      %p105 = scmp.eq.s32.totalorder %s23, 1
      %p106 = por %p104, %p105
      %p107 = scmp.ne.s32.totalorder %s99, %s102
      %p108 = scmp.eq.s32.totalorder %s23, 0
      %p109 = por %p107, %p108
      %p110 = scmp.ne.s32.totalorder %s99, %s102
      %p111 = scmp.eq.s32.totalorder %s28, 1
      %p112 = por %p110, %p111
      %p113 = scmp.ne.s32.totalorder %s102, %s103
      %p114 = scmp.eq.s32.totalorder %s28, 0
      %p115 = por %p113, %p114
      %p116 = scmp.ne.s32.totalorder %s102, %s103
      %p117 = scmp.eq.s32.totalorder %s29, 1
      %p118 = por %p116, %p117
      %p120 = scmp.ne.s32.totalorder %s103, %s119
      %p121 = scmp.eq.s32.totalorder %s29, 0
      %p122 = por %p120, %p121
      %s124 = sadd.s32 %s123, 1
      %p127 = scmp.eq.s32.totalorder %s23, 1
      %p128 = scmp.ne.s32.totalorder %s123, %s125
      %p129 = scmp.eq.s32.totalorder %s23, 0
      %p130 = por %p128, %p129
      %p131 = scmp.ne.s32.totalorder %s123, %s125
      %p132 = scmp.eq.s32.totalorder %s28, 1
      %p133 = por %p131, %p132
      %p134 = scmp.ne.s32.totalorder %s125, %s126
      %p135 = scmp.eq.s32.totalorder %s28, 0
      %p136 = por %p134, %p135
      %p137 = scmp.ne.s32.totalorder %s125, %s126
      %p138 = scmp.eq.s32.totalorder %s29, 1
      %p139 = por %p137, %p138
      %p141 = scmp.ne.s32.totalorder %s126, %s140
      %p142 = scmp.eq.s32.totalorder %s29, 0
      %p143 = por %p141, %p142
      %s145 = sadd.s32 %s144, 1
      %p148 = scmp.eq.s32.totalorder %s23, 1
      %p149 = scmp.ne.s32.totalorder %s144, %s146
      %p150 = scmp.eq.s32.totalorder %s23, 0
      %p151 = por %p149, %p150
      %p152 = scmp.ne.s32.totalorder %s144, %s146
      %p153 = scmp.eq.s32.totalorder %s28, 1
      %p154 = por %p152, %p153
      %p155 = scmp.ne.s32.totalorder %s146, %s147
      %p156 = scmp.eq.s32.totalorder %s28, 0
      %p157 = por %p155, %p156
      %p158 = scmp.ne.s32.totalorder %s146, %s147
      %p159 = scmp.eq.s32.totalorder %s29, 1
      %p160 = por %p158, %p159
      %p162 = scmp.ne.s32.totalorder %s147, %s161
      %p163 = scmp.eq.s32.totalorder %s29, 0
      %p164 = por %p162, %p163
      %s166 = sadd.s32 %s165, 1
      %p169 = scmp.eq.s32.totalorder %s23, 1
      %p170 = scmp.ne.s32.totalorder %s165, %s167
      %p171 = scmp.eq.s32.totalorder %s23, 0
      %p172 = por %p170, %p171
      %p173 = scmp.ne.s32.totalorder %s165, %s167
      %p174 = scmp.eq.s32.totalorder %s28, 1
      %p175 = por %p173, %p174
      %p176 = scmp.ne.s32.totalorder %s167, %s168
      %p177 = scmp.eq.s32.totalorder %s28, 0
      %p178 = por %p176, %p177
      %p179 = scmp.ne.s32.totalorder %s167, %s168
      %p180 = scmp.eq.s32.totalorder %s29, 1
      %p181 = por %p179, %p180
      %p183 = scmp.ne.s32.totalorder %s168, %s182
      %p184 = scmp.eq.s32.totalorder %s29, 0
      %p185 = por %p183, %p184
      %s187 = sadd.s32 %s186, 1
      %p190 = scmp.eq.s32.totalorder %s23, 1
      %p191 = scmp.ne.s32.totalorder %s186, %s188
      %p192 = scmp.eq.s32.totalorder %s23, 0
      %p193 = por %p191, %p192
      %p194 = scmp.ne.s32.totalorder %s186, %s188
      %p195 = scmp.eq.s32.totalorder %s28, 1
      %p196 = por %p194, %p195
      %p197 = scmp.ne.s32.totalorder %s188, %s189
      %p198 = scmp.eq.s32.totalorder %s28, 0
      %p199 = por %p197, %p198
      %p200 = scmp.ne.s32.totalorder %s188, %s189
      %p201 = scmp.eq.s32.totalorder %s29, 1
      %p202 = por %p200, %p201
      %p204 = scmp.ne.s32.totalorder %s189, %s203
      %p205 = scmp.eq.s32.totalorder %s29, 0
      %p206 = por %p204, %p205
      %s208 = sadd.s32 %s207, 1
      %p211 = scmp.eq.s32.totalorder %s23, 1
      %p212 = scmp.ne.s32.totalorder %s207, %s209
      %p213 = scmp.eq.s32.totalorder %s23, 0
      %p214 = por %p212, %p213
      %p215 = scmp.ne.s32.totalorder %s207, %s209
      %p216 = scmp.eq.s32.totalorder %s28, 1
      %p217 = por %p215, %p216
      %p218 = scmp.ne.s32.totalorder %s209, %s210
      %p219 = scmp.eq.s32.totalorder %s28, 0
      %p220 = por %p218, %p219
      %p221 = scmp.ne.s32.totalorder %s209, %s210
      %p222 = scmp.eq.s32.totalorder %s29, 1
      %p223 = por %p221, %p222
      %p225 = scmp.ne.s32.totalorder %s210, %s224
      %p226 = scmp.eq.s32.totalorder %s29, 0
      %p227 = por %p225, %p226
      %s229 = sadd.s32 %s228, 1
      %p232 = scmp.eq.s32.totalorder %s23, 1
      %p233 = scmp.ne.s32.totalorder %s228, %s230
      %p234 = scmp.eq.s32.totalorder %s23, 0
      %p235 = por %p233, %p234
      %p236 = scmp.ne.s32.totalorder %s228, %s230
      %p237 = scmp.eq.s32.totalorder %s28, 1
      %p238 = por %p236, %p237
      %p239 = scmp.ne.s32.totalorder %s230, %s231
      %p240 = scmp.eq.s32.totalorder %s28, 0
      %p241 = por %p239, %p240
      %p242 = scmp.ne.s32.totalorder %s230, %s231
      %p243 = scmp.eq.s32.totalorder %s29, 1
      %p244 = por %p242, %p243
      %p246 = scmp.ne.s32.totalorder %s231, %s245
      %p247 = scmp.eq.s32.totalorder %s29, 0
      %p248 = por %p246, %p247
      %s250 = sadd.s32 %s249, 1
      %p253 = scmp.eq.s32.totalorder %s23, 1
      %p254 = scmp.ne.s32.totalorder %s249, %s251
      %p255 = scmp.eq.s32.totalorder %s23, 0
      %p256 = por %p254, %p255
      %p257 = scmp.ne.s32.totalorder %s249, %s251
      %p258 = scmp.eq.s32.totalorder %s28, 1
      %p259 = por %p257, %p258
      %p260 = scmp.ne.s32.totalorder %s251, %s252
      %p261 = scmp.eq.s32.totalorder %s28, 0
      %p262 = por %p260, %p261
      %p263 = scmp.ne.s32.totalorder %s251, %s252
      %p264 = scmp.eq.s32.totalorder %s29, 1
      %p265 = por %p263, %p264
      %p267 = scmp.ne.s32.totalorder %s252, %s266
      %p268 = scmp.eq.s32.totalorder %s29, 0
      %p269 = por %p267, %p268
      %s271 = sadd.s32 %s270, 1
      %p274 = scmp.eq.s32.totalorder %s23, 1
      %p275 = scmp.ne.s32.totalorder %s270, %s272
      %p276 = scmp.eq.s32.totalorder %s23, 0
      %p277 = por %p275, %p276
      %p278 = scmp.ne.s32.totalorder %s270, %s272
      %p279 = scmp.eq.s32.totalorder %s28, 1
      %p280 = por %p278, %p279
      %p281 = scmp.ne.s32.totalorder %s272, %s273
      %p282 = scmp.eq.s32.totalorder %s28, 0
      %p283 = por %p281, %p282
      %p284 = scmp.ne.s32.totalorder %s272, %s273
      %p285 = scmp.eq.s32.totalorder %s29, 1
      %p286 = por %p284, %p285
      %p288 = scmp.ne.s32.totalorder %s273, %s287
      %p289 = scmp.eq.s32.totalorder %s29, 0
      %p290 = por %p288, %p289
      %s292 = sadd.s32 %s291, 1
      %p295 = scmp.eq.s32.totalorder %s23, 1
      %p296 = scmp.ne.s32.totalorder %s291, %s293
      %p297 = scmp.eq.s32.totalorder %s23, 0
      %p298 = por %p296, %p297
      %p299 = scmp.ne.s32.totalorder %s291, %s293
      %p300 = scmp.eq.s32.totalorder %s28, 1
      %p301 = por %p299, %p300
      %p302 = scmp.ne.s32.totalorder %s293, %s294
      %p303 = scmp.eq.s32.totalorder %s28, 0
      %p304 = por %p302, %p303
      %p305 = scmp.ne.s32.totalorder %s293, %s294
      %p306 = scmp.eq.s32.totalorder %s29, 1
      %p307 = por %p305, %p306
      %p309 = scmp.ne.s32.totalorder %s294, %s308
      %p310 = scmp.eq.s32.totalorder %s29, 0
      %p311 = por %p309, %p310
      %s313 = sadd.s32 %s312, 1
      %p316 = scmp.eq.s32.totalorder %s23, 1
      %p317 = scmp.ne.s32.totalorder %s312, %s314
      %p318 = scmp.eq.s32.totalorder %s23, 0
      %p319 = por %p317, %p318
      %p320 = scmp.ne.s32.totalorder %s312, %s314
      %p321 = scmp.eq.s32.totalorder %s28, 1
      %p322 = por %p320, %p321
      %p323 = scmp.ne.s32.totalorder %s314, %s315
      %p324 = scmp.eq.s32.totalorder %s28, 0
      %p325 = por %p323, %p324
      %p326 = scmp.ne.s32.totalorder %s314, %s315
      %p327 = scmp.eq.s32.totalorder %s29, 1
      %p328 = por %p326, %p327
      %p330 = scmp.ne.s32.totalorder %s315, %s329
      %p331 = scmp.eq.s32.totalorder %s29, 0
      %p332 = por %p330, %p331
      %s333 = ssub.s32 %s30, %s42
      %s334 = ssub.s32 %s31, %s38
      %s335 = sor.u32 %s333, %s334
      %p336 = scmp.eq.s32.totalorder %s335, 0
      %s338 = sadd.s32 %s337, 1
      %s339 = scalar_select %p336, %s337, %s338
      %p342 = pneg %p336
      %p343 = scmp.eq.s32.totalorder %s23, 1
      %p344 = por %p342, %p343
      %p345 = scmp.ne.s32.totalorder %s337, %s340
      %p346 = scmp.eq.s32.totalorder %s23, 0
      %p347 = por %p345, %p346
      %p348 = scmp.ne.s32.totalorder %s337, %s340
      %p349 = scmp.eq.s32.totalorder %s28, 1
      %p350 = por %p348, %p349
      %p351 = scmp.ne.s32.totalorder %s340, %s341
      %p352 = scmp.eq.s32.totalorder %s28, 0
      %p353 = por %p351, %p352
      %p354 = scmp.ne.s32.totalorder %s340, %s341
      %p355 = scmp.eq.s32.totalorder %s29, 1
      %p356 = por %p354, %p355
      %p358 = scmp.ne.s32.totalorder %s341, %s357
      %p359 = scmp.eq.s32.totalorder %s29, 0
      %p360 = por %p358, %p359
      %p361 = scmp.le.s32.totalorder 1, %s23
      %p362 = scmp.lt.s32.totalorder %s23, 3
      %p363 = pnand %p361, %p362
      %p364 = pneg %p363
      // Predicated region
      $region9: #{decoder_forward.11} parent=5 // pred_check
        _
      $region10: #{decoder_forward.11} parent=5 // pred_check_branch
        %366 = sbr.rel (%p363) target = $region12
      $region11: #{decoder_forward.11} parent=5 // pred_region
        %s367 = ssub.s32 %s23, 1
        // Predicated region
        $region13: #{decoder_forward.11} parent=11 // pred_check
          %p368 = pneg %p136
        $region14: #{decoder_forward.11} parent=11 // pred_check_branch
          %370 = sbr.rel (%p368) target = $region16
        $region15: #{decoder_forward.11} parent=11 // pred_region
          _
        $region16: #{decoder_forward.11} parent=11 // pred_fallthru
          _
        // Predicated region
        $region17: #{decoder_forward.11} parent=11 // pred_check
          %p371 = pneg %p157
        $region18: #{decoder_forward.11} parent=11 // pred_check_branch
          %373 = sbr.rel (%p371) target = $region20
        $region19: #{decoder_forward.11} parent=11 // pred_region
          %375 = vsyncadd [#allocation3], 0
          %s377 = sshll.u32 %s4, 4
          %s378 = int_to_ptr.hbm [resolvable:$true] %s377
          %s379 = sshll.u32 [#allocation2], 4
          %s380 = int_to_ptr.vmem [resolvable:$true] %s379
          %382 = dma.hbm_to_vmem [thread:$0]  %s378, 16, %s380, [#allocation3]
        $region20: #{decoder_forward.11} parent=11 // pred_fallthru
          _
        // Predicated region
        $region21: #{decoder_forward.11} parent=11 // pred_check
          %p383 = pneg %p178
        $region22: #{decoder_forward.11} parent=11 // pred_check_branch
          %385 = sbr.rel (%p383) target = $region24
        $region23: #{decoder_forward.11} parent=11 // pred_region
          %387 = vsyncadd [#allocation5], 0
          %s388 = sshll.u32 %s5, 4
          %s389 = int_to_ptr.hbm [resolvable:$true] %s388
          %s390 = sshll.u32 [#allocation4], 4
          %s391 = int_to_ptr.vmem [resolvable:$true] %s390
          %396 = dma.hbm_to_vmem [thread:$0]  %s389, 256, %s391, [#allocation5], 64, 64, 4
        $region24: #{decoder_forward.11} parent=11 // pred_fallthru
          _
        // Predicated region
        $region25: #{decoder_forward.11} parent=11 // pred_check
          %p397 = pneg %p199
        $region26: #{decoder_forward.11} parent=11 // pred_check_branch
          %399 = sbr.rel (%p397) target = $region28
        $region27: #{decoder_forward.11} parent=11 // pred_region
          _
        $region28: #{decoder_forward.11} parent=11 // pred_fallthru
          _
        // Predicated region
        $region29: #{decoder_forward.11} parent=11 // pred_check
          %p400 = pneg %p220
        $region30: #{decoder_forward.11} parent=11 // pred_check_branch
          %402 = sbr.rel (%p400) target = $region32
        $region31: #{decoder_forward.11} parent=11 // pred_region
          %404 = vsyncadd [#allocation5], 0
          %s405 = sshll.u32 %s7, 4
          %s406 = int_to_ptr.hbm [resolvable:$true] %s405
          %s407 = sshll.u32 [#allocation6], 4
          %s408 = int_to_ptr.vmem [resolvable:$true] %s407
          %413 = dma.hbm_to_vmem [thread:$0]  %s406, 256, %s408, [#allocation5], 64, 64, 4
        $region32: #{decoder_forward.11} parent=11 // pred_fallthru
          _
        // Predicated region
        $region33: #{decoder_forward.11} parent=11 // pred_check
          %p414 = pneg %p241
        $region34: #{decoder_forward.11} parent=11 // pred_check_branch
          %416 = sbr.rel (%p414) target = $region36
        $region35: #{decoder_forward.11} parent=11 // pred_region
          %418 = vsyncadd [#allocation8], 0
          %s420 = sshll.u32 %s8, 4
          %s421 = int_to_ptr.hbm [resolvable:$true] %s420
          %s422 = sshll.u32 [#allocation7], 4
          %s423 = int_to_ptr.vmem [resolvable:$true] %s422
          %425 = dma.hbm_to_vmem [thread:$0]  %s421, 16, %s423, [#allocation8]
        $region36: #{decoder_forward.11} parent=11 // pred_fallthru
          _
        // Predicated region
        $region37: #{decoder_forward.11} parent=11 // pred_check
          %p426 = pneg %p262
        $region38: #{decoder_forward.11} parent=11 // pred_check_branch
          %428 = sbr.rel (%p426) target = $region40
        $region39: #{decoder_forward.11} parent=11 // pred_region
          %430 = vsyncadd [#allocation8], 0
          %s431 = sshll.u32 %s9, 4
          %s432 = int_to_ptr.hbm [resolvable:$true] %s431
          %s433 = sshll.u32 [#allocation9], 4
          %s434 = int_to_ptr.vmem [resolvable:$true] %s433
          %439 = dma.hbm_to_vmem [thread:$0]  %s432, 256, %s434, [#allocation8], 64, 64, 4
        $region40: #{decoder_forward.11} parent=11 // pred_fallthru
          _
        // Predicated region
        $region41: #{decoder_forward.11} parent=11 // pred_check
          %p440 = pneg %p283
        $region42: #{decoder_forward.11} parent=11 // pred_check_branch
          %442 = sbr.rel (%p440) target = $region44
        $region43: #{decoder_forward.11} parent=11 // pred_region
          _
        $region44: #{decoder_forward.11} parent=11 // pred_fallthru
          _
        // Predicated region
        $region45: #{decoder_forward.11} parent=11 // pred_check
          %p443 = pneg %p304
        $region46: #{decoder_forward.11} parent=11 // pred_check_branch
          %445 = sbr.rel (%p443) target = $region48
        $region47: #{decoder_forward.11} parent=11 // pred_region
          %447 = vsyncadd [#allocation11], 0
          %s448 = sshll.u32 %s11, 4
          %s449 = int_to_ptr.hbm [resolvable:$true] %s448
          %s450 = sshll.u32 [#allocation10], 4
          %s451 = int_to_ptr.vmem [resolvable:$true] %s450
          %456 = dma.hbm_to_vmem [thread:$0]  %s449, 256, %s451, [#allocation11], 64, 64, 4
        $region48: #{decoder_forward.11} parent=11 // pred_fallthru
          _
        // Predicated region
        $region49: #{decoder_forward.11} parent=11 // pred_check
          %p457 = pneg %p325
        $region50: #{decoder_forward.11} parent=11 // pred_check_branch
          %459 = sbr.rel (%p457) target = $region52
        $region51: #{decoder_forward.11} parent=11 // pred_region
          %461 = vsyncadd [#allocation11], 0
          %s463 = sshll.u32 %s12, 4
          %s464 = int_to_ptr.hbm [resolvable:$true] %s463
          %s465 = sshll.u32 [#allocation12], 4
          %s466 = int_to_ptr.vmem [resolvable:$true] %s465
          %468 = dma.hbm_to_vmem [thread:$0]  %s464, 16, %s466, [#allocation11]
        $region52: #{decoder_forward.11} parent=11 // pred_fallthru
          _
      $region12: #{decoder_forward.11} parent=5 // pred_fallthru
        _
      %p469 = scmp.lt.s32.totalorder %s23, 2
      // Predicated region
      $region53: #{decoder_forward.11} parent=5 // pred_check
        %p470 = pneg %p469
      $region54: #{decoder_forward.11} parent=5 // pred_check_branch
        %472 = sbr.rel (%p470) target = $region56
      $region55: #{decoder_forward.11} parent=5 // pred_region
        // Predicated region
        $region57: #{decoder_forward.11} parent=55 // pred_check
          %p473 = pneg %p57
        $region58: #{decoder_forward.11} parent=55 // pred_check_branch
          %475 = sbr.rel (%p473) target = $region60
        $region59: #{decoder_forward.11} parent=55 // pred_region
          %p476 = scmp.lt.s32.totalorder %s30, 1
          %s477 = scalar_select %p476, %s30, 1
          %p478 = scmp.lt.s32.totalorder %s31, 0
          %s479 = scalar_select %p478, %s31, 0
          %s480 = sadd.s32 %s479, %s477
          %s481 = smul.addr %s480, 8
          %s482 = scalar_lea.vmem %s0, %s481
        $region60: #{decoder_forward.11} parent=55 // pred_fallthru
          _
        // Predicated region
        $region61: #{decoder_forward.11} parent=55 // pred_check
          %p483 = pneg %p83
        $region62: #{decoder_forward.11} parent=55 // pred_check_branch
          %485 = sbr.rel (%p483) target = $region64
        $region63: #{decoder_forward.11} parent=55 // pred_region
          %p486 = scmp.lt.s32.totalorder %s30, 1
          %s487 = scalar_select %p486, %s30, 1
          %s488 = smul.addr %s487, 8
          %s489 = scalar_lea.vmem %s1, %s488
        $region64: #{decoder_forward.11} parent=55 // pred_fallthru
          _
        // Predicated region
        $region65: #{decoder_forward.11} parent=55 // pred_check
          %p490 = pneg %p109
        $region66: #{decoder_forward.11} parent=55 // pred_check_branch
          %492 = sbr.rel (%p490) target = $region68
        $region67: #{decoder_forward.11} parent=55 // pred_region
          %p493 = scmp.lt.s32.totalorder %s30, 1
          %s494 = scalar_select %p493, %s30, 1
          %s495 = scalar_lea.vmem %s2, %s494
        $region68: #{decoder_forward.11} parent=55 // pred_fallthru
          _
      $region56: #{decoder_forward.11} parent=5 // pred_fallthru
        _
      %p496 = scmp.le.s32.totalorder 1, %s23
      %p497 = scmp.lt.s32.totalorder %s23, 3
      %p498 = pnand %p496, %p497
      %p499 = pneg %p498
      // Predicated region
      $region69: #{decoder_forward.11} parent=5 // pred_check
        _
      $region70: #{decoder_forward.11} parent=5 // pred_check_branch
        %501 = sbr.rel (%p498) target = $region72
      $region71: #{decoder_forward.11} parent=5 // pred_region
        %s502 = ssub.s32 %s23, 1
        // Predicated region
        $region73: #{decoder_forward.11} parent=71 // pred_check
          %p503 = pneg %p157
        $region74: #{decoder_forward.11} parent=71 // pred_check_branch
          %505 = sbr.rel (%p503) target = $region76
        $region75: #{decoder_forward.11} parent=71 // pred_region
          %507 = dma.done [#allocation3], 16
        $region76: #{decoder_forward.11} parent=71 // pred_fallthru
          _
        // Predicated region
        $region77: #{decoder_forward.11} parent=71 // pred_check
          %p508 = pneg %p178
        $region78: #{decoder_forward.11} parent=71 // pred_check_branch
          %510 = sbr.rel (%p508) target = $region80
        $region79: #{decoder_forward.11} parent=71 // pred_region
          %512 = dma.done [#allocation5], 256
        $region80: #{decoder_forward.11} parent=71 // pred_fallthru
          _
        // Predicated region
        $region81: #{decoder_forward.11} parent=71 // pred_check
          %p513 = pneg %p220
        $region82: #{decoder_forward.11} parent=71 // pred_check_branch
          %515 = sbr.rel (%p513) target = $region84
        $region83: #{decoder_forward.11} parent=71 // pred_region
          %517 = dma.done [#allocation5], 256
        $region84: #{decoder_forward.11} parent=71 // pred_fallthru
          _
        // Predicated region
        $region85: #{decoder_forward.11} parent=71 // pred_check
          %p518 = pneg %p241
        $region86: #{decoder_forward.11} parent=71 // pred_check_branch
          %520 = sbr.rel (%p518) target = $region88
        $region87: #{decoder_forward.11} parent=71 // pred_region
          %522 = dma.done [#allocation8], 16
        $region88: #{decoder_forward.11} parent=71 // pred_fallthru
          _
        // Predicated region
        $region89: #{decoder_forward.11} parent=71 // pred_check
          %p523 = pneg %p262
        $region90: #{decoder_forward.11} parent=71 // pred_check_branch
          %525 = sbr.rel (%p523) target = $region92
        $region91: #{decoder_forward.11} parent=71 // pred_region
          %527 = dma.done [#allocation8], 256
        $region92: #{decoder_forward.11} parent=71 // pred_fallthru
          _
        // Predicated region
        $region93: #{decoder_forward.11} parent=71 // pred_check
          %p528 = pneg %p304
        $region94: #{decoder_forward.11} parent=71 // pred_check_branch
          %530 = sbr.rel (%p528) target = $region96
        $region95: #{decoder_forward.11} parent=71 // pred_region
          %532 = dma.done [#allocation11], 256
        $region96: #{decoder_forward.11} parent=71 // pred_fallthru
          _
        // Predicated region
        $region97: #{decoder_forward.11} parent=71 // pred_check
          %p533 = pneg %p325
        $region98: #{decoder_forward.11} parent=71 // pred_check_branch
          %535 = sbr.rel (%p533) target = $region100
        $region99: #{decoder_forward.11} parent=71 // pred_region
          %537 = dma.done [#allocation11], 16
        $region100: #{decoder_forward.11} parent=71 // pred_fallthru
          _
        %p538 = scmp.lt.s32.totalorder %s32, 1
        %s539 = scalar_select %p538, %s32, 1
        %p540 = scmp.lt.s32.totalorder %s33, 0
        %s541 = scalar_select %p540, %s33, 0
        %s542 = sadd.s32 %s541, %s539
        %s543 = smul.addr %s542, 8
        %s544 = scalar_lea.vmem %s0, %s543
        %p545 = pneg %p63
        %p546 = pneg %p60
        %p547 = scmp.lt.s32.totalorder %s32, 1
        %s548 = scalar_select %p547, %s32, 1
        %s549 = smul.addr %s548, 8
        %s550 = scalar_lea.vmem %s1, %s549
        %p551 = pneg %p89
        %p552 = pneg %p86
        %p553 = scmp.lt.s32.totalorder %s32, 1
        %s554 = scalar_select %p553, %s32, 1
        %s555 = scalar_lea.vmem %s2, %s554
        %p556 = pneg %p115
        %p557 = pneg %p112
        %p558 = pneg %p136
        %p559 = pneg %p133
        %p560 = pneg %p157
        %p561 = pneg %p154
        %p562 = pneg %p178
        %p563 = pneg %p175
        %p564 = pneg %p199
        %p565 = pneg %p196
        %p566 = pneg %p220
        %p567 = pneg %p217
        %p568 = pneg %p241
        %p569 = pneg %p238
        %p570 = pneg %p262
        %p571 = pneg %p259
        %p572 = pneg %p283
        %p573 = pneg %p280
        %p574 = pneg %p304
        %p575 = pneg %p301
        %p576 = pneg %p325
        %p577 = pneg %p322
        %p578 = pneg %p353
        %p579 = pneg %p350
        %p580 = scmp.lt.s32.totalorder %s32, 1
        %s581 = scalar_select %p580, %s32, 1
        %p582 = scmp.lt.s32.totalorder %s33, 0
        %s583 = scalar_select %p582, %s33, 0
        %s584 = sadd.s32 %s583, %s581
        %s585 = smul.addr %s584, 8
        %s586 = scalar_lea.vmem %s13, %s585
        %p587 = scmp.lt.s32.totalorder %s32, 1
        %s588 = scalar_select %p587, %s32, 1
        %p589 = scmp.lt.s32.totalorder %s33, 0
        %s590 = scalar_select %p589, %s33, 0
        %s591 = sadd.s32 %s590, %s588
        %s592 = smul.addr %s591, 8
        %s593 = scalar_lea.vmem %s0, %s592
        %p594 = scmp.lt.s32.totalorder %s32, 1
        %s595 = scalar_select %p594, %s32, 1
        %s596 = smul.addr %s595, 8
        %s597 = scalar_lea.vmem %s1, %s596
        %p598 = scmp.lt.s32.totalorder %s32, 1
        %s599 = scalar_select %p598, %s32, 1
        %s600 = scalar_lea.vmem %s2, %s599
        %p601 = scmp.lt.s32.totalorder %s32, 1
        %s602 = scalar_select %p601, %s32, 1
        %p603 = scmp.lt.s32.totalorder %s33, 0
        %s604 = scalar_select %p603, %s33, 0
        %s605 = sadd.s32 %s604, %s602
        %s606 = smul.addr %s605, 8
        %s607 = scalar_lea.vmem %s13, %s606
        %v609 = vld [vmem:[%s593] sm:$0xff]
        %v610 = vld [vmem:[%s3] sm:$0x1]
        %v611 = vld [vmem:[#allocation2] sm:$0x1]
        %vm612 = vcmask 261120
        %v613 = vsel %vm612, %v609, 0.0
        %614 = vadd.xlane.f32.xlu0 %v613
        %v615 = vpop.xlane.xlu0 %614
        %v616 = vrcp.pop 32.0
        %v617 = vmul.f32 32.0, %v616
        %v618 = vsub.f32 1.0, %v617
        %v619 = vmul.f32 %v616, %v618
        %v620 = vadd.f32 %v616, %v619
        %vm621 = vweird.f32 %v616
        %v622 = vsel %vm621, %v616, %v620
        %v623 = vmul.f32 %v615, %v622
        %v624 = vsub.f32 %v609, %v623
        %v625 = vmul.f32 %v624, %v624
        %v626 = vsel %vm612, %v625, 0.0
        %627 = vadd.xlane.f32.xlu0 %v626
        %v628 = vpop.xlane.xlu0 %627
        %v629 = vmul.f32 %v628, 0.032258064
        %v630 = vrsqrt.pop %v629
        %v631 = vmul.f32 %v630, %v629
        %v632 = vmul.f32 %v631, %v630
        %v633 = vmul.f32 0.5, %v632
        %v634 = vsub.f32 1.5, %v633
        %v635 = vmul.f32 %v630, %v634
        %v636 = vmul.f32 %v629, %v635
        %vm637 = vcmp.eq.f32.partialorder %v629, inf
        %v638 = vsel %vm637, %v629, %v636
        %vm639 = vcmp.eq.f32.partialorder %v629, 0.0
        %v640 = vand.u32 %v629, 2147483648
        %v641 = vsel %vm639, %v640, %v638
        %v643 = vperm.slane %v610, 0
        %v645 = vmul.f32 %v643, %v624
        %v646 = vadd.f32 %v641, 1e-06
        %v647 = vrcp.pop %v646
        %v648 = vmul.f32 %v646, %v647
        %v649 = vsub.f32 1.0, %v648
        %v650 = vmul.f32 %v647, %v649
        %v651 = vadd.f32 %v647, %v650
        %vm652 = vweird.f32 %v646
        %vm653 = vweird.f32 %v647
        %vm654 = vmor %vm652, %vm653
        %v655 = vsel %vm654, %v647, %v651
        %v656 = vand.u32 2147483647, %v646
        %vm657 = vcmp.eq.f32.partialorder %v656, 8.507059e+37
        %v658 = vand.u32 %v646, 2147483648
        %v659 = vor.u32 1.1754944e-38, %v658
        %v660 = vsel %vm657, %v659, %v655
        %v661 = vmul.f32 1.0, %v660
        %v662 = vmul.f32 %v645, %v661
        %v664 = vperm.slane %v611, 0
        %v666 = vadd.f32 %v662, %v664
        %v667 = vld [vmem:[%s597] sm:$0xff]
        %v668 = vpack.c.bf16 %v667, %v667
        %v669 = vpack.c.bf16 %v666, %v666
        %v670 = vld [vmem:[#allocation4] sm:$0xf]
        %v671 = vld [vmem:[#allocation4 + $0x4] sm:$0xf]
        %v672 = vld [vmem:[#allocation4 + $0x8] sm:$0xf]
        %v673 = vld [vmem:[#allocation4 + $0xc] sm:$0xf]
        %v674 = vld [vmem:[%s6] sm:$0x1]
        %v676 = vperm.slane %v674, 0
        %v682 = vunpack.c.l.b16 %v670
        %v683 = vunpack.c.l.b16 %v671
        %v684 = vunpack.c.l.b16 %v672
        %v685 = vunpack.c.l.b16 %v673
        %v686 = vpack.c.b16 %v683, %v682
        %v687 = vpack.c.b16 %v685, %v684
        %v691 = vsel %vm612, %v669, 0
        %693 = vmatpush.bf16.msra.mxu0 0
        %694 = vmatpush.bf16.msra.mxu0 0
        %695 = vmatpush.bf16.msra.mxu0 0
        %696 = vmatpush.bf16.msra.mxu0 0
        %697 = vmatpush.bf16.msra.mxu0 0
        %698 = vmatpush.bf16.msra.mxu0 0
        %699 = vmatpush.bf16.msra.mxu0 %v687
        %700 = vmatpush.bf16.msra.mxu0 %v686
        %701 = vmatmul.bf16.gmra.mxu0 %v691
        %v702 = vpop.f32.mrf.mxu0
        %v703 = vadd.f32 %v676, %v702
        %v704 = vpop.f32.mrf.mxu0
        %705 = vdwg.mxu0
        %v706 = vpack.c.bf16 %v703, %v703
        %v707 = vld [vmem:[#allocation6] sm:$0xf]
        %v708 = vld [vmem:[#allocation6 + $0x4] sm:$0xf]
        %v709 = vld [vmem:[#allocation6 + $0x8] sm:$0xf]
        %v710 = vld [vmem:[#allocation6 + $0xc] sm:$0xf]
        %v711 = vld [vmem:[#allocation7] sm:$0x1]
        %v713 = vperm.slane %v711, 0
        %v719 = vunpack.c.l.b16 %v707
        %v720 = vunpack.c.l.b16 %v708
        %v721 = vunpack.c.l.b16 %v709
        %v722 = vunpack.c.l.b16 %v710
        %v723 = vpack.c.b16 %v720, %v719
        %v724 = vpack.c.b16 %v722, %v721
        %v728 = vsel %vm612, %v668, 0
        %730 = vmatpush.bf16.msra.mxu0 0
        %731 = vmatpush.bf16.msra.mxu0 0
        %732 = vmatpush.bf16.msra.mxu0 0
        %733 = vmatpush.bf16.msra.mxu0 0
        %734 = vmatpush.bf16.msra.mxu0 0
        %735 = vmatpush.bf16.msra.mxu0 0
        %736 = vmatpush.bf16.msra.mxu0 %v724
        %737 = vmatpush.bf16.msra.mxu0 %v723
        %738 = vmatmul.bf16.gmra.mxu0 %v728
        %v739 = vpop.f32.mrf.mxu0
        %v740 = vadd.f32 %v713, %v739
        %v741 = vpop.f32.mrf.mxu0
        %742 = vdwg.mxu0
        %v743 = vpack.c.bf16 %v740, %v740
        %v744 = vld [vmem:[#allocation9] sm:$0xf]
        %v745 = vld [vmem:[#allocation9 + $0x4] sm:$0xf]
        %v746 = vld [vmem:[#allocation9 + $0x8] sm:$0xf]
        %v747 = vld [vmem:[#allocation9 + $0xc] sm:$0xf]
        %v748 = vld [vmem:[%s10] sm:$0x1]
        %v750 = vperm.slane %v748, 0
        %v756 = vunpack.c.l.b16 %v744
        %v757 = vunpack.c.l.b16 %v745
        %v758 = vunpack.c.l.b16 %v746
        %v759 = vunpack.c.l.b16 %v747
        %v760 = vpack.c.b16 %v757, %v756
        %v761 = vpack.c.b16 %v759, %v758
        %764 = vmatpush.bf16.msra.mxu0 0
        %765 = vmatpush.bf16.msra.mxu0 0
        %766 = vmatpush.bf16.msra.mxu0 0
        %767 = vmatpush.bf16.msra.mxu0 0
        %768 = vmatpush.bf16.msra.mxu0 0
        %769 = vmatpush.bf16.msra.mxu0 0
        %770 = vmatpush.bf16.msra.mxu0 %v761
        %771 = vmatpush.bf16.msra.mxu0 %v760
        %772 = vmatmul.bf16.gmra.mxu0 %v728
        %v773 = vpop.f32.mrf.mxu0
        %v774 = vadd.f32 %v750, %v773
        %v775 = vpop.f32.mrf.mxu0
        %776 = vdwg.mxu0
        %v777 = vpack.c.bf16 %v774, %v774
        %v778 = vld [vmem:[%s600] sm:$0x1]
        %v779 = vsub.f32 %v778, 1.0
        %v780 = vmul.f32 %v779, 1e+09
        %vm781 = vcmask 64512
        %v783 = vsel %vm781, %v706, 0
        %v786 = vsel %vm781, %v743, 0
        %788 = vmatpush.bf16.xpose.msra.mxu0 0
        %789 = vmatpush.bf16.xpose.msra.mxu0 0
        %790 = vmatpush.bf16.xpose.msra.mxu0 0
        %791 = vmatpush.bf16.xpose.msra.mxu0 0
        %792 = vmatpush.bf16.xpose.msra.mxu0 0
        %793 = vmatpush.bf16.xpose.msra.mxu0 0
        %794 = vmatpush.bf16.xpose.msra.mxu0 0
        %795 = vmatpush.bf16.xpose.msra.mxu0 %v786
        %796 = vmatmul.bf16.gmra.mxu0 %v783
        %v797 = vpop.f32.mrf.mxu0
        %v798 = vadd.f32 0.0, %v797
        %v799 = vpop.f32.mrf.mxu0
        %800 = vdwg.mxu0
        %v801 = vmul.f32 %v798, 0.35355338
        %v803 = vperm.slane %v780, 0
        %v805 = vadd.f32 %v801, %v803
        %v806 = vsel %vm781, %v805, -inf
        %807 = vmax.xlane.f32.xlu0 %v806
        %v808 = vpop.xlane.xlu0 %807
        %v809 = vsub.f32 %v805, %v808
        %v810 = vmul.f32 %v809, 1.442695
        %v811 = vpow.pop %v810
        %v812 = vsel %vm781, %v811, 0.0
        %813 = vadd.xlane.f32.xlu0 %v812
        %v814 = vpop.xlane.xlu0 %813
        %v815 = vrcp.pop %v814
        %v816 = vmul.f32 %v811, %v815
        %v817 = vpack.c.bf16 %v816, %v816
        %v819 = vsel %vm781, %v817, 0
        %vm821 = vcmask 1043456
        %v823 = vsel %vm821, %v777, 0
        %825 = vmatpush.bf16.msra.mxu0 0
        %826 = vmatpush.bf16.msra.mxu0 0
        %827 = vmatpush.bf16.msra.mxu0 0
        %828 = vmatpush.bf16.msra.mxu0 0
        %829 = vmatpush.bf16.msra.mxu0 0
        %830 = vmatpush.bf16.msra.mxu0 0
        %831 = vmatpush.bf16.msra.mxu0 0
        %832 = vmatpush.bf16.msra.mxu0 %v823
        %833 = vmatmul.bf16.gmra.mxu0 %v819
        %v834 = vpop.f32.mrf.mxu0
        %v835 = vadd.f32 0.0, %v834
        %v836 = vpop.f32.mrf.mxu0
        %837 = vdwg.mxu0
        %v838 = vpack.c.bf16 %v835, %v835
        %v839 = vld [vmem:[#allocation10] sm:$0xf]
        %v841 = vunpack.c.l.b16 %v706
        %v842 = vpack.c.b16 %v841, %v841
        %843 = vrot.lane.b32.xlu0 %v842, 120
        %v844 = vpop.permute.xlu0 %843
        %v846 = vunpack.c.l.b16 %v743
        %v847 = vpack.c.b16 %v846, %v846
        %848 = vrot.lane.b32.xlu0 %v847, 120
        %v849 = vpop.permute.xlu0 %848
        %v851 = vsel %vm781, %v844, 0
        %v854 = vsel %vm781, %v849, 0
        %856 = vmatpush.bf16.xpose.msra.mxu0 0
        %857 = vmatpush.bf16.xpose.msra.mxu0 0
        %858 = vmatpush.bf16.xpose.msra.mxu0 0
        %859 = vmatpush.bf16.xpose.msra.mxu0 0
        %860 = vmatpush.bf16.xpose.msra.mxu0 0
        %861 = vmatpush.bf16.xpose.msra.mxu0 0
        %862 = vmatpush.bf16.xpose.msra.mxu0 0
        %863 = vmatpush.bf16.xpose.msra.mxu0 %v854
        %864 = vmatmul.bf16.gmra.mxu0 %v851
        %v865 = vpop.f32.mrf.mxu0
        %v866 = vadd.f32 0.0, %v865
        %v867 = vpop.f32.mrf.mxu0
        %868 = vdwg.mxu0
        %v869 = vmul.f32 %v866, 0.35355338
        %v870 = vadd.f32 %v869, %v803
        %v871 = vsel %vm781, %v870, -inf
        %872 = vmax.xlane.f32.xlu0 %v871
        %v873 = vpop.xlane.xlu0 %872
        %v874 = vsub.f32 %v870, %v873
        %v875 = vmul.f32 %v874, 1.442695
        %v876 = vpow.pop %v875
        %v877 = vsel %vm781, %v876, 0.0
        %878 = vadd.xlane.f32.xlu0 %v877
        %v879 = vpop.xlane.xlu0 %878
        %v880 = vrcp.pop %v879
        %v881 = vmul.f32 %v876, %v880
        %v882 = vpack.c.bf16 %v881, %v881
        %v884 = vunpack.c.l.b16 %v777
        %v885 = vpack.c.b16 %v884, %v884
        %886 = vrot.lane.b32.xlu0 %v885, 120
        %v887 = vpop.permute.xlu0 %886
        %v889 = vsel %vm781, %v882, 0
        %v892 = vsel %vm821, %v887, 0
        %894 = vmatpush.bf16.msra.mxu0 0
        %895 = vmatpush.bf16.msra.mxu0 0
        %896 = vmatpush.bf16.msra.mxu0 0
        %897 = vmatpush.bf16.msra.mxu0 0
        %898 = vmatpush.bf16.msra.mxu0 0
        %899 = vmatpush.bf16.msra.mxu0 0
        %900 = vmatpush.bf16.msra.mxu0 0
        %901 = vmatpush.bf16.msra.mxu0 %v892
        %902 = vmatmul.bf16.gmra.mxu0 %v889
        %v903 = vpop.f32.mrf.mxu0
        %v904 = vadd.f32 0.0, %v903
        %v905 = vpop.f32.mrf.mxu0
        %906 = vdwg.mxu0
        %v907 = vpack.c.bf16 %v904, %v904
        %v908 = vld [vmem:[#allocation10 + $0x4] sm:$0xf]
        %v910 = vsel %vm781, %v907, 0
        %v913 = vsel %vm821, %v908, 0
        %915 = vmatpush.bf16.msra.mxu0 0
        %916 = vmatpush.bf16.msra.mxu0 0
        %917 = vmatpush.bf16.msra.mxu0 0
        %918 = vmatpush.bf16.msra.mxu0 0
        %919 = vmatpush.bf16.msra.mxu0 0
        %920 = vmatpush.bf16.msra.mxu0 0
        %921 = vmatpush.bf16.msra.mxu0 0
        %922 = vmatpush.bf16.msra.mxu0 %v913
        %923 = vmatmul.bf16.gmra.mxu0 %v910
        %v924 = vpop.f32.mrf.mxu0
        %v925 = vadd.f32 0.0, %v924
        %v926 = vpop.f32.mrf.mxu0
        %927 = vdwg.mxu0
        %v929 = vsel %vm781, %v838, 0
        %v932 = vsel %vm821, %v839, 0
        %934 = vmatpush.bf16.msra.mxu0 0
        %935 = vmatpush.bf16.msra.mxu0 0
        %936 = vmatpush.bf16.msra.mxu0 0
        %937 = vmatpush.bf16.msra.mxu0 0
        %938 = vmatpush.bf16.msra.mxu0 0
        %939 = vmatpush.bf16.msra.mxu0 0
        %940 = vmatpush.bf16.msra.mxu0 0
        %941 = vmatpush.bf16.msra.mxu0 %v932
        %942 = vmatmul.bf16.gmra.mxu0 %v929
        %v943 = vpop.f32.mrf.mxu0
        %v944 = vadd.f32 %v925, %v943
        %v945 = vpop.f32.mrf.mxu0
        %946 = vdwg.mxu0
        %947 = vrot.lane.b32.xlu0 %v842, 112
        %v948 = vpop.permute.xlu0 %947
        %949 = vrot.lane.b32.xlu0 %v847, 112
        %v950 = vpop.permute.xlu0 %949
        %v952 = vsel %vm781, %v948, 0
        %v955 = vsel %vm781, %v950, 0
        %957 = vmatpush.bf16.xpose.msra.mxu0 0
        %958 = vmatpush.bf16.xpose.msra.mxu0 0
        %959 = vmatpush.bf16.xpose.msra.mxu0 0
        %960 = vmatpush.bf16.xpose.msra.mxu0 0
        %961 = vmatpush.bf16.xpose.msra.mxu0 0
        %962 = vmatpush.bf16.xpose.msra.mxu0 0
        %963 = vmatpush.bf16.xpose.msra.mxu0 0
        %964 = vmatpush.bf16.xpose.msra.mxu0 %v955
        %965 = vmatmul.bf16.gmra.mxu0 %v952
        %v966 = vpop.f32.mrf.mxu0
        %v967 = vadd.f32 0.0, %v966
        %v968 = vpop.f32.mrf.mxu0
        %969 = vdwg.mxu0
        %v970 = vmul.f32 %v967, 0.35355338
        %v971 = vadd.f32 %v970, %v803
        %v972 = vsel %vm781, %v971, -inf
        %973 = vmax.xlane.f32.xlu0 %v972
        %v974 = vpop.xlane.xlu0 %973
        %v975 = vsub.f32 %v971, %v974
        %v976 = vmul.f32 %v975, 1.442695
        %v977 = vpow.pop %v976
        %v978 = vsel %vm781, %v977, 0.0
        %979 = vadd.xlane.f32.xlu0 %v978
        %v980 = vpop.xlane.xlu0 %979
        %v981 = vrcp.pop %v980
        %v982 = vmul.f32 %v977, %v981
        %v983 = vpack.c.bf16 %v982, %v982
        %984 = vrot.lane.b32.xlu0 %v885, 112
        %v985 = vpop.permute.xlu0 %984
        %v987 = vsel %vm781, %v983, 0
        %v990 = vsel %vm821, %v985, 0
        %992 = vmatpush.bf16.msra.mxu0 0
        %993 = vmatpush.bf16.msra.mxu0 0
        %994 = vmatpush.bf16.msra.mxu0 0
        %995 = vmatpush.bf16.msra.mxu0 0
        %996 = vmatpush.bf16.msra.mxu0 0
        %997 = vmatpush.bf16.msra.mxu0 0
        %998 = vmatpush.bf16.msra.mxu0 0
        %999 = vmatpush.bf16.msra.mxu0 %v990
        %1000 = vmatmul.bf16.gmra.mxu0 %v987
        %v1001 = vpop.f32.mrf.mxu0
        %v1002 = vadd.f32 0.0, %v1001
        %v1003 = vpop.f32.mrf.mxu0
        %1004 = vdwg.mxu0
        %v1005 = vpack.c.bf16 %v1002, %v1002
        %v1006 = vld [vmem:[#allocation10 + $0x8] sm:$0xf]
        %v1008 = vsel %vm781, %v1005, 0
        %v1011 = vsel %vm821, %v1006, 0
        %1013 = vmatpush.bf16.msra.mxu0 0
        %1014 = vmatpush.bf16.msra.mxu0 0
        %1015 = vmatpush.bf16.msra.mxu0 0
        %1016 = vmatpush.bf16.msra.mxu0 0
        %1017 = vmatpush.bf16.msra.mxu0 0
        %1018 = vmatpush.bf16.msra.mxu0 0
        %1019 = vmatpush.bf16.msra.mxu0 0
        %1020 = vmatpush.bf16.msra.mxu0 %v1011
        %1021 = vmatmul.bf16.gmra.mxu0 %v1008
        %v1022 = vpop.f32.mrf.mxu0
        %v1023 = vadd.f32 0.0, %v1022
        %v1024 = vpop.f32.mrf.mxu0
        %1025 = vdwg.mxu0
        %v1026 = vadd.f32 %v944, %v1023
        %1027 = vrot.lane.b32.xlu0 %v842, 104
        %v1028 = vpop.permute.xlu0 %1027
        %1029 = vrot.lane.b32.xlu0 %v847, 104
        %v1030 = vpop.permute.xlu0 %1029
        %v1032 = vsel %vm781, %v1028, 0
        %v1035 = vsel %vm781, %v1030, 0
        %1037 = vmatpush.bf16.xpose.msra.mxu0 0
        %1038 = vmatpush.bf16.xpose.msra.mxu0 0
        %1039 = vmatpush.bf16.xpose.msra.mxu0 0
        %1040 = vmatpush.bf16.xpose.msra.mxu0 0
        %1041 = vmatpush.bf16.xpose.msra.mxu0 0
        %1042 = vmatpush.bf16.xpose.msra.mxu0 0
        %1043 = vmatpush.bf16.xpose.msra.mxu0 0
        %1044 = vmatpush.bf16.xpose.msra.mxu0 %v1035
        %1045 = vmatmul.bf16.gmra.mxu0 %v1032
        %v1046 = vpop.f32.mrf.mxu0
        %v1047 = vadd.f32 0.0, %v1046
        %v1048 = vpop.f32.mrf.mxu0
        %1049 = vdwg.mxu0
        %v1050 = vmul.f32 %v1047, 0.35355338
        %v1051 = vadd.f32 %v1050, %v803
        %v1052 = vsel %vm781, %v1051, -inf
        %1053 = vmax.xlane.f32.xlu0 %v1052
        %v1054 = vpop.xlane.xlu0 %1053
        %v1055 = vsub.f32 %v1051, %v1054
        %v1056 = vmul.f32 %v1055, 1.442695
        %v1057 = vpow.pop %v1056
        %v1058 = vsel %vm781, %v1057, 0.0
        %1059 = vadd.xlane.f32.xlu0 %v1058
        %v1060 = vpop.xlane.xlu0 %1059
        %v1061 = vrcp.pop %v1060
        %v1062 = vmul.f32 %v1057, %v1061
        %v1063 = vpack.c.bf16 %v1062, %v1062
        %1064 = vrot.lane.b32.xlu0 %v885, 104
        %v1065 = vpop.permute.xlu0 %1064
        %v1067 = vsel %vm781, %v1063, 0
        %v1070 = vsel %vm821, %v1065, 0
        %1072 = vmatpush.bf16.msra.mxu0 0
        %1073 = vmatpush.bf16.msra.mxu0 0
        %1074 = vmatpush.bf16.msra.mxu0 0
        %1075 = vmatpush.bf16.msra.mxu0 0
        %1076 = vmatpush.bf16.msra.mxu0 0
        %1077 = vmatpush.bf16.msra.mxu0 0
        %1078 = vmatpush.bf16.msra.mxu0 0
        %1079 = vmatpush.bf16.msra.mxu0 %v1070
        %1080 = vmatmul.bf16.gmra.mxu0 %v1067
        %v1081 = vpop.f32.mrf.mxu0
        %v1082 = vadd.f32 0.0, %v1081
        %v1083 = vpop.f32.mrf.mxu0
        %1084 = vdwg.mxu0
        %v1085 = vpack.c.bf16 %v1082, %v1082
        %v1086 = vld [vmem:[#allocation10 + $0xc] sm:$0xf]
        %v1088 = vsel %vm781, %v1085, 0
        %v1091 = vsel %vm821, %v1086, 0
        %1093 = vmatpush.bf16.msra.mxu0 0
        %1094 = vmatpush.bf16.msra.mxu0 0
        %1095 = vmatpush.bf16.msra.mxu0 0
        %1096 = vmatpush.bf16.msra.mxu0 0
        %1097 = vmatpush.bf16.msra.mxu0 0
        %1098 = vmatpush.bf16.msra.mxu0 0
        %1099 = vmatpush.bf16.msra.mxu0 0
        %1100 = vmatpush.bf16.msra.mxu0 %v1091
        %1101 = vmatmul.bf16.gmra.mxu0 %v1088
        %v1102 = vpop.f32.mrf.mxu0
        %v1103 = vadd.f32 0.0, %v1102
        %v1104 = vpop.f32.mrf.mxu0
        %1105 = vdwg.mxu0
        %v1106 = vadd.f32 %v1026, %v1103
        %v1107 = vadd.f32 %v609, %v1106
        %v1108 = vld [vmem:[#allocation12] sm:$0x1]
        %v1110 = vperm.slane %v1108, 0
        %v1112 = vadd.f32 %v1107, %v1110
        %1113 = vst.msk [vmem:[%s607] sm:$0xff] %vm612, %v1112
        %p1114 = scmp.lt.s32.totalorder %s32, 1
        %s1115 = scalar_select %p1114, %s32, 1
        %p1116 = scmp.lt.s32.totalorder %s33, 0
        %s1117 = scalar_select %p1116, %s33, 0
        %s1118 = sadd.s32 %s1117, %s1115
        %s1119 = smul.addr %s1118, 8
        %s1120 = scalar_lea.vmem %s13, %s1119
        // Predicated region
        $region101: #{decoder_forward.11} parent=71 // pred_check
          %p1121 = pneg %p350
        $region102: #{decoder_forward.11} parent=71 // pred_check_branch
          %1123 = sbr.rel (%p1121) target = $region104
        $region103: #{decoder_forward.11} parent=71 // pred_region
          _
        $region104: #{decoder_forward.11} parent=71 // pred_fallthru
          _
      $region72: #{decoder_forward.11} parent=5 // pred_fallthru
        _
      %p1124 = scmp.le.s32.totalorder 2, %s23
      // Predicated region
      $region105: #{decoder_forward.11} parent=5 // pred_check
        %p1125 = pneg %p1124
      $region106: #{decoder_forward.11} parent=5 // pred_check_branch
        %1127 = sbr.rel (%p1125) target = $region108
      $region107: #{decoder_forward.11} parent=5 // pred_region
        %s1128 = ssub.s32 %s23, 2
        // Predicated region
        $region109: #{decoder_forward.11} parent=107 // pred_check
          %p1129 = pneg %p356
        $region110: #{decoder_forward.11} parent=107 // pred_check_branch
          %1131 = sbr.rel (%p1129) target = $region112
        $region111: #{decoder_forward.11} parent=107 // pred_region
          %p1132 = scmp.lt.s32.totalorder %s34, 1
          %s1133 = scalar_select %p1132, %s34, 1
          %p1134 = scmp.lt.s32.totalorder %s35, 0
          %s1135 = scalar_select %p1134, %s35, 0
          %s1136 = sadd.s32 %s1135, %s1133
          %s1137 = smul.addr %s1136, 8
          %s1138 = scalar_lea.vmem %s13, %s1137
        $region112: #{decoder_forward.11} parent=107 // pred_fallthru
          _
      $region108: #{decoder_forward.11} parent=5 // pred_fallthru
        _
    $region6: #{decoder_forward.11} parent=1 // loop_footer
      %s27 = sadd.s32 1, %s23
    $region7: #{decoder_forward.11} parent=1 // loop_footer_branch
      %22 = sbr.rel target = $region3
    $region8: #{decoder_forward.11} parent=1 // loop_exit
      _
    %1139 = vsyncpa [#allocation3], 1
    %s1140 = scalar_lea.sflag [#allocation3], 1
    %1141 = vsyncpa %s1140, 1
    %1142 = vsyncpa [#allocation5], 1
    %1143 = vsyncpa [#allocation8], 1
    %1144 = vsyncpa [#allocation11], 1

</llo_original>
